<compile_context>
chip_gen: v5e
topology: v5e:2x2
jax: 0.10.0
libtpu: 0.0.40
codegen_flags: <defaults>
</compile_context>

<pallas_src>
import functools
import math

import jax
import jax.numpy as jnp
import numpy as np
from jax.experimental import pallas as pl
from jax.experimental.pallas import tpu as pltpu

# ----------------------------- config ---------------------------------------
IN_FEATURES = 3
HIDDEN_SIZES = (128, 256, 128)   # n_layers = 3
HEAD_HIDDEN = 128
OUT_FEATURES = 1
EPS_BN = 1e-5
EPS_LN = 1e-5
TILE_N = 1024                    # batch tile (sweep 512 / 1024 / 2048)
_LANE = 128


def _round_up(a, b):
    return ((a + b - 1) // b) * b


# --------------------------- in-kernel helpers -------------------------------
def _gelu_exact(x):
    # PyTorch nn.GELU() default (approximate='none'): 0.5*x*(1+erf(x/sqrt(2)))
    return 0.5 * x * (1.0 + jax.lax.erf(x * jnp.float32(1.0 / math.sqrt(2.0))))


def _gelu_tanh(x):
    # tanh approximation: moves the transcendental from the (saturated) VALU
    # erf polynomial to the (idle) EUP slot.  Slightly off PyTorch exact GELU.
    c = jnp.float32(math.sqrt(2.0 / math.pi))
    return 0.5 * x * (1.0 + jnp.tanh(c * (x + jnp.float32(0.044715) * x * x * x)))


def _layernorm(x, gamma, beta, eps):
    # Single-pass variance (E[x^2] - mu^2): one fewer full-tile VALU pass than
    # mean((x - mu)^2).  rsqrt routes to the EUP.
    mu = jnp.mean(x, axis=-1, keepdims=True)
    m2 = jnp.mean(x * x, axis=-1, keepdims=True)
    var = jnp.maximum(m2 - mu * mu, 0.0)
    inv = jax.lax.rsqrt(var + eps)
    return (x - mu) * inv * gamma + beta


# ------------------------------- kernel --------------------------------------
def _forward_kernel(
    x_ref,
    w0_ref, b0_ref, g0_ref, be0_ref,
    w1_ref, b1_ref, g1_ref, be1_ref,
    w2_ref, b2_ref, g2_ref, be2_ref,
    wo1_ref, bo1_ref, go_ref, beo_ref,
    wo2_ref, bo2_ref,
    out_ref,
    *, g_rows, gelu_approx,
):
    # x: (TILE_N, 3) f32 — BatchNorm already folded into w0/b0 on the host.
    x = x_ref[...]
    act = _gelu_tanh if gelu_approx else _gelu_exact

    # [Linear -> GELU -> LayerNorm -> Dropout(identity)] x 3 hidden layers,
    # then the head's Linear(128) -> GELU -> LayerNorm(128) in the same loop.
    blocks = (
        (w0_ref, b0_ref, g0_ref, be0_ref),
        (w1_ref, b1_ref, g1_ref, be1_ref),
        (w2_ref, b2_ref, g2_ref, be2_ref),
        (wo1_ref, bo1_ref, go_ref, beo_ref),
    )
    for w_ref, b_ref, g_ref, be_ref in blocks:
        w = w_ref[...]
        h = jnp.dot(x.astype(w.dtype), w, preferred_element_type=jnp.float32)
        h = act(h + b_ref[...])
        x = _layernorm(h, g_ref[...], be_ref[...], EPS_LN)
        # Dropout is identity at inference time.

    # ---- head: Linear(128 -> 1) + Tanh on the VPU/XLU, lane-dense row ----
    # x: (TILE_N, 128); wo2: (128, 1). Transpose once (XLU), broadcast-multiply
    # (VPU), reduce over sublanes (XLU) -> (1, TILE_N) lane-dense row.
    xt = x.T                                                  # (128, TILE_N)
    y = jnp.sum(xt * wo2_ref[...], axis=0, keepdims=True)     # (1, TILE_N)
    y = jnp.tanh(y + bo2_ref[...])

    # Sublane-dense store: out block is (1, g_rows, 128).  Write each 128-lane
    # slice into its own sublane row (static slices only -> guaranteed to
    # lower; no relayout/reshape op needed).
    for g in range(g_rows):
        out_ref[0, g:g + 1, :] = y[:, g * _LANE:(g + 1) * _LANE]


# ------------------------------ wrapper ---------------------------------------
def optuna_force_predictor_forward(x, params, *, tile_n=TILE_N,
                                   matmul_dtype=jnp.float32,
                                   gelu_approx=False):
    n, f = x.shape
    assert f == IN_FEATURES

    # --- batch tile selection --------------------------------------------------
    #  * multiple of 128 (sublane-dense output packing)
    #  * capped at ~ceil(n/2) so v7x's two TensorCores both get grid steps
    tile_n = min(int(tile_n), _round_up(pl.cdiv(n, 2), _LANE))
    tile_n = max(_LANE, _round_up(tile_n, _LANE))
    num_tiles = pl.cdiv(n, tile_n)
    n_pad = num_tiles * tile_n
    g_rows = tile_n // _LANE
    if n_pad != n:
        # Padded rows are independent, computed, and dropped (LN eps keeps them
        # finite).
        x = jnp.pad(x, ((0, n_pad - n), (0, 0)))

    # ---- fold eval-mode BatchNorm1d(3) into the first Linear (exact) ----
    scale = params["bn_gamma"] / jnp.sqrt(params["bn_var"] + EPS_BN)   # (1, 3)
    shift = params["bn_beta"] - params["bn_mean"] * scale              # (1, 3)
    w0 = params["w0"] * scale.reshape(IN_FEATURES, 1)                  # (3, 128)
    b0 = params["b0"] + shift @ params["w0"]                           # (1, 128)

    def cast_w(w):
        # Matmul operands only; accumulate + epilogue stay f32.  Default f32:
        # the kernel is VALU-bound, and on v5e the per-layer activation cast
        # would land on the saturated VALU slot for no MXU benefit.
        return w.astype(matmul_dtype)

    param_list = [
        cast_w(w0), b0, params["ln_g0"], params["ln_b0"],
        cast_w(params["w1"]), params["b1"], params["ln_g1"], params["ln_b1"],
        cast_w(params["w2"]), params["b2"], params["ln_g2"], params["ln_b2"],
        cast_w(params["w_out1"]), params["b_out1"],
        params["ln_g_out"], params["ln_b_out"],
        params["w_out2"], params["b_out2"],
    ]

    in_specs = [pl.BlockSpec((tile_n, IN_FEATURES), lambda i: (i, 0))]
    # Weights / per-feature params: full array with a constant index map ->
    # resident in VMEM across all grid steps (Pallas skips the re-DMA).
    in_specs += [pl.BlockSpec(p.shape, lambda i: (0, 0)) for p in param_list]

    # Advisory cost estimate (matmul flops, transcendentals, bytes).
    dims = [IN_FEATURES, *HIDDEN_SIZES, HEAD_HIDDEN, OUT_FEATURES]
    flops = 2 * n_pad * sum(a * b for a, b in zip(dims[:-1], dims[1:]))
    transcendentals = n_pad * (sum(HIDDEN_SIZES) + HEAD_HIDDEN + 1 + 4)
    bytes_accessed = int(x.size) * 4 + n_pad * 4 + sum(
        int(np.prod(p.shape)) * int(p.dtype.itemsize) for p in param_list)

    kernel = functools.partial(_forward_kernel, g_rows=g_rows,
                               gelu_approx=gelu_approx)

    out = pl.pallas_call(
        kernel,
        out_shape=jax.ShapeDtypeStruct((num_tiles, g_rows, _LANE), jnp.float32),
        grid=(num_tiles,),
        in_specs=in_specs,
        out_specs=pl.BlockSpec((1, g_rows, _LANE), lambda i: (i, 0, 0)),
        compiler_params=pltpu.CompilerParams(
            dimension_semantics=("parallel",),
            vmem_limit_bytes=32 * 1024 * 1024),
        cost_estimate=pl.CostEstimate(
            flops=flops, transcendentals=transcendentals,
            bytes_accessed=bytes_accessed),
    )(x, *param_list)

    # (num_tiles, g_rows, 128) sublane/lane-dense slab -> (n, 1) column.
    return out.reshape(n_pad, OUT_FEATURES)[:n]


# --------------------------- parameter init -----------------------------------
def _kaiming_normal(key, fan_in, fan_out, a=0.2):
    # PyTorch kaiming_normal_(nonlinearity='leaky_relu', a=0.2), fan_in mode.
    gain = math.sqrt(2.0 / (1.0 + a * a))
    std = gain / math.sqrt(fan_in)
    # stored as (in, out) = transpose of PyTorch's (out, in)
    return jax.random.normal(key, (fan_in, fan_out), dtype=jnp.float32) * std


def init_params(key):
    params = {
        # BatchNorm1d(3) defaults (eval mode)
        "bn_gamma": jnp.ones((1, IN_FEATURES), jnp.float32),
        "bn_beta": jnp.zeros((1, IN_FEATURES), jnp.float32),
        "bn_mean": jnp.zeros((1, IN_FEATURES), jnp.float32),
        "bn_var": jnp.ones((1, IN_FEATURES), jnp.float32),
    }
    in_size = IN_FEATURES
    keys = jax.random.split(key, len(HIDDEN_SIZES) + 2)
    for li, h in enumerate(HIDDEN_SIZES):
        params[f"w{li}"] = _kaiming_normal(keys[li], in_size, h)
        params[f"b{li}"] = jnp.zeros((1, h), jnp.float32)
        params[f"ln_g{li}"] = jnp.ones((1, h), jnp.float32)
        params[f"ln_b{li}"] = jnp.zeros((1, h), jnp.float32)
        in_size = h
    params["w_out1"] = _kaiming_normal(keys[-2], in_size, HEAD_HIDDEN)
    params["b_out1"] = jnp.zeros((1, HEAD_HIDDEN), jnp.float32)
    params["ln_g_out"] = jnp.ones((1, HEAD_HIDDEN), jnp.float32)
    params["ln_b_out"] = jnp.zeros((1, HEAD_HIDDEN), jnp.float32)
    params["w_out2"] = _kaiming_normal(keys[-1], HEAD_HIDDEN, OUT_FEATURES)
    params["b_out2"] = jnp.zeros((1, OUT_FEATURES), jnp.float32)
    return params


# --------------------------- pure-JAX reference --------------------------------
def _reference_forward(x, params):
    h = (x - params["bn_mean"]) / jnp.sqrt(params["bn_var"] + EPS_BN)
    h = h * params["bn_gamma"] + params["bn_beta"]
    for li in range(len(HIDDEN_SIZES)):
        h = h @ params[f"w{li}"] + params[f"b{li}"]
        h = jax.nn.gelu(h, approximate=False)
        mu = h.mean(-1, keepdims=True)
        var = ((h - mu) ** 2).mean(-1, keepdims=True)
        h = (h - mu) / jnp.sqrt(var + EPS_LN) * params[f"ln_g{li}"] + params[f"ln_b{li}"]
    h = h @ params["w_out1"] + params["b_out1"]
    h = jax.nn.gelu(h, approximate=False)
    mu = h.mean(-1, keepdims=True)
    var = ((h - mu) ** 2).mean(-1, keepdims=True)
    h = (h - mu) / jnp.sqrt(var + EPS_LN) * params["ln_g_out"] + params["ln_b_out"]
    return jnp.tanh(h @ params["w_out2"] + params["b_out2"])


# ---------------------------------- main ---------------------------------------
if __name__ == "__main__":
    key = jax.random.PRNGKey(0)
    k_param, k_x = jax.random.split(key)
    params = init_params(k_param)

    # Small example batch (not a multiple of the tile -> exercises pad + slice).
    batch = 64
    x = jax.random.normal(k_x, (batch, IN_FEATURES), dtype=jnp.float32)
    ref = jax.block_until_ready(_reference_forward(x, params))

    # Exact f32 path (matches PyTorch nn.GELU(approximate='none') semantics).
    out = jax.block_until_ready(optuna_force_predictor_forward(x, params))
    np.testing.assert_allclose(np.asarray(out), np.asarray(ref),
                               rtol=1e-4, atol=5e-5)

    # Non-multiple batch to validate padding/slicing path (same compiled shape).
    x_small = x[:37]
    out_small = jax.block_until_ready(optuna_force_predictor_forward(x_small, params))
    np.testing.assert_allclose(np.asarray(out_small), np.asarray(ref)[:37],
                               rtol=1e-4, atol=5e-5)

    # tanh-GELU fast path (transcendental on EUP); deviates slightly from the
    # exact-erf PyTorch GELU -> loose tolerance.
    out_fast = jax.block_until_ready(
        optuna_force_predictor_forward(x, params, gelu_approx=True))
    np.testing.assert_allclose(np.asarray(out_fast), np.asarray(ref),
                               rtol=0.0, atol=0.05)

    # bf16 matmul-operand path (only useful if MXU time is actually exposed);
    # very loose tolerance since every layer's activations are cast to bf16.
    out_bf16 = jax.block_until_ready(
        optuna_force_predictor_forward(x, params, matmul_dtype=jnp.bfloat16))
    np.testing.assert_allclose(np.asarray(out_bf16), np.asarray(ref),
                               rtol=0.0, atol=0.15)

    print("KERNEL_OK")
</pallas_src>

<mosaic_0001>
module attributes {stable_mosaic.version = 11 : i64} {
  func.func @_forward_kernel(%arg0: i32, %arg1: memref<128x3xf32, #tpu.memory_space<vmem>>, %arg2: memref<3x128xf32, #tpu.memory_space<vmem>>, %arg3: memref<1x128xf32, #tpu.memory_space<vmem>>, %arg4: memref<1x128xf32, #tpu.memory_space<vmem>>, %arg5: memref<1x128xf32, #tpu.memory_space<vmem>>, %arg6: memref<128x256xf32, #tpu.memory_space<vmem>>, %arg7: memref<1x256xf32, #tpu.memory_space<vmem>>, %arg8: memref<1x256xf32, #tpu.memory_space<vmem>>, %arg9: memref<1x256xf32, #tpu.memory_space<vmem>>, %arg10: memref<256x128xf32, #tpu.memory_space<vmem>>, %arg11: memref<1x128xf32, #tpu.memory_space<vmem>>, %arg12: memref<1x128xf32, #tpu.memory_space<vmem>>, %arg13: memref<1x128xf32, #tpu.memory_space<vmem>>, %arg14: memref<128x128xf32, #tpu.memory_space<vmem>>, %arg15: memref<1x128xf32, #tpu.memory_space<vmem>>, %arg16: memref<1x128xf32, #tpu.memory_space<vmem>>, %arg17: memref<1x128xf32, #tpu.memory_space<vmem>>, %arg18: memref<128x1xf32, #tpu.memory_space<vmem>>, %arg19: memref<1x1xf32, #tpu.memory_space<vmem>>, %arg20: memref<1x1x128xf32, #tpu.memory_space<vmem>>) attributes {dimension_semantics = [#tpu.dimension_semantics<parallel>], iteration_bounds = array<i64: 1>, scalar_prefetch = 0 : i64, scratch_operands = 0 : i64, tpu.core_type = #tpu.core_type<tc>, window_params = [{transform_indices = @transform_0, window_bounds = array<i64: 128, 3>}, {pipeline_mode = #tpu.pipeline_mode<synchronous>, transform_indices = @transform_1, window_bounds = array<i64: 3, 128>}, {pipeline_mode = #tpu.pipeline_mode<synchronous>, transform_indices = @transform_2, window_bounds = array<i64: 1, 128>}, {pipeline_mode = #tpu.pipeline_mode<synchronous>, transform_indices = @transform_3, window_bounds = array<i64: 1, 128>}, {pipeline_mode = #tpu.pipeline_mode<synchronous>, transform_indices = @transform_4, window_bounds = array<i64: 1, 128>}, {pipeline_mode = #tpu.pipeline_mode<synchronous>, transform_indices = @transform_5, window_bounds = array<i64: 128, 256>}, {pipeline_mode = #tpu.pipeline_mode<synchronous>, transform_indices = @transform_6, window_bounds = array<i64: 1, 256>}, {pipeline_mode = #tpu.pipeline_mode<synchronous>, transform_indices = @transform_7, window_bounds = array<i64: 1, 256>}, {pipeline_mode = #tpu.pipeline_mode<synchronous>, transform_indices = @transform_8, window_bounds = array<i64: 1, 256>}, {pipeline_mode = #tpu.pipeline_mode<synchronous>, transform_indices = @transform_9, window_bounds = array<i64: 256, 128>}, {pipeline_mode = #tpu.pipeline_mode<synchronous>, transform_indices = @transform_10, window_bounds = array<i64: 1, 128>}, {pipeline_mode = #tpu.pipeline_mode<synchronous>, transform_indices = @transform_11, window_bounds = array<i64: 1, 128>}, {pipeline_mode = #tpu.pipeline_mode<synchronous>, transform_indices = @transform_12, window_bounds = array<i64: 1, 128>}, {pipeline_mode = #tpu.pipeline_mode<synchronous>, transform_indices = @transform_13, window_bounds = array<i64: 128, 128>}, {pipeline_mode = #tpu.pipeline_mode<synchronous>, transform_indices = @transform_14, window_bounds = array<i64: 1, 128>}, {pipeline_mode = #tpu.pipeline_mode<synchronous>, transform_indices = @transform_15, window_bounds = array<i64: 1, 128>}, {pipeline_mode = #tpu.pipeline_mode<synchronous>, transform_indices = @transform_16, window_bounds = array<i64: 1, 128>}, {pipeline_mode = #tpu.pipeline_mode<synchronous>, transform_indices = @transform_17, window_bounds = array<i64: 128, 1>}, {pipeline_mode = #tpu.pipeline_mode<synchronous>, transform_indices = @transform_18, window_bounds = array<i64: 1, 1>}, {transform_indices = @transform_19, window_bounds = array<i64: 1, 1, 128>}]} {
    %c0 = arith.constant 0 : index
    %c0_0 = arith.constant 0 : index
    %0 = vector.load %arg1[%c0, %c0_0] : memref<128x3xf32, #tpu.memory_space<vmem>>, vector<128x3xf32>
    %c0_1 = arith.constant 0 : index
    %c0_2 = arith.constant 0 : index
    %1 = vector.load %arg2[%c0_1, %c0_2] : memref<3x128xf32, #tpu.memory_space<vmem>>, vector<3x128xf32>
    %cst = arith.constant dense<0.000000e+00> : vector<128x128xf32>
    %2 = tpu.matmul %0, %1, %cst {dimension_numbers = #tpu.dot_dimension_numbers<[1], [0], [0], [1], [0, 0, 1, 1], [], []>} : vector<128x3xf32>, vector<3x128xf32>, vector<128x128xf32> -> vector<128x128xf32>
    %c0_3 = arith.constant 0 : index
    %c0_4 = arith.constant 0 : index
    %3 = vector.load %arg3[%c0_3, %c0_4] : memref<1x128xf32, #tpu.memory_space<vmem>>, vector<1x128xf32>
    %4 = vector.broadcast %3 : vector<1x128xf32> to vector<128x128xf32>
    %5 = arith.addf %2, %4 : vector<128x128xf32>
    %cst_5 = arith.constant 5.000000e-01 : f32
    %6 = vector.broadcast %cst_5 : f32 to vector<128x128xf32>
    %7 = arith.mulf %6, %5 : vector<128x128xf32>
    %cst_6 = arith.constant 0.707106769 : f32
    %8 = vector.broadcast %cst_6 : f32 to vector<128x128xf32>
    %9 = arith.mulf %5, %8 : vector<128x128xf32>
    %10 = math.erf %9 : vector<128x128xf32>
    %cst_7 = arith.constant 1.000000e+00 : f32
    %11 = vector.broadcast %cst_7 : f32 to vector<128x128xf32>
    %12 = arith.addf %11, %10 : vector<128x128xf32>
    %13 = arith.mulf %7, %12 : vector<128x128xf32>
    %c0_8 = arith.constant 0 : index
    %c0_9 = arith.constant 0 : index
    %14 = vector.load %arg4[%c0_8, %c0_9] : memref<1x128xf32, #tpu.memory_space<vmem>>, vector<1x128xf32>
    %c0_10 = arith.constant 0 : index
    %c0_11 = arith.constant 0 : index
    %15 = vector.load %arg5[%c0_10, %c0_11] : memref<1x128xf32, #tpu.memory_space<vmem>>, vector<1x128xf32>
    %cst_12 = arith.constant dense<0.000000e+00> : vector<128xf32>
    %16 = vector.multi_reduction <add>, %13, %cst_12 [1] : vector<128x128xf32> to vector<128xf32>
    %17 = vector.shape_cast %16 : vector<128xf32> to vector<128x1xf32>
    %cst_13 = arith.constant 1.280000e+02 : f32
    %18 = vector.broadcast %cst_13 : f32 to vector<128x1xf32>
    %19 = arith.divf %17, %18 : vector<128x1xf32>
    %20 = arith.mulf %13, %13 : vector<128x128xf32>
    %cst_14 = arith.constant dense<0.000000e+00> : vector<128xf32>
    %21 = vector.multi_reduction <add>, %20, %cst_14 [1] : vector<128x128xf32> to vector<128xf32>
    %22 = vector.shape_cast %21 : vector<128xf32> to vector<128x1xf32>
    %cst_15 = arith.constant 1.280000e+02 : f32
    %23 = vector.broadcast %cst_15 : f32 to vector<128x1xf32>
    %24 = arith.divf %22, %23 : vector<128x1xf32>
    %25 = arith.mulf %19, %19 : vector<128x1xf32>
    %26 = arith.subf %24, %25 : vector<128x1xf32>
    %cst_16 = arith.constant 0.000000e+00 : f32
    %27 = vector.broadcast %cst_16 : f32 to vector<128x1xf32>
    %28 = arith.maximumf %26, %27 : vector<128x1xf32>
    %cst_17 = arith.constant 9.99999974E-6 : f32
    %29 = vector.broadcast %cst_17 : f32 to vector<128x1xf32>
    %30 = arith.addf %28, %29 : vector<128x1xf32>
    %31 = math.rsqrt %30 : vector<128x1xf32>
    %32 = vector.broadcast %19 : vector<128x1xf32> to vector<128x128xf32>
    %33 = arith.subf %13, %32 : vector<128x128xf32>
    %34 = vector.broadcast %31 : vector<128x1xf32> to vector<128x128xf32>
    %35 = arith.mulf %33, %34 : vector<128x128xf32>
    %36 = vector.broadcast %14 : vector<1x128xf32> to vector<128x128xf32>
    %37 = arith.mulf %35, %36 : vector<128x128xf32>
    %38 = vector.broadcast %15 : vector<1x128xf32> to vector<128x128xf32>
    %39 = arith.addf %37, %38 : vector<128x128xf32>
    %c0_18 = arith.constant 0 : index
    %c0_19 = arith.constant 0 : index
    %40 = vector.load %arg6[%c0_18, %c0_19] : memref<128x256xf32, #tpu.memory_space<vmem>>, vector<128x256xf32>
    %cst_20 = arith.constant dense<0.000000e+00> : vector<128x256xf32>
    %41 = tpu.matmul %39, %40, %cst_20 {dimension_numbers = #tpu.dot_dimension_numbers<[1], [0], [0], [1], [0, 0, 1, 1], [], []>} : vector<128x128xf32>, vector<128x256xf32>, vector<128x256xf32> -> vector<128x256xf32>
    %c0_21 = arith.constant 0 : index
    %c0_22 = arith.constant 0 : index
    %42 = vector.load %arg7[%c0_21, %c0_22] : memref<1x256xf32, #tpu.memory_space<vmem>>, vector<1x256xf32>
    %43 = vector.broadcast %42 : vector<1x256xf32> to vector<128x256xf32>
    %44 = arith.addf %41, %43 : vector<128x256xf32>
    %cst_23 = arith.constant 5.000000e-01 : f32
    %45 = vector.broadcast %cst_23 : f32 to vector<128x256xf32>
    %46 = arith.mulf %45, %44 : vector<128x256xf32>
    %cst_24 = arith.constant 0.707106769 : f32
    %47 = vector.broadcast %cst_24 : f32 to vector<128x256xf32>
    %48 = arith.mulf %44, %47 : vector<128x256xf32>
    %49 = math.erf %48 : vector<128x256xf32>
    %cst_25 = arith.constant 1.000000e+00 : f32
    %50 = vector.broadcast %cst_25 : f32 to vector<128x256xf32>
    %51 = arith.addf %50, %49 : vector<128x256xf32>
    %52 = arith.mulf %46, %51 : vector<128x256xf32>
    %c0_26 = arith.constant 0 : index
    %c0_27 = arith.constant 0 : index
    %53 = vector.load %arg8[%c0_26, %c0_27] : memref<1x256xf32, #tpu.memory_space<vmem>>, vector<1x256xf32>
    %c0_28 = arith.constant 0 : index
    %c0_29 = arith.constant 0 : index
    %54 = vector.load %arg9[%c0_28, %c0_29] : memref<1x256xf32, #tpu.memory_space<vmem>>, vector<1x256xf32>
    %cst_30 = arith.constant dense<0.000000e+00> : vector<128xf32>
    %55 = vector.multi_reduction <add>, %52, %cst_30 [1] : vector<128x256xf32> to vector<128xf32>
    %56 = vector.shape_cast %55 : vector<128xf32> to vector<128x1xf32>
    %cst_31 = arith.constant 2.560000e+02 : f32
    %57 = vector.broadcast %cst_31 : f32 to vector<128x1xf32>
    %58 = arith.divf %56, %57 : vector<128x1xf32>
    %59 = arith.mulf %52, %52 : vector<128x256xf32>
    %cst_32 = arith.constant dense<0.000000e+00> : vector<128xf32>
    %60 = vector.multi_reduction <add>, %59, %cst_32 [1] : vector<128x256xf32> to vector<128xf32>
    %61 = vector.shape_cast %60 : vector<128xf32> to vector<128x1xf32>
    %cst_33 = arith.constant 2.560000e+02 : f32
    %62 = vector.broadcast %cst_33 : f32 to vector<128x1xf32>
    %63 = arith.divf %61, %62 : vector<128x1xf32>
    %64 = arith.mulf %58, %58 : vector<128x1xf32>
    %65 = arith.subf %63, %64 : vector<128x1xf32>
    %cst_34 = arith.constant 0.000000e+00 : f32
    %66 = vector.broadcast %cst_34 : f32 to vector<128x1xf32>
    %67 = arith.maximumf %65, %66 : vector<128x1xf32>
    %cst_35 = arith.constant 9.99999974E-6 : f32
    %68 = vector.broadcast %cst_35 : f32 to vector<128x1xf32>
    %69 = arith.addf %67, %68 : vector<128x1xf32>
    %70 = math.rsqrt %69 : vector<128x1xf32>
    %71 = vector.broadcast %58 : vector<128x1xf32> to vector<128x256xf32>
    %72 = arith.subf %52, %71 : vector<128x256xf32>
    %73 = vector.broadcast %70 : vector<128x1xf32> to vector<128x256xf32>
    %74 = arith.mulf %72, %73 : vector<128x256xf32>
    %75 = vector.broadcast %53 : vector<1x256xf32> to vector<128x256xf32>
    %76 = arith.mulf %74, %75 : vector<128x256xf32>
    %77 = vector.broadcast %54 : vector<1x256xf32> to vector<128x256xf32>
    %78 = arith.addf %76, %77 : vector<128x256xf32>
    %c0_36 = arith.constant 0 : index
    %c0_37 = arith.constant 0 : index
    %79 = vector.load %arg10[%c0_36, %c0_37] : memref<256x128xf32, #tpu.memory_space<vmem>>, vector<256x128xf32>
    %cst_38 = arith.constant dense<0.000000e+00> : vector<128x128xf32>
    %80 = tpu.matmul %78, %79, %cst_38 {dimension_numbers = #tpu.dot_dimension_numbers<[1], [0], [0], [1], [0, 0, 1, 1], [], []>} : vector<128x256xf32>, vector<256x128xf32>, vector<128x128xf32> -> vector<128x128xf32>
    %c0_39 = arith.constant 0 : index
    %c0_40 = arith.constant 0 : index
    %81 = vector.load %arg11[%c0_39, %c0_40] : memref<1x128xf32, #tpu.memory_space<vmem>>, vector<1x128xf32>
    %82 = vector.broadcast %81 : vector<1x128xf32> to vector<128x128xf32>
    %83 = arith.addf %80, %82 : vector<128x128xf32>
    %cst_41 = arith.constant 5.000000e-01 : f32
    %84 = vector.broadcast %cst_41 : f32 to vector<128x128xf32>
    %85 = arith.mulf %84, %83 : vector<128x128xf32>
    %cst_42 = arith.constant 0.707106769 : f32
    %86 = vector.broadcast %cst_42 : f32 to vector<128x128xf32>
    %87 = arith.mulf %83, %86 : vector<128x128xf32>
    %88 = math.erf %87 : vector<128x128xf32>
    %cst_43 = arith.constant 1.000000e+00 : f32
    %89 = vector.broadcast %cst_43 : f32 to vector<128x128xf32>
    %90 = arith.addf %89, %88 : vector<128x128xf32>
    %91 = arith.mulf %85, %90 : vector<128x128xf32>
    %c0_44 = arith.constant 0 : index
    %c0_45 = arith.constant 0 : index
    %92 = vector.load %arg12[%c0_44, %c0_45] : memref<1x128xf32, #tpu.memory_space<vmem>>, vector<1x128xf32>
    %c0_46 = arith.constant 0 : index
    %c0_47 = arith.constant 0 : index
    %93 = vector.load %arg13[%c0_46, %c0_47] : memref<1x128xf32, #tpu.memory_space<vmem>>, vector<1x128xf32>
    %cst_48 = arith.constant dense<0.000000e+00> : vector<128xf32>
    %94 = vector.multi_reduction <add>, %91, %cst_48 [1] : vector<128x128xf32> to vector<128xf32>
    %95 = vector.shape_cast %94 : vector<128xf32> to vector<128x1xf32>
    %cst_49 = arith.constant 1.280000e+02 : f32
    %96 = vector.broadcast %cst_49 : f32 to vector<128x1xf32>
    %97 = arith.divf %95, %96 : vector<128x1xf32>
    %98 = arith.mulf %91, %91 : vector<128x128xf32>
    %cst_50 = arith.constant dense<0.000000e+00> : vector<128xf32>
    %99 = vector.multi_reduction <add>, %98, %cst_50 [1] : vector<128x128xf32> to vector<128xf32>
    %100 = vector.shape_cast %99 : vector<128xf32> to vector<128x1xf32>
    %cst_51 = arith.constant 1.280000e+02 : f32
    %101 = vector.broadcast %cst_51 : f32 to vector<128x1xf32>
    %102 = arith.divf %100, %101 : vector<128x1xf32>
    %103 = arith.mulf %97, %97 : vector<128x1xf32>
    %104 = arith.subf %102, %103 : vector<128x1xf32>
    %cst_52 = arith.constant 0.000000e+00 : f32
    %105 = vector.broadcast %cst_52 : f32 to vector<128x1xf32>
    %106 = arith.maximumf %104, %105 : vector<128x1xf32>
    %cst_53 = arith.constant 9.99999974E-6 : f32
    %107 = vector.broadcast %cst_53 : f32 to vector<128x1xf32>
    %108 = arith.addf %106, %107 : vector<128x1xf32>
    %109 = math.rsqrt %108 : vector<128x1xf32>
    %110 = vector.broadcast %97 : vector<128x1xf32> to vector<128x128xf32>
    %111 = arith.subf %91, %110 : vector<128x128xf32>
    %112 = vector.broadcast %109 : vector<128x1xf32> to vector<128x128xf32>
    %113 = arith.mulf %111, %112 : vector<128x128xf32>
    %114 = vector.broadcast %92 : vector<1x128xf32> to vector<128x128xf32>
    %115 = arith.mulf %113, %114 : vector<128x128xf32>
    %116 = vector.broadcast %93 : vector<1x128xf32> to vector<128x128xf32>
    %117 = arith.addf %115, %116 : vector<128x128xf32>
    %c0_54 = arith.constant 0 : index
    %c0_55 = arith.constant 0 : index
    %118 = vector.load %arg14[%c0_54, %c0_55] : memref<128x128xf32, #tpu.memory_space<vmem>>, vector<128x128xf32>
    %cst_56 = arith.constant dense<0.000000e+00> : vector<128x128xf32>
    %119 = tpu.matmul %117, %118, %cst_56 {dimension_numbers = #tpu.dot_dimension_numbers<[1], [0], [0], [1], [0, 0, 1, 1], [], []>} : vector<128x128xf32>, vector<128x128xf32>, vector<128x128xf32> -> vector<128x128xf32>
    %c0_57 = arith.constant 0 : index
    %c0_58 = arith.constant 0 : index
    %120 = vector.load %arg15[%c0_57, %c0_58] : memref<1x128xf32, #tpu.memory_space<vmem>>, vector<1x128xf32>
    %121 = vector.broadcast %120 : vector<1x128xf32> to vector<128x128xf32>
    %122 = arith.addf %119, %121 : vector<128x128xf32>
    %cst_59 = arith.constant 5.000000e-01 : f32
    %123 = vector.broadcast %cst_59 : f32 to vector<128x128xf32>
    %124 = arith.mulf %123, %122 : vector<128x128xf32>
    %cst_60 = arith.constant 0.707106769 : f32
    %125 = vector.broadcast %cst_60 : f32 to vector<128x128xf32>
    %126 = arith.mulf %122, %125 : vector<128x128xf32>
    %127 = math.erf %126 : vector<128x128xf32>
    %cst_61 = arith.constant 1.000000e+00 : f32
    %128 = vector.broadcast %cst_61 : f32 to vector<128x128xf32>
    %129 = arith.addf %128, %127 : vector<128x128xf32>
    %130 = arith.mulf %124, %129 : vector<128x128xf32>
    %c0_62 = arith.constant 0 : index
    %c0_63 = arith.constant 0 : index
    %131 = vector.load %arg16[%c0_62, %c0_63] : memref<1x128xf32, #tpu.memory_space<vmem>>, vector<1x128xf32>
    %c0_64 = arith.constant 0 : index
    %c0_65 = arith.constant 0 : index
    %132 = vector.load %arg17[%c0_64, %c0_65] : memref<1x128xf32, #tpu.memory_space<vmem>>, vector<1x128xf32>
    %cst_66 = arith.constant dense<0.000000e+00> : vector<128xf32>
    %133 = vector.multi_reduction <add>, %130, %cst_66 [1] : vector<128x128xf32> to vector<128xf32>
    %134 = vector.shape_cast %133 : vector<128xf32> to vector<128x1xf32>
    %cst_67 = arith.constant 1.280000e+02 : f32
    %135 = vector.broadcast %cst_67 : f32 to vector<128x1xf32>
    %136 = arith.divf %134, %135 : vector<128x1xf32>
    %137 = arith.mulf %130, %130 : vector<128x128xf32>
    %cst_68 = arith.constant dense<0.000000e+00> : vector<128xf32>
    %138 = vector.multi_reduction <add>, %137, %cst_68 [1] : vector<128x128xf32> to vector<128xf32>
    %139 = vector.shape_cast %138 : vector<128xf32> to vector<128x1xf32>
    %cst_69 = arith.constant 1.280000e+02 : f32
    %140 = vector.broadcast %cst_69 : f32 to vector<128x1xf32>
    %141 = arith.divf %139, %140 : vector<128x1xf32>
    %142 = arith.mulf %136, %136 : vector<128x1xf32>
    %143 = arith.subf %141, %142 : vector<128x1xf32>
    %cst_70 = arith.constant 0.000000e+00 : f32
    %144 = vector.broadcast %cst_70 : f32 to vector<128x1xf32>
    %145 = arith.maximumf %143, %144 : vector<128x1xf32>
    %cst_71 = arith.constant 9.99999974E-6 : f32
    %146 = vector.broadcast %cst_71 : f32 to vector<128x1xf32>
    %147 = arith.addf %145, %146 : vector<128x1xf32>
    %148 = math.rsqrt %147 : vector<128x1xf32>
    %149 = vector.broadcast %136 : vector<128x1xf32> to vector<128x128xf32>
    %150 = arith.subf %130, %149 : vector<128x128xf32>
    %151 = vector.broadcast %148 : vector<128x1xf32> to vector<128x128xf32>
    %152 = arith.mulf %150, %151 : vector<128x128xf32>
    %153 = vector.broadcast %131 : vector<1x128xf32> to vector<128x128xf32>
    %154 = arith.mulf %152, %153 : vector<128x128xf32>
    %155 = vector.broadcast %132 : vector<1x128xf32> to vector<128x128xf32>
    %156 = arith.addf %154, %155 : vector<128x128xf32>
    %157 = tpu.transpose %156, [1, 0] : vector<128x128xf32> -> vector<128x128xf32>
    %c0_72 = arith.constant 0 : index
    %c0_73 = arith.constant 0 : index
    %158 = vector.load %arg18[%c0_72, %c0_73] : memref<128x1xf32, #tpu.memory_space<vmem>>, vector<128x1xf32>
    %159 = vector.broadcast %158 : vector<128x1xf32> to vector<128x128xf32>
    %160 = arith.mulf %157, %159 : vector<128x128xf32>
    %cst_74 = arith.constant dense<0.000000e+00> : vector<128xf32>
    %161 = vector.multi_reduction <add>, %160, %cst_74 [0] : vector<128x128xf32> to vector<128xf32>
    %162 = vector.shape_cast %161 : vector<128xf32> to vector<1x128xf32>
    %c0_75 = arith.constant 0 : index
    %c0_76 = arith.constant 0 : index
    %163 = vector.load %arg19[%c0_75, %c0_76] : memref<1x1xf32, #tpu.memory_space<vmem>>, vector<1x1xf32>
    %164 = vector.broadcast %163 : vector<1x1xf32> to vector<1x128xf32>
    %165 = arith.addf %162, %164 : vector<1x128xf32>
    %166 = math.tanh %165 : vector<1x128xf32>
    %c0_77 = arith.constant 0 : index
    %c0_78 = arith.constant 0 : index
    %c0_79 = arith.constant 0 : index
    %167 = vector.load %arg20[%c0_77, %c0_78, %c0_79] : memref<1x1x128xf32, #tpu.memory_space<vmem>>, vector<1x1x128xf32>
    %168 = vector.shape_cast %167 : vector<1x1x128xf32> to vector<1x128xf32>
    %169 = vector.shape_cast %166 : vector<1x128xf32> to vector<1x1x128xf32>
    tpu.vector_store %arg20[%c0_77, %c0_78, %c0_79], %169 {strides = array<i32>} : memref<1x1x128xf32, #tpu.memory_space<vmem>>, vector<1x1x128xf32>,
    return
  }
  func.func @transform_0(%arg0: i32) -> (i32, i32) {
    %c0_i32 = arith.constant 0 : i32
    %c0_i32_0 = arith.constant 0 : i32
    return %arg0, %c0_i32 : i32, i32
  }
  func.func @transform_1(%arg0: i32) -> (i32, i32) {
    %c0_i32 = arith.constant 0 : i32
    %c0_i32_0 = arith.constant 0 : i32
    %c0_i32_1 = arith.constant 0 : i32
    return %c0_i32, %c0_i32_0 : i32, i32
  }
  func.func @transform_2(%arg0: i32) -> (i32, i32) {
    %c0_i32 = arith.constant 0 : i32
    %c0_i32_0 = arith.constant 0 : i32
    %c0_i32_1 = arith.constant 0 : i32
    return %c0_i32, %c0_i32_0 : i32, i32
  }
  func.func @transform_3(%arg0: i32) -> (i32, i32) {
    %c0_i32 = arith.constant 0 : i32
    %c0_i32_0 = arith.constant 0 : i32
    %c0_i32_1 = arith.constant 0 : i32
    return %c0_i32, %c0_i32_0 : i32, i32
  }
  func.func @transform_4(%arg0: i32) -> (i32, i32) {
    %c0_i32 = arith.constant 0 : i32
    %c0_i32_0 = arith.constant 0 : i32
    %c0_i32_1 = arith.constant 0 : i32
    return %c0_i32, %c0_i32_0 : i32, i32
  }
  func.func @transform_5(%arg0: i32) -> (i32, i32) {
    %c0_i32 = arith.constant 0 : i32
    %c0_i32_0 = arith.constant 0 : i32
    %c0_i32_1 = arith.constant 0 : i32
    return %c0_i32, %c0_i32_0 : i32, i32
  }
  func.func @transform_6(%arg0: i32) -> (i32, i32) {
    %c0_i32 = arith.constant 0 : i32
    %c0_i32_0 = arith.constant 0 : i32
    %c0_i32_1 = arith.constant 0 : i32
    return %c0_i32, %c0_i32_0 : i32, i32
  }
  func.func @transform_7(%arg0: i32) -> (i32, i32) {
    %c0_i32 = arith.constant 0 : i32
    %c0_i32_0 = arith.constant 0 : i32
    %c0_i32_1 = arith.constant 0 : i32
    return %c0_i32, %c0_i32_0 : i32, i32
  }
  func.func @transform_8(%arg0: i32) -> (i32, i32) {
    %c0_i32 = arith.constant 0 : i32
    %c0_i32_0 = arith.constant 0 : i32
    %c0_i32_1 = arith.constant 0 : i32
    return %c0_i32, %c0_i32_0 : i32, i32
  }
  func.func @transform_9(%arg0: i32) -> (i32, i32) {
    %c0_i32 = arith.constant 0 : i32
    %c0_i32_0 = arith.constant 0 : i32
    %c0_i32_1 = arith.constant 0 : i32
    return %c0_i32, %c0_i32_0 : i32, i32
  }
  func.func @transform_10(%arg0: i32) -> (i32, i32) {
    %c0_i32 = arith.constant 0 : i32
    %c0_i32_0 = arith.constant 0 : i32
    %c0_i32_1 = arith.constant 0 : i32
    return %c0_i32, %c0_i32_0 : i32, i32
  }
  func.func @transform_11(%arg0: i32) -> (i32, i32) {
    %c0_i32 = arith.constant 0 : i32
    %c0_i32_0 = arith.constant 0 : i32
    %c0_i32_1 = arith.constant 0 : i32
    return %c0_i32, %c0_i32_0 : i32, i32
  }
  func.func @transform_12(%arg0: i32) -> (i32, i32) {
    %c0_i32 = arith.constant 0 : i32
    %c0_i32_0 = arith.constant 0 : i32
    %c0_i32_1 = arith.constant 0 : i32
    return %c0_i32, %c0_i32_0 : i32, i32
  }
  func.func @transform_13(%arg0: i32) -> (i32, i32) {
    %c0_i32 = arith.constant 0 : i32
    %c0_i32_0 = arith.constant 0 : i32
    %c0_i32_1 = arith.constant 0 : i32
    return %c0_i32, %c0_i32_0 : i32, i32
  }
  func.func @transform_14(%arg0: i32) -> (i32, i32) {
    %c0_i32 = arith.constant 0 : i32
    %c0_i32_0 = arith.constant 0 : i32
    %c0_i32_1 = arith.constant 0 : i32
    return %c0_i32, %c0_i32_0 : i32, i32
  }
  func.func @transform_15(%arg0: i32) -> (i32, i32) {
    %c0_i32 = arith.constant 0 : i32
    %c0_i32_0 = arith.constant 0 : i32
    %c0_i32_1 = arith.constant 0 : i32
    return %c0_i32, %c0_i32_0 : i32, i32
  }
  func.func @transform_16(%arg0: i32) -> (i32, i32) {
    %c0_i32 = arith.constant 0 : i32
    %c0_i32_0 = arith.constant 0 : i32
    %c0_i32_1 = arith.constant 0 : i32
    return %c0_i32, %c0_i32_0 : i32, i32
  }
  func.func @transform_17(%arg0: i32) -> (i32, i32) {
    %c0_i32 = arith.constant 0 : i32
    %c0_i32_0 = arith.constant 0 : i32
    %c0_i32_1 = arith.constant 0 : i32
    return %c0_i32, %c0_i32_0 : i32, i32
  }
  func.func @transform_18(%arg0: i32) -> (i32, i32) {
    %c0_i32 = arith.constant 0 : i32
    %c0_i32_0 = arith.constant 0 : i32
    %c0_i32_1 = arith.constant 0 : i32
    return %c0_i32, %c0_i32_0 : i32, i32
  }
  func.func @transform_19(%arg0: i32) -> (i32, i32, i32) {
    %c0_i32 = arith.constant 0 : i32
    %c0_i32_0 = arith.constant 0 : i32
    %c0_i32_1 = arith.constant 0 : i32
    return %arg0, %c0_i32, %c0_i32_0 : i32, i32, i32
  }
}

</mosaic_0001>

<llo_original>
// kernel: tpu_custom_call.1
$region0: #{tpu_custom_call.1}
  #allocation0 [shape = 'u32[]', space=smem, size = 0x4, offset = 0x4, fixed_abs, tag = 'smem constant byte address 0x4 - core index']
  #allocation1 [shape = 'u32[72,128]{1,0:T(1,128)}', space=vmem, size = 0x9000, scoped, tag = 'internal scratch']
  #allocation2 [shape = 'f32[1,1]{1,0:T(1,128)S(1)}', space=vmem, size = 0x200, scoped, tag = 'scoped memory for tpu_custom_call.1']
  %s0 = inlined_call_operand.vmem [shape: f32[128,3], index: 0, kind: input, shape index: {}]
  %s1 = inlined_call_operand.vmem [shape: f32[3,128], index: 1, kind: input, shape index: {}]
  %s2 = inlined_call_operand.vmem [shape: f32[1,128], index: 2, kind: input, shape index: {}]
  %s3 = inlined_call_operand.hbm [shape: f32[1,128], index: 3, kind: input, shape index: {}]
  %s4 = inlined_call_operand.hbm [shape: f32[1,128], index: 4, kind: input, shape index: {}]
  %s5 = inlined_call_operand.vmem [shape: f32[128,256], index: 5, kind: input, shape index: {}]
  %s6 = inlined_call_operand.vmem [shape: f32[1,256], index: 6, kind: input, shape index: {}]
  %s7 = inlined_call_operand.vmem [shape: f32[1,256], index: 7, kind: input, shape index: {}]
  %s8 = inlined_call_operand.vmem [shape: f32[1,256], index: 8, kind: input, shape index: {}]
  %s9 = inlined_call_operand.hbm [shape: f32[256,128], index: 9, kind: input, shape index: {}]
  %s10 = inlined_call_operand.vmem [shape: f32[1,128], index: 10, kind: input, shape index: {}]
  %s11 = inlined_call_operand.vmem [shape: f32[1,128], index: 11, kind: input, shape index: {}]
  %s12 = inlined_call_operand.vmem [shape: f32[1,128], index: 12, kind: input, shape index: {}]
  %s13 = inlined_call_operand.hbm [shape: f32[128,128], index: 13, kind: input, shape index: {}]
  %s14 = inlined_call_operand.vmem [shape: f32[1,128], index: 14, kind: input, shape index: {}]
  %s15 = inlined_call_operand.vmem [shape: f32[1,128], index: 15, kind: input, shape index: {}]
  %s16 = inlined_call_operand.vmem [shape: f32[1,128], index: 16, kind: input, shape index: {}]
  %s17 = inlined_call_operand.vmem [shape: f32[128,1], index: 17, kind: input, shape index: {}]
  %s18 = inlined_call_operand.<no memory space> [shape: f32[1,1], index: 18, kind: input, shape index: {}]
  %s19 = inlined_call_operand.hbm [shape: f32[1,1,128], index: 19, kind: output, shape index: {}]
  %s20 = sld [smem:[#allocation0]]
  $region102: #{tpu_custom_call.1} parent=0
    _
  %s22 = ssub.s32 1, %s20
  %s23 = scalar_select 0, %s22, %s20
  %v24 = vstv %s18
  %25 = vst [vmem:[#allocation2] sm:$0x1] %v24
  $region1: #{tpu_custom_call.1} parent=0
    #allocation3 [shape = 'u8[512]{0}', space=vmem, size = 0x400, scoped, tag = 'input window, operand 3, single buffered']
    #allocation4 [shape = 's32[1]{0}', space=sflag, size = 0x4, scoped, tag = 'scoped memory for tpu_custom_call.1']
    #allocation5 [shape = 's32[1]{0}', space=sflag, size = 0x4, scoped, tag = 'scoped memory for tpu_custom_call.1']
    #allocation6 [shape = 'u8[512]{0}', space=vmem, size = 0x400, scoped, tag = 'input window, operand 4, single buffered']
    #allocation7 [shape = 's32[1]{0}', space=sflag, size = 0x4, scoped, tag = 'scoped memory for tpu_custom_call.1']
    #allocation8 [shape = 'u8[131072]{0}', space=vmem, size = 0x20000, scoped, tag = 'input window, operand 9, single buffered']
    #allocation9 [shape = 'u8[65536]{0}', space=vmem, size = 0x10000, scoped, tag = 'input window, operand 13, single buffered']
    #allocation10 [shape = 's32[1]{0}', space=sflag, size = 0x4, scoped, tag = 'scoped memory for tpu_custom_call.1']
    #allocation11 [shape = 'u8[512]{0}', space=vmem, size = 0x400, scoped, tag = 'output window, operand 0, single buffered']
    %26 = vsyncpa [#allocation4], 0
    %27 = vsyncpa [#allocation7], 0
    %28 = vsyncpa [#allocation10], 0
    %29 = vsyncpa [#allocation5], 0
    // Predicated region
    $region2: #{tpu_custom_call.1} parent=1 // pred_check
      _
    $region3: #{tpu_custom_call.1} parent=1 // pred_check_branch
      %31 = sbr.rel (0) target = $region5
    $region4: #{tpu_custom_call.1} parent=1 // pred_region
      _
    $region5: #{tpu_custom_call.1} parent=1 // pred_fallthru
      _
    // Predicated region
    $region6: #{tpu_custom_call.1} parent=1 // pred_check
      _
    $region7: #{tpu_custom_call.1} parent=1 // pred_check_branch
      %33 = sbr.rel (0) target = $region9
    $region8: #{tpu_custom_call.1} parent=1 // pred_region
      _
    $region9: #{tpu_custom_call.1} parent=1 // pred_fallthru
      _
    // Predicated region
    $region10: #{tpu_custom_call.1} parent=1 // pred_check
      _
    $region11: #{tpu_custom_call.1} parent=1 // pred_check_branch
      %35 = sbr.rel (0) target = $region13
    $region12: #{tpu_custom_call.1} parent=1 // pred_region
      _
    $region13: #{tpu_custom_call.1} parent=1 // pred_fallthru
      _
    // Predicated region
    $region14: #{tpu_custom_call.1} parent=1 // pred_check
      _
    $region15: #{tpu_custom_call.1} parent=1 // pred_check_branch
      %37 = sbr.rel (0) target = $region17
    $region16: #{tpu_custom_call.1} parent=1 // pred_region
      %39 = vsyncadd [#allocation4], 0
      %s41 = sshll.u32 %s3, 4
      %s42 = int_to_ptr.hbm [resolvable:$true] %s41
      %s43 = sshll.u32 [#allocation3], 4
      %s44 = int_to_ptr.vmem [resolvable:$true] %s43
      %46 = dma.hbm_to_vmem [thread:$0]  %s42, 16, %s44, [#allocation4]
    $region17: #{tpu_custom_call.1} parent=1 // pred_fallthru
      _
    // Predicated region
    $region18: #{tpu_custom_call.1} parent=1 // pred_check
      _
    $region19: #{tpu_custom_call.1} parent=1 // pred_check_branch
      %48 = sbr.rel (0) target = $region21
    $region20: #{tpu_custom_call.1} parent=1 // pred_region
      %50 = vsyncadd [#allocation7], 0
      %s52 = sshll.u32 %s4, 4
      %s53 = int_to_ptr.hbm [resolvable:$true] %s52
      %s54 = sshll.u32 [#allocation6], 4
      %s55 = int_to_ptr.vmem [resolvable:$true] %s54
      %57 = dma.hbm_to_vmem [thread:$0]  %s53, 16, %s55, [#allocation7]
    $region21: #{tpu_custom_call.1} parent=1 // pred_fallthru
      _
    // Predicated region
    $region22: #{tpu_custom_call.1} parent=1 // pred_check
      _
    $region23: #{tpu_custom_call.1} parent=1 // pred_check_branch
      %59 = sbr.rel (0) target = $region25
    $region24: #{tpu_custom_call.1} parent=1 // pred_region
      _
    $region25: #{tpu_custom_call.1} parent=1 // pred_fallthru
      _
    // Predicated region
    $region26: #{tpu_custom_call.1} parent=1 // pred_check
      _
    $region27: #{tpu_custom_call.1} parent=1 // pred_check_branch
      %61 = sbr.rel (0) target = $region29
    $region28: #{tpu_custom_call.1} parent=1 // pred_region
      _
    $region29: #{tpu_custom_call.1} parent=1 // pred_fallthru
      _
    // Predicated region
    $region30: #{tpu_custom_call.1} parent=1 // pred_check
      _
    $region31: #{tpu_custom_call.1} parent=1 // pred_check_branch
      %63 = sbr.rel (0) target = $region33
    $region32: #{tpu_custom_call.1} parent=1 // pred_region
      _
    $region33: #{tpu_custom_call.1} parent=1 // pred_fallthru
      _
    // Predicated region
    $region34: #{tpu_custom_call.1} parent=1 // pred_check
      _
    $region35: #{tpu_custom_call.1} parent=1 // pred_check_branch
      %65 = sbr.rel (0) target = $region37
    $region36: #{tpu_custom_call.1} parent=1 // pred_region
      _
    $region37: #{tpu_custom_call.1} parent=1 // pred_fallthru
      _
    // Predicated region
    $region38: #{tpu_custom_call.1} parent=1 // pred_check
      _
    $region39: #{tpu_custom_call.1} parent=1 // pred_check_branch
      %67 = sbr.rel (0) target = $region41
    $region40: #{tpu_custom_call.1} parent=1 // pred_region
      %69 = vsyncadd [#allocation7], 0
      %s70 = sshll.u32 %s9, 4
      %s71 = int_to_ptr.hbm [resolvable:$true] %s70
      %s72 = sshll.u32 [#allocation8], 4
      %s73 = int_to_ptr.vmem [resolvable:$true] %s72
      %78 = dma.hbm_to_vmem [thread:$0]  %s71, 4096, %s73, [#allocation7], 128, 128, 8
    $region41: #{tpu_custom_call.1} parent=1 // pred_fallthru
      _
    // Predicated region
    $region42: #{tpu_custom_call.1} parent=1 // pred_check
      _
    $region43: #{tpu_custom_call.1} parent=1 // pred_check_branch
      %80 = sbr.rel (0) target = $region45
    $region44: #{tpu_custom_call.1} parent=1 // pred_region
      _
    $region45: #{tpu_custom_call.1} parent=1 // pred_fallthru
      _
    // Predicated region
    $region46: #{tpu_custom_call.1} parent=1 // pred_check
      _
    $region47: #{tpu_custom_call.1} parent=1 // pred_check_branch
      %82 = sbr.rel (0) target = $region49
    $region48: #{tpu_custom_call.1} parent=1 // pred_region
      _
    $region49: #{tpu_custom_call.1} parent=1 // pred_fallthru
      _
    // Predicated region
    $region50: #{tpu_custom_call.1} parent=1 // pred_check
      _
    $region51: #{tpu_custom_call.1} parent=1 // pred_check_branch
      %84 = sbr.rel (0) target = $region53
    $region52: #{tpu_custom_call.1} parent=1 // pred_region
      _
    $region53: #{tpu_custom_call.1} parent=1 // pred_fallthru
      _
    // Predicated region
    $region54: #{tpu_custom_call.1} parent=1 // pred_check
      _
    $region55: #{tpu_custom_call.1} parent=1 // pred_check_branch
      %86 = sbr.rel (0) target = $region57
    $region56: #{tpu_custom_call.1} parent=1 // pred_region
      %88 = vsyncadd [#allocation10], 0
      %s89 = sshll.u32 %s13, 4
      %s90 = int_to_ptr.hbm [resolvable:$true] %s89
      %s91 = sshll.u32 [#allocation9], 4
      %s92 = int_to_ptr.vmem [resolvable:$true] %s91
      %97 = dma.hbm_to_vmem [thread:$0]  %s90, 2048, %s92, [#allocation10], 128, 128, 8
    $region57: #{tpu_custom_call.1} parent=1 // pred_fallthru
      _
    // Predicated region
    $region58: #{tpu_custom_call.1} parent=1 // pred_check
      _
    $region59: #{tpu_custom_call.1} parent=1 // pred_check_branch
      %99 = sbr.rel (0) target = $region61
    $region60: #{tpu_custom_call.1} parent=1 // pred_region
      _
    $region61: #{tpu_custom_call.1} parent=1 // pred_fallthru
      _
    // Predicated region
    $region62: #{tpu_custom_call.1} parent=1 // pred_check
      _
    $region63: #{tpu_custom_call.1} parent=1 // pred_check_branch
      %101 = sbr.rel (0) target = $region65
    $region64: #{tpu_custom_call.1} parent=1 // pred_region
      _
    $region65: #{tpu_custom_call.1} parent=1 // pred_fallthru
      _
    // Predicated region
    $region66: #{tpu_custom_call.1} parent=1 // pred_check
      _
    $region67: #{tpu_custom_call.1} parent=1 // pred_check_branch
      %103 = sbr.rel (0) target = $region69
    $region68: #{tpu_custom_call.1} parent=1 // pred_region
      _
    $region69: #{tpu_custom_call.1} parent=1 // pred_fallthru
      _
    // Predicated region
    $region70: #{tpu_custom_call.1} parent=1 // pred_check
      _
    $region71: #{tpu_custom_call.1} parent=1 // pred_check_branch
      %105 = sbr.rel (0) target = $region73
    $region72: #{tpu_custom_call.1} parent=1 // pred_region
      _
    $region73: #{tpu_custom_call.1} parent=1 // pred_fallthru
      _
    // Predicated region
    $region74: #{tpu_custom_call.1} parent=1 // pred_check
      _
    $region75: #{tpu_custom_call.1} parent=1 // pred_check_branch
      %107 = sbr.rel (0) target = $region77
    $region76: #{tpu_custom_call.1} parent=1 // pred_region
      _
    $region77: #{tpu_custom_call.1} parent=1 // pred_fallthru
      _
    // Predicated region
    $region78: #{tpu_custom_call.1} parent=1 // pred_check
      _
    $region79: #{tpu_custom_call.1} parent=1 // pred_check_branch
      %109 = sbr.rel (0) target = $region81
    $region80: #{tpu_custom_call.1} parent=1 // pred_region
      %111 = dma.done [#allocation4], 16
    $region81: #{tpu_custom_call.1} parent=1 // pred_fallthru
      _
    // Predicated region
    $region82: #{tpu_custom_call.1} parent=1 // pred_check
      _
    $region83: #{tpu_custom_call.1} parent=1 // pred_check_branch
      %113 = sbr.rel (0) target = $region85
    $region84: #{tpu_custom_call.1} parent=1 // pred_region
      %115 = dma.done [#allocation7], 16
    $region85: #{tpu_custom_call.1} parent=1 // pred_fallthru
      _
    // Predicated region
    $region86: #{tpu_custom_call.1} parent=1 // pred_check
      _
    $region87: #{tpu_custom_call.1} parent=1 // pred_check_branch
      %117 = sbr.rel (0) target = $region89
    $region88: #{tpu_custom_call.1} parent=1 // pred_region
      %119 = dma.done [#allocation7], 4096
    $region89: #{tpu_custom_call.1} parent=1 // pred_fallthru
      _
    // Predicated region
    $region90: #{tpu_custom_call.1} parent=1 // pred_check
      _
    $region91: #{tpu_custom_call.1} parent=1 // pred_check_branch
      %121 = sbr.rel (0) target = $region93
    $region92: #{tpu_custom_call.1} parent=1 // pred_region
      %123 = dma.done [#allocation10], 2048
    $region93: #{tpu_custom_call.1} parent=1 // pred_fallthru
      _
    %v124 = vld [vmem:[%s0] sm:$0xff]
    %v125 = vld [vmem:[%s0 + $0x8] sm:$0xff]
    %v126 = vld [vmem:[%s0 + $0x10] sm:$0xff]
    %v127 = vld [vmem:[%s0 + $0x18] sm:$0xff]
    %v128 = vld [vmem:[%s0 + $0x20] sm:$0xff]
    %v129 = vld [vmem:[%s0 + $0x28] sm:$0xff]
    %v130 = vld [vmem:[%s0 + $0x30] sm:$0xff]
    %v131 = vld [vmem:[%s0 + $0x38] sm:$0xff]
    %v132 = vld [vmem:[%s0 + $0x40] sm:$0xff]
    %v133 = vld [vmem:[%s0 + $0x48] sm:$0xff]
    %v134 = vld [vmem:[%s0 + $0x50] sm:$0xff]
    %v135 = vld [vmem:[%s0 + $0x58] sm:$0xff]
    %v136 = vld [vmem:[%s0 + $0x60] sm:$0xff]
    %v137 = vld [vmem:[%s0 + $0x68] sm:$0xff]
    %v138 = vld [vmem:[%s0 + $0x70] sm:$0xff]
    %v139 = vld [vmem:[%s0 + $0x78] sm:$0xff]
    %v140 = vld [vmem:[%s1] sm:$0x7]
    %v141 = vld [vmem:[%s2] sm:$0x1]
    %v143 = vperm.slane %v141, 0
    %vm145 = vcmask 23552
    %v147 = vsel %vm145, %v124, 0
    %v150 = vsel %vm145, %v125, 0
    %v153 = vsel %vm145, %v126, 0
    %v156 = vsel %vm145, %v127, 0
    %v159 = vsel %vm145, %v128, 0
    %v162 = vsel %vm145, %v129, 0
    %v165 = vsel %vm145, %v130, 0
    %v168 = vsel %vm145, %v131, 0
    %v171 = vsel %vm145, %v132, 0
    %v174 = vsel %vm145, %v133, 0
    %v177 = vsel %vm145, %v134, 0
    %v180 = vsel %vm145, %v135, 0
    %v183 = vsel %vm145, %v136, 0
    %v186 = vsel %vm145, %v137, 0
    %v189 = vsel %vm145, %v138, 0
    %v192 = vsel %vm145, %v139, 0
    %vm194 = vcmask 1042432
    %v196 = vsel %vm194, %v140, 0
    %198 = vmatpush.msra.mxu0 0.0
    %199 = vmatpush.msra.mxu0 0.0
    %200 = vmatpush.msra.mxu0 0.0
    %201 = vmatpush.msra.mxu0 0.0
    %202 = vmatpush.msra.mxu0 0.0
    %203 = vmatpush.msra.mxu0 0.0
    %204 = vmatpush.msra.mxu0 0.0
    %205 = vmatpush.msra.mxu0 0.0
    %206 = vmatpush.msra.mxu0 0.0
    %207 = vmatpush.msra.mxu0 0.0
    %208 = vmatpush.msra.mxu0 0.0
    %209 = vmatpush.msra.mxu0 0.0
    %210 = vmatpush.msra.mxu0 0.0
    %211 = vmatpush.msra.mxu0 0.0
    %212 = vmatpush.msra.mxu0 0.0
    %213 = vmatpush.msra.mxu0 %v196
    %214 = vmatmul.f32.gmra.mxu0 %v147
    %v215 = vpop.f32.mrf.mxu0
    %v216 = vadd.f32 %v143, %v215
    %217 = vmatmul.f32.gmra.mxu0 %v150
    %v218 = vpop.f32.mrf.mxu0
    %v219 = vadd.f32 %v143, %v218
    %220 = vmatmul.f32.gmra.mxu0 %v153
    %v221 = vpop.f32.mrf.mxu0
    %v222 = vadd.f32 %v143, %v221
    %223 = vmatmul.f32.gmra.mxu0 %v156
    %v224 = vpop.f32.mrf.mxu0
    %v225 = vadd.f32 %v143, %v224
    %226 = vmatmul.f32.gmra.mxu0 %v159
    %v227 = vpop.f32.mrf.mxu0
    %v228 = vadd.f32 %v143, %v227
    %229 = vmatmul.f32.gmra.mxu0 %v162
    %v230 = vpop.f32.mrf.mxu0
    %v231 = vadd.f32 %v143, %v230
    %232 = vmatmul.f32.gmra.mxu0 %v165
    %v233 = vpop.f32.mrf.mxu0
    %v234 = vadd.f32 %v143, %v233
    %235 = vmatmul.f32.gmra.mxu0 %v168
    %v236 = vpop.f32.mrf.mxu0
    %v237 = vadd.f32 %v143, %v236
    %238 = vmatmul.f32.gmra.mxu0 %v171
    %v239 = vpop.f32.mrf.mxu0
    %v240 = vadd.f32 %v143, %v239
    %241 = vmatmul.f32.gmra.mxu0 %v174
    %v242 = vpop.f32.mrf.mxu0
    %v243 = vadd.f32 %v143, %v242
    %244 = vmatmul.f32.gmra.mxu0 %v177
    %v245 = vpop.f32.mrf.mxu0
    %v246 = vadd.f32 %v143, %v245
    %247 = vmatmul.f32.gmra.mxu0 %v180
    %v248 = vpop.f32.mrf.mxu0
    %v249 = vadd.f32 %v143, %v248
    %250 = vmatmul.f32.gmra.mxu0 %v183
    %v251 = vpop.f32.mrf.mxu0
    %v252 = vadd.f32 %v143, %v251
    %253 = vmatmul.f32.gmra.mxu0 %v186
    %v254 = vpop.f32.mrf.mxu0
    %v255 = vadd.f32 %v143, %v254
    %256 = vmatmul.f32.gmra.mxu0 %v189
    %v257 = vpop.f32.mrf.mxu0
    %v258 = vadd.f32 %v143, %v257
    %259 = vmatmul.f32.gmra.mxu0 %v192
    %v260 = vpop.f32.mrf.mxu0
    %v261 = vadd.f32 %v143, %v260
    %262 = vdwg.mxu0
    %v263 = vmul.f32 %v216, 0.5
    %v264 = vmul.f32 %v219, 0.5
    %v265 = vmul.f32 %v222, 0.5
    %v266 = vmul.f32 %v225, 0.5
    %v267 = vmul.f32 %v228, 0.5
    %v268 = vmul.f32 %v231, 0.5
    %v269 = vmul.f32 %v234, 0.5
    %v270 = vmul.f32 %v237, 0.5
    %v271 = vmul.f32 %v240, 0.5
    %v272 = vmul.f32 %v243, 0.5
    %v273 = vmul.f32 %v246, 0.5
    %v274 = vmul.f32 %v249, 0.5
    %v275 = vmul.f32 %v252, 0.5
    %v276 = vmul.f32 %v255, 0.5
    %v277 = vmul.f32 %v258, 0.5
    %v278 = vmul.f32 %v261, 0.5
    %v279 = vmul.f32 %v216, 0.70710677
    %v280 = vmul.f32 %v219, 0.70710677
    %v281 = vmul.f32 %v222, 0.70710677
    %v282 = vmul.f32 %v225, 0.70710677
    %v283 = vmul.f32 %v228, 0.70710677
    %v284 = vmul.f32 %v231, 0.70710677
    %v285 = vmul.f32 %v234, 0.70710677
    %v286 = vmul.f32 %v237, 0.70710677
    %v287 = vmul.f32 %v240, 0.70710677
    %v288 = vmul.f32 %v243, 0.70710677
    %v289 = vmul.f32 %v246, 0.70710677
    %v290 = vmul.f32 %v249, 0.70710677
    %v291 = vmul.f32 %v252, 0.70710677
    %v292 = vmul.f32 %v255, 0.70710677
    %v293 = vmul.f32 %v258, 0.70710677
    %v294 = vmul.f32 %v261, 0.70710677
    %v295 = vmul.f32 %v279, %v279
    %v296 = vmin.f32 16.0, %v295
    %v297 = vmul.f32 %v296, 2.1237322e-06
    %v298 = vadd.f32 %v297, 0.00028619796
    %v299 = vmul.f32 %v296, %v298
    %v300 = vadd.f32 %v299, 0.0036580483
    %v301 = vmul.f32 %v296, %v300
    %v302 = vadd.f32 %v301, 0.05243302
    %v303 = vmul.f32 %v296, %v302
    %v304 = vadd.f32 %v303, 0.18741608
    %v305 = vmul.f32 %v296, %v304
    %v306 = vadd.f32 %v305, 1.1283791
    %v307 = vmul.f32 %v279, %v306
    %v308 = vmul.f32 %v296, 3.8918573e-05
    %v309 = vadd.f32 %v308, 0.001143296
    %v310 = vmul.f32 %v296, %v309
    %v311 = vadd.f32 %v310, 0.014752088
    %v312 = vmul.f32 %v296, %v311
    %v313 = vadd.f32 %v312, 0.112945676
    %v314 = vmul.f32 %v296, %v313
    %v315 = vadd.f32 %v314, 0.4994258
    %v316 = vmul.f32 %v296, %v315
    %v317 = vadd.f32 %v316, 1.0
    %v318 = vrcp.pop %v317
    %v319 = vmul.f32 %v317, %v318
    %v320 = vsub.f32 1.0, %v319
    %v321 = vmul.f32 %v318, %v320
    %v322 = vadd.f32 %v318, %v321
    %vm323 = vweird.f32 %v317
    %vm324 = vweird.f32 %v318
    %vm325 = vmor %vm323, %vm324
    %v326 = vsel %vm325, %v318, %v322
    %v327 = vand.u32 2147483647, %v317
    %vm328 = vcmp.eq.f32.partialorder %v327, 8.507059e+37
    %v329 = vand.u32 %v317, 2147483648
    %v330 = vor.u32 1.1754944e-38, %v329
    %v331 = vsel %vm328, %v330, %v326
    %v332 = vmul.f32 %v307, %v331
    %v333 = vmin.f32 %v332, 1.0
    %v334 = vmax.f32 %v333, -1.0
    %v335 = vmul.f32 %v280, %v280
    %v336 = vmin.f32 16.0, %v335
    %v337 = vmul.f32 %v336, 2.1237322e-06
    %v338 = vadd.f32 %v337, 0.00028619796
    %v339 = vmul.f32 %v336, %v338
    %v340 = vadd.f32 %v339, 0.0036580483
    %v341 = vmul.f32 %v336, %v340
    %v342 = vadd.f32 %v341, 0.05243302
    %v343 = vmul.f32 %v336, %v342
    %v344 = vadd.f32 %v343, 0.18741608
    %v345 = vmul.f32 %v336, %v344
    %v346 = vadd.f32 %v345, 1.1283791
    %v347 = vmul.f32 %v280, %v346
    %v348 = vmul.f32 %v336, 3.8918573e-05
    %v349 = vadd.f32 %v348, 0.001143296
    %v350 = vmul.f32 %v336, %v349
    %v351 = vadd.f32 %v350, 0.014752088
    %v352 = vmul.f32 %v336, %v351
    %v353 = vadd.f32 %v352, 0.112945676
    %v354 = vmul.f32 %v336, %v353
    %v355 = vadd.f32 %v354, 0.4994258
    %v356 = vmul.f32 %v336, %v355
    %v357 = vadd.f32 %v356, 1.0
    %v358 = vrcp.pop %v357
    %v359 = vmul.f32 %v357, %v358
    %v360 = vsub.f32 1.0, %v359
    %v361 = vmul.f32 %v358, %v360
    %v362 = vadd.f32 %v358, %v361
    %vm363 = vweird.f32 %v357
    %vm364 = vweird.f32 %v358
    %vm365 = vmor %vm363, %vm364
    %v366 = vsel %vm365, %v358, %v362
    %v367 = vand.u32 2147483647, %v357
    %vm368 = vcmp.eq.f32.partialorder %v367, 8.507059e+37
    %v369 = vand.u32 %v357, 2147483648
    %v370 = vor.u32 1.1754944e-38, %v369
    %v371 = vsel %vm368, %v370, %v366
    %v372 = vmul.f32 %v347, %v371
    %v373 = vmin.f32 %v372, 1.0
    %v374 = vmax.f32 %v373, -1.0
    %v375 = vmul.f32 %v281, %v281
    %v376 = vmin.f32 16.0, %v375
    %v377 = vmul.f32 %v376, 2.1237322e-06
    %v378 = vadd.f32 %v377, 0.00028619796
    %v379 = vmul.f32 %v376, %v378
    %v380 = vadd.f32 %v379, 0.0036580483
    %v381 = vmul.f32 %v376, %v380
    %v382 = vadd.f32 %v381, 0.05243302
    %v383 = vmul.f32 %v376, %v382
    %v384 = vadd.f32 %v383, 0.18741608
    %v385 = vmul.f32 %v376, %v384
    %v386 = vadd.f32 %v385, 1.1283791
    %v387 = vmul.f32 %v281, %v386
    %v388 = vmul.f32 %v376, 3.8918573e-05
    %v389 = vadd.f32 %v388, 0.001143296
    %v390 = vmul.f32 %v376, %v389
    %v391 = vadd.f32 %v390, 0.014752088
    %v392 = vmul.f32 %v376, %v391
    %v393 = vadd.f32 %v392, 0.112945676
    %v394 = vmul.f32 %v376, %v393
    %v395 = vadd.f32 %v394, 0.4994258
    %v396 = vmul.f32 %v376, %v395
    %v397 = vadd.f32 %v396, 1.0
    %v398 = vrcp.pop %v397
    %v399 = vmul.f32 %v397, %v398
    %v400 = vsub.f32 1.0, %v399
    %v401 = vmul.f32 %v398, %v400
    %v402 = vadd.f32 %v398, %v401
    %vm403 = vweird.f32 %v397
    %vm404 = vweird.f32 %v398
    %vm405 = vmor %vm403, %vm404
    %v406 = vsel %vm405, %v398, %v402
    %v407 = vand.u32 2147483647, %v397
    %vm408 = vcmp.eq.f32.partialorder %v407, 8.507059e+37
    %v409 = vand.u32 %v397, 2147483648
    %v410 = vor.u32 1.1754944e-38, %v409
    %v411 = vsel %vm408, %v410, %v406
    %v412 = vmul.f32 %v387, %v411
    %v413 = vmin.f32 %v412, 1.0
    %v414 = vmax.f32 %v413, -1.0
    %v415 = vmul.f32 %v282, %v282
    %v416 = vmin.f32 16.0, %v415
    %v417 = vmul.f32 %v416, 2.1237322e-06
    %v418 = vadd.f32 %v417, 0.00028619796
    %v419 = vmul.f32 %v416, %v418
    %v420 = vadd.f32 %v419, 0.0036580483
    %v421 = vmul.f32 %v416, %v420
    %v422 = vadd.f32 %v421, 0.05243302
    %v423 = vmul.f32 %v416, %v422
    %v424 = vadd.f32 %v423, 0.18741608
    %v425 = vmul.f32 %v416, %v424
    %v426 = vadd.f32 %v425, 1.1283791
    %v427 = vmul.f32 %v282, %v426
    %v428 = vmul.f32 %v416, 3.8918573e-05
    %v429 = vadd.f32 %v428, 0.001143296
    %v430 = vmul.f32 %v416, %v429
    %v431 = vadd.f32 %v430, 0.014752088
    %v432 = vmul.f32 %v416, %v431
    %v433 = vadd.f32 %v432, 0.112945676
    %v434 = vmul.f32 %v416, %v433
    %v435 = vadd.f32 %v434, 0.4994258
    %v436 = vmul.f32 %v416, %v435
    %v437 = vadd.f32 %v436, 1.0
    %v438 = vrcp.pop %v437
    %v439 = vmul.f32 %v437, %v438
    %v440 = vsub.f32 1.0, %v439
    %v441 = vmul.f32 %v438, %v440
    %v442 = vadd.f32 %v438, %v441
    %vm443 = vweird.f32 %v437
    %vm444 = vweird.f32 %v438
    %vm445 = vmor %vm443, %vm444
    %v446 = vsel %vm445, %v438, %v442
    %v447 = vand.u32 2147483647, %v437
    %vm448 = vcmp.eq.f32.partialorder %v447, 8.507059e+37
    %v449 = vand.u32 %v437, 2147483648
    %v450 = vor.u32 1.1754944e-38, %v449
    %v451 = vsel %vm448, %v450, %v446
    %v452 = vmul.f32 %v427, %v451
    %v453 = vmin.f32 %v452, 1.0
    %v454 = vmax.f32 %v453, -1.0
    %v455 = vmul.f32 %v283, %v283
    %v456 = vmin.f32 16.0, %v455
    %v457 = vmul.f32 %v456, 2.1237322e-06
    %v458 = vadd.f32 %v457, 0.00028619796
    %v459 = vmul.f32 %v456, %v458
    %v460 = vadd.f32 %v459, 0.0036580483
    %v461 = vmul.f32 %v456, %v460
    %v462 = vadd.f32 %v461, 0.05243302
    %v463 = vmul.f32 %v456, %v462
    %v464 = vadd.f32 %v463, 0.18741608
    %v465 = vmul.f32 %v456, %v464
    %v466 = vadd.f32 %v465, 1.1283791
    %v467 = vmul.f32 %v283, %v466
    %v468 = vmul.f32 %v456, 3.8918573e-05
    %v469 = vadd.f32 %v468, 0.001143296
    %v470 = vmul.f32 %v456, %v469
    %v471 = vadd.f32 %v470, 0.014752088
    %v472 = vmul.f32 %v456, %v471
    %v473 = vadd.f32 %v472, 0.112945676
    %v474 = vmul.f32 %v456, %v473
    %v475 = vadd.f32 %v474, 0.4994258
    %v476 = vmul.f32 %v456, %v475
    %v477 = vadd.f32 %v476, 1.0
    %v478 = vrcp.pop %v477
    %v479 = vmul.f32 %v477, %v478
    %v480 = vsub.f32 1.0, %v479
    %v481 = vmul.f32 %v478, %v480
    %v482 = vadd.f32 %v478, %v481
    %vm483 = vweird.f32 %v477
    %vm484 = vweird.f32 %v478
    %vm485 = vmor %vm483, %vm484
    %v486 = vsel %vm485, %v478, %v482
    %v487 = vand.u32 2147483647, %v477
    %vm488 = vcmp.eq.f32.partialorder %v487, 8.507059e+37
    %v489 = vand.u32 %v477, 2147483648
    %v490 = vor.u32 1.1754944e-38, %v489
    %v491 = vsel %vm488, %v490, %v486
    %v492 = vmul.f32 %v467, %v491
    %v493 = vmin.f32 %v492, 1.0
    %v494 = vmax.f32 %v493, -1.0
    %v495 = vmul.f32 %v284, %v284
    %v496 = vmin.f32 16.0, %v495
    %v497 = vmul.f32 %v496, 2.1237322e-06
    %v498 = vadd.f32 %v497, 0.00028619796
    %v499 = vmul.f32 %v496, %v498
    %v500 = vadd.f32 %v499, 0.0036580483
    %v501 = vmul.f32 %v496, %v500
    %v502 = vadd.f32 %v501, 0.05243302
    %v503 = vmul.f32 %v496, %v502
    %v504 = vadd.f32 %v503, 0.18741608
    %v505 = vmul.f32 %v496, %v504
    %v506 = vadd.f32 %v505, 1.1283791
    %v507 = vmul.f32 %v284, %v506
    %v508 = vmul.f32 %v496, 3.8918573e-05
    %v509 = vadd.f32 %v508, 0.001143296
    %v510 = vmul.f32 %v496, %v509
    %v511 = vadd.f32 %v510, 0.014752088
    %v512 = vmul.f32 %v496, %v511
    %v513 = vadd.f32 %v512, 0.112945676
    %v514 = vmul.f32 %v496, %v513
    %v515 = vadd.f32 %v514, 0.4994258
    %v516 = vmul.f32 %v496, %v515
    %v517 = vadd.f32 %v516, 1.0
    %v518 = vrcp.pop %v517
    %v519 = vmul.f32 %v517, %v518
    %v520 = vsub.f32 1.0, %v519
    %v521 = vmul.f32 %v518, %v520
    %v522 = vadd.f32 %v518, %v521
    %vm523 = vweird.f32 %v517
    %vm524 = vweird.f32 %v518
    %vm525 = vmor %vm523, %vm524
    %v526 = vsel %vm525, %v518, %v522
    %v527 = vand.u32 2147483647, %v517
    %vm528 = vcmp.eq.f32.partialorder %v527, 8.507059e+37
    %v529 = vand.u32 %v517, 2147483648
    %v530 = vor.u32 1.1754944e-38, %v529
    %v531 = vsel %vm528, %v530, %v526
    %v532 = vmul.f32 %v507, %v531
    %v533 = vmin.f32 %v532, 1.0
    %v534 = vmax.f32 %v533, -1.0
    %v535 = vmul.f32 %v285, %v285
    %v536 = vmin.f32 16.0, %v535
    %v537 = vmul.f32 %v536, 2.1237322e-06
    %v538 = vadd.f32 %v537, 0.00028619796
    %v539 = vmul.f32 %v536, %v538
    %v540 = vadd.f32 %v539, 0.0036580483
    %v541 = vmul.f32 %v536, %v540
    %v542 = vadd.f32 %v541, 0.05243302
    %v543 = vmul.f32 %v536, %v542
    %v544 = vadd.f32 %v543, 0.18741608
    %v545 = vmul.f32 %v536, %v544
    %v546 = vadd.f32 %v545, 1.1283791
    %v547 = vmul.f32 %v285, %v546
    %v548 = vmul.f32 %v536, 3.8918573e-05
    %v549 = vadd.f32 %v548, 0.001143296
    %v550 = vmul.f32 %v536, %v549
    %v551 = vadd.f32 %v550, 0.014752088
    %v552 = vmul.f32 %v536, %v551
    %v553 = vadd.f32 %v552, 0.112945676
    %v554 = vmul.f32 %v536, %v553
    %v555 = vadd.f32 %v554, 0.4994258
    %v556 = vmul.f32 %v536, %v555
    %v557 = vadd.f32 %v556, 1.0
    %v558 = vrcp.pop %v557
    %v559 = vmul.f32 %v557, %v558
    %v560 = vsub.f32 1.0, %v559
    %v561 = vmul.f32 %v558, %v560
    %v562 = vadd.f32 %v558, %v561
    %vm563 = vweird.f32 %v557
    %vm564 = vweird.f32 %v558
    %vm565 = vmor %vm563, %vm564
    %v566 = vsel %vm565, %v558, %v562
    %v567 = vand.u32 2147483647, %v557
    %vm568 = vcmp.eq.f32.partialorder %v567, 8.507059e+37
    %v569 = vand.u32 %v557, 2147483648
    %v570 = vor.u32 1.1754944e-38, %v569
    %v571 = vsel %vm568, %v570, %v566
    %v572 = vmul.f32 %v547, %v571
    %v573 = vmin.f32 %v572, 1.0
    %v574 = vmax.f32 %v573, -1.0
    %v575 = vmul.f32 %v286, %v286
    %v576 = vmin.f32 16.0, %v575
    %v577 = vmul.f32 %v576, 2.1237322e-06
    %v578 = vadd.f32 %v577, 0.00028619796
    %v579 = vmul.f32 %v576, %v578
    %v580 = vadd.f32 %v579, 0.0036580483
    %v581 = vmul.f32 %v576, %v580
    %v582 = vadd.f32 %v581, 0.05243302
    %v583 = vmul.f32 %v576, %v582
    %v584 = vadd.f32 %v583, 0.18741608
    %v585 = vmul.f32 %v576, %v584
    %v586 = vadd.f32 %v585, 1.1283791
    %v587 = vmul.f32 %v286, %v586
    %v588 = vmul.f32 %v576, 3.8918573e-05
    %v589 = vadd.f32 %v588, 0.001143296
    %v590 = vmul.f32 %v576, %v589
    %v591 = vadd.f32 %v590, 0.014752088
    %v592 = vmul.f32 %v576, %v591
    %v593 = vadd.f32 %v592, 0.112945676
    %v594 = vmul.f32 %v576, %v593
    %v595 = vadd.f32 %v594, 0.4994258
    %v596 = vmul.f32 %v576, %v595
    %v597 = vadd.f32 %v596, 1.0
    %v598 = vrcp.pop %v597
    %v599 = vmul.f32 %v597, %v598
    %v600 = vsub.f32 1.0, %v599
    %v601 = vmul.f32 %v598, %v600
    %v602 = vadd.f32 %v598, %v601
    %vm603 = vweird.f32 %v597
    %vm604 = vweird.f32 %v598
    %vm605 = vmor %vm603, %vm604
    %v606 = vsel %vm605, %v598, %v602
    %v607 = vand.u32 2147483647, %v597
    %vm608 = vcmp.eq.f32.partialorder %v607, 8.507059e+37
    %v609 = vand.u32 %v597, 2147483648
    %v610 = vor.u32 1.1754944e-38, %v609
    %v611 = vsel %vm608, %v610, %v606
    %v612 = vmul.f32 %v587, %v611
    %v613 = vmin.f32 %v612, 1.0
    %v614 = vmax.f32 %v613, -1.0
    %v615 = vmul.f32 %v287, %v287
    %v616 = vmin.f32 16.0, %v615
    %v617 = vmul.f32 %v616, 2.1237322e-06
    %v618 = vadd.f32 %v617, 0.00028619796
    %v619 = vmul.f32 %v616, %v618
    %v620 = vadd.f32 %v619, 0.0036580483
    %v621 = vmul.f32 %v616, %v620
    %v622 = vadd.f32 %v621, 0.05243302
    %v623 = vmul.f32 %v616, %v622
    %v624 = vadd.f32 %v623, 0.18741608
    %v625 = vmul.f32 %v616, %v624
    %v626 = vadd.f32 %v625, 1.1283791
    %v627 = vmul.f32 %v287, %v626
    %v628 = vmul.f32 %v616, 3.8918573e-05
    %v629 = vadd.f32 %v628, 0.001143296
    %v630 = vmul.f32 %v616, %v629
    %v631 = vadd.f32 %v630, 0.014752088
    %v632 = vmul.f32 %v616, %v631
    %v633 = vadd.f32 %v632, 0.112945676
    %v634 = vmul.f32 %v616, %v633
    %v635 = vadd.f32 %v634, 0.4994258
    %v636 = vmul.f32 %v616, %v635
    %v637 = vadd.f32 %v636, 1.0
    %v638 = vrcp.pop %v637
    %v639 = vmul.f32 %v637, %v638
    %v640 = vsub.f32 1.0, %v639
    %v641 = vmul.f32 %v638, %v640
    %v642 = vadd.f32 %v638, %v641
    %vm643 = vweird.f32 %v637
    %vm644 = vweird.f32 %v638
    %vm645 = vmor %vm643, %vm644
    %v646 = vsel %vm645, %v638, %v642
    %v647 = vand.u32 2147483647, %v637
    %vm648 = vcmp.eq.f32.partialorder %v647, 8.507059e+37
    %v649 = vand.u32 %v637, 2147483648
    %v650 = vor.u32 1.1754944e-38, %v649
    %v651 = vsel %vm648, %v650, %v646
    %v652 = vmul.f32 %v627, %v651
    %v653 = vmin.f32 %v652, 1.0
    %v654 = vmax.f32 %v653, -1.0
    %v655 = vmul.f32 %v288, %v288
    %v656 = vmin.f32 16.0, %v655
    %v657 = vmul.f32 %v656, 2.1237322e-06
    %v658 = vadd.f32 %v657, 0.00028619796
    %v659 = vmul.f32 %v656, %v658
    %v660 = vadd.f32 %v659, 0.0036580483
    %v661 = vmul.f32 %v656, %v660
    %v662 = vadd.f32 %v661, 0.05243302
    %v663 = vmul.f32 %v656, %v662
    %v664 = vadd.f32 %v663, 0.18741608
    %v665 = vmul.f32 %v656, %v664
    %v666 = vadd.f32 %v665, 1.1283791
    %v667 = vmul.f32 %v288, %v666
    %v668 = vmul.f32 %v656, 3.8918573e-05
    %v669 = vadd.f32 %v668, 0.001143296
    %v670 = vmul.f32 %v656, %v669
    %v671 = vadd.f32 %v670, 0.014752088
    %v672 = vmul.f32 %v656, %v671
    %v673 = vadd.f32 %v672, 0.112945676
    %v674 = vmul.f32 %v656, %v673
    %v675 = vadd.f32 %v674, 0.4994258
    %v676 = vmul.f32 %v656, %v675
    %v677 = vadd.f32 %v676, 1.0
    %v678 = vrcp.pop %v677
    %v679 = vmul.f32 %v677, %v678
    %v680 = vsub.f32 1.0, %v679
    %v681 = vmul.f32 %v678, %v680
    %v682 = vadd.f32 %v678, %v681
    %vm683 = vweird.f32 %v677
    %vm684 = vweird.f32 %v678
    %vm685 = vmor %vm683, %vm684
    %v686 = vsel %vm685, %v678, %v682
    %v687 = vand.u32 2147483647, %v677
    %vm688 = vcmp.eq.f32.partialorder %v687, 8.507059e+37
    %v689 = vand.u32 %v677, 2147483648
    %v690 = vor.u32 1.1754944e-38, %v689
    %v691 = vsel %vm688, %v690, %v686
    %v692 = vmul.f32 %v667, %v691
    %v693 = vmin.f32 %v692, 1.0
    %v694 = vmax.f32 %v693, -1.0
    %v695 = vmul.f32 %v289, %v289
    %v696 = vmin.f32 16.0, %v695
    %v697 = vmul.f32 %v696, 2.1237322e-06
    %v698 = vadd.f32 %v697, 0.00028619796
    %v699 = vmul.f32 %v696, %v698
    %v700 = vadd.f32 %v699, 0.0036580483
    %v701 = vmul.f32 %v696, %v700
    %v702 = vadd.f32 %v701, 0.05243302
    %v703 = vmul.f32 %v696, %v702
    %v704 = vadd.f32 %v703, 0.18741608
    %v705 = vmul.f32 %v696, %v704
    %v706 = vadd.f32 %v705, 1.1283791
    %v707 = vmul.f32 %v289, %v706
    %v708 = vmul.f32 %v696, 3.8918573e-05
    %v709 = vadd.f32 %v708, 0.001143296
    %v710 = vmul.f32 %v696, %v709
    %v711 = vadd.f32 %v710, 0.014752088
    %v712 = vmul.f32 %v696, %v711
    %v713 = vadd.f32 %v712, 0.112945676
    %v714 = vmul.f32 %v696, %v713
    %v715 = vadd.f32 %v714, 0.4994258
    %v716 = vmul.f32 %v696, %v715
    %v717 = vadd.f32 %v716, 1.0
    %v718 = vrcp.pop %v717
    %v719 = vmul.f32 %v717, %v718
    %v720 = vsub.f32 1.0, %v719
    %v721 = vmul.f32 %v718, %v720
    %v722 = vadd.f32 %v718, %v721
    %vm723 = vweird.f32 %v717
    %vm724 = vweird.f32 %v718
    %vm725 = vmor %vm723, %vm724
    %v726 = vsel %vm725, %v718, %v722
    %v727 = vand.u32 2147483647, %v717
    %vm728 = vcmp.eq.f32.partialorder %v727, 8.507059e+37
    %v729 = vand.u32 %v717, 2147483648
    %v730 = vor.u32 1.1754944e-38, %v729
    %v731 = vsel %vm728, %v730, %v726
    %v732 = vmul.f32 %v707, %v731
    %v733 = vmin.f32 %v732, 1.0
    %v734 = vmax.f32 %v733, -1.0
    %v735 = vmul.f32 %v290, %v290
    %v736 = vmin.f32 16.0, %v735
    %v737 = vmul.f32 %v736, 2.1237322e-06
    %v738 = vadd.f32 %v737, 0.00028619796
    %v739 = vmul.f32 %v736, %v738
    %v740 = vadd.f32 %v739, 0.0036580483
    %v741 = vmul.f32 %v736, %v740
    %v742 = vadd.f32 %v741, 0.05243302
    %v743 = vmul.f32 %v736, %v742
    %v744 = vadd.f32 %v743, 0.18741608
    %v745 = vmul.f32 %v736, %v744
    %v746 = vadd.f32 %v745, 1.1283791
    %v747 = vmul.f32 %v290, %v746
    %v748 = vmul.f32 %v736, 3.8918573e-05
    %v749 = vadd.f32 %v748, 0.001143296
    %v750 = vmul.f32 %v736, %v749
    %v751 = vadd.f32 %v750, 0.014752088
    %v752 = vmul.f32 %v736, %v751
    %v753 = vadd.f32 %v752, 0.112945676
    %v754 = vmul.f32 %v736, %v753
    %v755 = vadd.f32 %v754, 0.4994258
    %v756 = vmul.f32 %v736, %v755
    %v757 = vadd.f32 %v756, 1.0
    %v758 = vrcp.pop %v757
    %v759 = vmul.f32 %v757, %v758
    %v760 = vsub.f32 1.0, %v759
    %v761 = vmul.f32 %v758, %v760
    %v762 = vadd.f32 %v758, %v761
    %vm763 = vweird.f32 %v757
    %vm764 = vweird.f32 %v758
    %vm765 = vmor %vm763, %vm764
    %v766 = vsel %vm765, %v758, %v762
    %v767 = vand.u32 2147483647, %v757
    %vm768 = vcmp.eq.f32.partialorder %v767, 8.507059e+37
    %v769 = vand.u32 %v757, 2147483648
    %v770 = vor.u32 1.1754944e-38, %v769
    %v771 = vsel %vm768, %v770, %v766
    %v772 = vmul.f32 %v747, %v771
    %v773 = vmin.f32 %v772, 1.0
    %v774 = vmax.f32 %v773, -1.0
    %v775 = vmul.f32 %v291, %v291
    %v776 = vmin.f32 16.0, %v775
    %v777 = vmul.f32 %v776, 2.1237322e-06
    %v778 = vadd.f32 %v777, 0.00028619796
    %v779 = vmul.f32 %v776, %v778
    %v780 = vadd.f32 %v779, 0.0036580483
    %v781 = vmul.f32 %v776, %v780
    %v782 = vadd.f32 %v781, 0.05243302
    %v783 = vmul.f32 %v776, %v782
    %v784 = vadd.f32 %v783, 0.18741608
    %v785 = vmul.f32 %v776, %v784
    %v786 = vadd.f32 %v785, 1.1283791
    %v787 = vmul.f32 %v291, %v786
    %v788 = vmul.f32 %v776, 3.8918573e-05
    %v789 = vadd.f32 %v788, 0.001143296
    %v790 = vmul.f32 %v776, %v789
    %v791 = vadd.f32 %v790, 0.014752088
    %v792 = vmul.f32 %v776, %v791
    %v793 = vadd.f32 %v792, 0.112945676
    %v794 = vmul.f32 %v776, %v793
    %v795 = vadd.f32 %v794, 0.4994258
    %v796 = vmul.f32 %v776, %v795
    %v797 = vadd.f32 %v796, 1.0
    %v798 = vrcp.pop %v797
    %v799 = vmul.f32 %v797, %v798
    %v800 = vsub.f32 1.0, %v799
    %v801 = vmul.f32 %v798, %v800
    %v802 = vadd.f32 %v798, %v801
    %vm803 = vweird.f32 %v797
    %vm804 = vweird.f32 %v798
    %vm805 = vmor %vm803, %vm804
    %v806 = vsel %vm805, %v798, %v802
    %v807 = vand.u32 2147483647, %v797
    %vm808 = vcmp.eq.f32.partialorder %v807, 8.507059e+37
    %v809 = vand.u32 %v797, 2147483648
    %v810 = vor.u32 1.1754944e-38, %v809
    %v811 = vsel %vm808, %v810, %v806
    %v812 = vmul.f32 %v787, %v811
    %v813 = vmin.f32 %v812, 1.0
    %v814 = vmax.f32 %v813, -1.0
    %v815 = vmul.f32 %v292, %v292
    %v816 = vmin.f32 16.0, %v815
    %v817 = vmul.f32 %v816, 2.1237322e-06
    %v818 = vadd.f32 %v817, 0.00028619796
    %v819 = vmul.f32 %v816, %v818
    %v820 = vadd.f32 %v819, 0.0036580483
    %v821 = vmul.f32 %v816, %v820
    %v822 = vadd.f32 %v821, 0.05243302
    %v823 = vmul.f32 %v816, %v822
    %v824 = vadd.f32 %v823, 0.18741608
    %v825 = vmul.f32 %v816, %v824
    %v826 = vadd.f32 %v825, 1.1283791
    %v827 = vmul.f32 %v292, %v826
    %v828 = vmul.f32 %v816, 3.8918573e-05
    %v829 = vadd.f32 %v828, 0.001143296
    %v830 = vmul.f32 %v816, %v829
    %v831 = vadd.f32 %v830, 0.014752088
    %v832 = vmul.f32 %v816, %v831
    %v833 = vadd.f32 %v832, 0.112945676
    %v834 = vmul.f32 %v816, %v833
    %v835 = vadd.f32 %v834, 0.4994258
    %v836 = vmul.f32 %v816, %v835
    %v837 = vadd.f32 %v836, 1.0
    %v838 = vrcp.pop %v837
    %v839 = vmul.f32 %v837, %v838
    %v840 = vsub.f32 1.0, %v839
    %v841 = vmul.f32 %v838, %v840
    %v842 = vadd.f32 %v838, %v841
    %vm843 = vweird.f32 %v837
    %vm844 = vweird.f32 %v838
    %vm845 = vmor %vm843, %vm844
    %v846 = vsel %vm845, %v838, %v842
    %v847 = vand.u32 2147483647, %v837
    %vm848 = vcmp.eq.f32.partialorder %v847, 8.507059e+37
    %v849 = vand.u32 %v837, 2147483648
    %v850 = vor.u32 1.1754944e-38, %v849
    %v851 = vsel %vm848, %v850, %v846
    %v852 = vmul.f32 %v827, %v851
    %v853 = vmin.f32 %v852, 1.0
    %v854 = vmax.f32 %v853, -1.0
    %v855 = vmul.f32 %v293, %v293
    %v856 = vmin.f32 16.0, %v855
    %v857 = vmul.f32 %v856, 2.1237322e-06
    %v858 = vadd.f32 %v857, 0.00028619796
    %v859 = vmul.f32 %v856, %v858
    %v860 = vadd.f32 %v859, 0.0036580483
    %v861 = vmul.f32 %v856, %v860
    %v862 = vadd.f32 %v861, 0.05243302
    %v863 = vmul.f32 %v856, %v862
    %v864 = vadd.f32 %v863, 0.18741608
    %v865 = vmul.f32 %v856, %v864
    %v866 = vadd.f32 %v865, 1.1283791
    %v867 = vmul.f32 %v293, %v866
    %v868 = vmul.f32 %v856, 3.8918573e-05
    %v869 = vadd.f32 %v868, 0.001143296
    %v870 = vmul.f32 %v856, %v869
    %v871 = vadd.f32 %v870, 0.014752088
    %v872 = vmul.f32 %v856, %v871
    %v873 = vadd.f32 %v872, 0.112945676
    %v874 = vmul.f32 %v856, %v873
    %v875 = vadd.f32 %v874, 0.4994258
    %v876 = vmul.f32 %v856, %v875
    %v877 = vadd.f32 %v876, 1.0
    %v878 = vrcp.pop %v877
    %v879 = vmul.f32 %v877, %v878
    %v880 = vsub.f32 1.0, %v879
    %v881 = vmul.f32 %v878, %v880
    %v882 = vadd.f32 %v878, %v881
    %vm883 = vweird.f32 %v877
    %vm884 = vweird.f32 %v878
    %vm885 = vmor %vm883, %vm884
    %v886 = vsel %vm885, %v878, %v882
    %v887 = vand.u32 2147483647, %v877
    %vm888 = vcmp.eq.f32.partialorder %v887, 8.507059e+37
    %v889 = vand.u32 %v877, 2147483648
    %v890 = vor.u32 1.1754944e-38, %v889
    %v891 = vsel %vm888, %v890, %v886
    %v892 = vmul.f32 %v867, %v891
    %v893 = vmin.f32 %v892, 1.0
    %v894 = vmax.f32 %v893, -1.0
    %v895 = vmul.f32 %v294, %v294
    %v896 = vmin.f32 16.0, %v895
    %v897 = vmul.f32 %v896, 2.1237322e-06
    %v898 = vadd.f32 %v897, 0.00028619796
    %v899 = vmul.f32 %v896, %v898
    %v900 = vadd.f32 %v899, 0.0036580483
    %v901 = vmul.f32 %v896, %v900
    %v902 = vadd.f32 %v901, 0.05243302
    %v903 = vmul.f32 %v896, %v902
    %v904 = vadd.f32 %v903, 0.18741608
    %v905 = vmul.f32 %v896, %v904
    %v906 = vadd.f32 %v905, 1.1283791
    %v907 = vmul.f32 %v294, %v906
    %v908 = vmul.f32 %v896, 3.8918573e-05
    %v909 = vadd.f32 %v908, 0.001143296
    %v910 = vmul.f32 %v896, %v909
    %v911 = vadd.f32 %v910, 0.014752088
    %v912 = vmul.f32 %v896, %v911
    %v913 = vadd.f32 %v912, 0.112945676
    %v914 = vmul.f32 %v896, %v913
    %v915 = vadd.f32 %v914, 0.4994258
    %v916 = vmul.f32 %v896, %v915
    %v917 = vadd.f32 %v916, 1.0
    %v918 = vrcp.pop %v917
    %v919 = vmul.f32 %v917, %v918
    %v920 = vsub.f32 1.0, %v919
    %v921 = vmul.f32 %v918, %v920
    %v922 = vadd.f32 %v918, %v921
    %vm923 = vweird.f32 %v917
    %vm924 = vweird.f32 %v918
    %vm925 = vmor %vm923, %vm924
    %v926 = vsel %vm925, %v918, %v922
    %v927 = vand.u32 2147483647, %v917
    %vm928 = vcmp.eq.f32.partialorder %v927, 8.507059e+37
    %v929 = vand.u32 %v917, 2147483648
    %v930 = vor.u32 1.1754944e-38, %v929
    %v931 = vsel %vm928, %v930, %v926
    %v932 = vmul.f32 %v907, %v931
    %v933 = vmin.f32 %v932, 1.0
    %v934 = vmax.f32 %v933, -1.0
    %v935 = vadd.f32 %v334, 1.0
    %v936 = vadd.f32 %v374, 1.0
    %v937 = vadd.f32 %v414, 1.0
    %v938 = vadd.f32 %v454, 1.0
    %v939 = vadd.f32 %v494, 1.0
    %v940 = vadd.f32 %v534, 1.0
    %v941 = vadd.f32 %v574, 1.0
    %v942 = vadd.f32 %v614, 1.0
    %v943 = vadd.f32 %v654, 1.0
    %v944 = vadd.f32 %v694, 1.0
    %v945 = vadd.f32 %v734, 1.0
    %v946 = vadd.f32 %v774, 1.0
    %v947 = vadd.f32 %v814, 1.0
    %v948 = vadd.f32 %v854, 1.0
    %v949 = vadd.f32 %v894, 1.0
    %v950 = vadd.f32 %v934, 1.0
    %v951 = vmul.f32 %v263, %v935
    %v952 = vmul.f32 %v264, %v936
    %v953 = vmul.f32 %v265, %v937
    %v954 = vmul.f32 %v266, %v938
    %v955 = vmul.f32 %v267, %v939
    %v956 = vmul.f32 %v268, %v940
    %v957 = vmul.f32 %v269, %v941
    %v958 = vmul.f32 %v270, %v942
    %v959 = vmul.f32 %v271, %v943
    %v960 = vmul.f32 %v272, %v944
    %v961 = vmul.f32 %v273, %v945
    %v962 = vmul.f32 %v274, %v946
    %v963 = vmul.f32 %v275, %v947
    %v964 = vmul.f32 %v276, %v948
    %v965 = vmul.f32 %v277, %v949
    %v966 = vmul.f32 %v278, %v950
    %v967 = vld [vmem:[#allocation3] sm:$0x1]
    %v968 = vld [vmem:[#allocation6] sm:$0x1]
    %969 = vadd.xlane.f32.xlu0 %v951
    %v970 = vpop.xlane.xlu0 %969
    %971 = vadd.xlane.f32.xlu0 %v952
    %v972 = vpop.xlane.xlu0 %971
    %973 = vadd.xlane.f32.xlu0 %v953
    %v974 = vpop.xlane.xlu0 %973
    %975 = vadd.xlane.f32.xlu0 %v954
    %v976 = vpop.xlane.xlu0 %975
    %977 = vadd.xlane.f32.xlu0 %v955
    %v978 = vpop.xlane.xlu0 %977
    %979 = vadd.xlane.f32.xlu0 %v956
    %v980 = vpop.xlane.xlu0 %979
    %981 = vadd.xlane.f32.xlu0 %v957
    %v982 = vpop.xlane.xlu0 %981
    %983 = vadd.xlane.f32.xlu0 %v958
    %v984 = vpop.xlane.xlu0 %983
    %985 = vadd.xlane.f32.xlu0 %v959
    %v986 = vpop.xlane.xlu0 %985
    %987 = vadd.xlane.f32.xlu0 %v960
    %v988 = vpop.xlane.xlu0 %987
    %989 = vadd.xlane.f32.xlu0 %v961
    %v990 = vpop.xlane.xlu0 %989
    %991 = vadd.xlane.f32.xlu0 %v962
    %v992 = vpop.xlane.xlu0 %991
    %993 = vadd.xlane.f32.xlu0 %v963
    %v994 = vpop.xlane.xlu0 %993
    %995 = vadd.xlane.f32.xlu0 %v964
    %v996 = vpop.xlane.xlu0 %995
    %997 = vadd.xlane.f32.xlu0 %v965
    %v998 = vpop.xlane.xlu0 %997
    %999 = vadd.xlane.f32.xlu0 %v966
    %v1000 = vpop.xlane.xlu0 %999
    %v1001 = vrcp.pop 128.0
    %v1002 = vmul.f32 128.0, %v1001
    %v1003 = vsub.f32 1.0, %v1002
    %v1004 = vmul.f32 %v1001, %v1003
    %v1005 = vadd.f32 %v1001, %v1004
    %vm1006 = vweird.f32 %v1001
    %v1007 = vsel %vm1006, %v1001, %v1005
    %v1008 = vmul.f32 %v970, %v1007
    %v1009 = vmul.f32 %v972, %v1007
    %v1010 = vmul.f32 %v974, %v1007
    %v1011 = vmul.f32 %v976, %v1007
    %v1012 = vmul.f32 %v978, %v1007
    %v1013 = vmul.f32 %v980, %v1007
    %v1014 = vmul.f32 %v982, %v1007
    %v1015 = vmul.f32 %v984, %v1007
    %v1016 = vmul.f32 %v986, %v1007
    %v1017 = vmul.f32 %v988, %v1007
    %v1018 = vmul.f32 %v990, %v1007
    %v1019 = vmul.f32 %v992, %v1007
    %v1020 = vmul.f32 %v994, %v1007
    %v1021 = vmul.f32 %v996, %v1007
    %v1022 = vmul.f32 %v998, %v1007
    %v1023 = vmul.f32 %v1000, %v1007
    %v1024 = vmul.f32 %v951, %v951
    %v1025 = vmul.f32 %v952, %v952
    %v1026 = vmul.f32 %v953, %v953
    %v1027 = vmul.f32 %v954, %v954
    %v1028 = vmul.f32 %v955, %v955
    %v1029 = vmul.f32 %v956, %v956
    %v1030 = vmul.f32 %v957, %v957
    %v1031 = vmul.f32 %v958, %v958
    %v1032 = vmul.f32 %v959, %v959
    %v1033 = vmul.f32 %v960, %v960
    %v1034 = vmul.f32 %v961, %v961
    %v1035 = vmul.f32 %v962, %v962
    %v1036 = vmul.f32 %v963, %v963
    %v1037 = vmul.f32 %v964, %v964
    %v1038 = vmul.f32 %v965, %v965
    %v1039 = vmul.f32 %v966, %v966
    %1040 = vadd.xlane.f32.xlu0 %v1024
    %v1041 = vpop.xlane.xlu0 %1040
    %1042 = vadd.xlane.f32.xlu0 %v1025
    %v1043 = vpop.xlane.xlu0 %1042
    %1044 = vadd.xlane.f32.xlu0 %v1026
    %v1045 = vpop.xlane.xlu0 %1044
    %1046 = vadd.xlane.f32.xlu0 %v1027
    %v1047 = vpop.xlane.xlu0 %1046
    %1048 = vadd.xlane.f32.xlu0 %v1028
    %v1049 = vpop.xlane.xlu0 %1048
    %1050 = vadd.xlane.f32.xlu0 %v1029
    %v1051 = vpop.xlane.xlu0 %1050
    %1052 = vadd.xlane.f32.xlu0 %v1030
    %v1053 = vpop.xlane.xlu0 %1052
    %1054 = vadd.xlane.f32.xlu0 %v1031
    %v1055 = vpop.xlane.xlu0 %1054
    %1056 = vadd.xlane.f32.xlu0 %v1032
    %v1057 = vpop.xlane.xlu0 %1056
    %1058 = vadd.xlane.f32.xlu0 %v1033
    %v1059 = vpop.xlane.xlu0 %1058
    %1060 = vadd.xlane.f32.xlu0 %v1034
    %v1061 = vpop.xlane.xlu0 %1060
    %1062 = vadd.xlane.f32.xlu0 %v1035
    %v1063 = vpop.xlane.xlu0 %1062
    %1064 = vadd.xlane.f32.xlu0 %v1036
    %v1065 = vpop.xlane.xlu0 %1064
    %1066 = vadd.xlane.f32.xlu0 %v1037
    %v1067 = vpop.xlane.xlu0 %1066
    %1068 = vadd.xlane.f32.xlu0 %v1038
    %v1069 = vpop.xlane.xlu0 %1068
    %1070 = vadd.xlane.f32.xlu0 %v1039
    %v1071 = vpop.xlane.xlu0 %1070
    %v1072 = vmul.f32 %v1041, %v1007
    %v1073 = vmul.f32 %v1043, %v1007
    %v1074 = vmul.f32 %v1045, %v1007
    %v1075 = vmul.f32 %v1047, %v1007
    %v1076 = vmul.f32 %v1049, %v1007
    %v1077 = vmul.f32 %v1051, %v1007
    %v1078 = vmul.f32 %v1053, %v1007
    %v1079 = vmul.f32 %v1055, %v1007
    %v1080 = vmul.f32 %v1057, %v1007
    %v1081 = vmul.f32 %v1059, %v1007
    %v1082 = vmul.f32 %v1061, %v1007
    %v1083 = vmul.f32 %v1063, %v1007
    %v1084 = vmul.f32 %v1065, %v1007
    %v1085 = vmul.f32 %v1067, %v1007
    %v1086 = vmul.f32 %v1069, %v1007
    %v1087 = vmul.f32 %v1071, %v1007
    %v1088 = vmul.f32 %v1008, %v1008
    %v1089 = vmul.f32 %v1009, %v1009
    %v1090 = vmul.f32 %v1010, %v1010
    %v1091 = vmul.f32 %v1011, %v1011
    %v1092 = vmul.f32 %v1012, %v1012
    %v1093 = vmul.f32 %v1013, %v1013
    %v1094 = vmul.f32 %v1014, %v1014
    %v1095 = vmul.f32 %v1015, %v1015
    %v1096 = vmul.f32 %v1016, %v1016
    %v1097 = vmul.f32 %v1017, %v1017
    %v1098 = vmul.f32 %v1018, %v1018
    %v1099 = vmul.f32 %v1019, %v1019
    %v1100 = vmul.f32 %v1020, %v1020
    %v1101 = vmul.f32 %v1021, %v1021
    %v1102 = vmul.f32 %v1022, %v1022
    %v1103 = vmul.f32 %v1023, %v1023
    %v1104 = vsub.f32 %v1072, %v1088
    %v1105 = vsub.f32 %v1073, %v1089
    %v1106 = vsub.f32 %v1074, %v1090
    %v1107 = vsub.f32 %v1075, %v1091
    %v1108 = vsub.f32 %v1076, %v1092
    %v1109 = vsub.f32 %v1077, %v1093
    %v1110 = vsub.f32 %v1078, %v1094
    %v1111 = vsub.f32 %v1079, %v1095
    %v1112 = vsub.f32 %v1080, %v1096
    %v1113 = vsub.f32 %v1081, %v1097
    %v1114 = vsub.f32 %v1082, %v1098
    %v1115 = vsub.f32 %v1083, %v1099
    %v1116 = vsub.f32 %v1084, %v1100
    %v1117 = vsub.f32 %v1085, %v1101
    %v1118 = vsub.f32 %v1086, %v1102
    %v1119 = vsub.f32 %v1087, %v1103
    %v1120 = vmax.f32 %v1104, 0.0
    %v1121 = vmax.f32 %v1105, 0.0
    %v1122 = vmax.f32 %v1106, 0.0
    %v1123 = vmax.f32 %v1107, 0.0
    %v1124 = vmax.f32 %v1108, 0.0
    %v1125 = vmax.f32 %v1109, 0.0
    %v1126 = vmax.f32 %v1110, 0.0
    %v1127 = vmax.f32 %v1111, 0.0
    %v1128 = vmax.f32 %v1112, 0.0
    %v1129 = vmax.f32 %v1113, 0.0
    %v1130 = vmax.f32 %v1114, 0.0
    %v1131 = vmax.f32 %v1115, 0.0
    %v1132 = vmax.f32 %v1116, 0.0
    %v1133 = vmax.f32 %v1117, 0.0
    %v1134 = vmax.f32 %v1118, 0.0
    %v1135 = vmax.f32 %v1119, 0.0
    %v1136 = vadd.f32 %v1120, 1e-05
    %v1137 = vadd.f32 %v1121, 1e-05
    %v1138 = vadd.f32 %v1122, 1e-05
    %v1139 = vadd.f32 %v1123, 1e-05
    %v1140 = vadd.f32 %v1124, 1e-05
    %v1141 = vadd.f32 %v1125, 1e-05
    %v1142 = vadd.f32 %v1126, 1e-05
    %v1143 = vadd.f32 %v1127, 1e-05
    %v1144 = vadd.f32 %v1128, 1e-05
    %v1145 = vadd.f32 %v1129, 1e-05
    %v1146 = vadd.f32 %v1130, 1e-05
    %v1147 = vadd.f32 %v1131, 1e-05
    %v1148 = vadd.f32 %v1132, 1e-05
    %v1149 = vadd.f32 %v1133, 1e-05
    %v1150 = vadd.f32 %v1134, 1e-05
    %v1151 = vadd.f32 %v1135, 1e-05
    %v1152 = vrsqrt.pop %v1136
    %v1153 = vmul.f32 %v1152, %v1136
    %v1154 = vmul.f32 %v1153, %v1152
    %v1155 = vmul.f32 0.5, %v1154
    %v1156 = vsub.f32 1.5, %v1155
    %v1157 = vmul.f32 %v1152, %v1156
    %vm1158 = vweird.f32 %v1136
    %vm1159 = vweird.f32 %v1152
    %vm1160 = vmor %vm1158, %vm1159
    %v1161 = vsel %vm1160, %v1152, %v1157
    %v1162 = vrsqrt.pop %v1137
    %v1163 = vmul.f32 %v1162, %v1137
    %v1164 = vmul.f32 %v1163, %v1162
    %v1165 = vmul.f32 0.5, %v1164
    %v1166 = vsub.f32 1.5, %v1165
    %v1167 = vmul.f32 %v1162, %v1166
    %vm1168 = vweird.f32 %v1137
    %vm1169 = vweird.f32 %v1162
    %vm1170 = vmor %vm1168, %vm1169
    %v1171 = vsel %vm1170, %v1162, %v1167
    %v1172 = vrsqrt.pop %v1138
    %v1173 = vmul.f32 %v1172, %v1138
    %v1174 = vmul.f32 %v1173, %v1172
    %v1175 = vmul.f32 0.5, %v1174
    %v1176 = vsub.f32 1.5, %v1175
    %v1177 = vmul.f32 %v1172, %v1176
    %vm1178 = vweird.f32 %v1138
    %vm1179 = vweird.f32 %v1172
    %vm1180 = vmor %vm1178, %vm1179
    %v1181 = vsel %vm1180, %v1172, %v1177
    %v1182 = vrsqrt.pop %v1139
    %v1183 = vmul.f32 %v1182, %v1139
    %v1184 = vmul.f32 %v1183, %v1182
    %v1185 = vmul.f32 0.5, %v1184
    %v1186 = vsub.f32 1.5, %v1185
    %v1187 = vmul.f32 %v1182, %v1186
    %vm1188 = vweird.f32 %v1139
    %vm1189 = vweird.f32 %v1182
    %vm1190 = vmor %vm1188, %vm1189
    %v1191 = vsel %vm1190, %v1182, %v1187
    %v1192 = vrsqrt.pop %v1140
    %v1193 = vmul.f32 %v1192, %v1140
    %v1194 = vmul.f32 %v1193, %v1192
    %v1195 = vmul.f32 0.5, %v1194
    %v1196 = vsub.f32 1.5, %v1195
    %v1197 = vmul.f32 %v1192, %v1196
    %vm1198 = vweird.f32 %v1140
    %vm1199 = vweird.f32 %v1192
    %vm1200 = vmor %vm1198, %vm1199
    %v1201 = vsel %vm1200, %v1192, %v1197
    %v1202 = vrsqrt.pop %v1141
    %v1203 = vmul.f32 %v1202, %v1141
    %v1204 = vmul.f32 %v1203, %v1202
    %v1205 = vmul.f32 0.5, %v1204
    %v1206 = vsub.f32 1.5, %v1205
    %v1207 = vmul.f32 %v1202, %v1206
    %vm1208 = vweird.f32 %v1141
    %vm1209 = vweird.f32 %v1202
    %vm1210 = vmor %vm1208, %vm1209
    %v1211 = vsel %vm1210, %v1202, %v1207
    %v1212 = vrsqrt.pop %v1142
    %v1213 = vmul.f32 %v1212, %v1142
    %v1214 = vmul.f32 %v1213, %v1212
    %v1215 = vmul.f32 0.5, %v1214
    %v1216 = vsub.f32 1.5, %v1215
    %v1217 = vmul.f32 %v1212, %v1216
    %vm1218 = vweird.f32 %v1142
    %vm1219 = vweird.f32 %v1212
    %vm1220 = vmor %vm1218, %vm1219
    %v1221 = vsel %vm1220, %v1212, %v1217
    %v1222 = vrsqrt.pop %v1143
    %v1223 = vmul.f32 %v1222, %v1143
    %v1224 = vmul.f32 %v1223, %v1222
    %v1225 = vmul.f32 0.5, %v1224
    %v1226 = vsub.f32 1.5, %v1225
    %v1227 = vmul.f32 %v1222, %v1226
    %vm1228 = vweird.f32 %v1143
    %vm1229 = vweird.f32 %v1222
    %vm1230 = vmor %vm1228, %vm1229
    %v1231 = vsel %vm1230, %v1222, %v1227
    %v1232 = vrsqrt.pop %v1144
    %v1233 = vmul.f32 %v1232, %v1144
    %v1234 = vmul.f32 %v1233, %v1232
    %v1235 = vmul.f32 0.5, %v1234
    %v1236 = vsub.f32 1.5, %v1235
    %v1237 = vmul.f32 %v1232, %v1236
    %vm1238 = vweird.f32 %v1144
    %vm1239 = vweird.f32 %v1232
    %vm1240 = vmor %vm1238, %vm1239
    %v1241 = vsel %vm1240, %v1232, %v1237
    %v1242 = vrsqrt.pop %v1145
    %v1243 = vmul.f32 %v1242, %v1145
    %v1244 = vmul.f32 %v1243, %v1242
    %v1245 = vmul.f32 0.5, %v1244
    %v1246 = vsub.f32 1.5, %v1245
    %v1247 = vmul.f32 %v1242, %v1246
    %vm1248 = vweird.f32 %v1145
    %vm1249 = vweird.f32 %v1242
    %vm1250 = vmor %vm1248, %vm1249
    %v1251 = vsel %vm1250, %v1242, %v1247
    %v1252 = vrsqrt.pop %v1146
    %v1253 = vmul.f32 %v1252, %v1146
    %v1254 = vmul.f32 %v1253, %v1252
    %v1255 = vmul.f32 0.5, %v1254
    %v1256 = vsub.f32 1.5, %v1255
    %v1257 = vmul.f32 %v1252, %v1256
    %vm1258 = vweird.f32 %v1146
    %vm1259 = vweird.f32 %v1252
    %vm1260 = vmor %vm1258, %vm1259
    %v1261 = vsel %vm1260, %v1252, %v1257
    %v1262 = vrsqrt.pop %v1147
    %v1263 = vmul.f32 %v1262, %v1147
    %v1264 = vmul.f32 %v1263, %v1262
    %v1265 = vmul.f32 0.5, %v1264
    %v1266 = vsub.f32 1.5, %v1265
    %v1267 = vmul.f32 %v1262, %v1266
    %vm1268 = vweird.f32 %v1147
    %vm1269 = vweird.f32 %v1262
    %vm1270 = vmor %vm1268, %vm1269
    %v1271 = vsel %vm1270, %v1262, %v1267
    %v1272 = vrsqrt.pop %v1148
    %v1273 = vmul.f32 %v1272, %v1148
    %v1274 = vmul.f32 %v1273, %v1272
    %v1275 = vmul.f32 0.5, %v1274
    %v1276 = vsub.f32 1.5, %v1275
    %v1277 = vmul.f32 %v1272, %v1276
    %vm1278 = vweird.f32 %v1148
    %vm1279 = vweird.f32 %v1272
    %vm1280 = vmor %vm1278, %vm1279
    %v1281 = vsel %vm1280, %v1272, %v1277
    %v1282 = vrsqrt.pop %v1149
    %v1283 = vmul.f32 %v1282, %v1149
    %v1284 = vmul.f32 %v1283, %v1282
    %v1285 = vmul.f32 0.5, %v1284
    %v1286 = vsub.f32 1.5, %v1285
    %v1287 = vmul.f32 %v1282, %v1286
    %vm1288 = vweird.f32 %v1149
    %vm1289 = vweird.f32 %v1282
    %vm1290 = vmor %vm1288, %vm1289
    %v1291 = vsel %vm1290, %v1282, %v1287
    %v1292 = vrsqrt.pop %v1150
    %v1293 = vmul.f32 %v1292, %v1150
    %v1294 = vmul.f32 %v1293, %v1292
    %v1295 = vmul.f32 0.5, %v1294
    %v1296 = vsub.f32 1.5, %v1295
    %v1297 = vmul.f32 %v1292, %v1296
    %vm1298 = vweird.f32 %v1150
    %vm1299 = vweird.f32 %v1292
    %vm1300 = vmor %vm1298, %vm1299
    %v1301 = vsel %vm1300, %v1292, %v1297
    %v1302 = vrsqrt.pop %v1151
    %v1303 = vmul.f32 %v1302, %v1151
    %v1304 = vmul.f32 %v1303, %v1302
    %v1305 = vmul.f32 0.5, %v1304
    %v1306 = vsub.f32 1.5, %v1305
    %v1307 = vmul.f32 %v1302, %v1306
    %vm1308 = vweird.f32 %v1151
    %vm1309 = vweird.f32 %v1302
    %vm1310 = vmor %vm1308, %vm1309
    %v1311 = vsel %vm1310, %v1302, %v1307
    %v1312 = vsub.f32 %v951, %v1008
    %v1313 = vsub.f32 %v952, %v1009
    %v1314 = vsub.f32 %v953, %v1010
    %v1315 = vsub.f32 %v954, %v1011
    %v1316 = vsub.f32 %v955, %v1012
    %v1317 = vsub.f32 %v956, %v1013
    %v1318 = vsub.f32 %v957, %v1014
    %v1319 = vsub.f32 %v958, %v1015
    %v1320 = vsub.f32 %v959, %v1016
    %v1321 = vsub.f32 %v960, %v1017
    %v1322 = vsub.f32 %v961, %v1018
    %v1323 = vsub.f32 %v962, %v1019
    %v1324 = vsub.f32 %v963, %v1020
    %v1325 = vsub.f32 %v964, %v1021
    %v1326 = vsub.f32 %v965, %v1022
    %v1327 = vsub.f32 %v966, %v1023
    %v1328 = vmul.f32 %v1312, %v1161
    %v1329 = vmul.f32 %v1313, %v1171
    %v1330 = vmul.f32 %v1314, %v1181
    %v1331 = vmul.f32 %v1315, %v1191
    %v1332 = vmul.f32 %v1316, %v1201
    %v1333 = vmul.f32 %v1317, %v1211
    %v1334 = vmul.f32 %v1318, %v1221
    %v1335 = vmul.f32 %v1319, %v1231
    %v1336 = vmul.f32 %v1320, %v1241
    %v1337 = vmul.f32 %v1321, %v1251
    %v1338 = vmul.f32 %v1322, %v1261
    %v1339 = vmul.f32 %v1323, %v1271
    %v1340 = vmul.f32 %v1324, %v1281
    %v1341 = vmul.f32 %v1325, %v1291
    %v1342 = vmul.f32 %v1326, %v1301
    %v1343 = vmul.f32 %v1327, %v1311
    %v1345 = vperm.slane %v967, 0
    %v1347 = vmul.f32 %v1328, %v1345
    %v1348 = vmul.f32 %v1329, %v1345
    %v1349 = vmul.f32 %v1330, %v1345
    %v1350 = vmul.f32 %v1331, %v1345
    %v1351 = vmul.f32 %v1332, %v1345
    %v1352 = vmul.f32 %v1333, %v1345
    %v1353 = vmul.f32 %v1334, %v1345
    %v1354 = vmul.f32 %v1335, %v1345
    %v1355 = vmul.f32 %v1336, %v1345
    %v1356 = vmul.f32 %v1337, %v1345
    %v1357 = vmul.f32 %v1338, %v1345
    %v1358 = vmul.f32 %v1339, %v1345
    %v1359 = vmul.f32 %v1340, %v1345
    %v1360 = vmul.f32 %v1341, %v1345
    %v1361 = vmul.f32 %v1342, %v1345
    %v1362 = vmul.f32 %v1343, %v1345
    %v1364 = vperm.slane %v968, 0
    %v1366 = vadd.f32 %v1347, %v1364
    %v1367 = vadd.f32 %v1348, %v1364
    %v1368 = vadd.f32 %v1349, %v1364
    %v1369 = vadd.f32 %v1350, %v1364
    %v1370 = vadd.f32 %v1351, %v1364
    %v1371 = vadd.f32 %v1352, %v1364
    %v1372 = vadd.f32 %v1353, %v1364
    %v1373 = vadd.f32 %v1354, %v1364
    %v1374 = vadd.f32 %v1355, %v1364
    %v1375 = vadd.f32 %v1356, %v1364
    %v1376 = vadd.f32 %v1357, %v1364
    %v1377 = vadd.f32 %v1358, %v1364
    %v1378 = vadd.f32 %v1359, %v1364
    %v1379 = vadd.f32 %v1360, %v1364
    %v1380 = vadd.f32 %v1361, %v1364
    %v1381 = vadd.f32 %v1362, %v1364
    %v1382 = vld [vmem:[%s5] sm:$0xff]
    %v1383 = vld [vmem:[%s5 + $0x8] sm:$0xff]
    %v1384 = vld [vmem:[%s5 + $0x10] sm:$0xff]
    %v1385 = vld [vmem:[%s5 + $0x18] sm:$0xff]
    %v1386 = vld [vmem:[%s5 + $0x20] sm:$0xff]
    %v1387 = vld [vmem:[%s5 + $0x28] sm:$0xff]
    %v1388 = vld [vmem:[%s5 + $0x30] sm:$0xff]
    %v1389 = vld [vmem:[%s5 + $0x38] sm:$0xff]
    %v1390 = vld [vmem:[%s5 + $0x40] sm:$0xff]
    %v1391 = vld [vmem:[%s5 + $0x48] sm:$0xff]
    %v1392 = vld [vmem:[%s5 + $0x50] sm:$0xff]
    %v1393 = vld [vmem:[%s5 + $0x58] sm:$0xff]
    %v1394 = vld [vmem:[%s5 + $0x60] sm:$0xff]
    %v1395 = vld [vmem:[%s5 + $0x68] sm:$0xff]
    %v1396 = vld [vmem:[%s5 + $0x70] sm:$0xff]
    %v1397 = vld [vmem:[%s5 + $0x78] sm:$0xff]
    %v1398 = vld [vmem:[%s5 + $0x80] sm:$0xff]
    %v1399 = vld [vmem:[%s5 + $0x88] sm:$0xff]
    %v1400 = vld [vmem:[%s5 + $0x90] sm:$0xff]
    %v1401 = vld [vmem:[%s5 + $0x98] sm:$0xff]
    %v1402 = vld [vmem:[%s5 + $0xa0] sm:$0xff]
    %v1403 = vld [vmem:[%s5 + $0xa8] sm:$0xff]
    %v1404 = vld [vmem:[%s5 + $0xb0] sm:$0xff]
    %v1405 = vld [vmem:[%s5 + $0xb8] sm:$0xff]
    %v1406 = vld [vmem:[%s5 + $0xc0] sm:$0xff]
    %v1407 = vld [vmem:[%s5 + $0xc8] sm:$0xff]
    %v1408 = vld [vmem:[%s5 + $0xd0] sm:$0xff]
    %v1409 = vld [vmem:[%s5 + $0xd8] sm:$0xff]
    %v1410 = vld [vmem:[%s5 + $0xe0] sm:$0xff]
    %v1411 = vld [vmem:[%s5 + $0xe8] sm:$0xff]
    %v1412 = vld [vmem:[%s5 + $0xf0] sm:$0xff]
    %v1413 = vld [vmem:[%s5 + $0xf8] sm:$0xff]
    %v1414 = vld [vmem:[%s6] sm:$0x3]
    %v1416 = vperm.slane %v1414, 0
    %v1417 = vperm.slane %v1414, 1
    %1420 = vmatpush.msra.mxu0 %v1412
    %1421 = vmatpush.msra.mxu0 %v1410
    %1422 = vmatpush.msra.mxu0 %v1408
    %1423 = vmatpush.msra.mxu0 %v1406
    %1424 = vmatpush.msra.mxu0 %v1404
    %1425 = vmatpush.msra.mxu0 %v1402
    %1426 = vmatpush.msra.mxu0 %v1400
    %1427 = vmatpush.msra.mxu0 %v1398
    %1428 = vmatpush.msra.mxu0 %v1396
    %1429 = vmatpush.msra.mxu0 %v1394
    %1430 = vmatpush.msra.mxu0 %v1392
    %1431 = vmatpush.msra.mxu0 %v1390
    %1432 = vmatpush.msra.mxu0 %v1388
    %1433 = vmatpush.msra.mxu0 %v1386
    %1434 = vmatpush.msra.mxu0 %v1384
    %1435 = vmatpush.msra.mxu0 %v1382
    %1436 = vmatmul.f32.gmra.mxu0 %v1366
    %v1437 = vpop.f32.mrf.mxu0
    %v1438 = vadd.f32 %v1416, %v1437
    %1439 = vmatmul.f32.gmra.mxu0 %v1367
    %v1440 = vpop.f32.mrf.mxu0
    %v1441 = vadd.f32 %v1416, %v1440
    %1442 = vmatmul.f32.gmra.mxu0 %v1368
    %v1443 = vpop.f32.mrf.mxu0
    %v1444 = vadd.f32 %v1416, %v1443
    %1445 = vmatmul.f32.gmra.mxu0 %v1369
    %v1446 = vpop.f32.mrf.mxu0
    %v1447 = vadd.f32 %v1416, %v1446
    %1448 = vmatmul.f32.gmra.mxu0 %v1370
    %v1449 = vpop.f32.mrf.mxu0
    %v1450 = vadd.f32 %v1416, %v1449
    %1451 = vmatmul.f32.gmra.mxu0 %v1371
    %v1452 = vpop.f32.mrf.mxu0
    %v1453 = vadd.f32 %v1416, %v1452
    %1454 = vmatmul.f32.gmra.mxu0 %v1372
    %v1455 = vpop.f32.mrf.mxu0
    %v1456 = vadd.f32 %v1416, %v1455
    %1457 = vmatmul.f32.gmra.mxu0 %v1373
    %v1458 = vpop.f32.mrf.mxu0
    %v1459 = vadd.f32 %v1416, %v1458
    %1460 = vmatmul.f32.gmra.mxu0 %v1374
    %v1461 = vpop.f32.mrf.mxu0
    %v1462 = vadd.f32 %v1416, %v1461
    %1463 = vmatmul.f32.gmra.mxu0 %v1375
    %v1464 = vpop.f32.mrf.mxu0
    %v1465 = vadd.f32 %v1416, %v1464
    %1466 = vmatmul.f32.gmra.mxu0 %v1376
    %v1467 = vpop.f32.mrf.mxu0
    %v1468 = vadd.f32 %v1416, %v1467
    %1469 = vmatmul.f32.gmra.mxu0 %v1377
    %v1470 = vpop.f32.mrf.mxu0
    %v1471 = vadd.f32 %v1416, %v1470
    %1472 = vmatmul.f32.gmra.mxu0 %v1378
    %v1473 = vpop.f32.mrf.mxu0
    %v1474 = vadd.f32 %v1416, %v1473
    %1475 = vmatmul.f32.gmra.mxu0 %v1379
    %v1476 = vpop.f32.mrf.mxu0
    %v1477 = vadd.f32 %v1416, %v1476
    %1478 = vmatmul.f32.gmra.mxu0 %v1380
    %v1479 = vpop.f32.mrf.mxu0
    %v1480 = vadd.f32 %v1416, %v1479
    %1481 = vmatmul.f32.gmra.mxu0 %v1381
    %v1482 = vpop.f32.mrf.mxu0
    %v1483 = vadd.f32 %v1416, %v1482
    %1484 = vdwg.mxu0
    %1485 = vmatpush.msra.mxu0 %v1413
    %1486 = vmatpush.msra.mxu0 %v1411
    %1487 = vmatpush.msra.mxu0 %v1409
    %1488 = vmatpush.msra.mxu0 %v1407
    %1489 = vmatpush.msra.mxu0 %v1405
    %1490 = vmatpush.msra.mxu0 %v1403
    %1491 = vmatpush.msra.mxu0 %v1401
    %1492 = vmatpush.msra.mxu0 %v1399
    %1493 = vmatpush.msra.mxu0 %v1397
    %1494 = vmatpush.msra.mxu0 %v1395
    %1495 = vmatpush.msra.mxu0 %v1393
    %1496 = vmatpush.msra.mxu0 %v1391
    %1497 = vmatpush.msra.mxu0 %v1389
    %1498 = vmatpush.msra.mxu0 %v1387
    %1499 = vmatpush.msra.mxu0 %v1385
    %1500 = vmatpush.msra.mxu0 %v1383
    %1501 = vmatmul.f32.gmra.mxu0 %v1366
    %v1502 = vpop.f32.mrf.mxu0
    %v1503 = vadd.f32 %v1417, %v1502
    %1504 = vmatmul.f32.gmra.mxu0 %v1367
    %v1505 = vpop.f32.mrf.mxu0
    %v1506 = vadd.f32 %v1417, %v1505
    %1507 = vmatmul.f32.gmra.mxu0 %v1368
    %v1508 = vpop.f32.mrf.mxu0
    %v1509 = vadd.f32 %v1417, %v1508
    %1510 = vmatmul.f32.gmra.mxu0 %v1369
    %v1511 = vpop.f32.mrf.mxu0
    %v1512 = vadd.f32 %v1417, %v1511
    %1513 = vmatmul.f32.gmra.mxu0 %v1370
    %v1514 = vpop.f32.mrf.mxu0
    %v1515 = vadd.f32 %v1417, %v1514
    %1516 = vmatmul.f32.gmra.mxu0 %v1371
    %v1517 = vpop.f32.mrf.mxu0
    %v1518 = vadd.f32 %v1417, %v1517
    %1519 = vmatmul.f32.gmra.mxu0 %v1372
    %v1520 = vpop.f32.mrf.mxu0
    %v1521 = vadd.f32 %v1417, %v1520
    %1522 = vmatmul.f32.gmra.mxu0 %v1373
    %v1523 = vpop.f32.mrf.mxu0
    %v1524 = vadd.f32 %v1417, %v1523
    %1525 = vmatmul.f32.gmra.mxu0 %v1374
    %v1526 = vpop.f32.mrf.mxu0
    %v1527 = vadd.f32 %v1417, %v1526
    %1528 = vmatmul.f32.gmra.mxu0 %v1375
    %v1529 = vpop.f32.mrf.mxu0
    %v1530 = vadd.f32 %v1417, %v1529
    %1531 = vmatmul.f32.gmra.mxu0 %v1376
    %v1532 = vpop.f32.mrf.mxu0
    %v1533 = vadd.f32 %v1417, %v1532
    %1534 = vmatmul.f32.gmra.mxu0 %v1377
    %v1535 = vpop.f32.mrf.mxu0
    %v1536 = vadd.f32 %v1417, %v1535
    %1537 = vmatmul.f32.gmra.mxu0 %v1378
    %v1538 = vpop.f32.mrf.mxu0
    %v1539 = vadd.f32 %v1417, %v1538
    %1540 = vmatmul.f32.gmra.mxu0 %v1379
    %v1541 = vpop.f32.mrf.mxu0
    %v1542 = vadd.f32 %v1417, %v1541
    %1543 = vmatmul.f32.gmra.mxu0 %v1380
    %v1544 = vpop.f32.mrf.mxu0
    %v1545 = vadd.f32 %v1417, %v1544
    %1546 = vmatmul.f32.gmra.mxu0 %v1381
    %v1547 = vpop.f32.mrf.mxu0
    %v1548 = vadd.f32 %v1417, %v1547
    %1549 = vdwg.mxu0
    %v1550 = vmul.f32 %v1438, 0.5
    %v1551 = vmul.f32 %v1503, 0.5
    %v1552 = vmul.f32 %v1441, 0.5
    %v1553 = vmul.f32 %v1506, 0.5
    %v1554 = vmul.f32 %v1444, 0.5
    %v1555 = vmul.f32 %v1509, 0.5
    %v1556 = vmul.f32 %v1447, 0.5
    %v1557 = vmul.f32 %v1512, 0.5
    %v1558 = vmul.f32 %v1450, 0.5
    %v1559 = vmul.f32 %v1515, 0.5
    %v1560 = vmul.f32 %v1453, 0.5
    %v1561 = vmul.f32 %v1518, 0.5
    %v1562 = vmul.f32 %v1456, 0.5
    %v1563 = vmul.f32 %v1521, 0.5
    %v1564 = vmul.f32 %v1459, 0.5
    %v1565 = vmul.f32 %v1524, 0.5
    %v1566 = vmul.f32 %v1462, 0.5
    %v1567 = vmul.f32 %v1527, 0.5
    %v1568 = vmul.f32 %v1465, 0.5
    %v1569 = vmul.f32 %v1530, 0.5
    %v1570 = vmul.f32 %v1468, 0.5
    %v1571 = vmul.f32 %v1533, 0.5
    %v1572 = vmul.f32 %v1471, 0.5
    %v1573 = vmul.f32 %v1536, 0.5
    %v1574 = vmul.f32 %v1474, 0.5
    %v1575 = vmul.f32 %v1539, 0.5
    %v1576 = vmul.f32 %v1477, 0.5
    %v1577 = vmul.f32 %v1542, 0.5
    %v1578 = vmul.f32 %v1480, 0.5
    %v1579 = vmul.f32 %v1545, 0.5
    %v1580 = vmul.f32 %v1483, 0.5
    %v1581 = vmul.f32 %v1548, 0.5
    %v1582 = vmul.f32 %v1438, 0.70710677
    %v1583 = vmul.f32 %v1503, 0.70710677
    %v1584 = vmul.f32 %v1441, 0.70710677
    %v1585 = vmul.f32 %v1506, 0.70710677
    %v1586 = vmul.f32 %v1444, 0.70710677
    %v1587 = vmul.f32 %v1509, 0.70710677
    %v1588 = vmul.f32 %v1447, 0.70710677
    %v1589 = vmul.f32 %v1512, 0.70710677
    %v1590 = vmul.f32 %v1450, 0.70710677
    %v1591 = vmul.f32 %v1515, 0.70710677
    %v1592 = vmul.f32 %v1453, 0.70710677
    %v1593 = vmul.f32 %v1518, 0.70710677
    %v1594 = vmul.f32 %v1456, 0.70710677
    %v1595 = vmul.f32 %v1521, 0.70710677
    %v1596 = vmul.f32 %v1459, 0.70710677
    %v1597 = vmul.f32 %v1524, 0.70710677
    %v1598 = vmul.f32 %v1462, 0.70710677
    %v1599 = vmul.f32 %v1527, 0.70710677
    %v1600 = vmul.f32 %v1465, 0.70710677
    %v1601 = vmul.f32 %v1530, 0.70710677
    %v1602 = vmul.f32 %v1468, 0.70710677
    %v1603 = vmul.f32 %v1533, 0.70710677
    %v1604 = vmul.f32 %v1471, 0.70710677
    %v1605 = vmul.f32 %v1536, 0.70710677
    %v1606 = vmul.f32 %v1474, 0.70710677
    %v1607 = vmul.f32 %v1539, 0.70710677
    %v1608 = vmul.f32 %v1477, 0.70710677
    %v1609 = vmul.f32 %v1542, 0.70710677
    %v1610 = vmul.f32 %v1480, 0.70710677
    %v1611 = vmul.f32 %v1545, 0.70710677
    %v1612 = vmul.f32 %v1483, 0.70710677
    %v1613 = vmul.f32 %v1548, 0.70710677
    %v1614 = vmul.f32 %v1582, %v1582
    %v1615 = vmin.f32 16.0, %v1614
    %v1616 = vmul.f32 %v1615, 2.1237322e-06
    %v1617 = vadd.f32 %v1616, 0.00028619796
    %v1618 = vmul.f32 %v1615, %v1617
    %v1619 = vadd.f32 %v1618, 0.0036580483
    %v1620 = vmul.f32 %v1615, %v1619
    %v1621 = vadd.f32 %v1620, 0.05243302
    %v1622 = vmul.f32 %v1615, %v1621
    %v1623 = vadd.f32 %v1622, 0.18741608
    %v1624 = vmul.f32 %v1615, %v1623
    %v1625 = vadd.f32 %v1624, 1.1283791
    %v1626 = vmul.f32 %v1582, %v1625
    %v1627 = vmul.f32 %v1615, 3.8918573e-05
    %v1628 = vadd.f32 %v1627, 0.001143296
    %v1629 = vmul.f32 %v1615, %v1628
    %v1630 = vadd.f32 %v1629, 0.014752088
    %v1631 = vmul.f32 %v1615, %v1630
    %v1632 = vadd.f32 %v1631, 0.112945676
    %v1633 = vmul.f32 %v1615, %v1632
    %v1634 = vadd.f32 %v1633, 0.4994258
    %v1635 = vmul.f32 %v1615, %v1634
    %v1636 = vadd.f32 %v1635, 1.0
    %v1637 = vrcp.pop %v1636
    %v1638 = vmul.f32 %v1636, %v1637
    %v1639 = vsub.f32 1.0, %v1638
    %v1640 = vmul.f32 %v1637, %v1639
    %v1641 = vadd.f32 %v1637, %v1640
    %vm1642 = vweird.f32 %v1636
    %vm1643 = vweird.f32 %v1637
    %vm1644 = vmor %vm1642, %vm1643
    %v1645 = vsel %vm1644, %v1637, %v1641
    %v1646 = vand.u32 2147483647, %v1636
    %vm1647 = vcmp.eq.f32.partialorder %v1646, 8.507059e+37
    %v1648 = vand.u32 %v1636, 2147483648
    %v1649 = vor.u32 1.1754944e-38, %v1648
    %v1650 = vsel %vm1647, %v1649, %v1645
    %v1651 = vmul.f32 %v1626, %v1650
    %v1652 = vmin.f32 %v1651, 1.0
    %v1653 = vmax.f32 %v1652, -1.0
    %v1654 = vmul.f32 %v1583, %v1583
    %v1655 = vmin.f32 16.0, %v1654
    %v1656 = vmul.f32 %v1655, 2.1237322e-06
    %v1657 = vadd.f32 %v1656, 0.00028619796
    %v1658 = vmul.f32 %v1655, %v1657
    %v1659 = vadd.f32 %v1658, 0.0036580483
    %v1660 = vmul.f32 %v1655, %v1659
    %v1661 = vadd.f32 %v1660, 0.05243302
    %v1662 = vmul.f32 %v1655, %v1661
    %v1663 = vadd.f32 %v1662, 0.18741608
    %v1664 = vmul.f32 %v1655, %v1663
    %v1665 = vadd.f32 %v1664, 1.1283791
    %v1666 = vmul.f32 %v1583, %v1665
    %v1667 = vmul.f32 %v1655, 3.8918573e-05
    %v1668 = vadd.f32 %v1667, 0.001143296
    %v1669 = vmul.f32 %v1655, %v1668
    %v1670 = vadd.f32 %v1669, 0.014752088
    %v1671 = vmul.f32 %v1655, %v1670
    %v1672 = vadd.f32 %v1671, 0.112945676
    %v1673 = vmul.f32 %v1655, %v1672
    %v1674 = vadd.f32 %v1673, 0.4994258
    %v1675 = vmul.f32 %v1655, %v1674
    %v1676 = vadd.f32 %v1675, 1.0
    %v1677 = vrcp.pop %v1676
    %v1678 = vmul.f32 %v1676, %v1677
    %v1679 = vsub.f32 1.0, %v1678
    %v1680 = vmul.f32 %v1677, %v1679
    %v1681 = vadd.f32 %v1677, %v1680
    %vm1682 = vweird.f32 %v1676
    %vm1683 = vweird.f32 %v1677
    %vm1684 = vmor %vm1682, %vm1683
    %v1685 = vsel %vm1684, %v1677, %v1681
    %v1686 = vand.u32 2147483647, %v1676
    %vm1687 = vcmp.eq.f32.partialorder %v1686, 8.507059e+37
    %v1688 = vand.u32 %v1676, 2147483648
    %v1689 = vor.u32 1.1754944e-38, %v1688
    %v1690 = vsel %vm1687, %v1689, %v1685
    %v1691 = vmul.f32 %v1666, %v1690
    %v1692 = vmin.f32 %v1691, 1.0
    %v1693 = vmax.f32 %v1692, -1.0
    %v1694 = vmul.f32 %v1584, %v1584
    %v1695 = vmin.f32 16.0, %v1694
    %v1696 = vmul.f32 %v1695, 2.1237322e-06
    %v1697 = vadd.f32 %v1696, 0.00028619796
    %v1698 = vmul.f32 %v1695, %v1697
    %v1699 = vadd.f32 %v1698, 0.0036580483
    %v1700 = vmul.f32 %v1695, %v1699
    %v1701 = vadd.f32 %v1700, 0.05243302
    %v1702 = vmul.f32 %v1695, %v1701
    %v1703 = vadd.f32 %v1702, 0.18741608
    %v1704 = vmul.f32 %v1695, %v1703
    %v1705 = vadd.f32 %v1704, 1.1283791
    %v1706 = vmul.f32 %v1584, %v1705
    %v1707 = vmul.f32 %v1695, 3.8918573e-05
    %v1708 = vadd.f32 %v1707, 0.001143296
    %v1709 = vmul.f32 %v1695, %v1708
    %v1710 = vadd.f32 %v1709, 0.014752088
    %v1711 = vmul.f32 %v1695, %v1710
    %v1712 = vadd.f32 %v1711, 0.112945676
    %v1713 = vmul.f32 %v1695, %v1712
    %v1714 = vadd.f32 %v1713, 0.4994258
    %v1715 = vmul.f32 %v1695, %v1714
    %v1716 = vadd.f32 %v1715, 1.0
    %v1717 = vrcp.pop %v1716
    %v1718 = vmul.f32 %v1716, %v1717
    %v1719 = vsub.f32 1.0, %v1718
    %v1720 = vmul.f32 %v1717, %v1719
    %v1721 = vadd.f32 %v1717, %v1720
    %vm1722 = vweird.f32 %v1716
    %vm1723 = vweird.f32 %v1717
    %vm1724 = vmor %vm1722, %vm1723
    %v1725 = vsel %vm1724, %v1717, %v1721
    %v1726 = vand.u32 2147483647, %v1716
    %vm1727 = vcmp.eq.f32.partialorder %v1726, 8.507059e+37
    %v1728 = vand.u32 %v1716, 2147483648
    %v1729 = vor.u32 1.1754944e-38, %v1728
    %v1730 = vsel %vm1727, %v1729, %v1725
    %v1731 = vmul.f32 %v1706, %v1730
    %v1732 = vmin.f32 %v1731, 1.0
    %v1733 = vmax.f32 %v1732, -1.0
    %v1734 = vmul.f32 %v1585, %v1585
    %v1735 = vmin.f32 16.0, %v1734
    %v1736 = vmul.f32 %v1735, 2.1237322e-06
    %v1737 = vadd.f32 %v1736, 0.00028619796
    %v1738 = vmul.f32 %v1735, %v1737
    %v1739 = vadd.f32 %v1738, 0.0036580483
    %v1740 = vmul.f32 %v1735, %v1739
    %v1741 = vadd.f32 %v1740, 0.05243302
    %v1742 = vmul.f32 %v1735, %v1741
    %v1743 = vadd.f32 %v1742, 0.18741608
    %v1744 = vmul.f32 %v1735, %v1743
    %v1745 = vadd.f32 %v1744, 1.1283791
    %v1746 = vmul.f32 %v1585, %v1745
    %v1747 = vmul.f32 %v1735, 3.8918573e-05
    %v1748 = vadd.f32 %v1747, 0.001143296
    %v1749 = vmul.f32 %v1735, %v1748
    %v1750 = vadd.f32 %v1749, 0.014752088
    %v1751 = vmul.f32 %v1735, %v1750
    %v1752 = vadd.f32 %v1751, 0.112945676
    %v1753 = vmul.f32 %v1735, %v1752
    %v1754 = vadd.f32 %v1753, 0.4994258
    %v1755 = vmul.f32 %v1735, %v1754
    %v1756 = vadd.f32 %v1755, 1.0
    %v1757 = vrcp.pop %v1756
    %v1758 = vmul.f32 %v1756, %v1757
    %v1759 = vsub.f32 1.0, %v1758
    %v1760 = vmul.f32 %v1757, %v1759
    %v1761 = vadd.f32 %v1757, %v1760
    %vm1762 = vweird.f32 %v1756
    %vm1763 = vweird.f32 %v1757
    %vm1764 = vmor %vm1762, %vm1763
    %v1765 = vsel %vm1764, %v1757, %v1761
    %v1766 = vand.u32 2147483647, %v1756
    %vm1767 = vcmp.eq.f32.partialorder %v1766, 8.507059e+37
    %v1768 = vand.u32 %v1756, 2147483648
    %v1769 = vor.u32 1.1754944e-38, %v1768
    %v1770 = vsel %vm1767, %v1769, %v1765
    %v1771 = vmul.f32 %v1746, %v1770
    %v1772 = vmin.f32 %v1771, 1.0
    %v1773 = vmax.f32 %v1772, -1.0
    %v1774 = vmul.f32 %v1586, %v1586
    %v1775 = vmin.f32 16.0, %v1774
    %v1776 = vmul.f32 %v1775, 2.1237322e-06
    %v1777 = vadd.f32 %v1776, 0.00028619796
    %v1778 = vmul.f32 %v1775, %v1777
    %v1779 = vadd.f32 %v1778, 0.0036580483
    %v1780 = vmul.f32 %v1775, %v1779
    %v1781 = vadd.f32 %v1780, 0.05243302
    %v1782 = vmul.f32 %v1775, %v1781
    %v1783 = vadd.f32 %v1782, 0.18741608
    %v1784 = vmul.f32 %v1775, %v1783
    %v1785 = vadd.f32 %v1784, 1.1283791
    %v1786 = vmul.f32 %v1586, %v1785
    %v1787 = vmul.f32 %v1775, 3.8918573e-05
    %v1788 = vadd.f32 %v1787, 0.001143296
    %v1789 = vmul.f32 %v1775, %v1788
    %v1790 = vadd.f32 %v1789, 0.014752088
    %v1791 = vmul.f32 %v1775, %v1790
    %v1792 = vadd.f32 %v1791, 0.112945676
    %v1793 = vmul.f32 %v1775, %v1792
    %v1794 = vadd.f32 %v1793, 0.4994258
    %v1795 = vmul.f32 %v1775, %v1794
    %v1796 = vadd.f32 %v1795, 1.0
    %v1797 = vrcp.pop %v1796
    %v1798 = vmul.f32 %v1796, %v1797
    %v1799 = vsub.f32 1.0, %v1798
    %v1800 = vmul.f32 %v1797, %v1799
    %v1801 = vadd.f32 %v1797, %v1800
    %vm1802 = vweird.f32 %v1796
    %vm1803 = vweird.f32 %v1797
    %vm1804 = vmor %vm1802, %vm1803
    %v1805 = vsel %vm1804, %v1797, %v1801
    %v1806 = vand.u32 2147483647, %v1796
    %vm1807 = vcmp.eq.f32.partialorder %v1806, 8.507059e+37
    %v1808 = vand.u32 %v1796, 2147483648
    %v1809 = vor.u32 1.1754944e-38, %v1808
    %v1810 = vsel %vm1807, %v1809, %v1805
    %v1811 = vmul.f32 %v1786, %v1810
    %v1812 = vmin.f32 %v1811, 1.0
    %v1813 = vmax.f32 %v1812, -1.0
    %v1814 = vmul.f32 %v1587, %v1587
    %v1815 = vmin.f32 16.0, %v1814
    %v1816 = vmul.f32 %v1815, 2.1237322e-06
    %v1817 = vadd.f32 %v1816, 0.00028619796
    %v1818 = vmul.f32 %v1815, %v1817
    %v1819 = vadd.f32 %v1818, 0.0036580483
    %v1820 = vmul.f32 %v1815, %v1819
    %v1821 = vadd.f32 %v1820, 0.05243302
    %v1822 = vmul.f32 %v1815, %v1821
    %v1823 = vadd.f32 %v1822, 0.18741608
    %v1824 = vmul.f32 %v1815, %v1823
    %v1825 = vadd.f32 %v1824, 1.1283791
    %v1826 = vmul.f32 %v1587, %v1825
    %v1827 = vmul.f32 %v1815, 3.8918573e-05
    %v1828 = vadd.f32 %v1827, 0.001143296
    %v1829 = vmul.f32 %v1815, %v1828
    %v1830 = vadd.f32 %v1829, 0.014752088
    %v1831 = vmul.f32 %v1815, %v1830
    %v1832 = vadd.f32 %v1831, 0.112945676
    %v1833 = vmul.f32 %v1815, %v1832
    %v1834 = vadd.f32 %v1833, 0.4994258
    %v1835 = vmul.f32 %v1815, %v1834
    %v1836 = vadd.f32 %v1835, 1.0
    %v1837 = vrcp.pop %v1836
    %v1838 = vmul.f32 %v1836, %v1837
    %v1839 = vsub.f32 1.0, %v1838
    %v1840 = vmul.f32 %v1837, %v1839
    %v1841 = vadd.f32 %v1837, %v1840
    %vm1842 = vweird.f32 %v1836
    %vm1843 = vweird.f32 %v1837
    %vm1844 = vmor %vm1842, %vm1843
    %v1845 = vsel %vm1844, %v1837, %v1841
    %v1846 = vand.u32 2147483647, %v1836
    %vm1847 = vcmp.eq.f32.partialorder %v1846, 8.507059e+37
    %v1848 = vand.u32 %v1836, 2147483648
    %v1849 = vor.u32 1.1754944e-38, %v1848
    %v1850 = vsel %vm1847, %v1849, %v1845
    %v1851 = vmul.f32 %v1826, %v1850
    %v1852 = vmin.f32 %v1851, 1.0
    %v1853 = vmax.f32 %v1852, -1.0
    %v1854 = vmul.f32 %v1588, %v1588
    %v1855 = vmin.f32 16.0, %v1854
    %v1856 = vmul.f32 %v1855, 2.1237322e-06
    %v1857 = vadd.f32 %v1856, 0.00028619796
    %v1858 = vmul.f32 %v1855, %v1857
    %v1859 = vadd.f32 %v1858, 0.0036580483
    %v1860 = vmul.f32 %v1855, %v1859
    %v1861 = vadd.f32 %v1860, 0.05243302
    %v1862 = vmul.f32 %v1855, %v1861
    %v1863 = vadd.f32 %v1862, 0.18741608
    %v1864 = vmul.f32 %v1855, %v1863
    %v1865 = vadd.f32 %v1864, 1.1283791
    %v1866 = vmul.f32 %v1588, %v1865
    %v1867 = vmul.f32 %v1855, 3.8918573e-05
    %v1868 = vadd.f32 %v1867, 0.001143296
    %v1869 = vmul.f32 %v1855, %v1868
    %v1870 = vadd.f32 %v1869, 0.014752088
    %v1871 = vmul.f32 %v1855, %v1870
    %v1872 = vadd.f32 %v1871, 0.112945676
    %v1873 = vmul.f32 %v1855, %v1872
    %v1874 = vadd.f32 %v1873, 0.4994258
    %v1875 = vmul.f32 %v1855, %v1874
    %v1876 = vadd.f32 %v1875, 1.0
    %v1877 = vrcp.pop %v1876
    %v1878 = vmul.f32 %v1876, %v1877
    %v1879 = vsub.f32 1.0, %v1878
    %v1880 = vmul.f32 %v1877, %v1879
    %v1881 = vadd.f32 %v1877, %v1880
    %vm1882 = vweird.f32 %v1876
    %vm1883 = vweird.f32 %v1877
    %vm1884 = vmor %vm1882, %vm1883
    %v1885 = vsel %vm1884, %v1877, %v1881
    %v1886 = vand.u32 2147483647, %v1876
    %vm1887 = vcmp.eq.f32.partialorder %v1886, 8.507059e+37
    %v1888 = vand.u32 %v1876, 2147483648
    %v1889 = vor.u32 1.1754944e-38, %v1888
    %v1890 = vsel %vm1887, %v1889, %v1885
    %v1891 = vmul.f32 %v1866, %v1890
    %v1892 = vmin.f32 %v1891, 1.0
    %v1893 = vmax.f32 %v1892, -1.0
    %v1894 = vmul.f32 %v1589, %v1589
    %v1895 = vmin.f32 16.0, %v1894
    %v1896 = vmul.f32 %v1895, 2.1237322e-06
    %v1897 = vadd.f32 %v1896, 0.00028619796
    %v1898 = vmul.f32 %v1895, %v1897
    %v1899 = vadd.f32 %v1898, 0.0036580483
    %v1900 = vmul.f32 %v1895, %v1899
    %v1901 = vadd.f32 %v1900, 0.05243302
    %v1902 = vmul.f32 %v1895, %v1901
    %v1903 = vadd.f32 %v1902, 0.18741608
    %v1904 = vmul.f32 %v1895, %v1903
    %v1905 = vadd.f32 %v1904, 1.1283791
    %v1906 = vmul.f32 %v1589, %v1905
    %v1907 = vmul.f32 %v1895, 3.8918573e-05
    %v1908 = vadd.f32 %v1907, 0.001143296
    %v1909 = vmul.f32 %v1895, %v1908
    %v1910 = vadd.f32 %v1909, 0.014752088
    %v1911 = vmul.f32 %v1895, %v1910
    %v1912 = vadd.f32 %v1911, 0.112945676
    %v1913 = vmul.f32 %v1895, %v1912
    %v1914 = vadd.f32 %v1913, 0.4994258
    %v1915 = vmul.f32 %v1895, %v1914
    %v1916 = vadd.f32 %v1915, 1.0
    %v1917 = vrcp.pop %v1916
    %v1918 = vmul.f32 %v1916, %v1917
    %v1919 = vsub.f32 1.0, %v1918
    %v1920 = vmul.f32 %v1917, %v1919
    %v1921 = vadd.f32 %v1917, %v1920
    %vm1922 = vweird.f32 %v1916
    %vm1923 = vweird.f32 %v1917
    %vm1924 = vmor %vm1922, %vm1923
    %v1925 = vsel %vm1924, %v1917, %v1921
    %v1926 = vand.u32 2147483647, %v1916
    %vm1927 = vcmp.eq.f32.partialorder %v1926, 8.507059e+37
    %v1928 = vand.u32 %v1916, 2147483648
    %v1929 = vor.u32 1.1754944e-38, %v1928
    %v1930 = vsel %vm1927, %v1929, %v1925
    %v1931 = vmul.f32 %v1906, %v1930
    %v1932 = vmin.f32 %v1931, 1.0
    %v1933 = vmax.f32 %v1932, -1.0
    %v1934 = vmul.f32 %v1590, %v1590
    %v1935 = vmin.f32 16.0, %v1934
    %v1936 = vmul.f32 %v1935, 2.1237322e-06
    %v1937 = vadd.f32 %v1936, 0.00028619796
    %v1938 = vmul.f32 %v1935, %v1937
    %v1939 = vadd.f32 %v1938, 0.0036580483
    %v1940 = vmul.f32 %v1935, %v1939
    %v1941 = vadd.f32 %v1940, 0.05243302
    %v1942 = vmul.f32 %v1935, %v1941
    %v1943 = vadd.f32 %v1942, 0.18741608
    %v1944 = vmul.f32 %v1935, %v1943
    %v1945 = vadd.f32 %v1944, 1.1283791
    %v1946 = vmul.f32 %v1590, %v1945
    %v1947 = vmul.f32 %v1935, 3.8918573e-05
    %v1948 = vadd.f32 %v1947, 0.001143296
    %v1949 = vmul.f32 %v1935, %v1948
    %v1950 = vadd.f32 %v1949, 0.014752088
    %v1951 = vmul.f32 %v1935, %v1950
    %v1952 = vadd.f32 %v1951, 0.112945676
    %v1953 = vmul.f32 %v1935, %v1952
    %v1954 = vadd.f32 %v1953, 0.4994258
    %v1955 = vmul.f32 %v1935, %v1954
    %v1956 = vadd.f32 %v1955, 1.0
    %v1957 = vrcp.pop %v1956
    %v1958 = vmul.f32 %v1956, %v1957
    %v1959 = vsub.f32 1.0, %v1958
    %v1960 = vmul.f32 %v1957, %v1959
    %v1961 = vadd.f32 %v1957, %v1960
    %vm1962 = vweird.f32 %v1956
    %vm1963 = vweird.f32 %v1957
    %vm1964 = vmor %vm1962, %vm1963
    %v1965 = vsel %vm1964, %v1957, %v1961
    %v1966 = vand.u32 2147483647, %v1956
    %vm1967 = vcmp.eq.f32.partialorder %v1966, 8.507059e+37
    %v1968 = vand.u32 %v1956, 2147483648
    %v1969 = vor.u32 1.1754944e-38, %v1968
    %v1970 = vsel %vm1967, %v1969, %v1965
    %v1971 = vmul.f32 %v1946, %v1970
    %v1972 = vmin.f32 %v1971, 1.0
    %v1973 = vmax.f32 %v1972, -1.0
    %v1974 = vmul.f32 %v1591, %v1591
    %v1975 = vmin.f32 16.0, %v1974
    %v1976 = vmul.f32 %v1975, 2.1237322e-06
    %v1977 = vadd.f32 %v1976, 0.00028619796
    %v1978 = vmul.f32 %v1975, %v1977
    %v1979 = vadd.f32 %v1978, 0.0036580483
    %v1980 = vmul.f32 %v1975, %v1979
    %v1981 = vadd.f32 %v1980, 0.05243302
    %v1982 = vmul.f32 %v1975, %v1981
    %v1983 = vadd.f32 %v1982, 0.18741608
    %v1984 = vmul.f32 %v1975, %v1983
    %v1985 = vadd.f32 %v1984, 1.1283791
    %v1986 = vmul.f32 %v1591, %v1985
    %v1987 = vmul.f32 %v1975, 3.8918573e-05
    %v1988 = vadd.f32 %v1987, 0.001143296
    %v1989 = vmul.f32 %v1975, %v1988
    %v1990 = vadd.f32 %v1989, 0.014752088
    %v1991 = vmul.f32 %v1975, %v1990
    %v1992 = vadd.f32 %v1991, 0.112945676
    %v1993 = vmul.f32 %v1975, %v1992
    %v1994 = vadd.f32 %v1993, 0.4994258
    %v1995 = vmul.f32 %v1975, %v1994
    %v1996 = vadd.f32 %v1995, 1.0
    %v1997 = vrcp.pop %v1996
    %v1998 = vmul.f32 %v1996, %v1997
    %v1999 = vsub.f32 1.0, %v1998
    %v2000 = vmul.f32 %v1997, %v1999
    %v2001 = vadd.f32 %v1997, %v2000
    %vm2002 = vweird.f32 %v1996
    %vm2003 = vweird.f32 %v1997
    %vm2004 = vmor %vm2002, %vm2003
    %v2005 = vsel %vm2004, %v1997, %v2001
    %v2006 = vand.u32 2147483647, %v1996
    %vm2007 = vcmp.eq.f32.partialorder %v2006, 8.507059e+37
    %v2008 = vand.u32 %v1996, 2147483648
    %v2009 = vor.u32 1.1754944e-38, %v2008
    %v2010 = vsel %vm2007, %v2009, %v2005
    %v2011 = vmul.f32 %v1986, %v2010
    %v2012 = vmin.f32 %v2011, 1.0
    %v2013 = vmax.f32 %v2012, -1.0
    %v2014 = vmul.f32 %v1592, %v1592
    %v2015 = vmin.f32 16.0, %v2014
    %v2016 = vmul.f32 %v2015, 2.1237322e-06
    %v2017 = vadd.f32 %v2016, 0.00028619796
    %v2018 = vmul.f32 %v2015, %v2017
    %v2019 = vadd.f32 %v2018, 0.0036580483
    %v2020 = vmul.f32 %v2015, %v2019
    %v2021 = vadd.f32 %v2020, 0.05243302
    %v2022 = vmul.f32 %v2015, %v2021
    %v2023 = vadd.f32 %v2022, 0.18741608
    %v2024 = vmul.f32 %v2015, %v2023
    %v2025 = vadd.f32 %v2024, 1.1283791
    %v2026 = vmul.f32 %v1592, %v2025
    %v2027 = vmul.f32 %v2015, 3.8918573e-05
    %v2028 = vadd.f32 %v2027, 0.001143296
    %v2029 = vmul.f32 %v2015, %v2028
    %v2030 = vadd.f32 %v2029, 0.014752088
    %v2031 = vmul.f32 %v2015, %v2030
    %v2032 = vadd.f32 %v2031, 0.112945676
    %v2033 = vmul.f32 %v2015, %v2032
    %v2034 = vadd.f32 %v2033, 0.4994258
    %v2035 = vmul.f32 %v2015, %v2034
    %v2036 = vadd.f32 %v2035, 1.0
    %v2037 = vrcp.pop %v2036
    %v2038 = vmul.f32 %v2036, %v2037
    %v2039 = vsub.f32 1.0, %v2038
    %v2040 = vmul.f32 %v2037, %v2039
    %v2041 = vadd.f32 %v2037, %v2040
    %vm2042 = vweird.f32 %v2036
    %vm2043 = vweird.f32 %v2037
    %vm2044 = vmor %vm2042, %vm2043
    %v2045 = vsel %vm2044, %v2037, %v2041
    %v2046 = vand.u32 2147483647, %v2036
    %vm2047 = vcmp.eq.f32.partialorder %v2046, 8.507059e+37
    %v2048 = vand.u32 %v2036, 2147483648
    %v2049 = vor.u32 1.1754944e-38, %v2048
    %v2050 = vsel %vm2047, %v2049, %v2045
    %v2051 = vmul.f32 %v2026, %v2050
    %v2052 = vmin.f32 %v2051, 1.0
    %v2053 = vmax.f32 %v2052, -1.0
    %v2054 = vmul.f32 %v1593, %v1593
    %v2055 = vmin.f32 16.0, %v2054
    %v2056 = vmul.f32 %v2055, 2.1237322e-06
    %v2057 = vadd.f32 %v2056, 0.00028619796
    %v2058 = vmul.f32 %v2055, %v2057
    %v2059 = vadd.f32 %v2058, 0.0036580483
    %v2060 = vmul.f32 %v2055, %v2059
    %v2061 = vadd.f32 %v2060, 0.05243302
    %v2062 = vmul.f32 %v2055, %v2061
    %v2063 = vadd.f32 %v2062, 0.18741608
    %v2064 = vmul.f32 %v2055, %v2063
    %v2065 = vadd.f32 %v2064, 1.1283791
    %v2066 = vmul.f32 %v1593, %v2065
    %v2067 = vmul.f32 %v2055, 3.8918573e-05
    %v2068 = vadd.f32 %v2067, 0.001143296
    %v2069 = vmul.f32 %v2055, %v2068
    %v2070 = vadd.f32 %v2069, 0.014752088
    %v2071 = vmul.f32 %v2055, %v2070
    %v2072 = vadd.f32 %v2071, 0.112945676
    %v2073 = vmul.f32 %v2055, %v2072
    %v2074 = vadd.f32 %v2073, 0.4994258
    %v2075 = vmul.f32 %v2055, %v2074
    %v2076 = vadd.f32 %v2075, 1.0
    %v2077 = vrcp.pop %v2076
    %v2078 = vmul.f32 %v2076, %v2077
    %v2079 = vsub.f32 1.0, %v2078
    %v2080 = vmul.f32 %v2077, %v2079
    %v2081 = vadd.f32 %v2077, %v2080
    %vm2082 = vweird.f32 %v2076
    %vm2083 = vweird.f32 %v2077
    %vm2084 = vmor %vm2082, %vm2083
    %v2085 = vsel %vm2084, %v2077, %v2081
    %v2086 = vand.u32 2147483647, %v2076
    %vm2087 = vcmp.eq.f32.partialorder %v2086, 8.507059e+37
    %v2088 = vand.u32 %v2076, 2147483648
    %v2089 = vor.u32 1.1754944e-38, %v2088
    %v2090 = vsel %vm2087, %v2089, %v2085
    %v2091 = vmul.f32 %v2066, %v2090
    %v2092 = vmin.f32 %v2091, 1.0
    %v2093 = vmax.f32 %v2092, -1.0
    %v2094 = vmul.f32 %v1594, %v1594
    %v2095 = vmin.f32 16.0, %v2094
    %v2096 = vmul.f32 %v2095, 2.1237322e-06
    %v2097 = vadd.f32 %v2096, 0.00028619796
    %v2098 = vmul.f32 %v2095, %v2097
    %v2099 = vadd.f32 %v2098, 0.0036580483
    %v2100 = vmul.f32 %v2095, %v2099
    %v2101 = vadd.f32 %v2100, 0.05243302
    %v2102 = vmul.f32 %v2095, %v2101
    %v2103 = vadd.f32 %v2102, 0.18741608
    %v2104 = vmul.f32 %v2095, %v2103
    %v2105 = vadd.f32 %v2104, 1.1283791
    %v2106 = vmul.f32 %v1594, %v2105
    %v2107 = vmul.f32 %v2095, 3.8918573e-05
    %v2108 = vadd.f32 %v2107, 0.001143296
    %v2109 = vmul.f32 %v2095, %v2108
    %v2110 = vadd.f32 %v2109, 0.014752088
    %v2111 = vmul.f32 %v2095, %v2110
    %v2112 = vadd.f32 %v2111, 0.112945676
    %v2113 = vmul.f32 %v2095, %v2112
    %v2114 = vadd.f32 %v2113, 0.4994258
    %v2115 = vmul.f32 %v2095, %v2114
    %v2116 = vadd.f32 %v2115, 1.0
    %v2117 = vrcp.pop %v2116
    %v2118 = vmul.f32 %v2116, %v2117
    %v2119 = vsub.f32 1.0, %v2118
    %v2120 = vmul.f32 %v2117, %v2119
    %v2121 = vadd.f32 %v2117, %v2120
    %vm2122 = vweird.f32 %v2116
    %vm2123 = vweird.f32 %v2117
    %vm2124 = vmor %vm2122, %vm2123
    %v2125 = vsel %vm2124, %v2117, %v2121
    %v2126 = vand.u32 2147483647, %v2116
    %vm2127 = vcmp.eq.f32.partialorder %v2126, 8.507059e+37
    %v2128 = vand.u32 %v2116, 2147483648
    %v2129 = vor.u32 1.1754944e-38, %v2128
    %v2130 = vsel %vm2127, %v2129, %v2125
    %v2131 = vmul.f32 %v2106, %v2130
    %v2132 = vmin.f32 %v2131, 1.0
    %v2133 = vmax.f32 %v2132, -1.0
    %v2134 = vmul.f32 %v1595, %v1595
    %v2135 = vmin.f32 16.0, %v2134
    %v2136 = vmul.f32 %v2135, 2.1237322e-06
    %v2137 = vadd.f32 %v2136, 0.00028619796
    %v2138 = vmul.f32 %v2135, %v2137
    %v2139 = vadd.f32 %v2138, 0.0036580483
    %v2140 = vmul.f32 %v2135, %v2139
    %v2141 = vadd.f32 %v2140, 0.05243302
    %v2142 = vmul.f32 %v2135, %v2141
    %v2143 = vadd.f32 %v2142, 0.18741608
    %v2144 = vmul.f32 %v2135, %v2143
    %v2145 = vadd.f32 %v2144, 1.1283791
    %v2146 = vmul.f32 %v1595, %v2145
    %v2147 = vmul.f32 %v2135, 3.8918573e-05
    %v2148 = vadd.f32 %v2147, 0.001143296
    %v2149 = vmul.f32 %v2135, %v2148
    %v2150 = vadd.f32 %v2149, 0.014752088
    %v2151 = vmul.f32 %v2135, %v2150
    %v2152 = vadd.f32 %v2151, 0.112945676
    %v2153 = vmul.f32 %v2135, %v2152
    %v2154 = vadd.f32 %v2153, 0.4994258
    %v2155 = vmul.f32 %v2135, %v2154
    %v2156 = vadd.f32 %v2155, 1.0
    %v2157 = vrcp.pop %v2156
    %v2158 = vmul.f32 %v2156, %v2157
    %v2159 = vsub.f32 1.0, %v2158
    %v2160 = vmul.f32 %v2157, %v2159
    %v2161 = vadd.f32 %v2157, %v2160
    %vm2162 = vweird.f32 %v2156
    %vm2163 = vweird.f32 %v2157
    %vm2164 = vmor %vm2162, %vm2163
    %v2165 = vsel %vm2164, %v2157, %v2161
    %v2166 = vand.u32 2147483647, %v2156
    %vm2167 = vcmp.eq.f32.partialorder %v2166, 8.507059e+37
    %v2168 = vand.u32 %v2156, 2147483648
    %v2169 = vor.u32 1.1754944e-38, %v2168
    %v2170 = vsel %vm2167, %v2169, %v2165
    %v2171 = vmul.f32 %v2146, %v2170
    %v2172 = vmin.f32 %v2171, 1.0
    %v2173 = vmax.f32 %v2172, -1.0
    %v2174 = vmul.f32 %v1596, %v1596
    %v2175 = vmin.f32 16.0, %v2174
    %v2176 = vmul.f32 %v2175, 2.1237322e-06
    %v2177 = vadd.f32 %v2176, 0.00028619796
    %v2178 = vmul.f32 %v2175, %v2177
    %v2179 = vadd.f32 %v2178, 0.0036580483
    %v2180 = vmul.f32 %v2175, %v2179
    %v2181 = vadd.f32 %v2180, 0.05243302
    %v2182 = vmul.f32 %v2175, %v2181
    %v2183 = vadd.f32 %v2182, 0.18741608
    %v2184 = vmul.f32 %v2175, %v2183
    %v2185 = vadd.f32 %v2184, 1.1283791
    %v2186 = vmul.f32 %v1596, %v2185
    %v2187 = vmul.f32 %v2175, 3.8918573e-05
    %v2188 = vadd.f32 %v2187, 0.001143296
    %v2189 = vmul.f32 %v2175, %v2188
    %v2190 = vadd.f32 %v2189, 0.014752088
    %v2191 = vmul.f32 %v2175, %v2190
    %v2192 = vadd.f32 %v2191, 0.112945676
    %v2193 = vmul.f32 %v2175, %v2192
    %v2194 = vadd.f32 %v2193, 0.4994258
    %v2195 = vmul.f32 %v2175, %v2194
    %v2196 = vadd.f32 %v2195, 1.0
    %v2197 = vrcp.pop %v2196
    %v2198 = vmul.f32 %v2196, %v2197
    %v2199 = vsub.f32 1.0, %v2198
    %v2200 = vmul.f32 %v2197, %v2199
    %v2201 = vadd.f32 %v2197, %v2200
    %vm2202 = vweird.f32 %v2196
    %vm2203 = vweird.f32 %v2197
    %vm2204 = vmor %vm2202, %vm2203
    %v2205 = vsel %vm2204, %v2197, %v2201
    %v2206 = vand.u32 2147483647, %v2196
    %vm2207 = vcmp.eq.f32.partialorder %v2206, 8.507059e+37
    %v2208 = vand.u32 %v2196, 2147483648
    %v2209 = vor.u32 1.1754944e-38, %v2208
    %v2210 = vsel %vm2207, %v2209, %v2205
    %v2211 = vmul.f32 %v2186, %v2210
    %v2212 = vmin.f32 %v2211, 1.0
    %v2213 = vmax.f32 %v2212, -1.0
    %v2214 = vmul.f32 %v1597, %v1597
    %v2215 = vmin.f32 16.0, %v2214
    %v2216 = vmul.f32 %v2215, 2.1237322e-06
    %v2217 = vadd.f32 %v2216, 0.00028619796
    %v2218 = vmul.f32 %v2215, %v2217
    %v2219 = vadd.f32 %v2218, 0.0036580483
    %v2220 = vmul.f32 %v2215, %v2219
    %v2221 = vadd.f32 %v2220, 0.05243302
    %v2222 = vmul.f32 %v2215, %v2221
    %v2223 = vadd.f32 %v2222, 0.18741608
    %v2224 = vmul.f32 %v2215, %v2223
    %v2225 = vadd.f32 %v2224, 1.1283791
    %v2226 = vmul.f32 %v1597, %v2225
    %v2227 = vmul.f32 %v2215, 3.8918573e-05
    %v2228 = vadd.f32 %v2227, 0.001143296
    %v2229 = vmul.f32 %v2215, %v2228
    %v2230 = vadd.f32 %v2229, 0.014752088
    %v2231 = vmul.f32 %v2215, %v2230
    %v2232 = vadd.f32 %v2231, 0.112945676
    %v2233 = vmul.f32 %v2215, %v2232
    %v2234 = vadd.f32 %v2233, 0.4994258
    %v2235 = vmul.f32 %v2215, %v2234
    %v2236 = vadd.f32 %v2235, 1.0
    %v2237 = vrcp.pop %v2236
    %v2238 = vmul.f32 %v2236, %v2237
    %v2239 = vsub.f32 1.0, %v2238
    %v2240 = vmul.f32 %v2237, %v2239
    %v2241 = vadd.f32 %v2237, %v2240
    %vm2242 = vweird.f32 %v2236
    %vm2243 = vweird.f32 %v2237
    %vm2244 = vmor %vm2242, %vm2243
    %v2245 = vsel %vm2244, %v2237, %v2241
    %v2246 = vand.u32 2147483647, %v2236
    %vm2247 = vcmp.eq.f32.partialorder %v2246, 8.507059e+37
    %v2248 = vand.u32 %v2236, 2147483648
    %v2249 = vor.u32 1.1754944e-38, %v2248
    %v2250 = vsel %vm2247, %v2249, %v2245
    %v2251 = vmul.f32 %v2226, %v2250
    %v2252 = vmin.f32 %v2251, 1.0
    %v2253 = vmax.f32 %v2252, -1.0
    %v2254 = vmul.f32 %v1598, %v1598
    %v2255 = vmin.f32 16.0, %v2254
    %v2256 = vmul.f32 %v2255, 2.1237322e-06
    %v2257 = vadd.f32 %v2256, 0.00028619796
    %v2258 = vmul.f32 %v2255, %v2257
    %v2259 = vadd.f32 %v2258, 0.0036580483
    %v2260 = vmul.f32 %v2255, %v2259
    %v2261 = vadd.f32 %v2260, 0.05243302
    %v2262 = vmul.f32 %v2255, %v2261
    %v2263 = vadd.f32 %v2262, 0.18741608
    %v2264 = vmul.f32 %v2255, %v2263
    %v2265 = vadd.f32 %v2264, 1.1283791
    %v2266 = vmul.f32 %v1598, %v2265
    %v2267 = vmul.f32 %v2255, 3.8918573e-05
    %v2268 = vadd.f32 %v2267, 0.001143296
    %v2269 = vmul.f32 %v2255, %v2268
    %v2270 = vadd.f32 %v2269, 0.014752088
    %v2271 = vmul.f32 %v2255, %v2270
    %v2272 = vadd.f32 %v2271, 0.112945676
    %v2273 = vmul.f32 %v2255, %v2272
    %v2274 = vadd.f32 %v2273, 0.4994258
    %v2275 = vmul.f32 %v2255, %v2274
    %v2276 = vadd.f32 %v2275, 1.0
    %v2277 = vrcp.pop %v2276
    %v2278 = vmul.f32 %v2276, %v2277
    %v2279 = vsub.f32 1.0, %v2278
    %v2280 = vmul.f32 %v2277, %v2279
    %v2281 = vadd.f32 %v2277, %v2280
    %vm2282 = vweird.f32 %v2276
    %vm2283 = vweird.f32 %v2277
    %vm2284 = vmor %vm2282, %vm2283
    %v2285 = vsel %vm2284, %v2277, %v2281
    %v2286 = vand.u32 2147483647, %v2276
    %vm2287 = vcmp.eq.f32.partialorder %v2286, 8.507059e+37
    %v2288 = vand.u32 %v2276, 2147483648
    %v2289 = vor.u32 1.1754944e-38, %v2288
    %v2290 = vsel %vm2287, %v2289, %v2285
    %v2291 = vmul.f32 %v2266, %v2290
    %v2292 = vmin.f32 %v2291, 1.0
    %v2293 = vmax.f32 %v2292, -1.0
    %v2294 = vmul.f32 %v1599, %v1599
    %v2295 = vmin.f32 16.0, %v2294
    %v2296 = vmul.f32 %v2295, 2.1237322e-06
    %v2297 = vadd.f32 %v2296, 0.00028619796
    %v2298 = vmul.f32 %v2295, %v2297
    %v2299 = vadd.f32 %v2298, 0.0036580483
    %v2300 = vmul.f32 %v2295, %v2299
    %v2301 = vadd.f32 %v2300, 0.05243302
    %v2302 = vmul.f32 %v2295, %v2301
    %v2303 = vadd.f32 %v2302, 0.18741608
    %v2304 = vmul.f32 %v2295, %v2303
    %v2305 = vadd.f32 %v2304, 1.1283791
    %v2306 = vmul.f32 %v1599, %v2305
    %v2307 = vmul.f32 %v2295, 3.8918573e-05
    %v2308 = vadd.f32 %v2307, 0.001143296
    %v2309 = vmul.f32 %v2295, %v2308
    %v2310 = vadd.f32 %v2309, 0.014752088
    %v2311 = vmul.f32 %v2295, %v2310
    %v2312 = vadd.f32 %v2311, 0.112945676
    %v2313 = vmul.f32 %v2295, %v2312
    %v2314 = vadd.f32 %v2313, 0.4994258
    %v2315 = vmul.f32 %v2295, %v2314
    %v2316 = vadd.f32 %v2315, 1.0
    %v2317 = vrcp.pop %v2316
    %v2318 = vmul.f32 %v2316, %v2317
    %v2319 = vsub.f32 1.0, %v2318
    %v2320 = vmul.f32 %v2317, %v2319
    %v2321 = vadd.f32 %v2317, %v2320
    %vm2322 = vweird.f32 %v2316
    %vm2323 = vweird.f32 %v2317
    %vm2324 = vmor %vm2322, %vm2323
    %v2325 = vsel %vm2324, %v2317, %v2321
    %v2326 = vand.u32 2147483647, %v2316
    %vm2327 = vcmp.eq.f32.partialorder %v2326, 8.507059e+37
    %v2328 = vand.u32 %v2316, 2147483648
    %v2329 = vor.u32 1.1754944e-38, %v2328
    %v2330 = vsel %vm2327, %v2329, %v2325
    %v2331 = vmul.f32 %v2306, %v2330
    %v2332 = vmin.f32 %v2331, 1.0
    %v2333 = vmax.f32 %v2332, -1.0
    %v2334 = vmul.f32 %v1600, %v1600
    %v2335 = vmin.f32 16.0, %v2334
    %v2336 = vmul.f32 %v2335, 2.1237322e-06
    %v2337 = vadd.f32 %v2336, 0.00028619796
    %v2338 = vmul.f32 %v2335, %v2337
    %v2339 = vadd.f32 %v2338, 0.0036580483
    %v2340 = vmul.f32 %v2335, %v2339
    %v2341 = vadd.f32 %v2340, 0.05243302
    %v2342 = vmul.f32 %v2335, %v2341
    %v2343 = vadd.f32 %v2342, 0.18741608
    %v2344 = vmul.f32 %v2335, %v2343
    %v2345 = vadd.f32 %v2344, 1.1283791
    %v2346 = vmul.f32 %v1600, %v2345
    %v2347 = vmul.f32 %v2335, 3.8918573e-05
    %v2348 = vadd.f32 %v2347, 0.001143296
    %v2349 = vmul.f32 %v2335, %v2348
    %v2350 = vadd.f32 %v2349, 0.014752088
    %v2351 = vmul.f32 %v2335, %v2350
    %v2352 = vadd.f32 %v2351, 0.112945676
    %v2353 = vmul.f32 %v2335, %v2352
    %v2354 = vadd.f32 %v2353, 0.4994258
    %v2355 = vmul.f32 %v2335, %v2354
    %v2356 = vadd.f32 %v2355, 1.0
    %v2357 = vrcp.pop %v2356
    %v2358 = vmul.f32 %v2356, %v2357
    %v2359 = vsub.f32 1.0, %v2358
    %v2360 = vmul.f32 %v2357, %v2359
    %v2361 = vadd.f32 %v2357, %v2360
    %vm2362 = vweird.f32 %v2356
    %vm2363 = vweird.f32 %v2357
    %vm2364 = vmor %vm2362, %vm2363
    %v2365 = vsel %vm2364, %v2357, %v2361
    %v2366 = vand.u32 2147483647, %v2356
    %vm2367 = vcmp.eq.f32.partialorder %v2366, 8.507059e+37
    %v2368 = vand.u32 %v2356, 2147483648
    %v2369 = vor.u32 1.1754944e-38, %v2368
    %v2370 = vsel %vm2367, %v2369, %v2365
    %v2371 = vmul.f32 %v2346, %v2370
    %v2372 = vmin.f32 %v2371, 1.0
    %v2373 = vmax.f32 %v2372, -1.0
    %v2374 = vmul.f32 %v1601, %v1601
    %v2375 = vmin.f32 16.0, %v2374
    %v2376 = vmul.f32 %v2375, 2.1237322e-06
    %v2377 = vadd.f32 %v2376, 0.00028619796
    %v2378 = vmul.f32 %v2375, %v2377
    %v2379 = vadd.f32 %v2378, 0.0036580483
    %v2380 = vmul.f32 %v2375, %v2379
    %v2381 = vadd.f32 %v2380, 0.05243302
    %v2382 = vmul.f32 %v2375, %v2381
    %v2383 = vadd.f32 %v2382, 0.18741608
    %v2384 = vmul.f32 %v2375, %v2383
    %v2385 = vadd.f32 %v2384, 1.1283791
    %v2386 = vmul.f32 %v1601, %v2385
    %v2387 = vmul.f32 %v2375, 3.8918573e-05
    %v2388 = vadd.f32 %v2387, 0.001143296
    %v2389 = vmul.f32 %v2375, %v2388
    %v2390 = vadd.f32 %v2389, 0.014752088
    %v2391 = vmul.f32 %v2375, %v2390
    %v2392 = vadd.f32 %v2391, 0.112945676
    %v2393 = vmul.f32 %v2375, %v2392
    %v2394 = vadd.f32 %v2393, 0.4994258
    %v2395 = vmul.f32 %v2375, %v2394
    %v2396 = vadd.f32 %v2395, 1.0
    %v2397 = vrcp.pop %v2396
    %v2398 = vmul.f32 %v2396, %v2397
    %v2399 = vsub.f32 1.0, %v2398
    %v2400 = vmul.f32 %v2397, %v2399
    %v2401 = vadd.f32 %v2397, %v2400
    %vm2402 = vweird.f32 %v2396
    %vm2403 = vweird.f32 %v2397
    %vm2404 = vmor %vm2402, %vm2403
    %v2405 = vsel %vm2404, %v2397, %v2401
    %v2406 = vand.u32 2147483647, %v2396
    %vm2407 = vcmp.eq.f32.partialorder %v2406, 8.507059e+37
    %v2408 = vand.u32 %v2396, 2147483648
    %v2409 = vor.u32 1.1754944e-38, %v2408
    %v2410 = vsel %vm2407, %v2409, %v2405
    %v2411 = vmul.f32 %v2386, %v2410
    %v2412 = vmin.f32 %v2411, 1.0
    %v2413 = vmax.f32 %v2412, -1.0
    %v2414 = vmul.f32 %v1602, %v1602
    %v2415 = vmin.f32 16.0, %v2414
    %v2416 = vmul.f32 %v2415, 2.1237322e-06
    %v2417 = vadd.f32 %v2416, 0.00028619796
    %v2418 = vmul.f32 %v2415, %v2417
    %v2419 = vadd.f32 %v2418, 0.0036580483
    %v2420 = vmul.f32 %v2415, %v2419
    %v2421 = vadd.f32 %v2420, 0.05243302
    %v2422 = vmul.f32 %v2415, %v2421
    %v2423 = vadd.f32 %v2422, 0.18741608
    %v2424 = vmul.f32 %v2415, %v2423
    %v2425 = vadd.f32 %v2424, 1.1283791
    %v2426 = vmul.f32 %v1602, %v2425
    %v2427 = vmul.f32 %v2415, 3.8918573e-05
    %v2428 = vadd.f32 %v2427, 0.001143296
    %v2429 = vmul.f32 %v2415, %v2428
    %v2430 = vadd.f32 %v2429, 0.014752088
    %v2431 = vmul.f32 %v2415, %v2430
    %v2432 = vadd.f32 %v2431, 0.112945676
    %v2433 = vmul.f32 %v2415, %v2432
    %v2434 = vadd.f32 %v2433, 0.4994258
    %v2435 = vmul.f32 %v2415, %v2434
    %v2436 = vadd.f32 %v2435, 1.0
    %v2437 = vrcp.pop %v2436
    %v2438 = vmul.f32 %v2436, %v2437
    %v2439 = vsub.f32 1.0, %v2438
    %v2440 = vmul.f32 %v2437, %v2439
    %v2441 = vadd.f32 %v2437, %v2440
    %vm2442 = vweird.f32 %v2436
    %vm2443 = vweird.f32 %v2437
    %vm2444 = vmor %vm2442, %vm2443
    %v2445 = vsel %vm2444, %v2437, %v2441
    %v2446 = vand.u32 2147483647, %v2436
    %vm2447 = vcmp.eq.f32.partialorder %v2446, 8.507059e+37
    %v2448 = vand.u32 %v2436, 2147483648
    %v2449 = vor.u32 1.1754944e-38, %v2448
    %v2450 = vsel %vm2447, %v2449, %v2445
    %v2451 = vmul.f32 %v2426, %v2450
    %v2452 = vmin.f32 %v2451, 1.0
    %v2453 = vmax.f32 %v2452, -1.0
    %v2454 = vmul.f32 %v1603, %v1603
    %v2455 = vmin.f32 16.0, %v2454
    %v2456 = vmul.f32 %v2455, 2.1237322e-06
    %v2457 = vadd.f32 %v2456, 0.00028619796
    %v2458 = vmul.f32 %v2455, %v2457
    %v2459 = vadd.f32 %v2458, 0.0036580483
    %v2460 = vmul.f32 %v2455, %v2459
    %v2461 = vadd.f32 %v2460, 0.05243302
    %v2462 = vmul.f32 %v2455, %v2461
    %v2463 = vadd.f32 %v2462, 0.18741608
    %v2464 = vmul.f32 %v2455, %v2463
    %v2465 = vadd.f32 %v2464, 1.1283791
    %v2466 = vmul.f32 %v1603, %v2465
    %v2467 = vmul.f32 %v2455, 3.8918573e-05
    %v2468 = vadd.f32 %v2467, 0.001143296
    %v2469 = vmul.f32 %v2455, %v2468
    %v2470 = vadd.f32 %v2469, 0.014752088
    %v2471 = vmul.f32 %v2455, %v2470
    %v2472 = vadd.f32 %v2471, 0.112945676
    %v2473 = vmul.f32 %v2455, %v2472
    %v2474 = vadd.f32 %v2473, 0.4994258
    %v2475 = vmul.f32 %v2455, %v2474
    %v2476 = vadd.f32 %v2475, 1.0
    %v2477 = vrcp.pop %v2476
    %v2478 = vmul.f32 %v2476, %v2477
    %v2479 = vsub.f32 1.0, %v2478
    %v2480 = vmul.f32 %v2477, %v2479
    %v2481 = vadd.f32 %v2477, %v2480
    %vm2482 = vweird.f32 %v2476
    %vm2483 = vweird.f32 %v2477
    %vm2484 = vmor %vm2482, %vm2483
    %v2485 = vsel %vm2484, %v2477, %v2481
    %v2486 = vand.u32 2147483647, %v2476
    %vm2487 = vcmp.eq.f32.partialorder %v2486, 8.507059e+37
    %v2488 = vand.u32 %v2476, 2147483648
    %v2489 = vor.u32 1.1754944e-38, %v2488
    %v2490 = vsel %vm2487, %v2489, %v2485
    %v2491 = vmul.f32 %v2466, %v2490
    %v2492 = vmin.f32 %v2491, 1.0
    %v2493 = vmax.f32 %v2492, -1.0
    %v2494 = vmul.f32 %v1604, %v1604
    %v2495 = vmin.f32 16.0, %v2494
    %v2496 = vmul.f32 %v2495, 2.1237322e-06
    %v2497 = vadd.f32 %v2496, 0.00028619796
    %v2498 = vmul.f32 %v2495, %v2497
    %v2499 = vadd.f32 %v2498, 0.0036580483
    %v2500 = vmul.f32 %v2495, %v2499
    %v2501 = vadd.f32 %v2500, 0.05243302
    %v2502 = vmul.f32 %v2495, %v2501
    %v2503 = vadd.f32 %v2502, 0.18741608
    %v2504 = vmul.f32 %v2495, %v2503
    %v2505 = vadd.f32 %v2504, 1.1283791
    %v2506 = vmul.f32 %v1604, %v2505
    %v2507 = vmul.f32 %v2495, 3.8918573e-05
    %v2508 = vadd.f32 %v2507, 0.001143296
    %v2509 = vmul.f32 %v2495, %v2508
    %v2510 = vadd.f32 %v2509, 0.014752088
    %v2511 = vmul.f32 %v2495, %v2510
    %v2512 = vadd.f32 %v2511, 0.112945676
    %v2513 = vmul.f32 %v2495, %v2512
    %v2514 = vadd.f32 %v2513, 0.4994258
    %v2515 = vmul.f32 %v2495, %v2514
    %v2516 = vadd.f32 %v2515, 1.0
    %v2517 = vrcp.pop %v2516
    %v2518 = vmul.f32 %v2516, %v2517
    %v2519 = vsub.f32 1.0, %v2518
    %v2520 = vmul.f32 %v2517, %v2519
    %v2521 = vadd.f32 %v2517, %v2520
    %vm2522 = vweird.f32 %v2516
    %vm2523 = vweird.f32 %v2517
    %vm2524 = vmor %vm2522, %vm2523
    %v2525 = vsel %vm2524, %v2517, %v2521
    %v2526 = vand.u32 2147483647, %v2516
    %vm2527 = vcmp.eq.f32.partialorder %v2526, 8.507059e+37
    %v2528 = vand.u32 %v2516, 2147483648
    %v2529 = vor.u32 1.1754944e-38, %v2528
    %v2530 = vsel %vm2527, %v2529, %v2525
    %v2531 = vmul.f32 %v2506, %v2530
    %v2532 = vmin.f32 %v2531, 1.0
    %v2533 = vmax.f32 %v2532, -1.0
    %v2534 = vmul.f32 %v1605, %v1605
    %v2535 = vmin.f32 16.0, %v2534
    %v2536 = vmul.f32 %v2535, 2.1237322e-06
    %v2537 = vadd.f32 %v2536, 0.00028619796
    %v2538 = vmul.f32 %v2535, %v2537
    %v2539 = vadd.f32 %v2538, 0.0036580483
    %v2540 = vmul.f32 %v2535, %v2539
    %v2541 = vadd.f32 %v2540, 0.05243302
    %v2542 = vmul.f32 %v2535, %v2541
    %v2543 = vadd.f32 %v2542, 0.18741608
    %v2544 = vmul.f32 %v2535, %v2543
    %v2545 = vadd.f32 %v2544, 1.1283791
    %v2546 = vmul.f32 %v1605, %v2545
    %v2547 = vmul.f32 %v2535, 3.8918573e-05
    %v2548 = vadd.f32 %v2547, 0.001143296
    %v2549 = vmul.f32 %v2535, %v2548
    %v2550 = vadd.f32 %v2549, 0.014752088
    %v2551 = vmul.f32 %v2535, %v2550
    %v2552 = vadd.f32 %v2551, 0.112945676
    %v2553 = vmul.f32 %v2535, %v2552
    %v2554 = vadd.f32 %v2553, 0.4994258
    %v2555 = vmul.f32 %v2535, %v2554
    %v2556 = vadd.f32 %v2555, 1.0
    %v2557 = vrcp.pop %v2556
    %v2558 = vmul.f32 %v2556, %v2557
    %v2559 = vsub.f32 1.0, %v2558
    %v2560 = vmul.f32 %v2557, %v2559
    %v2561 = vadd.f32 %v2557, %v2560
    %vm2562 = vweird.f32 %v2556
    %vm2563 = vweird.f32 %v2557
    %vm2564 = vmor %vm2562, %vm2563
    %v2565 = vsel %vm2564, %v2557, %v2561
    %v2566 = vand.u32 2147483647, %v2556
    %vm2567 = vcmp.eq.f32.partialorder %v2566, 8.507059e+37
    %v2568 = vand.u32 %v2556, 2147483648
    %v2569 = vor.u32 1.1754944e-38, %v2568
    %v2570 = vsel %vm2567, %v2569, %v2565
    %v2571 = vmul.f32 %v2546, %v2570
    %v2572 = vmin.f32 %v2571, 1.0
    %v2573 = vmax.f32 %v2572, -1.0
    %v2574 = vmul.f32 %v1606, %v1606
    %v2575 = vmin.f32 16.0, %v2574
    %v2576 = vmul.f32 %v2575, 2.1237322e-06
    %v2577 = vadd.f32 %v2576, 0.00028619796
    %v2578 = vmul.f32 %v2575, %v2577
    %v2579 = vadd.f32 %v2578, 0.0036580483
    %v2580 = vmul.f32 %v2575, %v2579
    %v2581 = vadd.f32 %v2580, 0.05243302
    %v2582 = vmul.f32 %v2575, %v2581
    %v2583 = vadd.f32 %v2582, 0.18741608
    %v2584 = vmul.f32 %v2575, %v2583
    %v2585 = vadd.f32 %v2584, 1.1283791
    %v2586 = vmul.f32 %v1606, %v2585
    %v2587 = vmul.f32 %v2575, 3.8918573e-05
    %v2588 = vadd.f32 %v2587, 0.001143296
    %v2589 = vmul.f32 %v2575, %v2588
    %v2590 = vadd.f32 %v2589, 0.014752088
    %v2591 = vmul.f32 %v2575, %v2590
    %v2592 = vadd.f32 %v2591, 0.112945676
    %v2593 = vmul.f32 %v2575, %v2592
    %v2594 = vadd.f32 %v2593, 0.4994258
    %v2595 = vmul.f32 %v2575, %v2594
    %v2596 = vadd.f32 %v2595, 1.0
    %v2597 = vrcp.pop %v2596
    %v2598 = vmul.f32 %v2596, %v2597
    %v2599 = vsub.f32 1.0, %v2598
    %v2600 = vmul.f32 %v2597, %v2599
    %v2601 = vadd.f32 %v2597, %v2600
    %vm2602 = vweird.f32 %v2596
    %vm2603 = vweird.f32 %v2597
    %vm2604 = vmor %vm2602, %vm2603
    %v2605 = vsel %vm2604, %v2597, %v2601
    %v2606 = vand.u32 2147483647, %v2596
    %vm2607 = vcmp.eq.f32.partialorder %v2606, 8.507059e+37
    %v2608 = vand.u32 %v2596, 2147483648
    %v2609 = vor.u32 1.1754944e-38, %v2608
    %v2610 = vsel %vm2607, %v2609, %v2605
    %v2611 = vmul.f32 %v2586, %v2610
    %v2612 = vmin.f32 %v2611, 1.0
    %v2613 = vmax.f32 %v2612, -1.0
    %v2614 = vmul.f32 %v1607, %v1607
    %v2615 = vmin.f32 16.0, %v2614
    %v2616 = vmul.f32 %v2615, 2.1237322e-06
    %v2617 = vadd.f32 %v2616, 0.00028619796
    %v2618 = vmul.f32 %v2615, %v2617
    %v2619 = vadd.f32 %v2618, 0.0036580483
    %v2620 = vmul.f32 %v2615, %v2619
    %v2621 = vadd.f32 %v2620, 0.05243302
    %v2622 = vmul.f32 %v2615, %v2621
    %v2623 = vadd.f32 %v2622, 0.18741608
    %v2624 = vmul.f32 %v2615, %v2623
    %v2625 = vadd.f32 %v2624, 1.1283791
    %v2626 = vmul.f32 %v1607, %v2625
    %v2627 = vmul.f32 %v2615, 3.8918573e-05
    %v2628 = vadd.f32 %v2627, 0.001143296
    %v2629 = vmul.f32 %v2615, %v2628
    %v2630 = vadd.f32 %v2629, 0.014752088
    %v2631 = vmul.f32 %v2615, %v2630
    %v2632 = vadd.f32 %v2631, 0.112945676
    %v2633 = vmul.f32 %v2615, %v2632
    %v2634 = vadd.f32 %v2633, 0.4994258
    %v2635 = vmul.f32 %v2615, %v2634
    %v2636 = vadd.f32 %v2635, 1.0
    %v2637 = vrcp.pop %v2636
    %v2638 = vmul.f32 %v2636, %v2637
    %v2639 = vsub.f32 1.0, %v2638
    %v2640 = vmul.f32 %v2637, %v2639
    %v2641 = vadd.f32 %v2637, %v2640
    %vm2642 = vweird.f32 %v2636
    %vm2643 = vweird.f32 %v2637
    %vm2644 = vmor %vm2642, %vm2643
    %v2645 = vsel %vm2644, %v2637, %v2641
    %v2646 = vand.u32 2147483647, %v2636
    %vm2647 = vcmp.eq.f32.partialorder %v2646, 8.507059e+37
    %v2648 = vand.u32 %v2636, 2147483648
    %v2649 = vor.u32 1.1754944e-38, %v2648
    %v2650 = vsel %vm2647, %v2649, %v2645
    %v2651 = vmul.f32 %v2626, %v2650
    %v2652 = vmin.f32 %v2651, 1.0
    %v2653 = vmax.f32 %v2652, -1.0
    %v2654 = vmul.f32 %v1608, %v1608
    %v2655 = vmin.f32 16.0, %v2654
    %v2656 = vmul.f32 %v2655, 2.1237322e-06
    %v2657 = vadd.f32 %v2656, 0.00028619796
    %v2658 = vmul.f32 %v2655, %v2657
    %v2659 = vadd.f32 %v2658, 0.0036580483
    %v2660 = vmul.f32 %v2655, %v2659
    %v2661 = vadd.f32 %v2660, 0.05243302
    %v2662 = vmul.f32 %v2655, %v2661
    %v2663 = vadd.f32 %v2662, 0.18741608
    %v2664 = vmul.f32 %v2655, %v2663
    %v2665 = vadd.f32 %v2664, 1.1283791
    %v2666 = vmul.f32 %v1608, %v2665
    %v2667 = vmul.f32 %v2655, 3.8918573e-05
    %v2668 = vadd.f32 %v2667, 0.001143296
    %v2669 = vmul.f32 %v2655, %v2668
    %v2670 = vadd.f32 %v2669, 0.014752088
    %v2671 = vmul.f32 %v2655, %v2670
    %v2672 = vadd.f32 %v2671, 0.112945676
    %v2673 = vmul.f32 %v2655, %v2672
    %v2674 = vadd.f32 %v2673, 0.4994258
    %v2675 = vmul.f32 %v2655, %v2674
    %v2676 = vadd.f32 %v2675, 1.0
    %v2677 = vrcp.pop %v2676
    %v2678 = vmul.f32 %v2676, %v2677
    %v2679 = vsub.f32 1.0, %v2678
    %v2680 = vmul.f32 %v2677, %v2679
    %v2681 = vadd.f32 %v2677, %v2680
    %vm2682 = vweird.f32 %v2676
    %vm2683 = vweird.f32 %v2677
    %vm2684 = vmor %vm2682, %vm2683
    %v2685 = vsel %vm2684, %v2677, %v2681
    %v2686 = vand.u32 2147483647, %v2676
    %vm2687 = vcmp.eq.f32.partialorder %v2686, 8.507059e+37
    %v2688 = vand.u32 %v2676, 2147483648
    %v2689 = vor.u32 1.1754944e-38, %v2688
    %v2690 = vsel %vm2687, %v2689, %v2685
    %v2691 = vmul.f32 %v2666, %v2690
    %v2692 = vmin.f32 %v2691, 1.0
    %v2693 = vmax.f32 %v2692, -1.0
    %v2694 = vmul.f32 %v1609, %v1609
    %v2695 = vmin.f32 16.0, %v2694
    %v2696 = vmul.f32 %v2695, 2.1237322e-06
    %v2697 = vadd.f32 %v2696, 0.00028619796
    %v2698 = vmul.f32 %v2695, %v2697
    %v2699 = vadd.f32 %v2698, 0.0036580483
    %v2700 = vmul.f32 %v2695, %v2699
    %v2701 = vadd.f32 %v2700, 0.05243302
    %v2702 = vmul.f32 %v2695, %v2701
    %v2703 = vadd.f32 %v2702, 0.18741608
    %v2704 = vmul.f32 %v2695, %v2703
    %v2705 = vadd.f32 %v2704, 1.1283791
    %v2706 = vmul.f32 %v1609, %v2705
    %v2707 = vmul.f32 %v2695, 3.8918573e-05
    %v2708 = vadd.f32 %v2707, 0.001143296
    %v2709 = vmul.f32 %v2695, %v2708
    %v2710 = vadd.f32 %v2709, 0.014752088
    %v2711 = vmul.f32 %v2695, %v2710
    %v2712 = vadd.f32 %v2711, 0.112945676
    %v2713 = vmul.f32 %v2695, %v2712
    %v2714 = vadd.f32 %v2713, 0.4994258
    %v2715 = vmul.f32 %v2695, %v2714
    %v2716 = vadd.f32 %v2715, 1.0
    %v2717 = vrcp.pop %v2716
    %v2718 = vmul.f32 %v2716, %v2717
    %v2719 = vsub.f32 1.0, %v2718
    %v2720 = vmul.f32 %v2717, %v2719
    %v2721 = vadd.f32 %v2717, %v2720
    %vm2722 = vweird.f32 %v2716
    %vm2723 = vweird.f32 %v2717
    %vm2724 = vmor %vm2722, %vm2723
    %v2725 = vsel %vm2724, %v2717, %v2721
    %v2726 = vand.u32 2147483647, %v2716
    %vm2727 = vcmp.eq.f32.partialorder %v2726, 8.507059e+37
    %v2728 = vand.u32 %v2716, 2147483648
    %v2729 = vor.u32 1.1754944e-38, %v2728
    %v2730 = vsel %vm2727, %v2729, %v2725
    %v2731 = vmul.f32 %v2706, %v2730
    %v2732 = vmin.f32 %v2731, 1.0
    %v2733 = vmax.f32 %v2732, -1.0
    %v2734 = vmul.f32 %v1610, %v1610
    %v2735 = vmin.f32 16.0, %v2734
    %v2736 = vmul.f32 %v2735, 2.1237322e-06
    %v2737 = vadd.f32 %v2736, 0.00028619796
    %v2738 = vmul.f32 %v2735, %v2737
    %v2739 = vadd.f32 %v2738, 0.0036580483
    %v2740 = vmul.f32 %v2735, %v2739
    %v2741 = vadd.f32 %v2740, 0.05243302
    %v2742 = vmul.f32 %v2735, %v2741
    %v2743 = vadd.f32 %v2742, 0.18741608
    %v2744 = vmul.f32 %v2735, %v2743
    %v2745 = vadd.f32 %v2744, 1.1283791
    %v2746 = vmul.f32 %v1610, %v2745
    %v2747 = vmul.f32 %v2735, 3.8918573e-05
    %v2748 = vadd.f32 %v2747, 0.001143296
    %v2749 = vmul.f32 %v2735, %v2748
    %v2750 = vadd.f32 %v2749, 0.014752088
    %v2751 = vmul.f32 %v2735, %v2750
    %v2752 = vadd.f32 %v2751, 0.112945676
    %v2753 = vmul.f32 %v2735, %v2752
    %v2754 = vadd.f32 %v2753, 0.4994258
    %v2755 = vmul.f32 %v2735, %v2754
    %v2756 = vadd.f32 %v2755, 1.0
    %v2757 = vrcp.pop %v2756
    %v2758 = vmul.f32 %v2756, %v2757
    %v2759 = vsub.f32 1.0, %v2758
    %v2760 = vmul.f32 %v2757, %v2759
    %v2761 = vadd.f32 %v2757, %v2760
    %vm2762 = vweird.f32 %v2756
    %vm2763 = vweird.f32 %v2757
    %vm2764 = vmor %vm2762, %vm2763
    %v2765 = vsel %vm2764, %v2757, %v2761
    %v2766 = vand.u32 2147483647, %v2756
    %vm2767 = vcmp.eq.f32.partialorder %v2766, 8.507059e+37
    %v2768 = vand.u32 %v2756, 2147483648
    %v2769 = vor.u32 1.1754944e-38, %v2768
    %v2770 = vsel %vm2767, %v2769, %v2765
    %v2771 = vmul.f32 %v2746, %v2770
    %v2772 = vmin.f32 %v2771, 1.0
    %v2773 = vmax.f32 %v2772, -1.0
    %v2774 = vmul.f32 %v1611, %v1611
    %v2775 = vmin.f32 16.0, %v2774
    %v2776 = vmul.f32 %v2775, 2.1237322e-06
    %v2777 = vadd.f32 %v2776, 0.00028619796
    %v2778 = vmul.f32 %v2775, %v2777
    %v2779 = vadd.f32 %v2778, 0.0036580483
    %v2780 = vmul.f32 %v2775, %v2779
    %v2781 = vadd.f32 %v2780, 0.05243302
    %v2782 = vmul.f32 %v2775, %v2781
    %v2783 = vadd.f32 %v2782, 0.18741608
    %v2784 = vmul.f32 %v2775, %v2783
    %v2785 = vadd.f32 %v2784, 1.1283791
    %v2786 = vmul.f32 %v1611, %v2785
    %v2787 = vmul.f32 %v2775, 3.8918573e-05
    %v2788 = vadd.f32 %v2787, 0.001143296
    %v2789 = vmul.f32 %v2775, %v2788
    %v2790 = vadd.f32 %v2789, 0.014752088
    %v2791 = vmul.f32 %v2775, %v2790
    %v2792 = vadd.f32 %v2791, 0.112945676
    %v2793 = vmul.f32 %v2775, %v2792
    %v2794 = vadd.f32 %v2793, 0.4994258
    %v2795 = vmul.f32 %v2775, %v2794
    %v2796 = vadd.f32 %v2795, 1.0
    %v2797 = vrcp.pop %v2796
    %v2798 = vmul.f32 %v2796, %v2797
    %v2799 = vsub.f32 1.0, %v2798
    %v2800 = vmul.f32 %v2797, %v2799
    %v2801 = vadd.f32 %v2797, %v2800
    %vm2802 = vweird.f32 %v2796
    %vm2803 = vweird.f32 %v2797
    %vm2804 = vmor %vm2802, %vm2803
    %v2805 = vsel %vm2804, %v2797, %v2801
    %v2806 = vand.u32 2147483647, %v2796
    %vm2807 = vcmp.eq.f32.partialorder %v2806, 8.507059e+37
    %v2808 = vand.u32 %v2796, 2147483648
    %v2809 = vor.u32 1.1754944e-38, %v2808
    %v2810 = vsel %vm2807, %v2809, %v2805
    %v2811 = vmul.f32 %v2786, %v2810
    %v2812 = vmin.f32 %v2811, 1.0
    %v2813 = vmax.f32 %v2812, -1.0
    %v2814 = vmul.f32 %v1612, %v1612
    %v2815 = vmin.f32 16.0, %v2814
    %v2816 = vmul.f32 %v2815, 2.1237322e-06
    %v2817 = vadd.f32 %v2816, 0.00028619796
    %v2818 = vmul.f32 %v2815, %v2817
    %v2819 = vadd.f32 %v2818, 0.0036580483
    %v2820 = vmul.f32 %v2815, %v2819
    %v2821 = vadd.f32 %v2820, 0.05243302
    %v2822 = vmul.f32 %v2815, %v2821
    %v2823 = vadd.f32 %v2822, 0.18741608
    %v2824 = vmul.f32 %v2815, %v2823
    %v2825 = vadd.f32 %v2824, 1.1283791
    %v2826 = vmul.f32 %v1612, %v2825
    %v2827 = vmul.f32 %v2815, 3.8918573e-05
    %v2828 = vadd.f32 %v2827, 0.001143296
    %v2829 = vmul.f32 %v2815, %v2828
    %v2830 = vadd.f32 %v2829, 0.014752088
    %v2831 = vmul.f32 %v2815, %v2830
    %v2832 = vadd.f32 %v2831, 0.112945676
    %v2833 = vmul.f32 %v2815, %v2832
    %v2834 = vadd.f32 %v2833, 0.4994258
    %v2835 = vmul.f32 %v2815, %v2834
    %v2836 = vadd.f32 %v2835, 1.0
    %v2837 = vrcp.pop %v2836
    %v2838 = vmul.f32 %v2836, %v2837
    %v2839 = vsub.f32 1.0, %v2838
    %v2840 = vmul.f32 %v2837, %v2839
    %v2841 = vadd.f32 %v2837, %v2840
    %vm2842 = vweird.f32 %v2836
    %vm2843 = vweird.f32 %v2837
    %vm2844 = vmor %vm2842, %vm2843
    %v2845 = vsel %vm2844, %v2837, %v2841
    %v2846 = vand.u32 2147483647, %v2836
    %vm2847 = vcmp.eq.f32.partialorder %v2846, 8.507059e+37
    %v2848 = vand.u32 %v2836, 2147483648
    %v2849 = vor.u32 1.1754944e-38, %v2848
    %v2850 = vsel %vm2847, %v2849, %v2845
    %v2851 = vmul.f32 %v2826, %v2850
    %v2852 = vmin.f32 %v2851, 1.0
    %v2853 = vmax.f32 %v2852, -1.0
    %v2854 = vmul.f32 %v1613, %v1613
    %v2855 = vmin.f32 16.0, %v2854
    %v2856 = vmul.f32 %v2855, 2.1237322e-06
    %v2857 = vadd.f32 %v2856, 0.00028619796
    %v2858 = vmul.f32 %v2855, %v2857
    %v2859 = vadd.f32 %v2858, 0.0036580483
    %v2860 = vmul.f32 %v2855, %v2859
    %v2861 = vadd.f32 %v2860, 0.05243302
    %v2862 = vmul.f32 %v2855, %v2861
    %v2863 = vadd.f32 %v2862, 0.18741608
    %v2864 = vmul.f32 %v2855, %v2863
    %v2865 = vadd.f32 %v2864, 1.1283791
    %v2866 = vmul.f32 %v1613, %v2865
    %v2867 = vmul.f32 %v2855, 3.8918573e-05
    %v2868 = vadd.f32 %v2867, 0.001143296
    %v2869 = vmul.f32 %v2855, %v2868
    %v2870 = vadd.f32 %v2869, 0.014752088
    %v2871 = vmul.f32 %v2855, %v2870
    %v2872 = vadd.f32 %v2871, 0.112945676
    %v2873 = vmul.f32 %v2855, %v2872
    %v2874 = vadd.f32 %v2873, 0.4994258
    %v2875 = vmul.f32 %v2855, %v2874
    %v2876 = vadd.f32 %v2875, 1.0
    %v2877 = vrcp.pop %v2876
    %v2878 = vmul.f32 %v2876, %v2877
    %v2879 = vsub.f32 1.0, %v2878
    %v2880 = vmul.f32 %v2877, %v2879
    %v2881 = vadd.f32 %v2877, %v2880
    %vm2882 = vweird.f32 %v2876
    %vm2883 = vweird.f32 %v2877
    %vm2884 = vmor %vm2882, %vm2883
    %v2885 = vsel %vm2884, %v2877, %v2881
    %v2886 = vand.u32 2147483647, %v2876
    %vm2887 = vcmp.eq.f32.partialorder %v2886, 8.507059e+37
    %v2888 = vand.u32 %v2876, 2147483648
    %v2889 = vor.u32 1.1754944e-38, %v2888
    %v2890 = vsel %vm2887, %v2889, %v2885
    %v2891 = vmul.f32 %v2866, %v2890
    %v2892 = vmin.f32 %v2891, 1.0
    %v2893 = vmax.f32 %v2892, -1.0
    %v2894 = vadd.f32 %v1653, 1.0
    %v2895 = vadd.f32 %v1693, 1.0
    %v2896 = vadd.f32 %v1733, 1.0
    %v2897 = vadd.f32 %v1773, 1.0
    %v2898 = vadd.f32 %v1813, 1.0
    %v2899 = vadd.f32 %v1853, 1.0
    %v2900 = vadd.f32 %v1893, 1.0
    %v2901 = vadd.f32 %v1933, 1.0
    %v2902 = vadd.f32 %v1973, 1.0
    %v2903 = vadd.f32 %v2013, 1.0
    %v2904 = vadd.f32 %v2053, 1.0
    %v2905 = vadd.f32 %v2093, 1.0
    %v2906 = vadd.f32 %v2133, 1.0
    %v2907 = vadd.f32 %v2173, 1.0
    %v2908 = vadd.f32 %v2213, 1.0
    %v2909 = vadd.f32 %v2253, 1.0
    %v2910 = vadd.f32 %v2293, 1.0
    %v2911 = vadd.f32 %v2333, 1.0
    %v2912 = vadd.f32 %v2373, 1.0
    %v2913 = vadd.f32 %v2413, 1.0
    %v2914 = vadd.f32 %v2453, 1.0
    %v2915 = vadd.f32 %v2493, 1.0
    %v2916 = vadd.f32 %v2533, 1.0
    %v2917 = vadd.f32 %v2573, 1.0
    %v2918 = vadd.f32 %v2613, 1.0
    %v2919 = vadd.f32 %v2653, 1.0
    %v2920 = vadd.f32 %v2693, 1.0
    %v2921 = vadd.f32 %v2733, 1.0
    %v2922 = vadd.f32 %v2773, 1.0
    %v2923 = vadd.f32 %v2813, 1.0
    %v2924 = vadd.f32 %v2853, 1.0
    %v2925 = vadd.f32 %v2893, 1.0
    %v2926 = vmul.f32 %v1550, %v2894
    %v2927 = vmul.f32 %v1551, %v2895
    %v2928 = vmul.f32 %v1552, %v2896
    %v2929 = vmul.f32 %v1553, %v2897
    %v2930 = vmul.f32 %v1554, %v2898
    %v2931 = vmul.f32 %v1555, %v2899
    %v2932 = vmul.f32 %v1556, %v2900
    %v2933 = vmul.f32 %v1557, %v2901
    %v2934 = vmul.f32 %v1558, %v2902
    %v2935 = vmul.f32 %v1559, %v2903
    %v2936 = vmul.f32 %v1560, %v2904
    %v2937 = vmul.f32 %v1561, %v2905
    %v2938 = vmul.f32 %v1562, %v2906
    %v2939 = vmul.f32 %v1563, %v2907
    %v2940 = vmul.f32 %v1564, %v2908
    %v2941 = vmul.f32 %v1565, %v2909
    %v2942 = vmul.f32 %v1566, %v2910
    %v2943 = vmul.f32 %v1567, %v2911
    %v2944 = vmul.f32 %v1568, %v2912
    %v2945 = vmul.f32 %v1569, %v2913
    %v2946 = vmul.f32 %v1570, %v2914
    %v2947 = vmul.f32 %v1571, %v2915
    %v2948 = vmul.f32 %v1572, %v2916
    %v2949 = vmul.f32 %v1573, %v2917
    %v2950 = vmul.f32 %v1574, %v2918
    %v2951 = vmul.f32 %v1575, %v2919
    %v2952 = vmul.f32 %v1576, %v2920
    %v2953 = vmul.f32 %v1577, %v2921
    %v2954 = vmul.f32 %v1578, %v2922
    %v2955 = vmul.f32 %v1579, %v2923
    %v2956 = vmul.f32 %v1580, %v2924
    %v2957 = vmul.f32 %v1581, %v2925
    %v2958 = vld [vmem:[%s7] sm:$0x3]
    %v2959 = vld [vmem:[%s8] sm:$0x3]
    %v2960 = vadd.f32 %v2926, %v2927
    %2961 = vadd.xlane.f32.xlu0 %v2960
    %v2962 = vpop.xlane.xlu0 %2961
    %v2963 = vadd.f32 %v2928, %v2929
    %2964 = vadd.xlane.f32.xlu0 %v2963
    %v2965 = vpop.xlane.xlu0 %2964
    %v2966 = vadd.f32 %v2930, %v2931
    %2967 = vadd.xlane.f32.xlu0 %v2966
    %v2968 = vpop.xlane.xlu0 %2967
    %v2969 = vadd.f32 %v2932, %v2933
    %2970 = vadd.xlane.f32.xlu0 %v2969
    %v2971 = vpop.xlane.xlu0 %2970
    %v2972 = vadd.f32 %v2934, %v2935
    %2973 = vadd.xlane.f32.xlu0 %v2972
    %v2974 = vpop.xlane.xlu0 %2973
    %v2975 = vadd.f32 %v2936, %v2937
    %2976 = vadd.xlane.f32.xlu0 %v2975
    %v2977 = vpop.xlane.xlu0 %2976
    %v2978 = vadd.f32 %v2938, %v2939
    %2979 = vadd.xlane.f32.xlu0 %v2978
    %v2980 = vpop.xlane.xlu0 %2979
    %v2981 = vadd.f32 %v2940, %v2941
    %2982 = vadd.xlane.f32.xlu0 %v2981
    %v2983 = vpop.xlane.xlu0 %2982
    %v2984 = vadd.f32 %v2942, %v2943
    %2985 = vadd.xlane.f32.xlu0 %v2984
    %v2986 = vpop.xlane.xlu0 %2985
    %v2987 = vadd.f32 %v2944, %v2945
    %2988 = vadd.xlane.f32.xlu0 %v2987
    %v2989 = vpop.xlane.xlu0 %2988
    %v2990 = vadd.f32 %v2946, %v2947
    %2991 = vadd.xlane.f32.xlu0 %v2990
    %v2992 = vpop.xlane.xlu0 %2991
    %v2993 = vadd.f32 %v2948, %v2949
    %2994 = vadd.xlane.f32.xlu0 %v2993
    %v2995 = vpop.xlane.xlu0 %2994
    %v2996 = vadd.f32 %v2950, %v2951
    %2997 = vadd.xlane.f32.xlu0 %v2996
    %v2998 = vpop.xlane.xlu0 %2997
    %v2999 = vadd.f32 %v2952, %v2953
    %3000 = vadd.xlane.f32.xlu0 %v2999
    %v3001 = vpop.xlane.xlu0 %3000
    %v3002 = vadd.f32 %v2954, %v2955
    %3003 = vadd.xlane.f32.xlu0 %v3002
    %v3004 = vpop.xlane.xlu0 %3003
    %v3005 = vadd.f32 %v2956, %v2957
    %3006 = vadd.xlane.f32.xlu0 %v3005
    %v3007 = vpop.xlane.xlu0 %3006
    %v3008 = vrcp.pop 256.0
    %v3009 = vmul.f32 256.0, %v3008
    %v3010 = vsub.f32 1.0, %v3009
    %v3011 = vmul.f32 %v3008, %v3010
    %v3012 = vadd.f32 %v3008, %v3011
    %vm3013 = vweird.f32 %v3008
    %v3014 = vsel %vm3013, %v3008, %v3012
    %v3015 = vmul.f32 %v2962, %v3014
    %v3016 = vmul.f32 %v2965, %v3014
    %v3017 = vmul.f32 %v2968, %v3014
    %v3018 = vmul.f32 %v2971, %v3014
    %v3019 = vmul.f32 %v2974, %v3014
    %v3020 = vmul.f32 %v2977, %v3014
    %v3021 = vmul.f32 %v2980, %v3014
    %v3022 = vmul.f32 %v2983, %v3014
    %v3023 = vmul.f32 %v2986, %v3014
    %v3024 = vmul.f32 %v2989, %v3014
    %v3025 = vmul.f32 %v2992, %v3014
    %v3026 = vmul.f32 %v2995, %v3014
    %v3027 = vmul.f32 %v2998, %v3014
    %v3028 = vmul.f32 %v3001, %v3014
    %v3029 = vmul.f32 %v3004, %v3014
    %v3030 = vmul.f32 %v3007, %v3014
    %v3031 = vmul.f32 %v2926, %v2926
    %v3032 = vmul.f32 %v2927, %v2927
    %v3033 = vmul.f32 %v2928, %v2928
    %v3034 = vmul.f32 %v2929, %v2929
    %v3035 = vmul.f32 %v2930, %v2930
    %v3036 = vmul.f32 %v2931, %v2931
    %v3037 = vmul.f32 %v2932, %v2932
    %v3038 = vmul.f32 %v2933, %v2933
    %v3039 = vmul.f32 %v2934, %v2934
    %v3040 = vmul.f32 %v2935, %v2935
    %v3041 = vmul.f32 %v2936, %v2936
    %v3042 = vmul.f32 %v2937, %v2937
    %v3043 = vmul.f32 %v2938, %v2938
    %v3044 = vmul.f32 %v2939, %v2939
    %v3045 = vmul.f32 %v2940, %v2940
    %v3046 = vmul.f32 %v2941, %v2941
    %v3047 = vmul.f32 %v2942, %v2942
    %v3048 = vmul.f32 %v2943, %v2943
    %v3049 = vmul.f32 %v2944, %v2944
    %v3050 = vmul.f32 %v2945, %v2945
    %v3051 = vmul.f32 %v2946, %v2946
    %v3052 = vmul.f32 %v2947, %v2947
    %v3053 = vmul.f32 %v2948, %v2948
    %v3054 = vmul.f32 %v2949, %v2949
    %v3055 = vmul.f32 %v2950, %v2950
    %v3056 = vmul.f32 %v2951, %v2951
    %v3057 = vmul.f32 %v2952, %v2952
    %v3058 = vmul.f32 %v2953, %v2953
    %v3059 = vmul.f32 %v2954, %v2954
    %v3060 = vmul.f32 %v2955, %v2955
    %v3061 = vmul.f32 %v2956, %v2956
    %v3062 = vmul.f32 %v2957, %v2957
    %v3063 = vadd.f32 %v3031, %v3032
    %3064 = vadd.xlane.f32.xlu0 %v3063
    %v3065 = vpop.xlane.xlu0 %3064
    %v3066 = vadd.f32 %v3033, %v3034
    %3067 = vadd.xlane.f32.xlu0 %v3066
    %v3068 = vpop.xlane.xlu0 %3067
    %v3069 = vadd.f32 %v3035, %v3036
    %3070 = vadd.xlane.f32.xlu0 %v3069
    %v3071 = vpop.xlane.xlu0 %3070
    %v3072 = vadd.f32 %v3037, %v3038
    %3073 = vadd.xlane.f32.xlu0 %v3072
    %v3074 = vpop.xlane.xlu0 %3073
    %v3075 = vadd.f32 %v3039, %v3040
    %3076 = vadd.xlane.f32.xlu0 %v3075
    %v3077 = vpop.xlane.xlu0 %3076
    %v3078 = vadd.f32 %v3041, %v3042
    %3079 = vadd.xlane.f32.xlu0 %v3078
    %v3080 = vpop.xlane.xlu0 %3079
    %v3081 = vadd.f32 %v3043, %v3044
    %3082 = vadd.xlane.f32.xlu0 %v3081
    %v3083 = vpop.xlane.xlu0 %3082
    %v3084 = vadd.f32 %v3045, %v3046
    %3085 = vadd.xlane.f32.xlu0 %v3084
    %v3086 = vpop.xlane.xlu0 %3085
    %v3087 = vadd.f32 %v3047, %v3048
    %3088 = vadd.xlane.f32.xlu0 %v3087
    %v3089 = vpop.xlane.xlu0 %3088
    %v3090 = vadd.f32 %v3049, %v3050
    %3091 = vadd.xlane.f32.xlu0 %v3090
    %v3092 = vpop.xlane.xlu0 %3091
    %v3093 = vadd.f32 %v3051, %v3052
    %3094 = vadd.xlane.f32.xlu0 %v3093
    %v3095 = vpop.xlane.xlu0 %3094
    %v3096 = vadd.f32 %v3053, %v3054
    %3097 = vadd.xlane.f32.xlu0 %v3096
    %v3098 = vpop.xlane.xlu0 %3097
    %v3099 = vadd.f32 %v3055, %v3056
    %3100 = vadd.xlane.f32.xlu0 %v3099
    %v3101 = vpop.xlane.xlu0 %3100
    %v3102 = vadd.f32 %v3057, %v3058
    %3103 = vadd.xlane.f32.xlu0 %v3102
    %v3104 = vpop.xlane.xlu0 %3103
    %v3105 = vadd.f32 %v3059, %v3060
    %3106 = vadd.xlane.f32.xlu0 %v3105
    %v3107 = vpop.xlane.xlu0 %3106
    %v3108 = vadd.f32 %v3061, %v3062
    %3109 = vadd.xlane.f32.xlu0 %v3108
    %v3110 = vpop.xlane.xlu0 %3109
    %v3111 = vmul.f32 %v3065, %v3014
    %v3112 = vmul.f32 %v3068, %v3014
    %v3113 = vmul.f32 %v3071, %v3014
    %v3114 = vmul.f32 %v3074, %v3014
    %v3115 = vmul.f32 %v3077, %v3014
    %v3116 = vmul.f32 %v3080, %v3014
    %v3117 = vmul.f32 %v3083, %v3014
    %v3118 = vmul.f32 %v3086, %v3014
    %v3119 = vmul.f32 %v3089, %v3014
    %v3120 = vmul.f32 %v3092, %v3014
    %v3121 = vmul.f32 %v3095, %v3014
    %v3122 = vmul.f32 %v3098, %v3014
    %v3123 = vmul.f32 %v3101, %v3014
    %v3124 = vmul.f32 %v3104, %v3014
    %v3125 = vmul.f32 %v3107, %v3014
    %v3126 = vmul.f32 %v3110, %v3014
    %v3127 = vmul.f32 %v3015, %v3015
    %v3128 = vmul.f32 %v3016, %v3016
    %v3129 = vmul.f32 %v3017, %v3017
    %v3130 = vmul.f32 %v3018, %v3018
    %v3131 = vmul.f32 %v3019, %v3019
    %v3132 = vmul.f32 %v3020, %v3020
    %v3133 = vmul.f32 %v3021, %v3021
    %v3134 = vmul.f32 %v3022, %v3022
    %v3135 = vmul.f32 %v3023, %v3023
    %v3136 = vmul.f32 %v3024, %v3024
    %v3137 = vmul.f32 %v3025, %v3025
    %v3138 = vmul.f32 %v3026, %v3026
    %v3139 = vmul.f32 %v3027, %v3027
    %v3140 = vmul.f32 %v3028, %v3028
    %v3141 = vmul.f32 %v3029, %v3029
    %v3142 = vmul.f32 %v3030, %v3030
    %v3143 = vsub.f32 %v3111, %v3127
    %v3144 = vsub.f32 %v3112, %v3128
    %v3145 = vsub.f32 %v3113, %v3129
    %v3146 = vsub.f32 %v3114, %v3130
    %v3147 = vsub.f32 %v3115, %v3131
    %v3148 = vsub.f32 %v3116, %v3132
    %v3149 = vsub.f32 %v3117, %v3133
    %v3150 = vsub.f32 %v3118, %v3134
    %v3151 = vsub.f32 %v3119, %v3135
    %v3152 = vsub.f32 %v3120, %v3136
    %v3153 = vsub.f32 %v3121, %v3137
    %v3154 = vsub.f32 %v3122, %v3138
    %v3155 = vsub.f32 %v3123, %v3139
    %v3156 = vsub.f32 %v3124, %v3140
    %v3157 = vsub.f32 %v3125, %v3141
    %v3158 = vsub.f32 %v3126, %v3142
    %v3159 = vmax.f32 %v3143, 0.0
    %v3160 = vmax.f32 %v3144, 0.0
    %v3161 = vmax.f32 %v3145, 0.0
    %v3162 = vmax.f32 %v3146, 0.0
    %v3163 = vmax.f32 %v3147, 0.0
    %v3164 = vmax.f32 %v3148, 0.0
    %v3165 = vmax.f32 %v3149, 0.0
    %v3166 = vmax.f32 %v3150, 0.0
    %v3167 = vmax.f32 %v3151, 0.0
    %v3168 = vmax.f32 %v3152, 0.0
    %v3169 = vmax.f32 %v3153, 0.0
    %v3170 = vmax.f32 %v3154, 0.0
    %v3171 = vmax.f32 %v3155, 0.0
    %v3172 = vmax.f32 %v3156, 0.0
    %v3173 = vmax.f32 %v3157, 0.0
    %v3174 = vmax.f32 %v3158, 0.0
    %v3175 = vadd.f32 %v3159, 1e-05
    %v3176 = vadd.f32 %v3160, 1e-05
    %v3177 = vadd.f32 %v3161, 1e-05
    %v3178 = vadd.f32 %v3162, 1e-05
    %v3179 = vadd.f32 %v3163, 1e-05
    %v3180 = vadd.f32 %v3164, 1e-05
    %v3181 = vadd.f32 %v3165, 1e-05
    %v3182 = vadd.f32 %v3166, 1e-05
    %v3183 = vadd.f32 %v3167, 1e-05
    %v3184 = vadd.f32 %v3168, 1e-05
    %v3185 = vadd.f32 %v3169, 1e-05
    %v3186 = vadd.f32 %v3170, 1e-05
    %v3187 = vadd.f32 %v3171, 1e-05
    %v3188 = vadd.f32 %v3172, 1e-05
    %v3189 = vadd.f32 %v3173, 1e-05
    %v3190 = vadd.f32 %v3174, 1e-05
    %v3191 = vrsqrt.pop %v3175
    %v3192 = vmul.f32 %v3191, %v3175
    %v3193 = vmul.f32 %v3192, %v3191
    %v3194 = vmul.f32 0.5, %v3193
    %v3195 = vsub.f32 1.5, %v3194
    %v3196 = vmul.f32 %v3191, %v3195
    %vm3197 = vweird.f32 %v3175
    %vm3198 = vweird.f32 %v3191
    %vm3199 = vmor %vm3197, %vm3198
    %v3200 = vsel %vm3199, %v3191, %v3196
    %v3201 = vrsqrt.pop %v3176
    %v3202 = vmul.f32 %v3201, %v3176
    %v3203 = vmul.f32 %v3202, %v3201
    %v3204 = vmul.f32 0.5, %v3203
    %v3205 = vsub.f32 1.5, %v3204
    %v3206 = vmul.f32 %v3201, %v3205
    %vm3207 = vweird.f32 %v3176
    %vm3208 = vweird.f32 %v3201
    %vm3209 = vmor %vm3207, %vm3208
    %v3210 = vsel %vm3209, %v3201, %v3206
    %v3211 = vrsqrt.pop %v3177
    %v3212 = vmul.f32 %v3211, %v3177
    %v3213 = vmul.f32 %v3212, %v3211
    %v3214 = vmul.f32 0.5, %v3213
    %v3215 = vsub.f32 1.5, %v3214
    %v3216 = vmul.f32 %v3211, %v3215
    %vm3217 = vweird.f32 %v3177
    %vm3218 = vweird.f32 %v3211
    %vm3219 = vmor %vm3217, %vm3218
    %v3220 = vsel %vm3219, %v3211, %v3216
    %v3221 = vrsqrt.pop %v3178
    %v3222 = vmul.f32 %v3221, %v3178
    %v3223 = vmul.f32 %v3222, %v3221
    %v3224 = vmul.f32 0.5, %v3223
    %v3225 = vsub.f32 1.5, %v3224
    %v3226 = vmul.f32 %v3221, %v3225
    %vm3227 = vweird.f32 %v3178
    %vm3228 = vweird.f32 %v3221
    %vm3229 = vmor %vm3227, %vm3228
    %v3230 = vsel %vm3229, %v3221, %v3226
    %v3231 = vrsqrt.pop %v3179
    %v3232 = vmul.f32 %v3231, %v3179
    %v3233 = vmul.f32 %v3232, %v3231
    %v3234 = vmul.f32 0.5, %v3233
    %v3235 = vsub.f32 1.5, %v3234
    %v3236 = vmul.f32 %v3231, %v3235
    %vm3237 = vweird.f32 %v3179
    %vm3238 = vweird.f32 %v3231
    %vm3239 = vmor %vm3237, %vm3238
    %v3240 = vsel %vm3239, %v3231, %v3236
    %v3241 = vrsqrt.pop %v3180
    %v3242 = vmul.f32 %v3241, %v3180
    %v3243 = vmul.f32 %v3242, %v3241
    %v3244 = vmul.f32 0.5, %v3243
    %v3245 = vsub.f32 1.5, %v3244
    %v3246 = vmul.f32 %v3241, %v3245
    %vm3247 = vweird.f32 %v3180
    %vm3248 = vweird.f32 %v3241
    %vm3249 = vmor %vm3247, %vm3248
    %v3250 = vsel %vm3249, %v3241, %v3246
    %v3251 = vrsqrt.pop %v3181
    %v3252 = vmul.f32 %v3251, %v3181
    %v3253 = vmul.f32 %v3252, %v3251
    %v3254 = vmul.f32 0.5, %v3253
    %v3255 = vsub.f32 1.5, %v3254
    %v3256 = vmul.f32 %v3251, %v3255
    %vm3257 = vweird.f32 %v3181
    %vm3258 = vweird.f32 %v3251
    %vm3259 = vmor %vm3257, %vm3258
    %v3260 = vsel %vm3259, %v3251, %v3256
    %v3261 = vrsqrt.pop %v3182
    %v3262 = vmul.f32 %v3261, %v3182
    %v3263 = vmul.f32 %v3262, %v3261
    %v3264 = vmul.f32 0.5, %v3263
    %v3265 = vsub.f32 1.5, %v3264
    %v3266 = vmul.f32 %v3261, %v3265
    %vm3267 = vweird.f32 %v3182
    %vm3268 = vweird.f32 %v3261
    %vm3269 = vmor %vm3267, %vm3268
    %v3270 = vsel %vm3269, %v3261, %v3266
    %v3271 = vrsqrt.pop %v3183
    %v3272 = vmul.f32 %v3271, %v3183
    %v3273 = vmul.f32 %v3272, %v3271
    %v3274 = vmul.f32 0.5, %v3273
    %v3275 = vsub.f32 1.5, %v3274
    %v3276 = vmul.f32 %v3271, %v3275
    %vm3277 = vweird.f32 %v3183
    %vm3278 = vweird.f32 %v3271
    %vm3279 = vmor %vm3277, %vm3278
    %v3280 = vsel %vm3279, %v3271, %v3276
    %v3281 = vrsqrt.pop %v3184
    %v3282 = vmul.f32 %v3281, %v3184
    %v3283 = vmul.f32 %v3282, %v3281
    %v3284 = vmul.f32 0.5, %v3283
    %v3285 = vsub.f32 1.5, %v3284
    %v3286 = vmul.f32 %v3281, %v3285
    %vm3287 = vweird.f32 %v3184
    %vm3288 = vweird.f32 %v3281
    %vm3289 = vmor %vm3287, %vm3288
    %v3290 = vsel %vm3289, %v3281, %v3286
    %v3291 = vrsqrt.pop %v3185
    %v3292 = vmul.f32 %v3291, %v3185
    %v3293 = vmul.f32 %v3292, %v3291
    %v3294 = vmul.f32 0.5, %v3293
    %v3295 = vsub.f32 1.5, %v3294
    %v3296 = vmul.f32 %v3291, %v3295
    %vm3297 = vweird.f32 %v3185
    %vm3298 = vweird.f32 %v3291
    %vm3299 = vmor %vm3297, %vm3298
    %v3300 = vsel %vm3299, %v3291, %v3296
    %v3301 = vrsqrt.pop %v3186
    %v3302 = vmul.f32 %v3301, %v3186
    %v3303 = vmul.f32 %v3302, %v3301
    %v3304 = vmul.f32 0.5, %v3303
    %v3305 = vsub.f32 1.5, %v3304
    %v3306 = vmul.f32 %v3301, %v3305
    %vm3307 = vweird.f32 %v3186
    %vm3308 = vweird.f32 %v3301
    %vm3309 = vmor %vm3307, %vm3308
    %v3310 = vsel %vm3309, %v3301, %v3306
    %v3311 = vrsqrt.pop %v3187
    %v3312 = vmul.f32 %v3311, %v3187
    %v3313 = vmul.f32 %v3312, %v3311
    %v3314 = vmul.f32 0.5, %v3313
    %v3315 = vsub.f32 1.5, %v3314
    %v3316 = vmul.f32 %v3311, %v3315
    %vm3317 = vweird.f32 %v3187
    %vm3318 = vweird.f32 %v3311
    %vm3319 = vmor %vm3317, %vm3318
    %v3320 = vsel %vm3319, %v3311, %v3316
    %v3321 = vrsqrt.pop %v3188
    %v3322 = vmul.f32 %v3321, %v3188
    %v3323 = vmul.f32 %v3322, %v3321
    %v3324 = vmul.f32 0.5, %v3323
    %v3325 = vsub.f32 1.5, %v3324
    %v3326 = vmul.f32 %v3321, %v3325
    %vm3327 = vweird.f32 %v3188
    %vm3328 = vweird.f32 %v3321
    %vm3329 = vmor %vm3327, %vm3328
    %v3330 = vsel %vm3329, %v3321, %v3326
    %v3331 = vrsqrt.pop %v3189
    %v3332 = vmul.f32 %v3331, %v3189
    %v3333 = vmul.f32 %v3332, %v3331
    %v3334 = vmul.f32 0.5, %v3333
    %v3335 = vsub.f32 1.5, %v3334
    %v3336 = vmul.f32 %v3331, %v3335
    %vm3337 = vweird.f32 %v3189
    %vm3338 = vweird.f32 %v3331
    %vm3339 = vmor %vm3337, %vm3338
    %v3340 = vsel %vm3339, %v3331, %v3336
    %v3341 = vrsqrt.pop %v3190
    %v3342 = vmul.f32 %v3341, %v3190
    %v3343 = vmul.f32 %v3342, %v3341
    %v3344 = vmul.f32 0.5, %v3343
    %v3345 = vsub.f32 1.5, %v3344
    %v3346 = vmul.f32 %v3341, %v3345
    %vm3347 = vweird.f32 %v3190
    %vm3348 = vweird.f32 %v3341
    %vm3349 = vmor %vm3347, %vm3348
    %v3350 = vsel %vm3349, %v3341, %v3346
    %v3351 = vsub.f32 %v2926, %v3015
    %v3352 = vsub.f32 %v2927, %v3015
    %v3353 = vsub.f32 %v2928, %v3016
    %v3354 = vsub.f32 %v2929, %v3016
    %v3355 = vsub.f32 %v2930, %v3017
    %v3356 = vsub.f32 %v2931, %v3017
    %v3357 = vsub.f32 %v2932, %v3018
    %v3358 = vsub.f32 %v2933, %v3018
    %v3359 = vsub.f32 %v2934, %v3019
    %v3360 = vsub.f32 %v2935, %v3019
    %v3361 = vsub.f32 %v2936, %v3020
    %v3362 = vsub.f32 %v2937, %v3020
    %v3363 = vsub.f32 %v2938, %v3021
    %v3364 = vsub.f32 %v2939, %v3021
    %v3365 = vsub.f32 %v2940, %v3022
    %v3366 = vsub.f32 %v2941, %v3022
    %v3367 = vsub.f32 %v2942, %v3023
    %v3368 = vsub.f32 %v2943, %v3023
    %v3369 = vsub.f32 %v2944, %v3024
    %v3370 = vsub.f32 %v2945, %v3024
    %v3371 = vsub.f32 %v2946, %v3025
    %v3372 = vsub.f32 %v2947, %v3025
    %v3373 = vsub.f32 %v2948, %v3026
    %v3374 = vsub.f32 %v2949, %v3026
    %v3375 = vsub.f32 %v2950, %v3027
    %v3376 = vsub.f32 %v2951, %v3027
    %v3377 = vsub.f32 %v2952, %v3028
    %v3378 = vsub.f32 %v2953, %v3028
    %v3379 = vsub.f32 %v2954, %v3029
    %v3380 = vsub.f32 %v2955, %v3029
    %v3381 = vsub.f32 %v2956, %v3030
    %v3382 = vsub.f32 %v2957, %v3030
    %v3383 = vmul.f32 %v3351, %v3200
    %v3384 = vmul.f32 %v3352, %v3200
    %v3385 = vmul.f32 %v3353, %v3210
    %v3386 = vmul.f32 %v3354, %v3210
    %v3387 = vmul.f32 %v3355, %v3220
    %v3388 = vmul.f32 %v3356, %v3220
    %v3389 = vmul.f32 %v3357, %v3230
    %v3390 = vmul.f32 %v3358, %v3230
    %v3391 = vmul.f32 %v3359, %v3240
    %v3392 = vmul.f32 %v3360, %v3240
    %v3393 = vmul.f32 %v3361, %v3250
    %v3394 = vmul.f32 %v3362, %v3250
    %v3395 = vmul.f32 %v3363, %v3260
    %v3396 = vmul.f32 %v3364, %v3260
    %v3397 = vmul.f32 %v3365, %v3270
    %v3398 = vmul.f32 %v3366, %v3270
    %v3399 = vmul.f32 %v3367, %v3280
    %v3400 = vmul.f32 %v3368, %v3280
    %v3401 = vmul.f32 %v3369, %v3290
    %v3402 = vmul.f32 %v3370, %v3290
    %v3403 = vmul.f32 %v3371, %v3300
    %v3404 = vmul.f32 %v3372, %v3300
    %v3405 = vmul.f32 %v3373, %v3310
    %v3406 = vmul.f32 %v3374, %v3310
    %v3407 = vmul.f32 %v3375, %v3320
    %v3408 = vmul.f32 %v3376, %v3320
    %v3409 = vmul.f32 %v3377, %v3330
    %v3410 = vmul.f32 %v3378, %v3330
    %v3411 = vmul.f32 %v3379, %v3340
    %v3412 = vmul.f32 %v3380, %v3340
    %v3413 = vmul.f32 %v3381, %v3350
    %v3414 = vmul.f32 %v3382, %v3350
    %v3416 = vperm.slane %v2958, 0
    %v3417 = vperm.slane %v2958, 1
    %v3420 = vmul.f32 %v3383, %v3416
    %v3421 = vmul.f32 %v3384, %v3417
    %v3422 = vmul.f32 %v3385, %v3416
    %v3423 = vmul.f32 %v3386, %v3417
    %v3424 = vmul.f32 %v3387, %v3416
    %v3425 = vmul.f32 %v3388, %v3417
    %v3426 = vmul.f32 %v3389, %v3416
    %v3427 = vmul.f32 %v3390, %v3417
    %v3428 = vmul.f32 %v3391, %v3416
    %v3429 = vmul.f32 %v3392, %v3417
    %v3430 = vmul.f32 %v3393, %v3416
    %v3431 = vmul.f32 %v3394, %v3417
    %v3432 = vmul.f32 %v3395, %v3416
    %v3433 = vmul.f32 %v3396, %v3417
    %v3434 = vmul.f32 %v3397, %v3416
    %v3435 = vmul.f32 %v3398, %v3417
    %v3436 = vmul.f32 %v3399, %v3416
    %v3437 = vmul.f32 %v3400, %v3417
    %v3438 = vmul.f32 %v3401, %v3416
    %v3439 = vmul.f32 %v3402, %v3417
    %v3440 = vmul.f32 %v3403, %v3416
    %v3441 = vmul.f32 %v3404, %v3417
    %v3442 = vmul.f32 %v3405, %v3416
    %v3443 = vmul.f32 %v3406, %v3417
    %v3444 = vmul.f32 %v3407, %v3416
    %v3445 = vmul.f32 %v3408, %v3417
    %v3446 = vmul.f32 %v3409, %v3416
    %v3447 = vmul.f32 %v3410, %v3417
    %v3448 = vmul.f32 %v3411, %v3416
    %v3449 = vmul.f32 %v3412, %v3417
    %v3450 = vmul.f32 %v3413, %v3416
    %v3451 = vmul.f32 %v3414, %v3417
    %v3453 = vperm.slane %v2959, 0
    %v3454 = vperm.slane %v2959, 1
    %v3457 = vadd.f32 %v3420, %v3453
    %v3458 = vadd.f32 %v3421, %v3454
    %v3459 = vadd.f32 %v3422, %v3453
    %v3460 = vadd.f32 %v3423, %v3454
    %v3461 = vadd.f32 %v3424, %v3453
    %v3462 = vadd.f32 %v3425, %v3454
    %v3463 = vadd.f32 %v3426, %v3453
    %v3464 = vadd.f32 %v3427, %v3454
    %v3465 = vadd.f32 %v3428, %v3453
    %v3466 = vadd.f32 %v3429, %v3454
    %v3467 = vadd.f32 %v3430, %v3453
    %v3468 = vadd.f32 %v3431, %v3454
    %v3469 = vadd.f32 %v3432, %v3453
    %v3470 = vadd.f32 %v3433, %v3454
    %v3471 = vadd.f32 %v3434, %v3453
    %v3472 = vadd.f32 %v3435, %v3454
    %v3473 = vadd.f32 %v3436, %v3453
    %v3474 = vadd.f32 %v3437, %v3454
    %v3475 = vadd.f32 %v3438, %v3453
    %v3476 = vadd.f32 %v3439, %v3454
    %v3477 = vadd.f32 %v3440, %v3453
    %v3478 = vadd.f32 %v3441, %v3454
    %v3479 = vadd.f32 %v3442, %v3453
    %v3480 = vadd.f32 %v3443, %v3454
    %v3481 = vadd.f32 %v3444, %v3453
    %v3482 = vadd.f32 %v3445, %v3454
    %v3483 = vadd.f32 %v3446, %v3453
    %v3484 = vadd.f32 %v3447, %v3454
    %v3485 = vadd.f32 %v3448, %v3453
    %v3486 = vadd.f32 %v3449, %v3454
    %v3487 = vadd.f32 %v3450, %v3453
    %v3488 = vadd.f32 %v3451, %v3454
    %v3489 = vld [vmem:[#allocation8] sm:$0xff]
    %v3490 = vld [vmem:[#allocation8 + $0x8] sm:$0xff]
    %v3491 = vld [vmem:[#allocation8 + $0x10] sm:$0xff]
    %v3492 = vld [vmem:[#allocation8 + $0x18] sm:$0xff]
    %v3493 = vld [vmem:[#allocation8 + $0x20] sm:$0xff]
    %v3494 = vld [vmem:[#allocation8 + $0x28] sm:$0xff]
    %v3495 = vld [vmem:[#allocation8 + $0x30] sm:$0xff]
    %v3496 = vld [vmem:[#allocation8 + $0x38] sm:$0xff]
    %v3497 = vld [vmem:[#allocation8 + $0x40] sm:$0xff]
    %v3498 = vld [vmem:[#allocation8 + $0x48] sm:$0xff]
    %v3499 = vld [vmem:[#allocation8 + $0x50] sm:$0xff]
    %v3500 = vld [vmem:[#allocation8 + $0x58] sm:$0xff]
    %v3501 = vld [vmem:[#allocation8 + $0x60] sm:$0xff]
    %v3502 = vld [vmem:[#allocation8 + $0x68] sm:$0xff]
    %v3503 = vld [vmem:[#allocation8 + $0x70] sm:$0xff]
    %v3504 = vld [vmem:[#allocation8 + $0x78] sm:$0xff]
    %v3505 = vld [vmem:[#allocation8 + $0x80] sm:$0xff]
    %v3506 = vld [vmem:[#allocation8 + $0x88] sm:$0xff]
    %v3507 = vld [vmem:[#allocation8 + $0x90] sm:$0xff]
    %v3508 = vld [vmem:[#allocation8 + $0x98] sm:$0xff]
    %v3509 = vld [vmem:[#allocation8 + $0xa0] sm:$0xff]
    %v3510 = vld [vmem:[#allocation8 + $0xa8] sm:$0xff]
    %v3511 = vld [vmem:[#allocation8 + $0xb0] sm:$0xff]
    %v3512 = vld [vmem:[#allocation8 + $0xb8] sm:$0xff]
    %v3513 = vld [vmem:[#allocation8 + $0xc0] sm:$0xff]
    %v3514 = vld [vmem:[#allocation8 + $0xc8] sm:$0xff]
    %v3515 = vld [vmem:[#allocation8 + $0xd0] sm:$0xff]
    %v3516 = vld [vmem:[#allocation8 + $0xd8] sm:$0xff]
    %v3517 = vld [vmem:[#allocation8 + $0xe0] sm:$0xff]
    %v3518 = vld [vmem:[#allocation8 + $0xe8] sm:$0xff]
    %v3519 = vld [vmem:[#allocation8 + $0xf0] sm:$0xff]
    %v3520 = vld [vmem:[#allocation8 + $0xf8] sm:$0xff]
    %v3521 = vld [vmem:[%s10] sm:$0x1]
    %v3523 = vperm.slane %v3521, 0
    %3525 = vmatpush.msra.mxu0 %v3504
    %3526 = vmatpush.msra.mxu0 %v3503
    %3527 = vmatpush.msra.mxu0 %v3502
    %3528 = vmatpush.msra.mxu0 %v3501
    %3529 = vmatpush.msra.mxu0 %v3500
    %3530 = vmatpush.msra.mxu0 %v3499
    %3531 = vmatpush.msra.mxu0 %v3498
    %3532 = vmatpush.msra.mxu0 %v3497
    %3533 = vmatpush.msra.mxu0 %v3496
    %3534 = vmatpush.msra.mxu0 %v3495
    %3535 = vmatpush.msra.mxu0 %v3494
    %3536 = vmatpush.msra.mxu0 %v3493
    %3537 = vmatpush.msra.mxu0 %v3492
    %3538 = vmatpush.msra.mxu0 %v3491
    %3539 = vmatpush.msra.mxu0 %v3490
    %3540 = vmatpush.msra.mxu0 %v3489
    %3541 = vmatmul.f32.gmra.mxu0 %v3457
    %v3542 = vpop.f32.mrf.mxu0
    %v3543 = vadd.f32 %v3523, %v3542
    %3544 = vmatmul.f32.gmra.mxu0 %v3459
    %v3545 = vpop.f32.mrf.mxu0
    %v3546 = vadd.f32 %v3523, %v3545
    %3547 = vmatmul.f32.gmra.mxu0 %v3461
    %v3548 = vpop.f32.mrf.mxu0
    %v3549 = vadd.f32 %v3523, %v3548
    %3550 = vmatmul.f32.gmra.mxu0 %v3463
    %v3551 = vpop.f32.mrf.mxu0
    %v3552 = vadd.f32 %v3523, %v3551
    %3553 = vmatmul.f32.gmra.mxu0 %v3465
    %v3554 = vpop.f32.mrf.mxu0
    %v3555 = vadd.f32 %v3523, %v3554
    %3556 = vmatmul.f32.gmra.mxu0 %v3467
    %v3557 = vpop.f32.mrf.mxu0
    %v3558 = vadd.f32 %v3523, %v3557
    %3559 = vmatmul.f32.gmra.mxu0 %v3469
    %v3560 = vpop.f32.mrf.mxu0
    %v3561 = vadd.f32 %v3523, %v3560
    %3562 = vmatmul.f32.gmra.mxu0 %v3471
    %v3563 = vpop.f32.mrf.mxu0
    %v3564 = vadd.f32 %v3523, %v3563
    %3565 = vmatmul.f32.gmra.mxu0 %v3473
    %v3566 = vpop.f32.mrf.mxu0
    %v3567 = vadd.f32 %v3523, %v3566
    %3568 = vmatmul.f32.gmra.mxu0 %v3475
    %v3569 = vpop.f32.mrf.mxu0
    %v3570 = vadd.f32 %v3523, %v3569
    %3571 = vmatmul.f32.gmra.mxu0 %v3477
    %v3572 = vpop.f32.mrf.mxu0
    %v3573 = vadd.f32 %v3523, %v3572
    %3574 = vmatmul.f32.gmra.mxu0 %v3479
    %v3575 = vpop.f32.mrf.mxu0
    %v3576 = vadd.f32 %v3523, %v3575
    %3577 = vmatmul.f32.gmra.mxu0 %v3481
    %v3578 = vpop.f32.mrf.mxu0
    %v3579 = vadd.f32 %v3523, %v3578
    %3580 = vmatmul.f32.gmra.mxu0 %v3483
    %v3581 = vpop.f32.mrf.mxu0
    %v3582 = vadd.f32 %v3523, %v3581
    %3583 = vmatmul.f32.gmra.mxu0 %v3485
    %v3584 = vpop.f32.mrf.mxu0
    %v3585 = vadd.f32 %v3523, %v3584
    %3586 = vmatmul.f32.gmra.mxu0 %v3487
    %v3587 = vpop.f32.mrf.mxu0
    %v3588 = vadd.f32 %v3523, %v3587
    %3589 = vdwg.mxu0
    %3590 = vmatpush.msra.mxu0 %v3520
    %3591 = vmatpush.msra.mxu0 %v3519
    %3592 = vmatpush.msra.mxu0 %v3518
    %3593 = vmatpush.msra.mxu0 %v3517
    %3594 = vmatpush.msra.mxu0 %v3516
    %3595 = vmatpush.msra.mxu0 %v3515
    %3596 = vmatpush.msra.mxu0 %v3514
    %3597 = vmatpush.msra.mxu0 %v3513
    %3598 = vmatpush.msra.mxu0 %v3512
    %3599 = vmatpush.msra.mxu0 %v3511
    %3600 = vmatpush.msra.mxu0 %v3510
    %3601 = vmatpush.msra.mxu0 %v3509
    %3602 = vmatpush.msra.mxu0 %v3508
    %3603 = vmatpush.msra.mxu0 %v3507
    %3604 = vmatpush.msra.mxu0 %v3506
    %3605 = vmatpush.msra.mxu0 %v3505
    %3606 = vmatmul.f32.gmra.mxu0 %v3458
    %v3607 = vpop.f32.mrf.mxu0
    %v3608 = vadd.f32 %v3543, %v3607
    %3609 = vmatmul.f32.gmra.mxu0 %v3460
    %v3610 = vpop.f32.mrf.mxu0
    %v3611 = vadd.f32 %v3546, %v3610
    %3612 = vmatmul.f32.gmra.mxu0 %v3462
    %v3613 = vpop.f32.mrf.mxu0
    %v3614 = vadd.f32 %v3549, %v3613
    %3615 = vmatmul.f32.gmra.mxu0 %v3464
    %v3616 = vpop.f32.mrf.mxu0
    %v3617 = vadd.f32 %v3552, %v3616
    %3618 = vmatmul.f32.gmra.mxu0 %v3466
    %v3619 = vpop.f32.mrf.mxu0
    %v3620 = vadd.f32 %v3555, %v3619
    %3621 = vmatmul.f32.gmra.mxu0 %v3468
    %v3622 = vpop.f32.mrf.mxu0
    %v3623 = vadd.f32 %v3558, %v3622
    %3624 = vmatmul.f32.gmra.mxu0 %v3470
    %v3625 = vpop.f32.mrf.mxu0
    %v3626 = vadd.f32 %v3561, %v3625
    %3627 = vmatmul.f32.gmra.mxu0 %v3472
    %v3628 = vpop.f32.mrf.mxu0
    %v3629 = vadd.f32 %v3564, %v3628
    %3630 = vmatmul.f32.gmra.mxu0 %v3474
    %v3631 = vpop.f32.mrf.mxu0
    %v3632 = vadd.f32 %v3567, %v3631
    %3633 = vmatmul.f32.gmra.mxu0 %v3476
    %v3634 = vpop.f32.mrf.mxu0
    %v3635 = vadd.f32 %v3570, %v3634
    %3636 = vmatmul.f32.gmra.mxu0 %v3478
    %v3637 = vpop.f32.mrf.mxu0
    %v3638 = vadd.f32 %v3573, %v3637
    %3639 = vmatmul.f32.gmra.mxu0 %v3480
    %v3640 = vpop.f32.mrf.mxu0
    %v3641 = vadd.f32 %v3576, %v3640
    %3642 = vmatmul.f32.gmra.mxu0 %v3482
    %v3643 = vpop.f32.mrf.mxu0
    %v3644 = vadd.f32 %v3579, %v3643
    %3645 = vmatmul.f32.gmra.mxu0 %v3484
    %v3646 = vpop.f32.mrf.mxu0
    %v3647 = vadd.f32 %v3582, %v3646
    %3648 = vmatmul.f32.gmra.mxu0 %v3486
    %v3649 = vpop.f32.mrf.mxu0
    %v3650 = vadd.f32 %v3585, %v3649
    %3651 = vmatmul.f32.gmra.mxu0 %v3488
    %v3652 = vpop.f32.mrf.mxu0
    %v3653 = vadd.f32 %v3588, %v3652
    %3654 = vdwg.mxu0
    %v3655 = vmul.f32 %v3608, 0.5
    %v3656 = vmul.f32 %v3611, 0.5
    %v3657 = vmul.f32 %v3614, 0.5
    %v3658 = vmul.f32 %v3617, 0.5
    %v3659 = vmul.f32 %v3620, 0.5
    %v3660 = vmul.f32 %v3623, 0.5
    %v3661 = vmul.f32 %v3626, 0.5
    %v3662 = vmul.f32 %v3629, 0.5
    %v3663 = vmul.f32 %v3632, 0.5
    %v3664 = vmul.f32 %v3635, 0.5
    %v3665 = vmul.f32 %v3638, 0.5
    %v3666 = vmul.f32 %v3641, 0.5
    %v3667 = vmul.f32 %v3644, 0.5
    %v3668 = vmul.f32 %v3647, 0.5
    %v3669 = vmul.f32 %v3650, 0.5
    %v3670 = vmul.f32 %v3653, 0.5
    %v3671 = vmul.f32 %v3608, 0.70710677
    %v3672 = vmul.f32 %v3611, 0.70710677
    %v3673 = vmul.f32 %v3614, 0.70710677
    %v3674 = vmul.f32 %v3617, 0.70710677
    %v3675 = vmul.f32 %v3620, 0.70710677
    %v3676 = vmul.f32 %v3623, 0.70710677
    %v3677 = vmul.f32 %v3626, 0.70710677
    %v3678 = vmul.f32 %v3629, 0.70710677
    %v3679 = vmul.f32 %v3632, 0.70710677
    %v3680 = vmul.f32 %v3635, 0.70710677
    %v3681 = vmul.f32 %v3638, 0.70710677
    %v3682 = vmul.f32 %v3641, 0.70710677
    %v3683 = vmul.f32 %v3644, 0.70710677
    %v3684 = vmul.f32 %v3647, 0.70710677
    %v3685 = vmul.f32 %v3650, 0.70710677
    %v3686 = vmul.f32 %v3653, 0.70710677
    %v3687 = vmul.f32 %v3671, %v3671
    %v3688 = vmin.f32 16.0, %v3687
    %v3689 = vmul.f32 %v3688, 2.1237322e-06
    %v3690 = vadd.f32 %v3689, 0.00028619796
    %v3691 = vmul.f32 %v3688, %v3690
    %v3692 = vadd.f32 %v3691, 0.0036580483
    %v3693 = vmul.f32 %v3688, %v3692
    %v3694 = vadd.f32 %v3693, 0.05243302
    %v3695 = vmul.f32 %v3688, %v3694
    %v3696 = vadd.f32 %v3695, 0.18741608
    %v3697 = vmul.f32 %v3688, %v3696
    %v3698 = vadd.f32 %v3697, 1.1283791
    %v3699 = vmul.f32 %v3671, %v3698
    %v3700 = vmul.f32 %v3688, 3.8918573e-05
    %v3701 = vadd.f32 %v3700, 0.001143296
    %v3702 = vmul.f32 %v3688, %v3701
    %v3703 = vadd.f32 %v3702, 0.014752088
    %v3704 = vmul.f32 %v3688, %v3703
    %v3705 = vadd.f32 %v3704, 0.112945676
    %v3706 = vmul.f32 %v3688, %v3705
    %v3707 = vadd.f32 %v3706, 0.4994258
    %v3708 = vmul.f32 %v3688, %v3707
    %v3709 = vadd.f32 %v3708, 1.0
    %v3710 = vrcp.pop %v3709
    %v3711 = vmul.f32 %v3709, %v3710
    %v3712 = vsub.f32 1.0, %v3711
    %v3713 = vmul.f32 %v3710, %v3712
    %v3714 = vadd.f32 %v3710, %v3713
    %vm3715 = vweird.f32 %v3709
    %vm3716 = vweird.f32 %v3710
    %vm3717 = vmor %vm3715, %vm3716
    %v3718 = vsel %vm3717, %v3710, %v3714
    %v3719 = vand.u32 2147483647, %v3709
    %vm3720 = vcmp.eq.f32.partialorder %v3719, 8.507059e+37
    %v3721 = vand.u32 %v3709, 2147483648
    %v3722 = vor.u32 1.1754944e-38, %v3721
    %v3723 = vsel %vm3720, %v3722, %v3718
    %v3724 = vmul.f32 %v3699, %v3723
    %v3725 = vmin.f32 %v3724, 1.0
    %v3726 = vmax.f32 %v3725, -1.0
    %v3727 = vmul.f32 %v3672, %v3672
    %v3728 = vmin.f32 16.0, %v3727
    %v3729 = vmul.f32 %v3728, 2.1237322e-06
    %v3730 = vadd.f32 %v3729, 0.00028619796
    %v3731 = vmul.f32 %v3728, %v3730
    %v3732 = vadd.f32 %v3731, 0.0036580483
    %v3733 = vmul.f32 %v3728, %v3732
    %v3734 = vadd.f32 %v3733, 0.05243302
    %v3735 = vmul.f32 %v3728, %v3734
    %v3736 = vadd.f32 %v3735, 0.18741608
    %v3737 = vmul.f32 %v3728, %v3736
    %v3738 = vadd.f32 %v3737, 1.1283791
    %v3739 = vmul.f32 %v3672, %v3738
    %v3740 = vmul.f32 %v3728, 3.8918573e-05
    %v3741 = vadd.f32 %v3740, 0.001143296
    %v3742 = vmul.f32 %v3728, %v3741
    %v3743 = vadd.f32 %v3742, 0.014752088
    %v3744 = vmul.f32 %v3728, %v3743
    %v3745 = vadd.f32 %v3744, 0.112945676
    %v3746 = vmul.f32 %v3728, %v3745
    %v3747 = vadd.f32 %v3746, 0.4994258
    %v3748 = vmul.f32 %v3728, %v3747
    %v3749 = vadd.f32 %v3748, 1.0
    %v3750 = vrcp.pop %v3749
    %v3751 = vmul.f32 %v3749, %v3750
    %v3752 = vsub.f32 1.0, %v3751
    %v3753 = vmul.f32 %v3750, %v3752
    %v3754 = vadd.f32 %v3750, %v3753
    %vm3755 = vweird.f32 %v3749
    %vm3756 = vweird.f32 %v3750
    %vm3757 = vmor %vm3755, %vm3756
    %v3758 = vsel %vm3757, %v3750, %v3754
    %v3759 = vand.u32 2147483647, %v3749
    %vm3760 = vcmp.eq.f32.partialorder %v3759, 8.507059e+37
    %v3761 = vand.u32 %v3749, 2147483648
    %v3762 = vor.u32 1.1754944e-38, %v3761
    %v3763 = vsel %vm3760, %v3762, %v3758
    %v3764 = vmul.f32 %v3739, %v3763
    %v3765 = vmin.f32 %v3764, 1.0
    %v3766 = vmax.f32 %v3765, -1.0
    %v3767 = vmul.f32 %v3673, %v3673
    %v3768 = vmin.f32 16.0, %v3767
    %v3769 = vmul.f32 %v3768, 2.1237322e-06
    %v3770 = vadd.f32 %v3769, 0.00028619796
    %v3771 = vmul.f32 %v3768, %v3770
    %v3772 = vadd.f32 %v3771, 0.0036580483
    %v3773 = vmul.f32 %v3768, %v3772
    %v3774 = vadd.f32 %v3773, 0.05243302
    %v3775 = vmul.f32 %v3768, %v3774
    %v3776 = vadd.f32 %v3775, 0.18741608
    %v3777 = vmul.f32 %v3768, %v3776
    %v3778 = vadd.f32 %v3777, 1.1283791
    %v3779 = vmul.f32 %v3673, %v3778
    %v3780 = vmul.f32 %v3768, 3.8918573e-05
    %v3781 = vadd.f32 %v3780, 0.001143296
    %v3782 = vmul.f32 %v3768, %v3781
    %v3783 = vadd.f32 %v3782, 0.014752088
    %v3784 = vmul.f32 %v3768, %v3783
    %v3785 = vadd.f32 %v3784, 0.112945676
    %v3786 = vmul.f32 %v3768, %v3785
    %v3787 = vadd.f32 %v3786, 0.4994258
    %v3788 = vmul.f32 %v3768, %v3787
    %v3789 = vadd.f32 %v3788, 1.0
    %v3790 = vrcp.pop %v3789
    %v3791 = vmul.f32 %v3789, %v3790
    %v3792 = vsub.f32 1.0, %v3791
    %v3793 = vmul.f32 %v3790, %v3792
    %v3794 = vadd.f32 %v3790, %v3793
    %vm3795 = vweird.f32 %v3789
    %vm3796 = vweird.f32 %v3790
    %vm3797 = vmor %vm3795, %vm3796
    %v3798 = vsel %vm3797, %v3790, %v3794
    %v3799 = vand.u32 2147483647, %v3789
    %vm3800 = vcmp.eq.f32.partialorder %v3799, 8.507059e+37
    %v3801 = vand.u32 %v3789, 2147483648
    %v3802 = vor.u32 1.1754944e-38, %v3801
    %v3803 = vsel %vm3800, %v3802, %v3798
    %v3804 = vmul.f32 %v3779, %v3803
    %v3805 = vmin.f32 %v3804, 1.0
    %v3806 = vmax.f32 %v3805, -1.0
    %v3807 = vmul.f32 %v3674, %v3674
    %v3808 = vmin.f32 16.0, %v3807
    %v3809 = vmul.f32 %v3808, 2.1237322e-06
    %v3810 = vadd.f32 %v3809, 0.00028619796
    %v3811 = vmul.f32 %v3808, %v3810
    %v3812 = vadd.f32 %v3811, 0.0036580483
    %v3813 = vmul.f32 %v3808, %v3812
    %v3814 = vadd.f32 %v3813, 0.05243302
    %v3815 = vmul.f32 %v3808, %v3814
    %v3816 = vadd.f32 %v3815, 0.18741608
    %v3817 = vmul.f32 %v3808, %v3816
    %v3818 = vadd.f32 %v3817, 1.1283791
    %v3819 = vmul.f32 %v3674, %v3818
    %v3820 = vmul.f32 %v3808, 3.8918573e-05
    %v3821 = vadd.f32 %v3820, 0.001143296
    %v3822 = vmul.f32 %v3808, %v3821
    %v3823 = vadd.f32 %v3822, 0.014752088
    %v3824 = vmul.f32 %v3808, %v3823
    %v3825 = vadd.f32 %v3824, 0.112945676
    %v3826 = vmul.f32 %v3808, %v3825
    %v3827 = vadd.f32 %v3826, 0.4994258
    %v3828 = vmul.f32 %v3808, %v3827
    %v3829 = vadd.f32 %v3828, 1.0
    %v3830 = vrcp.pop %v3829
    %v3831 = vmul.f32 %v3829, %v3830
    %v3832 = vsub.f32 1.0, %v3831
    %v3833 = vmul.f32 %v3830, %v3832
    %v3834 = vadd.f32 %v3830, %v3833
    %vm3835 = vweird.f32 %v3829
    %vm3836 = vweird.f32 %v3830
    %vm3837 = vmor %vm3835, %vm3836
    %v3838 = vsel %vm3837, %v3830, %v3834
    %v3839 = vand.u32 2147483647, %v3829
    %vm3840 = vcmp.eq.f32.partialorder %v3839, 8.507059e+37
    %v3841 = vand.u32 %v3829, 2147483648
    %v3842 = vor.u32 1.1754944e-38, %v3841
    %v3843 = vsel %vm3840, %v3842, %v3838
    %v3844 = vmul.f32 %v3819, %v3843
    %v3845 = vmin.f32 %v3844, 1.0
    %v3846 = vmax.f32 %v3845, -1.0
    %v3847 = vmul.f32 %v3675, %v3675
    %v3848 = vmin.f32 16.0, %v3847
    %v3849 = vmul.f32 %v3848, 2.1237322e-06
    %v3850 = vadd.f32 %v3849, 0.00028619796
    %v3851 = vmul.f32 %v3848, %v3850
    %v3852 = vadd.f32 %v3851, 0.0036580483
    %v3853 = vmul.f32 %v3848, %v3852
    %v3854 = vadd.f32 %v3853, 0.05243302
    %v3855 = vmul.f32 %v3848, %v3854
    %v3856 = vadd.f32 %v3855, 0.18741608
    %v3857 = vmul.f32 %v3848, %v3856
    %v3858 = vadd.f32 %v3857, 1.1283791
    %v3859 = vmul.f32 %v3675, %v3858
    %v3860 = vmul.f32 %v3848, 3.8918573e-05
    %v3861 = vadd.f32 %v3860, 0.001143296
    %v3862 = vmul.f32 %v3848, %v3861
    %v3863 = vadd.f32 %v3862, 0.014752088
    %v3864 = vmul.f32 %v3848, %v3863
    %v3865 = vadd.f32 %v3864, 0.112945676
    %v3866 = vmul.f32 %v3848, %v3865
    %v3867 = vadd.f32 %v3866, 0.4994258
    %v3868 = vmul.f32 %v3848, %v3867
    %v3869 = vadd.f32 %v3868, 1.0
    %v3870 = vrcp.pop %v3869
    %v3871 = vmul.f32 %v3869, %v3870
    %v3872 = vsub.f32 1.0, %v3871
    %v3873 = vmul.f32 %v3870, %v3872
    %v3874 = vadd.f32 %v3870, %v3873
    %vm3875 = vweird.f32 %v3869
    %vm3876 = vweird.f32 %v3870
    %vm3877 = vmor %vm3875, %vm3876
    %v3878 = vsel %vm3877, %v3870, %v3874
    %v3879 = vand.u32 2147483647, %v3869
    %vm3880 = vcmp.eq.f32.partialorder %v3879, 8.507059e+37
    %v3881 = vand.u32 %v3869, 2147483648
    %v3882 = vor.u32 1.1754944e-38, %v3881
    %v3883 = vsel %vm3880, %v3882, %v3878
    %v3884 = vmul.f32 %v3859, %v3883
    %v3885 = vmin.f32 %v3884, 1.0
    %v3886 = vmax.f32 %v3885, -1.0
    %v3887 = vmul.f32 %v3676, %v3676
    %v3888 = vmin.f32 16.0, %v3887
    %v3889 = vmul.f32 %v3888, 2.1237322e-06
    %v3890 = vadd.f32 %v3889, 0.00028619796
    %v3891 = vmul.f32 %v3888, %v3890
    %v3892 = vadd.f32 %v3891, 0.0036580483
    %v3893 = vmul.f32 %v3888, %v3892
    %v3894 = vadd.f32 %v3893, 0.05243302
    %v3895 = vmul.f32 %v3888, %v3894
    %v3896 = vadd.f32 %v3895, 0.18741608
    %v3897 = vmul.f32 %v3888, %v3896
    %v3898 = vadd.f32 %v3897, 1.1283791
    %v3899 = vmul.f32 %v3676, %v3898
    %v3900 = vmul.f32 %v3888, 3.8918573e-05
    %v3901 = vadd.f32 %v3900, 0.001143296
    %v3902 = vmul.f32 %v3888, %v3901
    %v3903 = vadd.f32 %v3902, 0.014752088
    %v3904 = vmul.f32 %v3888, %v3903
    %v3905 = vadd.f32 %v3904, 0.112945676
    %v3906 = vmul.f32 %v3888, %v3905
    %v3907 = vadd.f32 %v3906, 0.4994258
    %v3908 = vmul.f32 %v3888, %v3907
    %v3909 = vadd.f32 %v3908, 1.0
    %v3910 = vrcp.pop %v3909
    %v3911 = vmul.f32 %v3909, %v3910
    %v3912 = vsub.f32 1.0, %v3911
    %v3913 = vmul.f32 %v3910, %v3912
    %v3914 = vadd.f32 %v3910, %v3913
    %vm3915 = vweird.f32 %v3909
    %vm3916 = vweird.f32 %v3910
    %vm3917 = vmor %vm3915, %vm3916
    %v3918 = vsel %vm3917, %v3910, %v3914
    %v3919 = vand.u32 2147483647, %v3909
    %vm3920 = vcmp.eq.f32.partialorder %v3919, 8.507059e+37
    %v3921 = vand.u32 %v3909, 2147483648
    %v3922 = vor.u32 1.1754944e-38, %v3921
    %v3923 = vsel %vm3920, %v3922, %v3918
    %v3924 = vmul.f32 %v3899, %v3923
    %v3925 = vmin.f32 %v3924, 1.0
    %v3926 = vmax.f32 %v3925, -1.0
    %v3927 = vmul.f32 %v3677, %v3677
    %v3928 = vmin.f32 16.0, %v3927
    %v3929 = vmul.f32 %v3928, 2.1237322e-06
    %v3930 = vadd.f32 %v3929, 0.00028619796
    %v3931 = vmul.f32 %v3928, %v3930
    %v3932 = vadd.f32 %v3931, 0.0036580483
    %v3933 = vmul.f32 %v3928, %v3932
    %v3934 = vadd.f32 %v3933, 0.05243302
    %v3935 = vmul.f32 %v3928, %v3934
    %v3936 = vadd.f32 %v3935, 0.18741608
    %v3937 = vmul.f32 %v3928, %v3936
    %v3938 = vadd.f32 %v3937, 1.1283791
    %v3939 = vmul.f32 %v3677, %v3938
    %v3940 = vmul.f32 %v3928, 3.8918573e-05
    %v3941 = vadd.f32 %v3940, 0.001143296
    %v3942 = vmul.f32 %v3928, %v3941
    %v3943 = vadd.f32 %v3942, 0.014752088
    %v3944 = vmul.f32 %v3928, %v3943
    %v3945 = vadd.f32 %v3944, 0.112945676
    %v3946 = vmul.f32 %v3928, %v3945
    %v3947 = vadd.f32 %v3946, 0.4994258
    %v3948 = vmul.f32 %v3928, %v3947
    %v3949 = vadd.f32 %v3948, 1.0
    %v3950 = vrcp.pop %v3949
    %v3951 = vmul.f32 %v3949, %v3950
    %v3952 = vsub.f32 1.0, %v3951
    %v3953 = vmul.f32 %v3950, %v3952
    %v3954 = vadd.f32 %v3950, %v3953
    %vm3955 = vweird.f32 %v3949
    %vm3956 = vweird.f32 %v3950
    %vm3957 = vmor %vm3955, %vm3956
    %v3958 = vsel %vm3957, %v3950, %v3954
    %v3959 = vand.u32 2147483647, %v3949
    %vm3960 = vcmp.eq.f32.partialorder %v3959, 8.507059e+37
    %v3961 = vand.u32 %v3949, 2147483648
    %v3962 = vor.u32 1.1754944e-38, %v3961
    %v3963 = vsel %vm3960, %v3962, %v3958
    %v3964 = vmul.f32 %v3939, %v3963
    %v3965 = vmin.f32 %v3964, 1.0
    %v3966 = vmax.f32 %v3965, -1.0
    %v3967 = vmul.f32 %v3678, %v3678
    %v3968 = vmin.f32 16.0, %v3967
    %v3969 = vmul.f32 %v3968, 2.1237322e-06
    %v3970 = vadd.f32 %v3969, 0.00028619796
    %v3971 = vmul.f32 %v3968, %v3970
    %v3972 = vadd.f32 %v3971, 0.0036580483
    %v3973 = vmul.f32 %v3968, %v3972
    %v3974 = vadd.f32 %v3973, 0.05243302
    %v3975 = vmul.f32 %v3968, %v3974
    %v3976 = vadd.f32 %v3975, 0.18741608
    %v3977 = vmul.f32 %v3968, %v3976
    %v3978 = vadd.f32 %v3977, 1.1283791
    %v3979 = vmul.f32 %v3678, %v3978
    %v3980 = vmul.f32 %v3968, 3.8918573e-05
    %v3981 = vadd.f32 %v3980, 0.001143296
    %v3982 = vmul.f32 %v3968, %v3981
    %v3983 = vadd.f32 %v3982, 0.014752088
    %v3984 = vmul.f32 %v3968, %v3983
    %v3985 = vadd.f32 %v3984, 0.112945676
    %v3986 = vmul.f32 %v3968, %v3985
    %v3987 = vadd.f32 %v3986, 0.4994258
    %v3988 = vmul.f32 %v3968, %v3987
    %v3989 = vadd.f32 %v3988, 1.0
    %v3990 = vrcp.pop %v3989
    %v3991 = vmul.f32 %v3989, %v3990
    %v3992 = vsub.f32 1.0, %v3991
    %v3993 = vmul.f32 %v3990, %v3992
    %v3994 = vadd.f32 %v3990, %v3993
    %vm3995 = vweird.f32 %v3989
    %vm3996 = vweird.f32 %v3990
    %vm3997 = vmor %vm3995, %vm3996
    %v3998 = vsel %vm3997, %v3990, %v3994
    %v3999 = vand.u32 2147483647, %v3989
    %vm4000 = vcmp.eq.f32.partialorder %v3999, 8.507059e+37
    %v4001 = vand.u32 %v3989, 2147483648
    %v4002 = vor.u32 1.1754944e-38, %v4001
    %v4003 = vsel %vm4000, %v4002, %v3998
    %v4004 = vmul.f32 %v3979, %v4003
    %v4005 = vmin.f32 %v4004, 1.0
    %v4006 = vmax.f32 %v4005, -1.0
    %v4007 = vmul.f32 %v3679, %v3679
    %v4008 = vmin.f32 16.0, %v4007
    %v4009 = vmul.f32 %v4008, 2.1237322e-06
    %v4010 = vadd.f32 %v4009, 0.00028619796
    %v4011 = vmul.f32 %v4008, %v4010
    %v4012 = vadd.f32 %v4011, 0.0036580483
    %v4013 = vmul.f32 %v4008, %v4012
    %v4014 = vadd.f32 %v4013, 0.05243302
    %v4015 = vmul.f32 %v4008, %v4014
    %v4016 = vadd.f32 %v4015, 0.18741608
    %v4017 = vmul.f32 %v4008, %v4016
    %v4018 = vadd.f32 %v4017, 1.1283791
    %v4019 = vmul.f32 %v3679, %v4018
    %v4020 = vmul.f32 %v4008, 3.8918573e-05
    %v4021 = vadd.f32 %v4020, 0.001143296
    %v4022 = vmul.f32 %v4008, %v4021
    %v4023 = vadd.f32 %v4022, 0.014752088
    %v4024 = vmul.f32 %v4008, %v4023
    %v4025 = vadd.f32 %v4024, 0.112945676
    %v4026 = vmul.f32 %v4008, %v4025
    %v4027 = vadd.f32 %v4026, 0.4994258
    %v4028 = vmul.f32 %v4008, %v4027
    %v4029 = vadd.f32 %v4028, 1.0
    %v4030 = vrcp.pop %v4029
    %v4031 = vmul.f32 %v4029, %v4030
    %v4032 = vsub.f32 1.0, %v4031
    %v4033 = vmul.f32 %v4030, %v4032
    %v4034 = vadd.f32 %v4030, %v4033
    %vm4035 = vweird.f32 %v4029
    %vm4036 = vweird.f32 %v4030
    %vm4037 = vmor %vm4035, %vm4036
    %v4038 = vsel %vm4037, %v4030, %v4034
    %v4039 = vand.u32 2147483647, %v4029
    %vm4040 = vcmp.eq.f32.partialorder %v4039, 8.507059e+37
    %v4041 = vand.u32 %v4029, 2147483648
    %v4042 = vor.u32 1.1754944e-38, %v4041
    %v4043 = vsel %vm4040, %v4042, %v4038
    %v4044 = vmul.f32 %v4019, %v4043
    %v4045 = vmin.f32 %v4044, 1.0
    %v4046 = vmax.f32 %v4045, -1.0
    %v4047 = vmul.f32 %v3680, %v3680
    %v4048 = vmin.f32 16.0, %v4047
    %v4049 = vmul.f32 %v4048, 2.1237322e-06
    %v4050 = vadd.f32 %v4049, 0.00028619796
    %v4051 = vmul.f32 %v4048, %v4050
    %v4052 = vadd.f32 %v4051, 0.0036580483
    %v4053 = vmul.f32 %v4048, %v4052
    %v4054 = vadd.f32 %v4053, 0.05243302
    %v4055 = vmul.f32 %v4048, %v4054
    %v4056 = vadd.f32 %v4055, 0.18741608
    %v4057 = vmul.f32 %v4048, %v4056
    %v4058 = vadd.f32 %v4057, 1.1283791
    %v4059 = vmul.f32 %v3680, %v4058
    %v4060 = vmul.f32 %v4048, 3.8918573e-05
    %v4061 = vadd.f32 %v4060, 0.001143296
    %v4062 = vmul.f32 %v4048, %v4061
    %v4063 = vadd.f32 %v4062, 0.014752088
    %v4064 = vmul.f32 %v4048, %v4063
    %v4065 = vadd.f32 %v4064, 0.112945676
    %v4066 = vmul.f32 %v4048, %v4065
    %v4067 = vadd.f32 %v4066, 0.4994258
    %v4068 = vmul.f32 %v4048, %v4067
    %v4069 = vadd.f32 %v4068, 1.0
    %v4070 = vrcp.pop %v4069
    %v4071 = vmul.f32 %v4069, %v4070
    %v4072 = vsub.f32 1.0, %v4071
    %v4073 = vmul.f32 %v4070, %v4072
    %v4074 = vadd.f32 %v4070, %v4073
    %vm4075 = vweird.f32 %v4069
    %vm4076 = vweird.f32 %v4070
    %vm4077 = vmor %vm4075, %vm4076
    %v4078 = vsel %vm4077, %v4070, %v4074
    %v4079 = vand.u32 2147483647, %v4069
    %vm4080 = vcmp.eq.f32.partialorder %v4079, 8.507059e+37
    %v4081 = vand.u32 %v4069, 2147483648
    %v4082 = vor.u32 1.1754944e-38, %v4081
    %v4083 = vsel %vm4080, %v4082, %v4078
    %v4084 = vmul.f32 %v4059, %v4083
    %v4085 = vmin.f32 %v4084, 1.0
    %v4086 = vmax.f32 %v4085, -1.0
    %v4087 = vmul.f32 %v3681, %v3681
    %v4088 = vmin.f32 16.0, %v4087
    %v4089 = vmul.f32 %v4088, 2.1237322e-06
    %v4090 = vadd.f32 %v4089, 0.00028619796
    %v4091 = vmul.f32 %v4088, %v4090
    %v4092 = vadd.f32 %v4091, 0.0036580483
    %v4093 = vmul.f32 %v4088, %v4092
    %v4094 = vadd.f32 %v4093, 0.05243302
    %v4095 = vmul.f32 %v4088, %v4094
    %v4096 = vadd.f32 %v4095, 0.18741608
    %v4097 = vmul.f32 %v4088, %v4096
    %v4098 = vadd.f32 %v4097, 1.1283791
    %v4099 = vmul.f32 %v3681, %v4098
    %v4100 = vmul.f32 %v4088, 3.8918573e-05
    %v4101 = vadd.f32 %v4100, 0.001143296
    %v4102 = vmul.f32 %v4088, %v4101
    %v4103 = vadd.f32 %v4102, 0.014752088
    %v4104 = vmul.f32 %v4088, %v4103
    %v4105 = vadd.f32 %v4104, 0.112945676
    %v4106 = vmul.f32 %v4088, %v4105
    %v4107 = vadd.f32 %v4106, 0.4994258
    %v4108 = vmul.f32 %v4088, %v4107
    %v4109 = vadd.f32 %v4108, 1.0
    %v4110 = vrcp.pop %v4109
    %v4111 = vmul.f32 %v4109, %v4110
    %v4112 = vsub.f32 1.0, %v4111
    %v4113 = vmul.f32 %v4110, %v4112
    %v4114 = vadd.f32 %v4110, %v4113
    %vm4115 = vweird.f32 %v4109
    %vm4116 = vweird.f32 %v4110
    %vm4117 = vmor %vm4115, %vm4116
    %v4118 = vsel %vm4117, %v4110, %v4114
    %v4119 = vand.u32 2147483647, %v4109
    %vm4120 = vcmp.eq.f32.partialorder %v4119, 8.507059e+37
    %v4121 = vand.u32 %v4109, 2147483648
    %v4122 = vor.u32 1.1754944e-38, %v4121
    %v4123 = vsel %vm4120, %v4122, %v4118
    %v4124 = vmul.f32 %v4099, %v4123
    %v4125 = vmin.f32 %v4124, 1.0
    %v4126 = vmax.f32 %v4125, -1.0
    %v4127 = vmul.f32 %v3682, %v3682
    %v4128 = vmin.f32 16.0, %v4127
    %v4129 = vmul.f32 %v4128, 2.1237322e-06
    %v4130 = vadd.f32 %v4129, 0.00028619796
    %v4131 = vmul.f32 %v4128, %v4130
    %v4132 = vadd.f32 %v4131, 0.0036580483
    %v4133 = vmul.f32 %v4128, %v4132
    %v4134 = vadd.f32 %v4133, 0.05243302
    %v4135 = vmul.f32 %v4128, %v4134
    %v4136 = vadd.f32 %v4135, 0.18741608
    %v4137 = vmul.f32 %v4128, %v4136
    %v4138 = vadd.f32 %v4137, 1.1283791
    %v4139 = vmul.f32 %v3682, %v4138
    %v4140 = vmul.f32 %v4128, 3.8918573e-05
    %v4141 = vadd.f32 %v4140, 0.001143296
    %v4142 = vmul.f32 %v4128, %v4141
    %v4143 = vadd.f32 %v4142, 0.014752088
    %v4144 = vmul.f32 %v4128, %v4143
    %v4145 = vadd.f32 %v4144, 0.112945676
    %v4146 = vmul.f32 %v4128, %v4145
    %v4147 = vadd.f32 %v4146, 0.4994258
    %v4148 = vmul.f32 %v4128, %v4147
    %v4149 = vadd.f32 %v4148, 1.0
    %v4150 = vrcp.pop %v4149
    %v4151 = vmul.f32 %v4149, %v4150
    %v4152 = vsub.f32 1.0, %v4151
    %v4153 = vmul.f32 %v4150, %v4152
    %v4154 = vadd.f32 %v4150, %v4153
    %vm4155 = vweird.f32 %v4149
    %vm4156 = vweird.f32 %v4150
    %vm4157 = vmor %vm4155, %vm4156
    %v4158 = vsel %vm4157, %v4150, %v4154
    %v4159 = vand.u32 2147483647, %v4149
    %vm4160 = vcmp.eq.f32.partialorder %v4159, 8.507059e+37
    %v4161 = vand.u32 %v4149, 2147483648
    %v4162 = vor.u32 1.1754944e-38, %v4161
    %v4163 = vsel %vm4160, %v4162, %v4158
    %v4164 = vmul.f32 %v4139, %v4163
    %v4165 = vmin.f32 %v4164, 1.0
    %v4166 = vmax.f32 %v4165, -1.0
    %v4167 = vmul.f32 %v3683, %v3683
    %v4168 = vmin.f32 16.0, %v4167
    %v4169 = vmul.f32 %v4168, 2.1237322e-06
    %v4170 = vadd.f32 %v4169, 0.00028619796
    %v4171 = vmul.f32 %v4168, %v4170
    %v4172 = vadd.f32 %v4171, 0.0036580483
    %v4173 = vmul.f32 %v4168, %v4172
    %v4174 = vadd.f32 %v4173, 0.05243302
    %v4175 = vmul.f32 %v4168, %v4174
    %v4176 = vadd.f32 %v4175, 0.18741608
    %v4177 = vmul.f32 %v4168, %v4176
    %v4178 = vadd.f32 %v4177, 1.1283791
    %v4179 = vmul.f32 %v3683, %v4178
    %v4180 = vmul.f32 %v4168, 3.8918573e-05
    %v4181 = vadd.f32 %v4180, 0.001143296
    %v4182 = vmul.f32 %v4168, %v4181
    %v4183 = vadd.f32 %v4182, 0.014752088
    %v4184 = vmul.f32 %v4168, %v4183
    %v4185 = vadd.f32 %v4184, 0.112945676
    %v4186 = vmul.f32 %v4168, %v4185
    %v4187 = vadd.f32 %v4186, 0.4994258
    %v4188 = vmul.f32 %v4168, %v4187
    %v4189 = vadd.f32 %v4188, 1.0
    %v4190 = vrcp.pop %v4189
    %v4191 = vmul.f32 %v4189, %v4190
    %v4192 = vsub.f32 1.0, %v4191
    %v4193 = vmul.f32 %v4190, %v4192
    %v4194 = vadd.f32 %v4190, %v4193
    %vm4195 = vweird.f32 %v4189
    %vm4196 = vweird.f32 %v4190
    %vm4197 = vmor %vm4195, %vm4196
    %v4198 = vsel %vm4197, %v4190, %v4194
    %v4199 = vand.u32 2147483647, %v4189
    %vm4200 = vcmp.eq.f32.partialorder %v4199, 8.507059e+37
    %v4201 = vand.u32 %v4189, 2147483648
    %v4202 = vor.u32 1.1754944e-38, %v4201
    %v4203 = vsel %vm4200, %v4202, %v4198
    %v4204 = vmul.f32 %v4179, %v4203
    %v4205 = vmin.f32 %v4204, 1.0
    %v4206 = vmax.f32 %v4205, -1.0
    %v4207 = vmul.f32 %v3684, %v3684
    %v4208 = vmin.f32 16.0, %v4207
    %v4209 = vmul.f32 %v4208, 2.1237322e-06
    %v4210 = vadd.f32 %v4209, 0.00028619796
    %v4211 = vmul.f32 %v4208, %v4210
    %v4212 = vadd.f32 %v4211, 0.0036580483
    %v4213 = vmul.f32 %v4208, %v4212
    %v4214 = vadd.f32 %v4213, 0.05243302
    %v4215 = vmul.f32 %v4208, %v4214
    %v4216 = vadd.f32 %v4215, 0.18741608
    %v4217 = vmul.f32 %v4208, %v4216
    %v4218 = vadd.f32 %v4217, 1.1283791
    %v4219 = vmul.f32 %v3684, %v4218
    %v4220 = vmul.f32 %v4208, 3.8918573e-05
    %v4221 = vadd.f32 %v4220, 0.001143296
    %v4222 = vmul.f32 %v4208, %v4221
    %v4223 = vadd.f32 %v4222, 0.014752088
    %v4224 = vmul.f32 %v4208, %v4223
    %v4225 = vadd.f32 %v4224, 0.112945676
    %v4226 = vmul.f32 %v4208, %v4225
    %v4227 = vadd.f32 %v4226, 0.4994258
    %v4228 = vmul.f32 %v4208, %v4227
    %v4229 = vadd.f32 %v4228, 1.0
    %v4230 = vrcp.pop %v4229
    %v4231 = vmul.f32 %v4229, %v4230
    %v4232 = vsub.f32 1.0, %v4231
    %v4233 = vmul.f32 %v4230, %v4232
    %v4234 = vadd.f32 %v4230, %v4233
    %vm4235 = vweird.f32 %v4229
    %vm4236 = vweird.f32 %v4230
    %vm4237 = vmor %vm4235, %vm4236
    %v4238 = vsel %vm4237, %v4230, %v4234
    %v4239 = vand.u32 2147483647, %v4229
    %vm4240 = vcmp.eq.f32.partialorder %v4239, 8.507059e+37
    %v4241 = vand.u32 %v4229, 2147483648
    %v4242 = vor.u32 1.1754944e-38, %v4241
    %v4243 = vsel %vm4240, %v4242, %v4238
    %v4244 = vmul.f32 %v4219, %v4243
    %v4245 = vmin.f32 %v4244, 1.0
    %v4246 = vmax.f32 %v4245, -1.0
    %v4247 = vmul.f32 %v3685, %v3685
    %v4248 = vmin.f32 16.0, %v4247
    %v4249 = vmul.f32 %v4248, 2.1237322e-06
    %v4250 = vadd.f32 %v4249, 0.00028619796
    %v4251 = vmul.f32 %v4248, %v4250
    %v4252 = vadd.f32 %v4251, 0.0036580483
    %v4253 = vmul.f32 %v4248, %v4252
    %v4254 = vadd.f32 %v4253, 0.05243302
    %v4255 = vmul.f32 %v4248, %v4254
    %v4256 = vadd.f32 %v4255, 0.18741608
    %v4257 = vmul.f32 %v4248, %v4256
    %v4258 = vadd.f32 %v4257, 1.1283791
    %v4259 = vmul.f32 %v3685, %v4258
    %v4260 = vmul.f32 %v4248, 3.8918573e-05
    %v4261 = vadd.f32 %v4260, 0.001143296
    %v4262 = vmul.f32 %v4248, %v4261
    %v4263 = vadd.f32 %v4262, 0.014752088
    %v4264 = vmul.f32 %v4248, %v4263
    %v4265 = vadd.f32 %v4264, 0.112945676
    %v4266 = vmul.f32 %v4248, %v4265
    %v4267 = vadd.f32 %v4266, 0.4994258
    %v4268 = vmul.f32 %v4248, %v4267
    %v4269 = vadd.f32 %v4268, 1.0
    %v4270 = vrcp.pop %v4269
    %v4271 = vmul.f32 %v4269, %v4270
    %v4272 = vsub.f32 1.0, %v4271
    %v4273 = vmul.f32 %v4270, %v4272
    %v4274 = vadd.f32 %v4270, %v4273
    %vm4275 = vweird.f32 %v4269
    %vm4276 = vweird.f32 %v4270
    %vm4277 = vmor %vm4275, %vm4276
    %v4278 = vsel %vm4277, %v4270, %v4274
    %v4279 = vand.u32 2147483647, %v4269
    %vm4280 = vcmp.eq.f32.partialorder %v4279, 8.507059e+37
    %v4281 = vand.u32 %v4269, 2147483648
    %v4282 = vor.u32 1.1754944e-38, %v4281
    %v4283 = vsel %vm4280, %v4282, %v4278
    %v4284 = vmul.f32 %v4259, %v4283
    %v4285 = vmin.f32 %v4284, 1.0
    %v4286 = vmax.f32 %v4285, -1.0
    %v4287 = vmul.f32 %v3686, %v3686
    %v4288 = vmin.f32 16.0, %v4287
    %v4289 = vmul.f32 %v4288, 2.1237322e-06
    %v4290 = vadd.f32 %v4289, 0.00028619796
    %v4291 = vmul.f32 %v4288, %v4290
    %v4292 = vadd.f32 %v4291, 0.0036580483
    %v4293 = vmul.f32 %v4288, %v4292
    %v4294 = vadd.f32 %v4293, 0.05243302
    %v4295 = vmul.f32 %v4288, %v4294
    %v4296 = vadd.f32 %v4295, 0.18741608
    %v4297 = vmul.f32 %v4288, %v4296
    %v4298 = vadd.f32 %v4297, 1.1283791
    %v4299 = vmul.f32 %v3686, %v4298
    %v4300 = vmul.f32 %v4288, 3.8918573e-05
    %v4301 = vadd.f32 %v4300, 0.001143296
    %v4302 = vmul.f32 %v4288, %v4301
    %v4303 = vadd.f32 %v4302, 0.014752088
    %v4304 = vmul.f32 %v4288, %v4303
    %v4305 = vadd.f32 %v4304, 0.112945676
    %v4306 = vmul.f32 %v4288, %v4305
    %v4307 = vadd.f32 %v4306, 0.4994258
    %v4308 = vmul.f32 %v4288, %v4307
    %v4309 = vadd.f32 %v4308, 1.0
    %v4310 = vrcp.pop %v4309
    %v4311 = vmul.f32 %v4309, %v4310
    %v4312 = vsub.f32 1.0, %v4311
    %v4313 = vmul.f32 %v4310, %v4312
    %v4314 = vadd.f32 %v4310, %v4313
    %vm4315 = vweird.f32 %v4309
    %vm4316 = vweird.f32 %v4310
    %vm4317 = vmor %vm4315, %vm4316
    %v4318 = vsel %vm4317, %v4310, %v4314
    %v4319 = vand.u32 2147483647, %v4309
    %vm4320 = vcmp.eq.f32.partialorder %v4319, 8.507059e+37
    %v4321 = vand.u32 %v4309, 2147483648
    %v4322 = vor.u32 1.1754944e-38, %v4321
    %v4323 = vsel %vm4320, %v4322, %v4318
    %v4324 = vmul.f32 %v4299, %v4323
    %v4325 = vmin.f32 %v4324, 1.0
    %v4326 = vmax.f32 %v4325, -1.0
    %v4327 = vadd.f32 %v3726, 1.0
    %v4328 = vadd.f32 %v3766, 1.0
    %v4329 = vadd.f32 %v3806, 1.0
    %v4330 = vadd.f32 %v3846, 1.0
    %v4331 = vadd.f32 %v3886, 1.0
    %v4332 = vadd.f32 %v3926, 1.0
    %v4333 = vadd.f32 %v3966, 1.0
    %v4334 = vadd.f32 %v4006, 1.0
    %v4335 = vadd.f32 %v4046, 1.0
    %v4336 = vadd.f32 %v4086, 1.0
    %v4337 = vadd.f32 %v4126, 1.0
    %v4338 = vadd.f32 %v4166, 1.0
    %v4339 = vadd.f32 %v4206, 1.0
    %v4340 = vadd.f32 %v4246, 1.0
    %v4341 = vadd.f32 %v4286, 1.0
    %v4342 = vadd.f32 %v4326, 1.0
    %v4343 = vmul.f32 %v3655, %v4327
    %v4344 = vmul.f32 %v3656, %v4328
    %v4345 = vmul.f32 %v3657, %v4329
    %v4346 = vmul.f32 %v3658, %v4330
    %v4347 = vmul.f32 %v3659, %v4331
    %v4348 = vmul.f32 %v3660, %v4332
    %v4349 = vmul.f32 %v3661, %v4333
    %v4350 = vmul.f32 %v3662, %v4334
    %v4351 = vmul.f32 %v3663, %v4335
    %v4352 = vmul.f32 %v3664, %v4336
    %v4353 = vmul.f32 %v3665, %v4337
    %v4354 = vmul.f32 %v3666, %v4338
    %v4355 = vmul.f32 %v3667, %v4339
    %v4356 = vmul.f32 %v3668, %v4340
    %v4357 = vmul.f32 %v3669, %v4341
    %v4358 = vmul.f32 %v3670, %v4342
    %v4359 = vld [vmem:[%s11] sm:$0x1]
    %v4360 = vld [vmem:[%s12] sm:$0x1]
    %4361 = vadd.xlane.f32.xlu0 %v4343
    %v4362 = vpop.xlane.xlu0 %4361
    %4363 = vadd.xlane.f32.xlu0 %v4344
    %v4364 = vpop.xlane.xlu0 %4363
    %4365 = vadd.xlane.f32.xlu0 %v4345
    %v4366 = vpop.xlane.xlu0 %4365
    %4367 = vadd.xlane.f32.xlu0 %v4346
    %v4368 = vpop.xlane.xlu0 %4367
    %4369 = vadd.xlane.f32.xlu0 %v4347
    %v4370 = vpop.xlane.xlu0 %4369
    %4371 = vadd.xlane.f32.xlu0 %v4348
    %v4372 = vpop.xlane.xlu0 %4371
    %4373 = vadd.xlane.f32.xlu0 %v4349
    %v4374 = vpop.xlane.xlu0 %4373
    %4375 = vadd.xlane.f32.xlu0 %v4350
    %v4376 = vpop.xlane.xlu0 %4375
    %4377 = vadd.xlane.f32.xlu0 %v4351
    %v4378 = vpop.xlane.xlu0 %4377
    %4379 = vadd.xlane.f32.xlu0 %v4352
    %v4380 = vpop.xlane.xlu0 %4379
    %4381 = vadd.xlane.f32.xlu0 %v4353
    %v4382 = vpop.xlane.xlu0 %4381
    %4383 = vadd.xlane.f32.xlu0 %v4354
    %v4384 = vpop.xlane.xlu0 %4383
    %4385 = vadd.xlane.f32.xlu0 %v4355
    %v4386 = vpop.xlane.xlu0 %4385
    %4387 = vadd.xlane.f32.xlu0 %v4356
    %v4388 = vpop.xlane.xlu0 %4387
    %4389 = vadd.xlane.f32.xlu0 %v4357
    %v4390 = vpop.xlane.xlu0 %4389
    %4391 = vadd.xlane.f32.xlu0 %v4358
    %v4392 = vpop.xlane.xlu0 %4391
    %v4393 = vmul.f32 %v4362, %v1007
    %v4394 = vmul.f32 %v4364, %v1007
    %v4395 = vmul.f32 %v4366, %v1007
    %v4396 = vmul.f32 %v4368, %v1007
    %v4397 = vmul.f32 %v4370, %v1007
    %v4398 = vmul.f32 %v4372, %v1007
    %v4399 = vmul.f32 %v4374, %v1007
    %v4400 = vmul.f32 %v4376, %v1007
    %v4401 = vmul.f32 %v4378, %v1007
    %v4402 = vmul.f32 %v4380, %v1007
    %v4403 = vmul.f32 %v4382, %v1007
    %v4404 = vmul.f32 %v4384, %v1007
    %v4405 = vmul.f32 %v4386, %v1007
    %v4406 = vmul.f32 %v4388, %v1007
    %v4407 = vmul.f32 %v4390, %v1007
    %v4408 = vmul.f32 %v4392, %v1007
    %v4409 = vmul.f32 %v4343, %v4343
    %v4410 = vmul.f32 %v4344, %v4344
    %v4411 = vmul.f32 %v4345, %v4345
    %v4412 = vmul.f32 %v4346, %v4346
    %v4413 = vmul.f32 %v4347, %v4347
    %v4414 = vmul.f32 %v4348, %v4348
    %v4415 = vmul.f32 %v4349, %v4349
    %v4416 = vmul.f32 %v4350, %v4350
    %v4417 = vmul.f32 %v4351, %v4351
    %v4418 = vmul.f32 %v4352, %v4352
    %v4419 = vmul.f32 %v4353, %v4353
    %v4420 = vmul.f32 %v4354, %v4354
    %v4421 = vmul.f32 %v4355, %v4355
    %v4422 = vmul.f32 %v4356, %v4356
    %v4423 = vmul.f32 %v4357, %v4357
    %v4424 = vmul.f32 %v4358, %v4358
    %4425 = vadd.xlane.f32.xlu0 %v4409
    %v4426 = vpop.xlane.xlu0 %4425
    %4427 = vadd.xlane.f32.xlu0 %v4410
    %v4428 = vpop.xlane.xlu0 %4427
    %4429 = vadd.xlane.f32.xlu0 %v4411
    %v4430 = vpop.xlane.xlu0 %4429
    %4431 = vadd.xlane.f32.xlu0 %v4412
    %v4432 = vpop.xlane.xlu0 %4431
    %4433 = vadd.xlane.f32.xlu0 %v4413
    %v4434 = vpop.xlane.xlu0 %4433
    %4435 = vadd.xlane.f32.xlu0 %v4414
    %v4436 = vpop.xlane.xlu0 %4435
    %4437 = vadd.xlane.f32.xlu0 %v4415
    %v4438 = vpop.xlane.xlu0 %4437
    %4439 = vadd.xlane.f32.xlu0 %v4416
    %v4440 = vpop.xlane.xlu0 %4439
    %4441 = vadd.xlane.f32.xlu0 %v4417
    %v4442 = vpop.xlane.xlu0 %4441
    %4443 = vadd.xlane.f32.xlu0 %v4418
    %v4444 = vpop.xlane.xlu0 %4443
    %4445 = vadd.xlane.f32.xlu0 %v4419
    %v4446 = vpop.xlane.xlu0 %4445
    %4447 = vadd.xlane.f32.xlu0 %v4420
    %v4448 = vpop.xlane.xlu0 %4447
    %4449 = vadd.xlane.f32.xlu0 %v4421
    %v4450 = vpop.xlane.xlu0 %4449
    %4451 = vadd.xlane.f32.xlu0 %v4422
    %v4452 = vpop.xlane.xlu0 %4451
    %4453 = vadd.xlane.f32.xlu0 %v4423
    %v4454 = vpop.xlane.xlu0 %4453
    %4455 = vadd.xlane.f32.xlu0 %v4424
    %v4456 = vpop.xlane.xlu0 %4455
    %v4457 = vmul.f32 %v4426, %v1007
    %v4458 = vmul.f32 %v4428, %v1007
    %v4459 = vmul.f32 %v4430, %v1007
    %v4460 = vmul.f32 %v4432, %v1007
    %v4461 = vmul.f32 %v4434, %v1007
    %v4462 = vmul.f32 %v4436, %v1007
    %v4463 = vmul.f32 %v4438, %v1007
    %v4464 = vmul.f32 %v4440, %v1007
    %v4465 = vmul.f32 %v4442, %v1007
    %v4466 = vmul.f32 %v4444, %v1007
    %v4467 = vmul.f32 %v4446, %v1007
    %v4468 = vmul.f32 %v4448, %v1007
    %v4469 = vmul.f32 %v4450, %v1007
    %v4470 = vmul.f32 %v4452, %v1007
    %v4471 = vmul.f32 %v4454, %v1007
    %v4472 = vmul.f32 %v4456, %v1007
    %v4473 = vmul.f32 %v4393, %v4393
    %v4474 = vmul.f32 %v4394, %v4394
    %v4475 = vmul.f32 %v4395, %v4395
    %v4476 = vmul.f32 %v4396, %v4396
    %v4477 = vmul.f32 %v4397, %v4397
    %v4478 = vmul.f32 %v4398, %v4398
    %v4479 = vmul.f32 %v4399, %v4399
    %v4480 = vmul.f32 %v4400, %v4400
    %v4481 = vmul.f32 %v4401, %v4401
    %v4482 = vmul.f32 %v4402, %v4402
    %v4483 = vmul.f32 %v4403, %v4403
    %v4484 = vmul.f32 %v4404, %v4404
    %v4485 = vmul.f32 %v4405, %v4405
    %v4486 = vmul.f32 %v4406, %v4406
    %v4487 = vmul.f32 %v4407, %v4407
    %v4488 = vmul.f32 %v4408, %v4408
    %v4489 = vsub.f32 %v4457, %v4473
    %v4490 = vsub.f32 %v4458, %v4474
    %v4491 = vsub.f32 %v4459, %v4475
    %v4492 = vsub.f32 %v4460, %v4476
    %v4493 = vsub.f32 %v4461, %v4477
    %v4494 = vsub.f32 %v4462, %v4478
    %v4495 = vsub.f32 %v4463, %v4479
    %v4496 = vsub.f32 %v4464, %v4480
    %v4497 = vsub.f32 %v4465, %v4481
    %v4498 = vsub.f32 %v4466, %v4482
    %v4499 = vsub.f32 %v4467, %v4483
    %v4500 = vsub.f32 %v4468, %v4484
    %v4501 = vsub.f32 %v4469, %v4485
    %v4502 = vsub.f32 %v4470, %v4486
    %v4503 = vsub.f32 %v4471, %v4487
    %v4504 = vsub.f32 %v4472, %v4488
    %v4505 = vmax.f32 %v4489, 0.0
    %v4506 = vmax.f32 %v4490, 0.0
    %v4507 = vmax.f32 %v4491, 0.0
    %v4508 = vmax.f32 %v4492, 0.0
    %v4509 = vmax.f32 %v4493, 0.0
    %v4510 = vmax.f32 %v4494, 0.0
    %v4511 = vmax.f32 %v4495, 0.0
    %v4512 = vmax.f32 %v4496, 0.0
    %v4513 = vmax.f32 %v4497, 0.0
    %v4514 = vmax.f32 %v4498, 0.0
    %v4515 = vmax.f32 %v4499, 0.0
    %v4516 = vmax.f32 %v4500, 0.0
    %v4517 = vmax.f32 %v4501, 0.0
    %v4518 = vmax.f32 %v4502, 0.0
    %v4519 = vmax.f32 %v4503, 0.0
    %v4520 = vmax.f32 %v4504, 0.0
    %v4521 = vadd.f32 %v4505, 1e-05
    %v4522 = vadd.f32 %v4506, 1e-05
    %v4523 = vadd.f32 %v4507, 1e-05
    %v4524 = vadd.f32 %v4508, 1e-05
    %v4525 = vadd.f32 %v4509, 1e-05
    %v4526 = vadd.f32 %v4510, 1e-05
    %v4527 = vadd.f32 %v4511, 1e-05
    %v4528 = vadd.f32 %v4512, 1e-05
    %v4529 = vadd.f32 %v4513, 1e-05
    %v4530 = vadd.f32 %v4514, 1e-05
    %v4531 = vadd.f32 %v4515, 1e-05
    %v4532 = vadd.f32 %v4516, 1e-05
    %v4533 = vadd.f32 %v4517, 1e-05
    %v4534 = vadd.f32 %v4518, 1e-05
    %v4535 = vadd.f32 %v4519, 1e-05
    %v4536 = vadd.f32 %v4520, 1e-05
    %v4537 = vrsqrt.pop %v4521
    %v4538 = vmul.f32 %v4537, %v4521
    %v4539 = vmul.f32 %v4538, %v4537
    %v4540 = vmul.f32 0.5, %v4539
    %v4541 = vsub.f32 1.5, %v4540
    %v4542 = vmul.f32 %v4537, %v4541
    %vm4543 = vweird.f32 %v4521
    %vm4544 = vweird.f32 %v4537
    %vm4545 = vmor %vm4543, %vm4544
    %v4546 = vsel %vm4545, %v4537, %v4542
    %v4547 = vrsqrt.pop %v4522
    %v4548 = vmul.f32 %v4547, %v4522
    %v4549 = vmul.f32 %v4548, %v4547
    %v4550 = vmul.f32 0.5, %v4549
    %v4551 = vsub.f32 1.5, %v4550
    %v4552 = vmul.f32 %v4547, %v4551
    %vm4553 = vweird.f32 %v4522
    %vm4554 = vweird.f32 %v4547
    %vm4555 = vmor %vm4553, %vm4554
    %v4556 = vsel %vm4555, %v4547, %v4552
    %v4557 = vrsqrt.pop %v4523
    %v4558 = vmul.f32 %v4557, %v4523
    %v4559 = vmul.f32 %v4558, %v4557
    %v4560 = vmul.f32 0.5, %v4559
    %v4561 = vsub.f32 1.5, %v4560
    %v4562 = vmul.f32 %v4557, %v4561
    %vm4563 = vweird.f32 %v4523
    %vm4564 = vweird.f32 %v4557
    %vm4565 = vmor %vm4563, %vm4564
    %v4566 = vsel %vm4565, %v4557, %v4562
    %v4567 = vrsqrt.pop %v4524
    %v4568 = vmul.f32 %v4567, %v4524
    %v4569 = vmul.f32 %v4568, %v4567
    %v4570 = vmul.f32 0.5, %v4569
    %v4571 = vsub.f32 1.5, %v4570
    %v4572 = vmul.f32 %v4567, %v4571
    %vm4573 = vweird.f32 %v4524
    %vm4574 = vweird.f32 %v4567
    %vm4575 = vmor %vm4573, %vm4574
    %v4576 = vsel %vm4575, %v4567, %v4572
    %v4577 = vrsqrt.pop %v4525
    %v4578 = vmul.f32 %v4577, %v4525
    %v4579 = vmul.f32 %v4578, %v4577
    %v4580 = vmul.f32 0.5, %v4579
    %v4581 = vsub.f32 1.5, %v4580
    %v4582 = vmul.f32 %v4577, %v4581
    %vm4583 = vweird.f32 %v4525
    %vm4584 = vweird.f32 %v4577
    %vm4585 = vmor %vm4583, %vm4584
    %v4586 = vsel %vm4585, %v4577, %v4582
    %v4587 = vrsqrt.pop %v4526
    %v4588 = vmul.f32 %v4587, %v4526
    %v4589 = vmul.f32 %v4588, %v4587
    %v4590 = vmul.f32 0.5, %v4589
    %v4591 = vsub.f32 1.5, %v4590
    %v4592 = vmul.f32 %v4587, %v4591
    %vm4593 = vweird.f32 %v4526
    %vm4594 = vweird.f32 %v4587
    %vm4595 = vmor %vm4593, %vm4594
    %v4596 = vsel %vm4595, %v4587, %v4592
    %v4597 = vrsqrt.pop %v4527
    %v4598 = vmul.f32 %v4597, %v4527
    %v4599 = vmul.f32 %v4598, %v4597
    %v4600 = vmul.f32 0.5, %v4599
    %v4601 = vsub.f32 1.5, %v4600
    %v4602 = vmul.f32 %v4597, %v4601
    %vm4603 = vweird.f32 %v4527
    %vm4604 = vweird.f32 %v4597
    %vm4605 = vmor %vm4603, %vm4604
    %v4606 = vsel %vm4605, %v4597, %v4602
    %v4607 = vrsqrt.pop %v4528
    %v4608 = vmul.f32 %v4607, %v4528
    %v4609 = vmul.f32 %v4608, %v4607
    %v4610 = vmul.f32 0.5, %v4609
    %v4611 = vsub.f32 1.5, %v4610
    %v4612 = vmul.f32 %v4607, %v4611
    %vm4613 = vweird.f32 %v4528
    %vm4614 = vweird.f32 %v4607
    %vm4615 = vmor %vm4613, %vm4614
    %v4616 = vsel %vm4615, %v4607, %v4612
    %v4617 = vrsqrt.pop %v4529
    %v4618 = vmul.f32 %v4617, %v4529
    %v4619 = vmul.f32 %v4618, %v4617
    %v4620 = vmul.f32 0.5, %v4619
    %v4621 = vsub.f32 1.5, %v4620
    %v4622 = vmul.f32 %v4617, %v4621
    %vm4623 = vweird.f32 %v4529
    %vm4624 = vweird.f32 %v4617
    %vm4625 = vmor %vm4623, %vm4624
    %v4626 = vsel %vm4625, %v4617, %v4622
    %v4627 = vrsqrt.pop %v4530
    %v4628 = vmul.f32 %v4627, %v4530
    %v4629 = vmul.f32 %v4628, %v4627
    %v4630 = vmul.f32 0.5, %v4629
    %v4631 = vsub.f32 1.5, %v4630
    %v4632 = vmul.f32 %v4627, %v4631
    %vm4633 = vweird.f32 %v4530
    %vm4634 = vweird.f32 %v4627
    %vm4635 = vmor %vm4633, %vm4634
    %v4636 = vsel %vm4635, %v4627, %v4632
    %v4637 = vrsqrt.pop %v4531
    %v4638 = vmul.f32 %v4637, %v4531
    %v4639 = vmul.f32 %v4638, %v4637
    %v4640 = vmul.f32 0.5, %v4639
    %v4641 = vsub.f32 1.5, %v4640
    %v4642 = vmul.f32 %v4637, %v4641
    %vm4643 = vweird.f32 %v4531
    %vm4644 = vweird.f32 %v4637
    %vm4645 = vmor %vm4643, %vm4644
    %v4646 = vsel %vm4645, %v4637, %v4642
    %v4647 = vrsqrt.pop %v4532
    %v4648 = vmul.f32 %v4647, %v4532
    %v4649 = vmul.f32 %v4648, %v4647
    %v4650 = vmul.f32 0.5, %v4649
    %v4651 = vsub.f32 1.5, %v4650
    %v4652 = vmul.f32 %v4647, %v4651
    %vm4653 = vweird.f32 %v4532
    %vm4654 = vweird.f32 %v4647
    %vm4655 = vmor %vm4653, %vm4654
    %v4656 = vsel %vm4655, %v4647, %v4652
    %v4657 = vrsqrt.pop %v4533
    %v4658 = vmul.f32 %v4657, %v4533
    %v4659 = vmul.f32 %v4658, %v4657
    %v4660 = vmul.f32 0.5, %v4659
    %v4661 = vsub.f32 1.5, %v4660
    %v4662 = vmul.f32 %v4657, %v4661
    %vm4663 = vweird.f32 %v4533
    %vm4664 = vweird.f32 %v4657
    %vm4665 = vmor %vm4663, %vm4664
    %v4666 = vsel %vm4665, %v4657, %v4662
    %v4667 = vrsqrt.pop %v4534
    %v4668 = vmul.f32 %v4667, %v4534
    %v4669 = vmul.f32 %v4668, %v4667
    %v4670 = vmul.f32 0.5, %v4669
    %v4671 = vsub.f32 1.5, %v4670
    %v4672 = vmul.f32 %v4667, %v4671
    %vm4673 = vweird.f32 %v4534
    %vm4674 = vweird.f32 %v4667
    %vm4675 = vmor %vm4673, %vm4674
    %v4676 = vsel %vm4675, %v4667, %v4672
    %v4677 = vrsqrt.pop %v4535
    %v4678 = vmul.f32 %v4677, %v4535
    %v4679 = vmul.f32 %v4678, %v4677
    %v4680 = vmul.f32 0.5, %v4679
    %v4681 = vsub.f32 1.5, %v4680
    %v4682 = vmul.f32 %v4677, %v4681
    %vm4683 = vweird.f32 %v4535
    %vm4684 = vweird.f32 %v4677
    %vm4685 = vmor %vm4683, %vm4684
    %v4686 = vsel %vm4685, %v4677, %v4682
    %v4687 = vrsqrt.pop %v4536
    %v4688 = vmul.f32 %v4687, %v4536
    %v4689 = vmul.f32 %v4688, %v4687
    %v4690 = vmul.f32 0.5, %v4689
    %v4691 = vsub.f32 1.5, %v4690
    %v4692 = vmul.f32 %v4687, %v4691
    %vm4693 = vweird.f32 %v4536
    %vm4694 = vweird.f32 %v4687
    %vm4695 = vmor %vm4693, %vm4694
    %v4696 = vsel %vm4695, %v4687, %v4692
    %v4697 = vsub.f32 %v4343, %v4393
    %v4698 = vsub.f32 %v4344, %v4394
    %v4699 = vsub.f32 %v4345, %v4395
    %v4700 = vsub.f32 %v4346, %v4396
    %v4701 = vsub.f32 %v4347, %v4397
    %v4702 = vsub.f32 %v4348, %v4398
    %v4703 = vsub.f32 %v4349, %v4399
    %v4704 = vsub.f32 %v4350, %v4400
    %v4705 = vsub.f32 %v4351, %v4401
    %v4706 = vsub.f32 %v4352, %v4402
    %v4707 = vsub.f32 %v4353, %v4403
    %v4708 = vsub.f32 %v4354, %v4404
    %v4709 = vsub.f32 %v4355, %v4405
    %v4710 = vsub.f32 %v4356, %v4406
    %v4711 = vsub.f32 %v4357, %v4407
    %v4712 = vsub.f32 %v4358, %v4408
    %v4713 = vmul.f32 %v4697, %v4546
    %v4714 = vmul.f32 %v4698, %v4556
    %v4715 = vmul.f32 %v4699, %v4566
    %v4716 = vmul.f32 %v4700, %v4576
    %v4717 = vmul.f32 %v4701, %v4586
    %v4718 = vmul.f32 %v4702, %v4596
    %v4719 = vmul.f32 %v4703, %v4606
    %v4720 = vmul.f32 %v4704, %v4616
    %v4721 = vmul.f32 %v4705, %v4626
    %v4722 = vmul.f32 %v4706, %v4636
    %v4723 = vmul.f32 %v4707, %v4646
    %v4724 = vmul.f32 %v4708, %v4656
    %v4725 = vmul.f32 %v4709, %v4666
    %v4726 = vmul.f32 %v4710, %v4676
    %v4727 = vmul.f32 %v4711, %v4686
    %v4728 = vmul.f32 %v4712, %v4696
    %v4730 = vperm.slane %v4359, 0
    %v4732 = vmul.f32 %v4713, %v4730
    %v4733 = vmul.f32 %v4714, %v4730
    %v4734 = vmul.f32 %v4715, %v4730
    %v4735 = vmul.f32 %v4716, %v4730
    %v4736 = vmul.f32 %v4717, %v4730
    %v4737 = vmul.f32 %v4718, %v4730
    %v4738 = vmul.f32 %v4719, %v4730
    %v4739 = vmul.f32 %v4720, %v4730
    %v4740 = vmul.f32 %v4721, %v4730
    %v4741 = vmul.f32 %v4722, %v4730
    %v4742 = vmul.f32 %v4723, %v4730
    %v4743 = vmul.f32 %v4724, %v4730
    %v4744 = vmul.f32 %v4725, %v4730
    %v4745 = vmul.f32 %v4726, %v4730
    %v4746 = vmul.f32 %v4727, %v4730
    %v4747 = vmul.f32 %v4728, %v4730
    %v4749 = vperm.slane %v4360, 0
    %v4751 = vadd.f32 %v4732, %v4749
    %v4752 = vadd.f32 %v4733, %v4749
    %v4753 = vadd.f32 %v4734, %v4749
    %v4754 = vadd.f32 %v4735, %v4749
    %v4755 = vadd.f32 %v4736, %v4749
    %v4756 = vadd.f32 %v4737, %v4749
    %v4757 = vadd.f32 %v4738, %v4749
    %v4758 = vadd.f32 %v4739, %v4749
    %v4759 = vadd.f32 %v4740, %v4749
    %v4760 = vadd.f32 %v4741, %v4749
    %v4761 = vadd.f32 %v4742, %v4749
    %v4762 = vadd.f32 %v4743, %v4749
    %v4763 = vadd.f32 %v4744, %v4749
    %v4764 = vadd.f32 %v4745, %v4749
    %v4765 = vadd.f32 %v4746, %v4749
    %v4766 = vadd.f32 %v4747, %v4749
    %v4767 = vld [vmem:[#allocation9] sm:$0xff]
    %v4768 = vld [vmem:[#allocation9 + $0x8] sm:$0xff]
    %v4769 = vld [vmem:[#allocation9 + $0x10] sm:$0xff]
    %v4770 = vld [vmem:[#allocation9 + $0x18] sm:$0xff]
    %v4771 = vld [vmem:[#allocation9 + $0x20] sm:$0xff]
    %v4772 = vld [vmem:[#allocation9 + $0x28] sm:$0xff]
    %v4773 = vld [vmem:[#allocation9 + $0x30] sm:$0xff]
    %v4774 = vld [vmem:[#allocation9 + $0x38] sm:$0xff]
    %v4775 = vld [vmem:[#allocation9 + $0x40] sm:$0xff]
    %v4776 = vld [vmem:[#allocation9 + $0x48] sm:$0xff]
    %v4777 = vld [vmem:[#allocation9 + $0x50] sm:$0xff]
    %v4778 = vld [vmem:[#allocation9 + $0x58] sm:$0xff]
    %v4779 = vld [vmem:[#allocation9 + $0x60] sm:$0xff]
    %v4780 = vld [vmem:[#allocation9 + $0x68] sm:$0xff]
    %v4781 = vld [vmem:[#allocation9 + $0x70] sm:$0xff]
    %v4782 = vld [vmem:[#allocation9 + $0x78] sm:$0xff]
    %v4783 = vld [vmem:[%s14] sm:$0x1]
    %v4785 = vperm.slane %v4783, 0
    %4787 = vmatpush.msra.mxu0 %v4782
    %4788 = vmatpush.msra.mxu0 %v4781
    %4789 = vmatpush.msra.mxu0 %v4780
    %4790 = vmatpush.msra.mxu0 %v4779
    %4791 = vmatpush.msra.mxu0 %v4778
    %4792 = vmatpush.msra.mxu0 %v4777
    %4793 = vmatpush.msra.mxu0 %v4776
    %4794 = vmatpush.msra.mxu0 %v4775
    %4795 = vmatpush.msra.mxu0 %v4774
    %4796 = vmatpush.msra.mxu0 %v4773
    %4797 = vmatpush.msra.mxu0 %v4772
    %4798 = vmatpush.msra.mxu0 %v4771
    %4799 = vmatpush.msra.mxu0 %v4770
    %4800 = vmatpush.msra.mxu0 %v4769
    %4801 = vmatpush.msra.mxu0 %v4768
    %4802 = vmatpush.msra.mxu0 %v4767
    %4803 = vmatmul.f32.gmra.mxu0 %v4751
    %v4804 = vpop.f32.mrf.mxu0
    %v4805 = vadd.f32 %v4785, %v4804
    %4806 = vmatmul.f32.gmra.mxu0 %v4752
    %v4807 = vpop.f32.mrf.mxu0
    %v4808 = vadd.f32 %v4785, %v4807
    %4809 = vmatmul.f32.gmra.mxu0 %v4753
    %v4810 = vpop.f32.mrf.mxu0
    %v4811 = vadd.f32 %v4785, %v4810
    %4812 = vmatmul.f32.gmra.mxu0 %v4754
    %v4813 = vpop.f32.mrf.mxu0
    %v4814 = vadd.f32 %v4785, %v4813
    %4815 = vmatmul.f32.gmra.mxu0 %v4755
    %v4816 = vpop.f32.mrf.mxu0
    %v4817 = vadd.f32 %v4785, %v4816
    %4818 = vmatmul.f32.gmra.mxu0 %v4756
    %v4819 = vpop.f32.mrf.mxu0
    %v4820 = vadd.f32 %v4785, %v4819
    %4821 = vmatmul.f32.gmra.mxu0 %v4757
    %v4822 = vpop.f32.mrf.mxu0
    %v4823 = vadd.f32 %v4785, %v4822
    %4824 = vmatmul.f32.gmra.mxu0 %v4758
    %v4825 = vpop.f32.mrf.mxu0
    %v4826 = vadd.f32 %v4785, %v4825
    %4827 = vmatmul.f32.gmra.mxu0 %v4759
    %v4828 = vpop.f32.mrf.mxu0
    %v4829 = vadd.f32 %v4785, %v4828
    %4830 = vmatmul.f32.gmra.mxu0 %v4760
    %v4831 = vpop.f32.mrf.mxu0
    %v4832 = vadd.f32 %v4785, %v4831
    %4833 = vmatmul.f32.gmra.mxu0 %v4761
    %v4834 = vpop.f32.mrf.mxu0
    %v4835 = vadd.f32 %v4785, %v4834
    %4836 = vmatmul.f32.gmra.mxu0 %v4762
    %v4837 = vpop.f32.mrf.mxu0
    %v4838 = vadd.f32 %v4785, %v4837
    %4839 = vmatmul.f32.gmra.mxu0 %v4763
    %v4840 = vpop.f32.mrf.mxu0
    %v4841 = vadd.f32 %v4785, %v4840
    %4842 = vmatmul.f32.gmra.mxu0 %v4764
    %v4843 = vpop.f32.mrf.mxu0
    %v4844 = vadd.f32 %v4785, %v4843
    %4845 = vmatmul.f32.gmra.mxu0 %v4765
    %v4846 = vpop.f32.mrf.mxu0
    %v4847 = vadd.f32 %v4785, %v4846
    %4848 = vmatmul.f32.gmra.mxu0 %v4766
    %v4849 = vpop.f32.mrf.mxu0
    %v4850 = vadd.f32 %v4785, %v4849
    %4851 = vdwg.mxu0
    %v4852 = vmul.f32 %v4805, 0.5
    %v4853 = vmul.f32 %v4808, 0.5
    %v4854 = vmul.f32 %v4811, 0.5
    %v4855 = vmul.f32 %v4814, 0.5
    %v4856 = vmul.f32 %v4817, 0.5
    %v4857 = vmul.f32 %v4820, 0.5
    %v4858 = vmul.f32 %v4823, 0.5
    %v4859 = vmul.f32 %v4826, 0.5
    %v4860 = vmul.f32 %v4829, 0.5
    %v4861 = vmul.f32 %v4832, 0.5
    %v4862 = vmul.f32 %v4835, 0.5
    %v4863 = vmul.f32 %v4838, 0.5
    %v4864 = vmul.f32 %v4841, 0.5
    %v4865 = vmul.f32 %v4844, 0.5
    %v4866 = vmul.f32 %v4847, 0.5
    %v4867 = vmul.f32 %v4850, 0.5
    %v4868 = vmul.f32 %v4805, 0.70710677
    %v4869 = vmul.f32 %v4808, 0.70710677
    %v4870 = vmul.f32 %v4811, 0.70710677
    %v4871 = vmul.f32 %v4814, 0.70710677
    %v4872 = vmul.f32 %v4817, 0.70710677
    %v4873 = vmul.f32 %v4820, 0.70710677
    %v4874 = vmul.f32 %v4823, 0.70710677
    %v4875 = vmul.f32 %v4826, 0.70710677
    %v4876 = vmul.f32 %v4829, 0.70710677
    %v4877 = vmul.f32 %v4832, 0.70710677
    %v4878 = vmul.f32 %v4835, 0.70710677
    %v4879 = vmul.f32 %v4838, 0.70710677
    %v4880 = vmul.f32 %v4841, 0.70710677
    %v4881 = vmul.f32 %v4844, 0.70710677
    %v4882 = vmul.f32 %v4847, 0.70710677
    %v4883 = vmul.f32 %v4850, 0.70710677
    %v4884 = vmul.f32 %v4868, %v4868
    %v4885 = vmin.f32 16.0, %v4884
    %v4886 = vmul.f32 %v4885, 2.1237322e-06
    %v4887 = vadd.f32 %v4886, 0.00028619796
    %v4888 = vmul.f32 %v4885, %v4887
    %v4889 = vadd.f32 %v4888, 0.0036580483
    %v4890 = vmul.f32 %v4885, %v4889
    %v4891 = vadd.f32 %v4890, 0.05243302
    %v4892 = vmul.f32 %v4885, %v4891
    %v4893 = vadd.f32 %v4892, 0.18741608
    %v4894 = vmul.f32 %v4885, %v4893
    %v4895 = vadd.f32 %v4894, 1.1283791
    %v4896 = vmul.f32 %v4868, %v4895
    %v4897 = vmul.f32 %v4885, 3.8918573e-05
    %v4898 = vadd.f32 %v4897, 0.001143296
    %v4899 = vmul.f32 %v4885, %v4898
    %v4900 = vadd.f32 %v4899, 0.014752088
    %v4901 = vmul.f32 %v4885, %v4900
    %v4902 = vadd.f32 %v4901, 0.112945676
    %v4903 = vmul.f32 %v4885, %v4902
    %v4904 = vadd.f32 %v4903, 0.4994258
    %v4905 = vmul.f32 %v4885, %v4904
    %v4906 = vadd.f32 %v4905, 1.0
    %v4907 = vrcp.pop %v4906
    %v4908 = vmul.f32 %v4906, %v4907
    %v4909 = vsub.f32 1.0, %v4908
    %v4910 = vmul.f32 %v4907, %v4909
    %v4911 = vadd.f32 %v4907, %v4910
    %vm4912 = vweird.f32 %v4906
    %vm4913 = vweird.f32 %v4907
    %vm4914 = vmor %vm4912, %vm4913
    %v4915 = vsel %vm4914, %v4907, %v4911
    %v4916 = vand.u32 2147483647, %v4906
    %vm4917 = vcmp.eq.f32.partialorder %v4916, 8.507059e+37
    %v4918 = vand.u32 %v4906, 2147483648
    %v4919 = vor.u32 1.1754944e-38, %v4918
    %v4920 = vsel %vm4917, %v4919, %v4915
    %v4921 = vmul.f32 %v4896, %v4920
    %v4922 = vmin.f32 %v4921, 1.0
    %v4923 = vmax.f32 %v4922, -1.0
    %v4924 = vmul.f32 %v4869, %v4869
    %v4925 = vmin.f32 16.0, %v4924
    %v4926 = vmul.f32 %v4925, 2.1237322e-06
    %v4927 = vadd.f32 %v4926, 0.00028619796
    %v4928 = vmul.f32 %v4925, %v4927
    %v4929 = vadd.f32 %v4928, 0.0036580483
    %v4930 = vmul.f32 %v4925, %v4929
    %v4931 = vadd.f32 %v4930, 0.05243302
    %v4932 = vmul.f32 %v4925, %v4931
    %v4933 = vadd.f32 %v4932, 0.18741608
    %v4934 = vmul.f32 %v4925, %v4933
    %v4935 = vadd.f32 %v4934, 1.1283791
    %v4936 = vmul.f32 %v4869, %v4935
    %v4937 = vmul.f32 %v4925, 3.8918573e-05
    %v4938 = vadd.f32 %v4937, 0.001143296
    %v4939 = vmul.f32 %v4925, %v4938
    %v4940 = vadd.f32 %v4939, 0.014752088
    %v4941 = vmul.f32 %v4925, %v4940
    %v4942 = vadd.f32 %v4941, 0.112945676
    %v4943 = vmul.f32 %v4925, %v4942
    %v4944 = vadd.f32 %v4943, 0.4994258
    %v4945 = vmul.f32 %v4925, %v4944
    %v4946 = vadd.f32 %v4945, 1.0
    %v4947 = vrcp.pop %v4946
    %v4948 = vmul.f32 %v4946, %v4947
    %v4949 = vsub.f32 1.0, %v4948
    %v4950 = vmul.f32 %v4947, %v4949
    %v4951 = vadd.f32 %v4947, %v4950
    %vm4952 = vweird.f32 %v4946
    %vm4953 = vweird.f32 %v4947
    %vm4954 = vmor %vm4952, %vm4953
    %v4955 = vsel %vm4954, %v4947, %v4951
    %v4956 = vand.u32 2147483647, %v4946
    %vm4957 = vcmp.eq.f32.partialorder %v4956, 8.507059e+37
    %v4958 = vand.u32 %v4946, 2147483648
    %v4959 = vor.u32 1.1754944e-38, %v4958
    %v4960 = vsel %vm4957, %v4959, %v4955
    %v4961 = vmul.f32 %v4936, %v4960
    %v4962 = vmin.f32 %v4961, 1.0
    %v4963 = vmax.f32 %v4962, -1.0
    %v4964 = vmul.f32 %v4870, %v4870
    %v4965 = vmin.f32 16.0, %v4964
    %v4966 = vmul.f32 %v4965, 2.1237322e-06
    %v4967 = vadd.f32 %v4966, 0.00028619796
    %v4968 = vmul.f32 %v4965, %v4967
    %v4969 = vadd.f32 %v4968, 0.0036580483
    %v4970 = vmul.f32 %v4965, %v4969
    %v4971 = vadd.f32 %v4970, 0.05243302
    %v4972 = vmul.f32 %v4965, %v4971
    %v4973 = vadd.f32 %v4972, 0.18741608
    %v4974 = vmul.f32 %v4965, %v4973
    %v4975 = vadd.f32 %v4974, 1.1283791
    %v4976 = vmul.f32 %v4870, %v4975
    %v4977 = vmul.f32 %v4965, 3.8918573e-05
    %v4978 = vadd.f32 %v4977, 0.001143296
    %v4979 = vmul.f32 %v4965, %v4978
    %v4980 = vadd.f32 %v4979, 0.014752088
    %v4981 = vmul.f32 %v4965, %v4980
    %v4982 = vadd.f32 %v4981, 0.112945676
    %v4983 = vmul.f32 %v4965, %v4982
    %v4984 = vadd.f32 %v4983, 0.4994258
    %v4985 = vmul.f32 %v4965, %v4984
    %v4986 = vadd.f32 %v4985, 1.0
    %v4987 = vrcp.pop %v4986
    %v4988 = vmul.f32 %v4986, %v4987
    %v4989 = vsub.f32 1.0, %v4988
    %v4990 = vmul.f32 %v4987, %v4989
    %v4991 = vadd.f32 %v4987, %v4990
    %vm4992 = vweird.f32 %v4986
    %vm4993 = vweird.f32 %v4987
    %vm4994 = vmor %vm4992, %vm4993
    %v4995 = vsel %vm4994, %v4987, %v4991
    %v4996 = vand.u32 2147483647, %v4986
    %vm4997 = vcmp.eq.f32.partialorder %v4996, 8.507059e+37
    %v4998 = vand.u32 %v4986, 2147483648
    %v4999 = vor.u32 1.1754944e-38, %v4998
    %v5000 = vsel %vm4997, %v4999, %v4995
    %v5001 = vmul.f32 %v4976, %v5000
    %v5002 = vmin.f32 %v5001, 1.0
    %v5003 = vmax.f32 %v5002, -1.0
    %v5004 = vmul.f32 %v4871, %v4871
    %v5005 = vmin.f32 16.0, %v5004
    %v5006 = vmul.f32 %v5005, 2.1237322e-06
    %v5007 = vadd.f32 %v5006, 0.00028619796
    %v5008 = vmul.f32 %v5005, %v5007
    %v5009 = vadd.f32 %v5008, 0.0036580483
    %v5010 = vmul.f32 %v5005, %v5009
    %v5011 = vadd.f32 %v5010, 0.05243302
    %v5012 = vmul.f32 %v5005, %v5011
    %v5013 = vadd.f32 %v5012, 0.18741608
    %v5014 = vmul.f32 %v5005, %v5013
    %v5015 = vadd.f32 %v5014, 1.1283791
    %v5016 = vmul.f32 %v4871, %v5015
    %v5017 = vmul.f32 %v5005, 3.8918573e-05
    %v5018 = vadd.f32 %v5017, 0.001143296
    %v5019 = vmul.f32 %v5005, %v5018
    %v5020 = vadd.f32 %v5019, 0.014752088
    %v5021 = vmul.f32 %v5005, %v5020
    %v5022 = vadd.f32 %v5021, 0.112945676
    %v5023 = vmul.f32 %v5005, %v5022
    %v5024 = vadd.f32 %v5023, 0.4994258
    %v5025 = vmul.f32 %v5005, %v5024
    %v5026 = vadd.f32 %v5025, 1.0
    %v5027 = vrcp.pop %v5026
    %v5028 = vmul.f32 %v5026, %v5027
    %v5029 = vsub.f32 1.0, %v5028
    %v5030 = vmul.f32 %v5027, %v5029
    %v5031 = vadd.f32 %v5027, %v5030
    %vm5032 = vweird.f32 %v5026
    %vm5033 = vweird.f32 %v5027
    %vm5034 = vmor %vm5032, %vm5033
    %v5035 = vsel %vm5034, %v5027, %v5031
    %v5036 = vand.u32 2147483647, %v5026
    %vm5037 = vcmp.eq.f32.partialorder %v5036, 8.507059e+37
    %v5038 = vand.u32 %v5026, 2147483648
    %v5039 = vor.u32 1.1754944e-38, %v5038
    %v5040 = vsel %vm5037, %v5039, %v5035
    %v5041 = vmul.f32 %v5016, %v5040
    %v5042 = vmin.f32 %v5041, 1.0
    %v5043 = vmax.f32 %v5042, -1.0
    %v5044 = vmul.f32 %v4872, %v4872
    %v5045 = vmin.f32 16.0, %v5044
    %v5046 = vmul.f32 %v5045, 2.1237322e-06
    %v5047 = vadd.f32 %v5046, 0.00028619796
    %v5048 = vmul.f32 %v5045, %v5047
    %v5049 = vadd.f32 %v5048, 0.0036580483
    %v5050 = vmul.f32 %v5045, %v5049
    %v5051 = vadd.f32 %v5050, 0.05243302
    %v5052 = vmul.f32 %v5045, %v5051
    %v5053 = vadd.f32 %v5052, 0.18741608
    %v5054 = vmul.f32 %v5045, %v5053
    %v5055 = vadd.f32 %v5054, 1.1283791
    %v5056 = vmul.f32 %v4872, %v5055
    %v5057 = vmul.f32 %v5045, 3.8918573e-05
    %v5058 = vadd.f32 %v5057, 0.001143296
    %v5059 = vmul.f32 %v5045, %v5058
    %v5060 = vadd.f32 %v5059, 0.014752088
    %v5061 = vmul.f32 %v5045, %v5060
    %v5062 = vadd.f32 %v5061, 0.112945676
    %v5063 = vmul.f32 %v5045, %v5062
    %v5064 = vadd.f32 %v5063, 0.4994258
    %v5065 = vmul.f32 %v5045, %v5064
    %v5066 = vadd.f32 %v5065, 1.0
    %v5067 = vrcp.pop %v5066
    %v5068 = vmul.f32 %v5066, %v5067
    %v5069 = vsub.f32 1.0, %v5068
    %v5070 = vmul.f32 %v5067, %v5069
    %v5071 = vadd.f32 %v5067, %v5070
    %vm5072 = vweird.f32 %v5066
    %vm5073 = vweird.f32 %v5067
    %vm5074 = vmor %vm5072, %vm5073
    %v5075 = vsel %vm5074, %v5067, %v5071
    %v5076 = vand.u32 2147483647, %v5066
    %vm5077 = vcmp.eq.f32.partialorder %v5076, 8.507059e+37
    %v5078 = vand.u32 %v5066, 2147483648
    %v5079 = vor.u32 1.1754944e-38, %v5078
    %v5080 = vsel %vm5077, %v5079, %v5075
    %v5081 = vmul.f32 %v5056, %v5080
    %v5082 = vmin.f32 %v5081, 1.0
    %v5083 = vmax.f32 %v5082, -1.0
    %v5084 = vmul.f32 %v4873, %v4873
    %v5085 = vmin.f32 16.0, %v5084
    %v5086 = vmul.f32 %v5085, 2.1237322e-06
    %v5087 = vadd.f32 %v5086, 0.00028619796
    %v5088 = vmul.f32 %v5085, %v5087
    %v5089 = vadd.f32 %v5088, 0.0036580483
    %v5090 = vmul.f32 %v5085, %v5089
    %v5091 = vadd.f32 %v5090, 0.05243302
    %v5092 = vmul.f32 %v5085, %v5091
    %v5093 = vadd.f32 %v5092, 0.18741608
    %v5094 = vmul.f32 %v5085, %v5093
    %v5095 = vadd.f32 %v5094, 1.1283791
    %v5096 = vmul.f32 %v4873, %v5095
    %v5097 = vmul.f32 %v5085, 3.8918573e-05
    %v5098 = vadd.f32 %v5097, 0.001143296
    %v5099 = vmul.f32 %v5085, %v5098
    %v5100 = vadd.f32 %v5099, 0.014752088
    %v5101 = vmul.f32 %v5085, %v5100
    %v5102 = vadd.f32 %v5101, 0.112945676
    %v5103 = vmul.f32 %v5085, %v5102
    %v5104 = vadd.f32 %v5103, 0.4994258
    %v5105 = vmul.f32 %v5085, %v5104
    %v5106 = vadd.f32 %v5105, 1.0
    %v5107 = vrcp.pop %v5106
    %v5108 = vmul.f32 %v5106, %v5107
    %v5109 = vsub.f32 1.0, %v5108
    %v5110 = vmul.f32 %v5107, %v5109
    %v5111 = vadd.f32 %v5107, %v5110
    %vm5112 = vweird.f32 %v5106
    %vm5113 = vweird.f32 %v5107
    %vm5114 = vmor %vm5112, %vm5113
    %v5115 = vsel %vm5114, %v5107, %v5111
    %v5116 = vand.u32 2147483647, %v5106
    %vm5117 = vcmp.eq.f32.partialorder %v5116, 8.507059e+37
    %v5118 = vand.u32 %v5106, 2147483648
    %v5119 = vor.u32 1.1754944e-38, %v5118
    %v5120 = vsel %vm5117, %v5119, %v5115
    %v5121 = vmul.f32 %v5096, %v5120
    %v5122 = vmin.f32 %v5121, 1.0
    %v5123 = vmax.f32 %v5122, -1.0
    %v5124 = vmul.f32 %v4874, %v4874
    %v5125 = vmin.f32 16.0, %v5124
    %v5126 = vmul.f32 %v5125, 2.1237322e-06
    %v5127 = vadd.f32 %v5126, 0.00028619796
    %v5128 = vmul.f32 %v5125, %v5127
    %v5129 = vadd.f32 %v5128, 0.0036580483
    %v5130 = vmul.f32 %v5125, %v5129
    %v5131 = vadd.f32 %v5130, 0.05243302
    %v5132 = vmul.f32 %v5125, %v5131
    %v5133 = vadd.f32 %v5132, 0.18741608
    %v5134 = vmul.f32 %v5125, %v5133
    %v5135 = vadd.f32 %v5134, 1.1283791
    %v5136 = vmul.f32 %v4874, %v5135
    %v5137 = vmul.f32 %v5125, 3.8918573e-05
    %v5138 = vadd.f32 %v5137, 0.001143296
    %v5139 = vmul.f32 %v5125, %v5138
    %v5140 = vadd.f32 %v5139, 0.014752088
    %v5141 = vmul.f32 %v5125, %v5140
    %v5142 = vadd.f32 %v5141, 0.112945676
    %v5143 = vmul.f32 %v5125, %v5142
    %v5144 = vadd.f32 %v5143, 0.4994258
    %v5145 = vmul.f32 %v5125, %v5144
    %v5146 = vadd.f32 %v5145, 1.0
    %v5147 = vrcp.pop %v5146
    %v5148 = vmul.f32 %v5146, %v5147
    %v5149 = vsub.f32 1.0, %v5148
    %v5150 = vmul.f32 %v5147, %v5149
    %v5151 = vadd.f32 %v5147, %v5150
    %vm5152 = vweird.f32 %v5146
    %vm5153 = vweird.f32 %v5147
    %vm5154 = vmor %vm5152, %vm5153
    %v5155 = vsel %vm5154, %v5147, %v5151
    %v5156 = vand.u32 2147483647, %v5146
    %vm5157 = vcmp.eq.f32.partialorder %v5156, 8.507059e+37
    %v5158 = vand.u32 %v5146, 2147483648
    %v5159 = vor.u32 1.1754944e-38, %v5158
    %v5160 = vsel %vm5157, %v5159, %v5155
    %v5161 = vmul.f32 %v5136, %v5160
    %v5162 = vmin.f32 %v5161, 1.0
    %v5163 = vmax.f32 %v5162, -1.0
    %v5164 = vmul.f32 %v4875, %v4875
    %v5165 = vmin.f32 16.0, %v5164
    %v5166 = vmul.f32 %v5165, 2.1237322e-06
    %v5167 = vadd.f32 %v5166, 0.00028619796
    %v5168 = vmul.f32 %v5165, %v5167
    %v5169 = vadd.f32 %v5168, 0.0036580483
    %v5170 = vmul.f32 %v5165, %v5169
    %v5171 = vadd.f32 %v5170, 0.05243302
    %v5172 = vmul.f32 %v5165, %v5171
    %v5173 = vadd.f32 %v5172, 0.18741608
    %v5174 = vmul.f32 %v5165, %v5173
    %v5175 = vadd.f32 %v5174, 1.1283791
    %v5176 = vmul.f32 %v4875, %v5175
    %v5177 = vmul.f32 %v5165, 3.8918573e-05
    %v5178 = vadd.f32 %v5177, 0.001143296
    %v5179 = vmul.f32 %v5165, %v5178
    %v5180 = vadd.f32 %v5179, 0.014752088
    %v5181 = vmul.f32 %v5165, %v5180
    %v5182 = vadd.f32 %v5181, 0.112945676
    %v5183 = vmul.f32 %v5165, %v5182
    %v5184 = vadd.f32 %v5183, 0.4994258
    %v5185 = vmul.f32 %v5165, %v5184
    %v5186 = vadd.f32 %v5185, 1.0
    %v5187 = vrcp.pop %v5186
    %v5188 = vmul.f32 %v5186, %v5187
    %v5189 = vsub.f32 1.0, %v5188
    %v5190 = vmul.f32 %v5187, %v5189
    %v5191 = vadd.f32 %v5187, %v5190
    %vm5192 = vweird.f32 %v5186
    %vm5193 = vweird.f32 %v5187
    %vm5194 = vmor %vm5192, %vm5193
    %v5195 = vsel %vm5194, %v5187, %v5191
    %v5196 = vand.u32 2147483647, %v5186
    %vm5197 = vcmp.eq.f32.partialorder %v5196, 8.507059e+37
    %v5198 = vand.u32 %v5186, 2147483648
    %v5199 = vor.u32 1.1754944e-38, %v5198
    %v5200 = vsel %vm5197, %v5199, %v5195
    %v5201 = vmul.f32 %v5176, %v5200
    %v5202 = vmin.f32 %v5201, 1.0
    %v5203 = vmax.f32 %v5202, -1.0
    %v5204 = vmul.f32 %v4876, %v4876
    %v5205 = vmin.f32 16.0, %v5204
    %v5206 = vmul.f32 %v5205, 2.1237322e-06
    %v5207 = vadd.f32 %v5206, 0.00028619796
    %v5208 = vmul.f32 %v5205, %v5207
    %v5209 = vadd.f32 %v5208, 0.0036580483
    %v5210 = vmul.f32 %v5205, %v5209
    %v5211 = vadd.f32 %v5210, 0.05243302
    %v5212 = vmul.f32 %v5205, %v5211
    %v5213 = vadd.f32 %v5212, 0.18741608
    %v5214 = vmul.f32 %v5205, %v5213
    %v5215 = vadd.f32 %v5214, 1.1283791
    %v5216 = vmul.f32 %v4876, %v5215
    %v5217 = vmul.f32 %v5205, 3.8918573e-05
    %v5218 = vadd.f32 %v5217, 0.001143296
    %v5219 = vmul.f32 %v5205, %v5218
    %v5220 = vadd.f32 %v5219, 0.014752088
    %v5221 = vmul.f32 %v5205, %v5220
    %v5222 = vadd.f32 %v5221, 0.112945676
    %v5223 = vmul.f32 %v5205, %v5222
    %v5224 = vadd.f32 %v5223, 0.4994258
    %v5225 = vmul.f32 %v5205, %v5224
    %v5226 = vadd.f32 %v5225, 1.0
    %v5227 = vrcp.pop %v5226
    %v5228 = vmul.f32 %v5226, %v5227
    %v5229 = vsub.f32 1.0, %v5228
    %v5230 = vmul.f32 %v5227, %v5229
    %v5231 = vadd.f32 %v5227, %v5230
    %vm5232 = vweird.f32 %v5226
    %vm5233 = vweird.f32 %v5227
    %vm5234 = vmor %vm5232, %vm5233
    %v5235 = vsel %vm5234, %v5227, %v5231
    %v5236 = vand.u32 2147483647, %v5226
    %vm5237 = vcmp.eq.f32.partialorder %v5236, 8.507059e+37
    %v5238 = vand.u32 %v5226, 2147483648
    %v5239 = vor.u32 1.1754944e-38, %v5238
    %v5240 = vsel %vm5237, %v5239, %v5235
    %v5241 = vmul.f32 %v5216, %v5240
    %v5242 = vmin.f32 %v5241, 1.0
    %v5243 = vmax.f32 %v5242, -1.0
    %v5244 = vmul.f32 %v4877, %v4877
    %v5245 = vmin.f32 16.0, %v5244
    %v5246 = vmul.f32 %v5245, 2.1237322e-06
    %v5247 = vadd.f32 %v5246, 0.00028619796
    %v5248 = vmul.f32 %v5245, %v5247
    %v5249 = vadd.f32 %v5248, 0.0036580483
    %v5250 = vmul.f32 %v5245, %v5249
    %v5251 = vadd.f32 %v5250, 0.05243302
    %v5252 = vmul.f32 %v5245, %v5251
    %v5253 = vadd.f32 %v5252, 0.18741608
    %v5254 = vmul.f32 %v5245, %v5253
    %v5255 = vadd.f32 %v5254, 1.1283791
    %v5256 = vmul.f32 %v4877, %v5255
    %v5257 = vmul.f32 %v5245, 3.8918573e-05
    %v5258 = vadd.f32 %v5257, 0.001143296
    %v5259 = vmul.f32 %v5245, %v5258
    %v5260 = vadd.f32 %v5259, 0.014752088
    %v5261 = vmul.f32 %v5245, %v5260
    %v5262 = vadd.f32 %v5261, 0.112945676
    %v5263 = vmul.f32 %v5245, %v5262
    %v5264 = vadd.f32 %v5263, 0.4994258
    %v5265 = vmul.f32 %v5245, %v5264
    %v5266 = vadd.f32 %v5265, 1.0
    %v5267 = vrcp.pop %v5266
    %v5268 = vmul.f32 %v5266, %v5267
    %v5269 = vsub.f32 1.0, %v5268
    %v5270 = vmul.f32 %v5267, %v5269
    %v5271 = vadd.f32 %v5267, %v5270
    %vm5272 = vweird.f32 %v5266
    %vm5273 = vweird.f32 %v5267
    %vm5274 = vmor %vm5272, %vm5273
    %v5275 = vsel %vm5274, %v5267, %v5271
    %v5276 = vand.u32 2147483647, %v5266
    %vm5277 = vcmp.eq.f32.partialorder %v5276, 8.507059e+37
    %v5278 = vand.u32 %v5266, 2147483648
    %v5279 = vor.u32 1.1754944e-38, %v5278
    %v5280 = vsel %vm5277, %v5279, %v5275
    %v5281 = vmul.f32 %v5256, %v5280
    %v5282 = vmin.f32 %v5281, 1.0
    %v5283 = vmax.f32 %v5282, -1.0
    %v5284 = vmul.f32 %v4878, %v4878
    %v5285 = vmin.f32 16.0, %v5284
    %v5286 = vmul.f32 %v5285, 2.1237322e-06
    %v5287 = vadd.f32 %v5286, 0.00028619796
    %v5288 = vmul.f32 %v5285, %v5287
    %v5289 = vadd.f32 %v5288, 0.0036580483
    %v5290 = vmul.f32 %v5285, %v5289
    %v5291 = vadd.f32 %v5290, 0.05243302
    %v5292 = vmul.f32 %v5285, %v5291
    %v5293 = vadd.f32 %v5292, 0.18741608
    %v5294 = vmul.f32 %v5285, %v5293
    %v5295 = vadd.f32 %v5294, 1.1283791
    %v5296 = vmul.f32 %v4878, %v5295
    %v5297 = vmul.f32 %v5285, 3.8918573e-05
    %v5298 = vadd.f32 %v5297, 0.001143296
    %v5299 = vmul.f32 %v5285, %v5298
    %v5300 = vadd.f32 %v5299, 0.014752088
    %v5301 = vmul.f32 %v5285, %v5300
    %v5302 = vadd.f32 %v5301, 0.112945676
    %v5303 = vmul.f32 %v5285, %v5302
    %v5304 = vadd.f32 %v5303, 0.4994258
    %v5305 = vmul.f32 %v5285, %v5304
    %v5306 = vadd.f32 %v5305, 1.0
    %v5307 = vrcp.pop %v5306
    %v5308 = vmul.f32 %v5306, %v5307
    %v5309 = vsub.f32 1.0, %v5308
    %v5310 = vmul.f32 %v5307, %v5309
    %v5311 = vadd.f32 %v5307, %v5310
    %vm5312 = vweird.f32 %v5306
    %vm5313 = vweird.f32 %v5307
    %vm5314 = vmor %vm5312, %vm5313
    %v5315 = vsel %vm5314, %v5307, %v5311
    %v5316 = vand.u32 2147483647, %v5306
    %vm5317 = vcmp.eq.f32.partialorder %v5316, 8.507059e+37
    %v5318 = vand.u32 %v5306, 2147483648
    %v5319 = vor.u32 1.1754944e-38, %v5318
    %v5320 = vsel %vm5317, %v5319, %v5315
    %v5321 = vmul.f32 %v5296, %v5320
    %v5322 = vmin.f32 %v5321, 1.0
    %v5323 = vmax.f32 %v5322, -1.0
    %v5324 = vmul.f32 %v4879, %v4879
    %v5325 = vmin.f32 16.0, %v5324
    %v5326 = vmul.f32 %v5325, 2.1237322e-06
    %v5327 = vadd.f32 %v5326, 0.00028619796
    %v5328 = vmul.f32 %v5325, %v5327
    %v5329 = vadd.f32 %v5328, 0.0036580483
    %v5330 = vmul.f32 %v5325, %v5329
    %v5331 = vadd.f32 %v5330, 0.05243302
    %v5332 = vmul.f32 %v5325, %v5331
    %v5333 = vadd.f32 %v5332, 0.18741608
    %v5334 = vmul.f32 %v5325, %v5333
    %v5335 = vadd.f32 %v5334, 1.1283791
    %v5336 = vmul.f32 %v4879, %v5335
    %v5337 = vmul.f32 %v5325, 3.8918573e-05
    %v5338 = vadd.f32 %v5337, 0.001143296
    %v5339 = vmul.f32 %v5325, %v5338
    %v5340 = vadd.f32 %v5339, 0.014752088
    %v5341 = vmul.f32 %v5325, %v5340
    %v5342 = vadd.f32 %v5341, 0.112945676
    %v5343 = vmul.f32 %v5325, %v5342
    %v5344 = vadd.f32 %v5343, 0.4994258
    %v5345 = vmul.f32 %v5325, %v5344
    %v5346 = vadd.f32 %v5345, 1.0
    %v5347 = vrcp.pop %v5346
    %v5348 = vmul.f32 %v5346, %v5347
    %v5349 = vsub.f32 1.0, %v5348
    %v5350 = vmul.f32 %v5347, %v5349
    %v5351 = vadd.f32 %v5347, %v5350
    %vm5352 = vweird.f32 %v5346
    %vm5353 = vweird.f32 %v5347
    %vm5354 = vmor %vm5352, %vm5353
    %v5355 = vsel %vm5354, %v5347, %v5351
    %v5356 = vand.u32 2147483647, %v5346
    %vm5357 = vcmp.eq.f32.partialorder %v5356, 8.507059e+37
    %v5358 = vand.u32 %v5346, 2147483648
    %v5359 = vor.u32 1.1754944e-38, %v5358
    %v5360 = vsel %vm5357, %v5359, %v5355
    %v5361 = vmul.f32 %v5336, %v5360
    %v5362 = vmin.f32 %v5361, 1.0
    %v5363 = vmax.f32 %v5362, -1.0
    %v5364 = vmul.f32 %v4880, %v4880
    %v5365 = vmin.f32 16.0, %v5364
    %v5366 = vmul.f32 %v5365, 2.1237322e-06
    %v5367 = vadd.f32 %v5366, 0.00028619796
    %v5368 = vmul.f32 %v5365, %v5367
    %v5369 = vadd.f32 %v5368, 0.0036580483
    %v5370 = vmul.f32 %v5365, %v5369
    %v5371 = vadd.f32 %v5370, 0.05243302
    %v5372 = vmul.f32 %v5365, %v5371
    %v5373 = vadd.f32 %v5372, 0.18741608
    %v5374 = vmul.f32 %v5365, %v5373
    %v5375 = vadd.f32 %v5374, 1.1283791
    %v5376 = vmul.f32 %v4880, %v5375
    %v5377 = vmul.f32 %v5365, 3.8918573e-05
    %v5378 = vadd.f32 %v5377, 0.001143296
    %v5379 = vmul.f32 %v5365, %v5378
    %v5380 = vadd.f32 %v5379, 0.014752088
    %v5381 = vmul.f32 %v5365, %v5380
    %v5382 = vadd.f32 %v5381, 0.112945676
    %v5383 = vmul.f32 %v5365, %v5382
    %v5384 = vadd.f32 %v5383, 0.4994258
    %v5385 = vmul.f32 %v5365, %v5384
    %v5386 = vadd.f32 %v5385, 1.0
    %v5387 = vrcp.pop %v5386
    %v5388 = vmul.f32 %v5386, %v5387
    %v5389 = vsub.f32 1.0, %v5388
    %v5390 = vmul.f32 %v5387, %v5389
    %v5391 = vadd.f32 %v5387, %v5390
    %vm5392 = vweird.f32 %v5386
    %vm5393 = vweird.f32 %v5387
    %vm5394 = vmor %vm5392, %vm5393
    %v5395 = vsel %vm5394, %v5387, %v5391
    %v5396 = vand.u32 2147483647, %v5386
    %vm5397 = vcmp.eq.f32.partialorder %v5396, 8.507059e+37
    %v5398 = vand.u32 %v5386, 2147483648
    %v5399 = vor.u32 1.1754944e-38, %v5398
    %v5400 = vsel %vm5397, %v5399, %v5395
    %v5401 = vmul.f32 %v5376, %v5400
    %v5402 = vmin.f32 %v5401, 1.0
    %v5403 = vmax.f32 %v5402, -1.0
    %v5404 = vmul.f32 %v4881, %v4881
    %v5405 = vmin.f32 16.0, %v5404
    %v5406 = vmul.f32 %v5405, 2.1237322e-06
    %v5407 = vadd.f32 %v5406, 0.00028619796
    %v5408 = vmul.f32 %v5405, %v5407
    %v5409 = vadd.f32 %v5408, 0.0036580483
    %v5410 = vmul.f32 %v5405, %v5409
    %v5411 = vadd.f32 %v5410, 0.05243302
    %v5412 = vmul.f32 %v5405, %v5411
    %v5413 = vadd.f32 %v5412, 0.18741608
    %v5414 = vmul.f32 %v5405, %v5413
    %v5415 = vadd.f32 %v5414, 1.1283791
    %v5416 = vmul.f32 %v4881, %v5415
    %v5417 = vmul.f32 %v5405, 3.8918573e-05
    %v5418 = vadd.f32 %v5417, 0.001143296
    %v5419 = vmul.f32 %v5405, %v5418
    %v5420 = vadd.f32 %v5419, 0.014752088
    %v5421 = vmul.f32 %v5405, %v5420
    %v5422 = vadd.f32 %v5421, 0.112945676
    %v5423 = vmul.f32 %v5405, %v5422
    %v5424 = vadd.f32 %v5423, 0.4994258
    %v5425 = vmul.f32 %v5405, %v5424
    %v5426 = vadd.f32 %v5425, 1.0
    %v5427 = vrcp.pop %v5426
    %v5428 = vmul.f32 %v5426, %v5427
    %v5429 = vsub.f32 1.0, %v5428
    %v5430 = vmul.f32 %v5427, %v5429
    %v5431 = vadd.f32 %v5427, %v5430
    %vm5432 = vweird.f32 %v5426
    %vm5433 = vweird.f32 %v5427
    %vm5434 = vmor %vm5432, %vm5433
    %v5435 = vsel %vm5434, %v5427, %v5431
    %v5436 = vand.u32 2147483647, %v5426
    %vm5437 = vcmp.eq.f32.partialorder %v5436, 8.507059e+37
    %v5438 = vand.u32 %v5426, 2147483648
    %v5439 = vor.u32 1.1754944e-38, %v5438
    %v5440 = vsel %vm5437, %v5439, %v5435
    %v5441 = vmul.f32 %v5416, %v5440
    %v5442 = vmin.f32 %v5441, 1.0
    %v5443 = vmax.f32 %v5442, -1.0
    %v5444 = vmul.f32 %v4882, %v4882
    %v5445 = vmin.f32 16.0, %v5444
    %v5446 = vmul.f32 %v5445, 2.1237322e-06
    %v5447 = vadd.f32 %v5446, 0.00028619796
    %v5448 = vmul.f32 %v5445, %v5447
    %v5449 = vadd.f32 %v5448, 0.0036580483
    %v5450 = vmul.f32 %v5445, %v5449
    %v5451 = vadd.f32 %v5450, 0.05243302
    %v5452 = vmul.f32 %v5445, %v5451
    %v5453 = vadd.f32 %v5452, 0.18741608
    %v5454 = vmul.f32 %v5445, %v5453
    %v5455 = vadd.f32 %v5454, 1.1283791
    %v5456 = vmul.f32 %v4882, %v5455
    %v5457 = vmul.f32 %v5445, 3.8918573e-05
    %v5458 = vadd.f32 %v5457, 0.001143296
    %v5459 = vmul.f32 %v5445, %v5458
    %v5460 = vadd.f32 %v5459, 0.014752088
    %v5461 = vmul.f32 %v5445, %v5460
    %v5462 = vadd.f32 %v5461, 0.112945676
    %v5463 = vmul.f32 %v5445, %v5462
    %v5464 = vadd.f32 %v5463, 0.4994258
    %v5465 = vmul.f32 %v5445, %v5464
    %v5466 = vadd.f32 %v5465, 1.0
    %v5467 = vrcp.pop %v5466
    %v5468 = vmul.f32 %v5466, %v5467
    %v5469 = vsub.f32 1.0, %v5468
    %v5470 = vmul.f32 %v5467, %v5469
    %v5471 = vadd.f32 %v5467, %v5470
    %vm5472 = vweird.f32 %v5466
    %vm5473 = vweird.f32 %v5467
    %vm5474 = vmor %vm5472, %vm5473
    %v5475 = vsel %vm5474, %v5467, %v5471
    %v5476 = vand.u32 2147483647, %v5466
    %vm5477 = vcmp.eq.f32.partialorder %v5476, 8.507059e+37
    %v5478 = vand.u32 %v5466, 2147483648
    %v5479 = vor.u32 1.1754944e-38, %v5478
    %v5480 = vsel %vm5477, %v5479, %v5475
    %v5481 = vmul.f32 %v5456, %v5480
    %v5482 = vmin.f32 %v5481, 1.0
    %v5483 = vmax.f32 %v5482, -1.0
    %v5484 = vmul.f32 %v4883, %v4883
    %v5485 = vmin.f32 16.0, %v5484
    %v5486 = vmul.f32 %v5485, 2.1237322e-06
    %v5487 = vadd.f32 %v5486, 0.00028619796
    %v5488 = vmul.f32 %v5485, %v5487
    %v5489 = vadd.f32 %v5488, 0.0036580483
    %v5490 = vmul.f32 %v5485, %v5489
    %v5491 = vadd.f32 %v5490, 0.05243302
    %v5492 = vmul.f32 %v5485, %v5491
    %v5493 = vadd.f32 %v5492, 0.18741608
    %v5494 = vmul.f32 %v5485, %v5493
    %v5495 = vadd.f32 %v5494, 1.1283791
    %v5496 = vmul.f32 %v4883, %v5495
    %v5497 = vmul.f32 %v5485, 3.8918573e-05
    %v5498 = vadd.f32 %v5497, 0.001143296
    %v5499 = vmul.f32 %v5485, %v5498
    %v5500 = vadd.f32 %v5499, 0.014752088
    %v5501 = vmul.f32 %v5485, %v5500
    %v5502 = vadd.f32 %v5501, 0.112945676
    %v5503 = vmul.f32 %v5485, %v5502
    %v5504 = vadd.f32 %v5503, 0.4994258
    %v5505 = vmul.f32 %v5485, %v5504
    %v5506 = vadd.f32 %v5505, 1.0
    %v5507 = vrcp.pop %v5506
    %v5508 = vmul.f32 %v5506, %v5507
    %v5509 = vsub.f32 1.0, %v5508
    %v5510 = vmul.f32 %v5507, %v5509
    %v5511 = vadd.f32 %v5507, %v5510
    %vm5512 = vweird.f32 %v5506
    %vm5513 = vweird.f32 %v5507
    %vm5514 = vmor %vm5512, %vm5513
    %v5515 = vsel %vm5514, %v5507, %v5511
    %v5516 = vand.u32 2147483647, %v5506
    %vm5517 = vcmp.eq.f32.partialorder %v5516, 8.507059e+37
    %v5518 = vand.u32 %v5506, 2147483648
    %v5519 = vor.u32 1.1754944e-38, %v5518
    %v5520 = vsel %vm5517, %v5519, %v5515
    %v5521 = vmul.f32 %v5496, %v5520
    %v5522 = vmin.f32 %v5521, 1.0
    %v5523 = vmax.f32 %v5522, -1.0
    %v5524 = vadd.f32 %v4923, 1.0
    %v5525 = vadd.f32 %v4963, 1.0
    %v5526 = vadd.f32 %v5003, 1.0
    %v5527 = vadd.f32 %v5043, 1.0
    %v5528 = vadd.f32 %v5083, 1.0
    %v5529 = vadd.f32 %v5123, 1.0
    %v5530 = vadd.f32 %v5163, 1.0
    %v5531 = vadd.f32 %v5203, 1.0
    %v5532 = vadd.f32 %v5243, 1.0
    %v5533 = vadd.f32 %v5283, 1.0
    %v5534 = vadd.f32 %v5323, 1.0
    %v5535 = vadd.f32 %v5363, 1.0
    %v5536 = vadd.f32 %v5403, 1.0
    %v5537 = vadd.f32 %v5443, 1.0
    %v5538 = vadd.f32 %v5483, 1.0
    %v5539 = vadd.f32 %v5523, 1.0
    %v5540 = vmul.f32 %v4852, %v5524
    %v5541 = vmul.f32 %v4853, %v5525
    %v5542 = vmul.f32 %v4854, %v5526
    %v5543 = vmul.f32 %v4855, %v5527
    %v5544 = vmul.f32 %v4856, %v5528
    %v5545 = vmul.f32 %v4857, %v5529
    %v5546 = vmul.f32 %v4858, %v5530
    %v5547 = vmul.f32 %v4859, %v5531
    %v5548 = vmul.f32 %v4860, %v5532
    %v5549 = vmul.f32 %v4861, %v5533
    %v5550 = vmul.f32 %v4862, %v5534
    %v5551 = vmul.f32 %v4863, %v5535
    %v5552 = vmul.f32 %v4864, %v5536
    %v5553 = vmul.f32 %v4865, %v5537
    %v5554 = vmul.f32 %v4866, %v5538
    %v5555 = vmul.f32 %v4867, %v5539
    %v5556 = vld [vmem:[%s15] sm:$0x1]
    %v5557 = vld [vmem:[%s16] sm:$0x1]
    %5558 = vadd.xlane.f32.xlu0 %v5540
    %v5559 = vpop.xlane.xlu0 %5558
    %5560 = vadd.xlane.f32.xlu0 %v5541
    %v5561 = vpop.xlane.xlu0 %5560
    %5562 = vadd.xlane.f32.xlu0 %v5542
    %v5563 = vpop.xlane.xlu0 %5562
    %5564 = vadd.xlane.f32.xlu0 %v5543
    %v5565 = vpop.xlane.xlu0 %5564
    %5566 = vadd.xlane.f32.xlu0 %v5544
    %v5567 = vpop.xlane.xlu0 %5566
    %5568 = vadd.xlane.f32.xlu0 %v5545
    %v5569 = vpop.xlane.xlu0 %5568
    %5570 = vadd.xlane.f32.xlu0 %v5546
    %v5571 = vpop.xlane.xlu0 %5570
    %5572 = vadd.xlane.f32.xlu0 %v5547
    %v5573 = vpop.xlane.xlu0 %5572
    %5574 = vadd.xlane.f32.xlu0 %v5548
    %v5575 = vpop.xlane.xlu0 %5574
    %5576 = vadd.xlane.f32.xlu0 %v5549
    %v5577 = vpop.xlane.xlu0 %5576
    %5578 = vadd.xlane.f32.xlu0 %v5550
    %v5579 = vpop.xlane.xlu0 %5578
    %5580 = vadd.xlane.f32.xlu0 %v5551
    %v5581 = vpop.xlane.xlu0 %5580
    %5582 = vadd.xlane.f32.xlu0 %v5552
    %v5583 = vpop.xlane.xlu0 %5582
    %5584 = vadd.xlane.f32.xlu0 %v5553
    %v5585 = vpop.xlane.xlu0 %5584
    %5586 = vadd.xlane.f32.xlu0 %v5554
    %v5587 = vpop.xlane.xlu0 %5586
    %5588 = vadd.xlane.f32.xlu0 %v5555
    %v5589 = vpop.xlane.xlu0 %5588
    %v5590 = vmul.f32 %v5559, %v1007
    %v5591 = vmul.f32 %v5561, %v1007
    %v5592 = vmul.f32 %v5563, %v1007
    %v5593 = vmul.f32 %v5565, %v1007
    %v5594 = vmul.f32 %v5567, %v1007
    %v5595 = vmul.f32 %v5569, %v1007
    %v5596 = vmul.f32 %v5571, %v1007
    %v5597 = vmul.f32 %v5573, %v1007
    %v5598 = vmul.f32 %v5575, %v1007
    %v5599 = vmul.f32 %v5577, %v1007
    %v5600 = vmul.f32 %v5579, %v1007
    %v5601 = vmul.f32 %v5581, %v1007
    %v5602 = vmul.f32 %v5583, %v1007
    %v5603 = vmul.f32 %v5585, %v1007
    %v5604 = vmul.f32 %v5587, %v1007
    %v5605 = vmul.f32 %v5589, %v1007
    %v5606 = vmul.f32 %v5540, %v5540
    %v5607 = vmul.f32 %v5541, %v5541
    %v5608 = vmul.f32 %v5542, %v5542
    %v5609 = vmul.f32 %v5543, %v5543
    %v5610 = vmul.f32 %v5544, %v5544
    %v5611 = vmul.f32 %v5545, %v5545
    %v5612 = vmul.f32 %v5546, %v5546
    %v5613 = vmul.f32 %v5547, %v5547
    %v5614 = vmul.f32 %v5548, %v5548
    %v5615 = vmul.f32 %v5549, %v5549
    %v5616 = vmul.f32 %v5550, %v5550
    %v5617 = vmul.f32 %v5551, %v5551
    %v5618 = vmul.f32 %v5552, %v5552
    %v5619 = vmul.f32 %v5553, %v5553
    %v5620 = vmul.f32 %v5554, %v5554
    %v5621 = vmul.f32 %v5555, %v5555
    %5622 = vadd.xlane.f32.xlu0 %v5606
    %v5623 = vpop.xlane.xlu0 %5622
    %5624 = vadd.xlane.f32.xlu0 %v5607
    %v5625 = vpop.xlane.xlu0 %5624
    %5626 = vadd.xlane.f32.xlu0 %v5608
    %v5627 = vpop.xlane.xlu0 %5626
    %5628 = vadd.xlane.f32.xlu0 %v5609
    %v5629 = vpop.xlane.xlu0 %5628
    %5630 = vadd.xlane.f32.xlu0 %v5610
    %v5631 = vpop.xlane.xlu0 %5630
    %5632 = vadd.xlane.f32.xlu0 %v5611
    %v5633 = vpop.xlane.xlu0 %5632
    %5634 = vadd.xlane.f32.xlu0 %v5612
    %v5635 = vpop.xlane.xlu0 %5634
    %5636 = vadd.xlane.f32.xlu0 %v5613
    %v5637 = vpop.xlane.xlu0 %5636
    %5638 = vadd.xlane.f32.xlu0 %v5614
    %v5639 = vpop.xlane.xlu0 %5638
    %5640 = vadd.xlane.f32.xlu0 %v5615
    %v5641 = vpop.xlane.xlu0 %5640
    %5642 = vadd.xlane.f32.xlu0 %v5616
    %v5643 = vpop.xlane.xlu0 %5642
    %5644 = vadd.xlane.f32.xlu0 %v5617
    %v5645 = vpop.xlane.xlu0 %5644
    %5646 = vadd.xlane.f32.xlu0 %v5618
    %v5647 = vpop.xlane.xlu0 %5646
    %5648 = vadd.xlane.f32.xlu0 %v5619
    %v5649 = vpop.xlane.xlu0 %5648
    %5650 = vadd.xlane.f32.xlu0 %v5620
    %v5651 = vpop.xlane.xlu0 %5650
    %5652 = vadd.xlane.f32.xlu0 %v5621
    %v5653 = vpop.xlane.xlu0 %5652
    %v5654 = vmul.f32 %v5623, %v1007
    %v5655 = vmul.f32 %v5625, %v1007
    %v5656 = vmul.f32 %v5627, %v1007
    %v5657 = vmul.f32 %v5629, %v1007
    %v5658 = vmul.f32 %v5631, %v1007
    %v5659 = vmul.f32 %v5633, %v1007
    %v5660 = vmul.f32 %v5635, %v1007
    %v5661 = vmul.f32 %v5637, %v1007
    %v5662 = vmul.f32 %v5639, %v1007
    %v5663 = vmul.f32 %v5641, %v1007
    %v5664 = vmul.f32 %v5643, %v1007
    %v5665 = vmul.f32 %v5645, %v1007
    %v5666 = vmul.f32 %v5647, %v1007
    %v5667 = vmul.f32 %v5649, %v1007
    %v5668 = vmul.f32 %v5651, %v1007
    %v5669 = vmul.f32 %v5653, %v1007
    %v5670 = vmul.f32 %v5590, %v5590
    %v5671 = vmul.f32 %v5591, %v5591
    %v5672 = vmul.f32 %v5592, %v5592
    %v5673 = vmul.f32 %v5593, %v5593
    %v5674 = vmul.f32 %v5594, %v5594
    %v5675 = vmul.f32 %v5595, %v5595
    %v5676 = vmul.f32 %v5596, %v5596
    %v5677 = vmul.f32 %v5597, %v5597
    %v5678 = vmul.f32 %v5598, %v5598
    %v5679 = vmul.f32 %v5599, %v5599
    %v5680 = vmul.f32 %v5600, %v5600
    %v5681 = vmul.f32 %v5601, %v5601
    %v5682 = vmul.f32 %v5602, %v5602
    %v5683 = vmul.f32 %v5603, %v5603
    %v5684 = vmul.f32 %v5604, %v5604
    %v5685 = vmul.f32 %v5605, %v5605
    %v5686 = vsub.f32 %v5654, %v5670
    %v5687 = vsub.f32 %v5655, %v5671
    %v5688 = vsub.f32 %v5656, %v5672
    %v5689 = vsub.f32 %v5657, %v5673
    %v5690 = vsub.f32 %v5658, %v5674
    %v5691 = vsub.f32 %v5659, %v5675
    %v5692 = vsub.f32 %v5660, %v5676
    %v5693 = vsub.f32 %v5661, %v5677
    %v5694 = vsub.f32 %v5662, %v5678
    %v5695 = vsub.f32 %v5663, %v5679
    %v5696 = vsub.f32 %v5664, %v5680
    %v5697 = vsub.f32 %v5665, %v5681
    %v5698 = vsub.f32 %v5666, %v5682
    %v5699 = vsub.f32 %v5667, %v5683
    %v5700 = vsub.f32 %v5668, %v5684
    %v5701 = vsub.f32 %v5669, %v5685
    %v5702 = vmax.f32 %v5686, 0.0
    %v5703 = vmax.f32 %v5687, 0.0
    %v5704 = vmax.f32 %v5688, 0.0
    %v5705 = vmax.f32 %v5689, 0.0
    %v5706 = vmax.f32 %v5690, 0.0
    %v5707 = vmax.f32 %v5691, 0.0
    %v5708 = vmax.f32 %v5692, 0.0
    %v5709 = vmax.f32 %v5693, 0.0
    %v5710 = vmax.f32 %v5694, 0.0
    %v5711 = vmax.f32 %v5695, 0.0
    %v5712 = vmax.f32 %v5696, 0.0
    %v5713 = vmax.f32 %v5697, 0.0
    %v5714 = vmax.f32 %v5698, 0.0
    %v5715 = vmax.f32 %v5699, 0.0
    %v5716 = vmax.f32 %v5700, 0.0
    %v5717 = vmax.f32 %v5701, 0.0
    %v5718 = vadd.f32 %v5702, 1e-05
    %v5719 = vadd.f32 %v5703, 1e-05
    %v5720 = vadd.f32 %v5704, 1e-05
    %v5721 = vadd.f32 %v5705, 1e-05
    %v5722 = vadd.f32 %v5706, 1e-05
    %v5723 = vadd.f32 %v5707, 1e-05
    %v5724 = vadd.f32 %v5708, 1e-05
    %v5725 = vadd.f32 %v5709, 1e-05
    %v5726 = vadd.f32 %v5710, 1e-05
    %v5727 = vadd.f32 %v5711, 1e-05
    %v5728 = vadd.f32 %v5712, 1e-05
    %v5729 = vadd.f32 %v5713, 1e-05
    %v5730 = vadd.f32 %v5714, 1e-05
    %v5731 = vadd.f32 %v5715, 1e-05
    %v5732 = vadd.f32 %v5716, 1e-05
    %v5733 = vadd.f32 %v5717, 1e-05
    %v5734 = vrsqrt.pop %v5718
    %v5735 = vmul.f32 %v5734, %v5718
    %v5736 = vmul.f32 %v5735, %v5734
    %v5737 = vmul.f32 0.5, %v5736
    %v5738 = vsub.f32 1.5, %v5737
    %v5739 = vmul.f32 %v5734, %v5738
    %vm5740 = vweird.f32 %v5718
    %vm5741 = vweird.f32 %v5734
    %vm5742 = vmor %vm5740, %vm5741
    %v5743 = vsel %vm5742, %v5734, %v5739
    %v5744 = vrsqrt.pop %v5719
    %v5745 = vmul.f32 %v5744, %v5719
    %v5746 = vmul.f32 %v5745, %v5744
    %v5747 = vmul.f32 0.5, %v5746
    %v5748 = vsub.f32 1.5, %v5747
    %v5749 = vmul.f32 %v5744, %v5748
    %vm5750 = vweird.f32 %v5719
    %vm5751 = vweird.f32 %v5744
    %vm5752 = vmor %vm5750, %vm5751
    %v5753 = vsel %vm5752, %v5744, %v5749
    %v5754 = vrsqrt.pop %v5720
    %v5755 = vmul.f32 %v5754, %v5720
    %v5756 = vmul.f32 %v5755, %v5754
    %v5757 = vmul.f32 0.5, %v5756
    %v5758 = vsub.f32 1.5, %v5757
    %v5759 = vmul.f32 %v5754, %v5758
    %vm5760 = vweird.f32 %v5720
    %vm5761 = vweird.f32 %v5754
    %vm5762 = vmor %vm5760, %vm5761
    %v5763 = vsel %vm5762, %v5754, %v5759
    %v5764 = vrsqrt.pop %v5721
    %v5765 = vmul.f32 %v5764, %v5721
    %v5766 = vmul.f32 %v5765, %v5764
    %v5767 = vmul.f32 0.5, %v5766
    %v5768 = vsub.f32 1.5, %v5767
    %v5769 = vmul.f32 %v5764, %v5768
    %vm5770 = vweird.f32 %v5721
    %vm5771 = vweird.f32 %v5764
    %vm5772 = vmor %vm5770, %vm5771
    %v5773 = vsel %vm5772, %v5764, %v5769
    %v5774 = vrsqrt.pop %v5722
    %v5775 = vmul.f32 %v5774, %v5722
    %v5776 = vmul.f32 %v5775, %v5774
    %v5777 = vmul.f32 0.5, %v5776
    %v5778 = vsub.f32 1.5, %v5777
    %v5779 = vmul.f32 %v5774, %v5778
    %vm5780 = vweird.f32 %v5722
    %vm5781 = vweird.f32 %v5774
    %vm5782 = vmor %vm5780, %vm5781
    %v5783 = vsel %vm5782, %v5774, %v5779
    %v5784 = vrsqrt.pop %v5723
    %v5785 = vmul.f32 %v5784, %v5723
    %v5786 = vmul.f32 %v5785, %v5784
    %v5787 = vmul.f32 0.5, %v5786
    %v5788 = vsub.f32 1.5, %v5787
    %v5789 = vmul.f32 %v5784, %v5788
    %vm5790 = vweird.f32 %v5723
    %vm5791 = vweird.f32 %v5784
    %vm5792 = vmor %vm5790, %vm5791
    %v5793 = vsel %vm5792, %v5784, %v5789
    %v5794 = vrsqrt.pop %v5724
    %v5795 = vmul.f32 %v5794, %v5724
    %v5796 = vmul.f32 %v5795, %v5794
    %v5797 = vmul.f32 0.5, %v5796
    %v5798 = vsub.f32 1.5, %v5797
    %v5799 = vmul.f32 %v5794, %v5798
    %vm5800 = vweird.f32 %v5724
    %vm5801 = vweird.f32 %v5794
    %vm5802 = vmor %vm5800, %vm5801
    %v5803 = vsel %vm5802, %v5794, %v5799
    %v5804 = vrsqrt.pop %v5725
    %v5805 = vmul.f32 %v5804, %v5725
    %v5806 = vmul.f32 %v5805, %v5804
    %v5807 = vmul.f32 0.5, %v5806
    %v5808 = vsub.f32 1.5, %v5807
    %v5809 = vmul.f32 %v5804, %v5808
    %vm5810 = vweird.f32 %v5725
    %vm5811 = vweird.f32 %v5804
    %vm5812 = vmor %vm5810, %vm5811
    %v5813 = vsel %vm5812, %v5804, %v5809
    %v5814 = vrsqrt.pop %v5726
    %v5815 = vmul.f32 %v5814, %v5726
    %v5816 = vmul.f32 %v5815, %v5814
    %v5817 = vmul.f32 0.5, %v5816
    %v5818 = vsub.f32 1.5, %v5817
    %v5819 = vmul.f32 %v5814, %v5818
    %vm5820 = vweird.f32 %v5726
    %vm5821 = vweird.f32 %v5814
    %vm5822 = vmor %vm5820, %vm5821
    %v5823 = vsel %vm5822, %v5814, %v5819
    %v5824 = vrsqrt.pop %v5727
    %v5825 = vmul.f32 %v5824, %v5727
    %v5826 = vmul.f32 %v5825, %v5824
    %v5827 = vmul.f32 0.5, %v5826
    %v5828 = vsub.f32 1.5, %v5827
    %v5829 = vmul.f32 %v5824, %v5828
    %vm5830 = vweird.f32 %v5727
    %vm5831 = vweird.f32 %v5824
    %vm5832 = vmor %vm5830, %vm5831
    %v5833 = vsel %vm5832, %v5824, %v5829
    %v5834 = vrsqrt.pop %v5728
    %v5835 = vmul.f32 %v5834, %v5728
    %v5836 = vmul.f32 %v5835, %v5834
    %v5837 = vmul.f32 0.5, %v5836
    %v5838 = vsub.f32 1.5, %v5837
    %v5839 = vmul.f32 %v5834, %v5838
    %vm5840 = vweird.f32 %v5728
    %vm5841 = vweird.f32 %v5834
    %vm5842 = vmor %vm5840, %vm5841
    %v5843 = vsel %vm5842, %v5834, %v5839
    %v5844 = vrsqrt.pop %v5729
    %v5845 = vmul.f32 %v5844, %v5729
    %v5846 = vmul.f32 %v5845, %v5844
    %v5847 = vmul.f32 0.5, %v5846
    %v5848 = vsub.f32 1.5, %v5847
    %v5849 = vmul.f32 %v5844, %v5848
    %vm5850 = vweird.f32 %v5729
    %vm5851 = vweird.f32 %v5844
    %vm5852 = vmor %vm5850, %vm5851
    %v5853 = vsel %vm5852, %v5844, %v5849
    %v5854 = vrsqrt.pop %v5730
    %v5855 = vmul.f32 %v5854, %v5730
    %v5856 = vmul.f32 %v5855, %v5854
    %v5857 = vmul.f32 0.5, %v5856
    %v5858 = vsub.f32 1.5, %v5857
    %v5859 = vmul.f32 %v5854, %v5858
    %vm5860 = vweird.f32 %v5730
    %vm5861 = vweird.f32 %v5854
    %vm5862 = vmor %vm5860, %vm5861
    %v5863 = vsel %vm5862, %v5854, %v5859
    %v5864 = vrsqrt.pop %v5731
    %v5865 = vmul.f32 %v5864, %v5731
    %v5866 = vmul.f32 %v5865, %v5864
    %v5867 = vmul.f32 0.5, %v5866
    %v5868 = vsub.f32 1.5, %v5867
    %v5869 = vmul.f32 %v5864, %v5868
    %vm5870 = vweird.f32 %v5731
    %vm5871 = vweird.f32 %v5864
    %vm5872 = vmor %vm5870, %vm5871
    %v5873 = vsel %vm5872, %v5864, %v5869
    %v5874 = vrsqrt.pop %v5732
    %v5875 = vmul.f32 %v5874, %v5732
    %v5876 = vmul.f32 %v5875, %v5874
    %v5877 = vmul.f32 0.5, %v5876
    %v5878 = vsub.f32 1.5, %v5877
    %v5879 = vmul.f32 %v5874, %v5878
    %vm5880 = vweird.f32 %v5732
    %vm5881 = vweird.f32 %v5874
    %vm5882 = vmor %vm5880, %vm5881
    %v5883 = vsel %vm5882, %v5874, %v5879
    %v5884 = vrsqrt.pop %v5733
    %v5885 = vmul.f32 %v5884, %v5733
    %v5886 = vmul.f32 %v5885, %v5884
    %v5887 = vmul.f32 0.5, %v5886
    %v5888 = vsub.f32 1.5, %v5887
    %v5889 = vmul.f32 %v5884, %v5888
    %vm5890 = vweird.f32 %v5733
    %vm5891 = vweird.f32 %v5884
    %vm5892 = vmor %vm5890, %vm5891
    %v5893 = vsel %vm5892, %v5884, %v5889
    %v5894 = vsub.f32 %v5540, %v5590
    %v5895 = vsub.f32 %v5541, %v5591
    %v5896 = vsub.f32 %v5542, %v5592
    %v5897 = vsub.f32 %v5543, %v5593
    %v5898 = vsub.f32 %v5544, %v5594
    %v5899 = vsub.f32 %v5545, %v5595
    %v5900 = vsub.f32 %v5546, %v5596
    %v5901 = vsub.f32 %v5547, %v5597
    %v5902 = vsub.f32 %v5548, %v5598
    %v5903 = vsub.f32 %v5549, %v5599
    %v5904 = vsub.f32 %v5550, %v5600
    %v5905 = vsub.f32 %v5551, %v5601
    %v5906 = vsub.f32 %v5552, %v5602
    %v5907 = vsub.f32 %v5553, %v5603
    %v5908 = vsub.f32 %v5554, %v5604
    %v5909 = vsub.f32 %v5555, %v5605
    %v5910 = vmul.f32 %v5894, %v5743
    %v5911 = vmul.f32 %v5895, %v5753
    %v5912 = vmul.f32 %v5896, %v5763
    %v5913 = vmul.f32 %v5897, %v5773
    %v5914 = vmul.f32 %v5898, %v5783
    %v5915 = vmul.f32 %v5899, %v5793
    %v5916 = vmul.f32 %v5900, %v5803
    %v5917 = vmul.f32 %v5901, %v5813
    %v5918 = vmul.f32 %v5902, %v5823
    %v5919 = vmul.f32 %v5903, %v5833
    %v5920 = vmul.f32 %v5904, %v5843
    %v5921 = vmul.f32 %v5905, %v5853
    %v5922 = vmul.f32 %v5906, %v5863
    %v5923 = vmul.f32 %v5907, %v5873
    %v5924 = vmul.f32 %v5908, %v5883
    %v5925 = vmul.f32 %v5909, %v5893
    %v5927 = vperm.slane %v5556, 0
    %v5929 = vmul.f32 %v5910, %v5927
    %v5930 = vmul.f32 %v5911, %v5927
    %v5931 = vmul.f32 %v5912, %v5927
    %v5932 = vmul.f32 %v5913, %v5927
    %v5933 = vmul.f32 %v5914, %v5927
    %v5934 = vmul.f32 %v5915, %v5927
    %v5935 = vmul.f32 %v5916, %v5927
    %v5936 = vmul.f32 %v5917, %v5927
    %v5937 = vmul.f32 %v5918, %v5927
    %v5938 = vmul.f32 %v5919, %v5927
    %v5939 = vmul.f32 %v5920, %v5927
    %v5940 = vmul.f32 %v5921, %v5927
    %v5941 = vmul.f32 %v5922, %v5927
    %v5942 = vmul.f32 %v5923, %v5927
    %v5943 = vmul.f32 %v5924, %v5927
    %v5944 = vmul.f32 %v5925, %v5927
    %v5946 = vperm.slane %v5557, 0
    %v5948 = vadd.f32 %v5929, %v5946
    %v5949 = vadd.f32 %v5930, %v5946
    %v5950 = vadd.f32 %v5931, %v5946
    %v5951 = vadd.f32 %v5932, %v5946
    %v5952 = vadd.f32 %v5933, %v5946
    %v5953 = vadd.f32 %v5934, %v5946
    %v5954 = vadd.f32 %v5935, %v5946
    %v5955 = vadd.f32 %v5936, %v5946
    %v5956 = vadd.f32 %v5937, %v5946
    %v5957 = vadd.f32 %v5938, %v5946
    %v5958 = vadd.f32 %v5939, %v5946
    %v5959 = vadd.f32 %v5940, %v5946
    %v5960 = vadd.f32 %v5941, %v5946
    %v5961 = vadd.f32 %v5942, %v5946
    %v5962 = vadd.f32 %v5943, %v5946
    %v5963 = vadd.f32 %v5944, %v5946
    %5964 = vxpose.xlu0.b32.start [1/16] %v5948, 128
    %5965 = vxpose.xlu0.b32.cont [2/16] %v5949, 128
    %5966 = vxpose.xlu0.b32.cont [3/16] %v5950, 128
    %5967 = vxpose.xlu0.b32.cont [4/16] %v5951, 128
    %5968 = vxpose.xlu0.b32.cont [5/16] %v5952, 128
    %5969 = vxpose.xlu0.b32.cont [6/16] %v5953, 128
    %5970 = vxpose.xlu0.b32.cont [7/16] %v5954, 128
    %5971 = vxpose.xlu0.b32.cont [8/16] %v5955, 128
    %5972 = vxpose.xlu0.b32.cont [9/16] %v5956, 128
    %5973 = vxpose.xlu0.b32.cont [10/16] %v5957, 128
    %5974 = vxpose.xlu0.b32.cont [11/16] %v5958, 128
    %5975 = vxpose.xlu0.b32.cont [12/16] %v5959, 128
    %5976 = vxpose.xlu0.b32.cont [13/16] %v5960, 128
    %5977 = vxpose.xlu0.b32.cont [14/16] %v5961, 128
    %5978 = vxpose.xlu0.b32.cont [15/16] %v5962, 128
    %5979 = vxpose.xlu0.b32.end [16/16] %v5963, 128
    %v5980 = vpop.trf.xlu0
    %v5981 = vpop.trf.xlu0
    %v5982 = vpop.trf.xlu0
    %v5983 = vpop.trf.xlu0
    %v5984 = vpop.trf.xlu0
    %v5985 = vpop.trf.xlu0
    %v5986 = vpop.trf.xlu0
    %v5987 = vpop.trf.xlu0
    %v5988 = vpop.trf.xlu0
    %v5989 = vpop.trf.xlu0
    %v5990 = vpop.trf.xlu0
    %v5991 = vpop.trf.xlu0
    %v5992 = vpop.trf.xlu0
    %v5993 = vpop.trf.xlu0
    %v5994 = vpop.trf.xlu0
    %v5995 = vpop.trf.xlu0
    %v5996 = vld [vmem:[%s17] sm:$0xff]
    %v5997 = vld [vmem:[%s17 + $0x8] sm:$0xff]
    %v5998 = vld [vmem:[%s17 + $0x10] sm:$0xff]
    %v5999 = vld [vmem:[%s17 + $0x18] sm:$0xff]
    %v6000 = vld [vmem:[%s17 + $0x20] sm:$0xff]
    %v6001 = vld [vmem:[%s17 + $0x28] sm:$0xff]
    %v6002 = vld [vmem:[%s17 + $0x30] sm:$0xff]
    %v6003 = vld [vmem:[%s17 + $0x38] sm:$0xff]
    %v6004 = vld [vmem:[%s17 + $0x40] sm:$0xff]
    %v6005 = vld [vmem:[%s17 + $0x48] sm:$0xff]
    %v6006 = vld [vmem:[%s17 + $0x50] sm:$0xff]
    %v6007 = vld [vmem:[%s17 + $0x58] sm:$0xff]
    %v6008 = vld [vmem:[%s17 + $0x60] sm:$0xff]
    %v6009 = vld [vmem:[%s17 + $0x68] sm:$0xff]
    %v6010 = vld [vmem:[%s17 + $0x70] sm:$0xff]
    %v6011 = vld [vmem:[%s17 + $0x78] sm:$0xff]
    %6013 = vset.pattern.permute.xlu0 0
    %6014 = vperm.xlu0 %6013, %v5996
    %v6015 = vpop.permute.xlu0 %6014
    %6018 = vset.pattern.permute.xlu0 0
    %6019 = vperm.xlu0 %6018, %v5997
    %v6020 = vpop.permute.xlu0 %6019
    %6023 = vset.pattern.permute.xlu0 0
    %6024 = vperm.xlu0 %6023, %v5998
    %v6025 = vpop.permute.xlu0 %6024
    %6028 = vset.pattern.permute.xlu0 0
    %6029 = vperm.xlu0 %6028, %v5999
    %v6030 = vpop.permute.xlu0 %6029
    %6033 = vset.pattern.permute.xlu0 0
    %6034 = vperm.xlu0 %6033, %v6000
    %v6035 = vpop.permute.xlu0 %6034
    %6038 = vset.pattern.permute.xlu0 0
    %6039 = vperm.xlu0 %6038, %v6001
    %v6040 = vpop.permute.xlu0 %6039
    %6043 = vset.pattern.permute.xlu0 0
    %6044 = vperm.xlu0 %6043, %v6002
    %v6045 = vpop.permute.xlu0 %6044
    %6048 = vset.pattern.permute.xlu0 0
    %6049 = vperm.xlu0 %6048, %v6003
    %v6050 = vpop.permute.xlu0 %6049
    %6053 = vset.pattern.permute.xlu0 0
    %6054 = vperm.xlu0 %6053, %v6004
    %v6055 = vpop.permute.xlu0 %6054
    %6058 = vset.pattern.permute.xlu0 0
    %6059 = vperm.xlu0 %6058, %v6005
    %v6060 = vpop.permute.xlu0 %6059
    %6063 = vset.pattern.permute.xlu0 0
    %6064 = vperm.xlu0 %6063, %v6006
    %v6065 = vpop.permute.xlu0 %6064
    %6068 = vset.pattern.permute.xlu0 0
    %6069 = vperm.xlu0 %6068, %v6007
    %v6070 = vpop.permute.xlu0 %6069
    %6073 = vset.pattern.permute.xlu0 0
    %6074 = vperm.xlu0 %6073, %v6008
    %v6075 = vpop.permute.xlu0 %6074
    %6078 = vset.pattern.permute.xlu0 0
    %6079 = vperm.xlu0 %6078, %v6009
    %v6080 = vpop.permute.xlu0 %6079
    %6083 = vset.pattern.permute.xlu0 0
    %6084 = vperm.xlu0 %6083, %v6010
    %v6085 = vpop.permute.xlu0 %6084
    %6088 = vset.pattern.permute.xlu0 0
    %6089 = vperm.xlu0 %6088, %v6011
    %v6090 = vpop.permute.xlu0 %6089
    %v6092 = vmul.f32 %v5980, %v6015
    %v6093 = vmul.f32 %v5981, %v6020
    %v6094 = vmul.f32 %v5982, %v6025
    %v6095 = vmul.f32 %v5983, %v6030
    %v6096 = vmul.f32 %v5984, %v6035
    %v6097 = vmul.f32 %v5985, %v6040
    %v6098 = vmul.f32 %v5986, %v6045
    %v6099 = vmul.f32 %v5987, %v6050
    %v6100 = vmul.f32 %v5988, %v6055
    %v6101 = vmul.f32 %v5989, %v6060
    %v6102 = vmul.f32 %v5990, %v6065
    %v6103 = vmul.f32 %v5991, %v6070
    %v6104 = vmul.f32 %v5992, %v6075
    %v6105 = vmul.f32 %v5993, %v6080
    %v6106 = vmul.f32 %v5994, %v6085
    %v6107 = vmul.f32 %v5995, %v6090
    %v6108 = vadd.f32 %v6092, %v6093
    %v6109 = vadd.f32 %v6108, %v6094
    %v6110 = vadd.f32 %v6109, %v6095
    %v6111 = vadd.f32 %v6110, %v6096
    %v6112 = vadd.f32 %v6111, %v6097
    %v6113 = vadd.f32 %v6112, %v6098
    %v6114 = vadd.f32 %v6113, %v6099
    %v6115 = vadd.f32 %v6114, %v6100
    %v6116 = vadd.f32 %v6115, %v6101
    %v6117 = vadd.f32 %v6116, %v6102
    %v6118 = vadd.f32 %v6117, %v6103
    %v6119 = vadd.f32 %v6118, %v6104
    %v6120 = vadd.f32 %v6119, %v6105
    %v6121 = vadd.f32 %v6120, %v6106
    %v6122 = vadd.f32 %v6121, %v6107
    %v6123 = vrot.slane %v6122, 4
    %v6124 = vadd.f32 %v6122, %v6123
    %v6125 = vrot.slane %v6124, 2
    %v6126 = vadd.f32 %v6124, %v6125
    %v6127 = vrot.slane %v6126, 1
    %v6128 = vadd.f32 %v6126, %v6127
    %v6129 = vld [vmem:[#allocation2] sm:$0x1]
    %6131 = vset.pattern.permute.xlu0 0
    %6132 = vperm.xlu0 %6131, %v6129
    %v6133 = vpop.permute.xlu0 %6132
    %v6135 = vperm.slane %v6133, 0
    %v6136 = vadd.f32 %v6128, %v6135
    %v6137 = vtanh.pop %v6136
    %6138 = vst [vmem:[#allocation11] sm:$0x1] %v6137
    // Predicated region
    $region94: #{tpu_custom_call.1} parent=1 // pred_check
      _
    $region95: #{tpu_custom_call.1} parent=1 // pred_check_branch
      %6140 = sbr.rel (0) target = $region97
    $region96: #{tpu_custom_call.1} parent=1 // pred_region
      %6142 = vsyncadd [#allocation5], 0
      %s6144 = sshll.u32 [#allocation11], 4
      %s6145 = int_to_ptr.vmem [resolvable:$true] %s6144
      %s6146 = sshll.u32 %s19, 4
      %s6147 = int_to_ptr.hbm [resolvable:$true] %s6146
      %6149 = dma.vmem_to_hbm [thread:$0]  %s6145, 16, %s6147, [#allocation5]
    $region97: #{tpu_custom_call.1} parent=1 // pred_fallthru
      _
    // Predicated region
    $region98: #{tpu_custom_call.1} parent=1 // pred_check
      _
    $region99: #{tpu_custom_call.1} parent=1 // pred_check_branch
      %6151 = sbr.rel (0) target = $region101
    $region100: #{tpu_custom_call.1} parent=1 // pred_region
      %6153 = dma.done [#allocation5], 16
    $region101: #{tpu_custom_call.1} parent=1 // pred_fallthru
      _
    %6154 = vsyncpa [#allocation4], 1
    %6155 = vsyncpa [#allocation7], 1
    %6156 = vsyncpa [#allocation10], 1
    %6157 = vsyncpa [#allocation5], 1

</llo_original>
